<compile_context>
chip_gen: v7x
topology: tpu7x:2x2x1
jax: 0.10.0
libtpu: 0.0.40
codegen_flags: <defaults>
</compile_context>

<pallas_src>
import functools

import jax
import jax.numpy as jnp
from jax.experimental import pallas as pl
from jax.experimental.pallas import tpu as pltpu


# Static per-block config (stride, is_final) — kept out of the jitted pytree.
BLOCK_CFG = ((2, False), (2, False), (3, False), (2, True))


def _round_up(x, m):
    return ((x + m - 1) // m) * m


# ----------------------------------------------------------------------------
# Pallas kernel: fused (patches @ W_folded) + shift, followed by activation.
# BatchNorm scale is pre-folded into W, so the epilogue is a single add + act.
# ----------------------------------------------------------------------------
def _fused_conv_block_kernel(p_ref, w_ref, shift_ref, o_ref, *, activation):
    x = jnp.dot(p_ref[...], w_ref[...], preferred_element_type=jnp.float32)  # MXU, f32 acc
    x = x + shift_ref[...]                                                   # bias + BN shift
    if activation == "leaky_relu":
        x = jnp.where(x > 0, x, 0.2 * x)
    elif activation == "tanh":
        x = jnp.tanh(x)
    o_ref[...] = x.astype(o_ref.dtype)


def fused_conv_block(patches, w_mat, shift, activation, out_dtype, tm):
    """patches: [M_pad, K] bf16, w_mat: [K, Cout] bf16, shift: [1, Cout] f32 -> [M_pad, Cout]."""
    M_pad, K = patches.shape
    K2, Cout = w_mat.shape
    assert K == K2 and M_pad % tm == 0
    assert K % 128 == 0 and Cout % 128 == 0, (K, Cout)  # lane-dense contraction & output

    kernel = functools.partial(_fused_conv_block_kernel, activation=activation)
    return pl.pallas_call(
        kernel,
        out_shape=jax.ShapeDtypeStruct((M_pad, Cout), out_dtype),
        grid=(M_pad // tm,),
        in_specs=[
            pl.BlockSpec((tm, K), lambda i: (i, 0)),     # patches: streamed / double-buffered
            pl.BlockSpec((K, Cout), lambda i: (0, 0)),   # weights: constant block -> resident
            pl.BlockSpec((1, Cout), lambda i: (0, 0)),   # shift:   constant block -> resident
        ],
        out_specs=pl.BlockSpec((tm, Cout), lambda i: (i, 0)),
        compiler_params=pltpu.CompilerParams(
            dimension_semantics=("parallel",),           # megacore sharding on v7x
        ),
    )(patches, w_mat, shift)


# ----------------------------------------------------------------------------
# Plain-JAX glue: im2col patch extraction (NHWC). Runs inside the same jit so
# the slices fuse and stay bf16; matches PyTorch's floor-division conv output.
# ----------------------------------------------------------------------------
def im2col(x_nhwc, kh, kw, stride):
    N, H, W, C = x_nhwc.shape
    oh = (H - kh) // stride + 1
    ow = (W - kw) // stride + 1
    cols = []
    for i in range(kh):
        for j in range(kw):
            cols.append(x_nhwc[:, i:i + stride * oh:stride, j:j + stride * ow:stride, :])
    p = jnp.stack(cols, axis=3)                        # [N, oh, ow, kh*kw, C]
    return p.reshape(N * oh * ow, kh * kw * C), oh, ow


# ----------------------------------------------------------------------------
# One conv block: pad K/Cout to 128-multiples, fold BN, call the Pallas kernel.
# ----------------------------------------------------------------------------
def _conv_block(x_nhwc, w, b, gamma, beta, rmean, rvar, stride, final, tm_max=512):
    n = x_nhwc.shape[0]
    cout, cin = w.shape[0], w.shape[1]
    cin_pad = _round_up(cin, 8)            # K = 16*cin_pad becomes a multiple of 128
    cout_pad = _round_up(cout, 128)        # lane-dense output columns

    if cin_pad != cin:
        x_nhwc = jnp.pad(x_nhwc, ((0, 0), (0, 0), (0, 0), (0, cin_pad - cin)))

    patches, oh, ow = im2col(x_nhwc, 4, 4, stride)
    M = patches.shape[0]
    tm = min(tm_max, _round_up(M, 16))     # tile M; VMEM stays well under the 32 MiB scoped
    M_pad = _round_up(M, tm)               # default even on v7x (worst case ~10 MiB/step)
    if M_pad != M:
        patches = jnp.pad(patches, ((0, M_pad - M), (0, 0)))
    patches = patches.astype(jnp.bfloat16)

    # Fold conv bias + BatchNorm (running stats) into (weights, shift) at trace time.
    eps = 1e-5
    w_t = jnp.transpose(w, (2, 3, 1, 0))   # [KH, KW, Cin, Cout] matches patch ordering
    if not final:
        inv_std = gamma / jnp.sqrt(rvar + eps)
        scale = inv_std
        shift = (b - rmean) * inv_std + beta
        act = "leaky_relu"
        out_dtype = jnp.bfloat16           # next block's patches stay bf16
    else:
        scale = jnp.ones((cout,), jnp.float32)
        shift = b
        act = "tanh"
        out_dtype = jnp.float32
    w_t = w_t * scale[None, None, None, :]                       # fold BN scale into weights
    w_t = jnp.pad(w_t, ((0, 0), (0, 0), (0, cin_pad - cin), (0, cout_pad - cout)))
    w_mat = w_t.reshape(16 * cin_pad, cout_pad).astype(jnp.bfloat16)
    shift = jnp.pad(shift, (0, cout_pad - cout)).astype(jnp.float32)[None, :]

    out = fused_conv_block(patches, w_mat, shift, act, out_dtype, tm)
    # Slice off row / channel padding (padded cols are exactly 0: zero w, zero shift).
    return out[:M, :cout].reshape(n, oh, ow, cout)


# ----------------------------------------------------------------------------
# Deterministic parameter init (shapes match the PyTorch module's __init__).
# ----------------------------------------------------------------------------
def init_params(key, im_chan=3, hidden_dim=64, n_classes=40):
    channels = [
        (im_chan, hidden_dim),
        (hidden_dim, hidden_dim * 2),
        (hidden_dim * 2, hidden_dim * 4),
        (hidden_dim * 4, n_classes),
    ]
    params = []
    for idx, (cin, cout) in enumerate(channels):
        final = BLOCK_CFG[idx][1]
        key, k1, k2, k3, k4 = jax.random.split(key, 5)
        fan_in = cin * 4 * 4
        w = jax.random.normal(k1, (cout, cin, 4, 4), jnp.float32) / jnp.sqrt(float(fan_in))
        b = 0.05 * jax.random.normal(k2, (cout,), jnp.float32)
        if not final:
            gamma = 1.0 + 0.1 * jax.random.normal(k3, (cout,), jnp.float32)
            beta = 0.1 * jax.random.normal(k4, (cout,), jnp.float32)
            rmean = jnp.zeros((cout,), jnp.float32)
            rvar = jnp.ones((cout,), jnp.float32)
        else:
            gamma = beta = rmean = rvar = None
        params.append(dict(w=w, b=b, gamma=gamma, beta=beta, rmean=rmean, rvar=rvar))
    return params


# ----------------------------------------------------------------------------
# Forward pass (matches Classif.forward semantics). Whole thing is one jit so
# im2col / padding / slicing fuse around the Pallas calls.
# ----------------------------------------------------------------------------
@jax.jit
def classif_forward(image_nchw, params):
    x = jnp.transpose(image_nchw, (0, 2, 3, 1)).astype(jnp.bfloat16)  # NCHW -> NHWC, bf16
    n = x.shape[0]
    for p, (stride, final) in zip(params, BLOCK_CFG):
        x = _conv_block(x, p["w"], p["b"], p["gamma"], p["beta"],
                        p["rmean"], p["rvar"], stride, final)
    # final feature map is [N, 1, 1, n_classes]; .view(len(x), -1) -> [N, n_classes]
    return x.reshape(n, -1).astype(jnp.float32)


if __name__ == "__main__":
    key = jax.random.PRNGKey(0)
    k_img, k_par = jax.random.split(key)

    # Smallest CelebA-like input consistent with the conv stack (64x64 -> 31 -> 14 -> 4 -> 1).
    batch, im_chan, hw = 2, 3, 64
    image = jax.random.normal(k_img, (batch, im_chan, hw, hw), jnp.float32)

    params = init_params(k_par, im_chan=im_chan, hidden_dim=64, n_classes=40)

    out = classif_forward(image, params)
    out = jax.block_until_ready(out)
    assert out.shape == (batch, 40), out.shape
    assert bool(jnp.all(jnp.isfinite(out)))
    print("KERNEL_OK")
</pallas_src>

<mosaic_0001>
module attributes {stable_mosaic.version = 11 : i64} {
  func.func @_fused_conv_block_kernel(%arg0: i32, %arg1: memref<512x128xbf16, #tpu.memory_space<vmem>>, %arg2: memref<128x128xbf16, #tpu.memory_space<vmem>>, %arg3: memref<1x128xf32, #tpu.memory_space<vmem>>, %arg4: memref<512x128xbf16, #tpu.memory_space<vmem>>) attributes {dimension_semantics = [#tpu.dimension_semantics<parallel>], iteration_bounds = array<i64: 4>, scalar_prefetch = 0 : i64, scratch_operands = 0 : i64, tpu.core_type = #tpu.core_type<tc>, window_params = [{transform_indices = @transform_0, window_bounds = array<i64: 512, 128>}, {pipeline_mode = #tpu.pipeline_mode<synchronous>, transform_indices = @transform_1, window_bounds = array<i64: 128, 128>}, {pipeline_mode = #tpu.pipeline_mode<synchronous>, transform_indices = @transform_2, window_bounds = array<i64: 1, 128>}, {transform_indices = @transform_3, window_bounds = array<i64: 512, 128>}]} {
    %c0 = arith.constant 0 : index
    %c0_0 = arith.constant 0 : index
    %0 = vector.load %arg1[%c0, %c0_0] : memref<512x128xbf16, #tpu.memory_space<vmem>>, vector<512x128xbf16>
    %c0_1 = arith.constant 0 : index
    %c0_2 = arith.constant 0 : index
    %1 = vector.load %arg2[%c0_1, %c0_2] : memref<128x128xbf16, #tpu.memory_space<vmem>>, vector<128x128xbf16>
    %cst = arith.constant dense<0.000000e+00> : vector<512x128xf32>
    %2 = tpu.matmul %0, %1, %cst {dimension_numbers = #tpu.dot_dimension_numbers<[1], [0], [0], [1], [0, 0, 1, 1], [], []>} : vector<512x128xbf16>, vector<128x128xbf16>, vector<512x128xf32> -> vector<512x128xf32>
    %c0_3 = arith.constant 0 : index
    %c0_4 = arith.constant 0 : index
    %3 = vector.load %arg3[%c0_3, %c0_4] : memref<1x128xf32, #tpu.memory_space<vmem>>, vector<1x128xf32>
    %4 = vector.broadcast %3 : vector<1x128xf32> to vector<512x128xf32>
    %5 = arith.addf %2, %4 : vector<512x128xf32>
    %cst_5 = arith.constant 0.000000e+00 : f32
    %6 = vector.broadcast %cst_5 : f32 to vector<512x128xf32>
    %7 = arith.cmpf ogt, %5, %6 : vector<512x128xf32>
    %cst_6 = arith.constant 2.000000e-01 : f32
    %8 = vector.broadcast %cst_6 : f32 to vector<512x128xf32>
    %9 = arith.mulf %8, %5 : vector<512x128xf32>
    %10 = arith.select %7, %5, %9 : vector<512x128xi1>, vector<512x128xf32>
    %11 = arith.truncf %10 : vector<512x128xf32> to vector<512x128xbf16>
    %c0_7 = arith.constant 0 : index
    %c0_8 = arith.constant 0 : index
    %12 = vector.load %arg4[%c0_7, %c0_8] : memref<512x128xbf16, #tpu.memory_space<vmem>>, vector<512x128xbf16>
    tpu.vector_store %arg4[%c0_7, %c0_8], %11 {strides = array<i32>} : memref<512x128xbf16, #tpu.memory_space<vmem>>, vector<512x128xbf16>,
    return
  }
  func.func @transform_0(%arg0: i32) -> (i32, i32) {
    %c0_i32 = arith.constant 0 : i32
    %c0_i32_0 = arith.constant 0 : i32
    return %arg0, %c0_i32 : i32, i32
  }
  func.func @transform_1(%arg0: i32) -> (i32, i32) {
    %c0_i32 = arith.constant 0 : i32
    %c0_i32_0 = arith.constant 0 : i32
    %c0_i32_1 = arith.constant 0 : i32
    return %c0_i32, %c0_i32_0 : i32, i32
  }
  func.func @transform_2(%arg0: i32) -> (i32, i32) {
    %c0_i32 = arith.constant 0 : i32
    %c0_i32_0 = arith.constant 0 : i32
    %c0_i32_1 = arith.constant 0 : i32
    return %c0_i32, %c0_i32_0 : i32, i32
  }
  func.func @transform_3(%arg0: i32) -> (i32, i32) {
    %c0_i32 = arith.constant 0 : i32
    %c0_i32_0 = arith.constant 0 : i32
    return %arg0, %c0_i32 : i32, i32
  }
}

module attributes {stable_mosaic.version = 11 : i64} {
  func.func @_fused_conv_block_kernel(%arg0: i32, %arg1: memref<400x1024xbf16, #tpu.memory_space<vmem>>, %arg2: memref<1024x128xbf16, #tpu.memory_space<vmem>>, %arg3: memref<1x128xf32, #tpu.memory_space<vmem>>, %arg4: memref<400x128xbf16, #tpu.memory_space<vmem>>) attributes {dimension_semantics = [#tpu.dimension_semantics<parallel>], iteration_bounds = array<i64: 1>, scalar_prefetch = 0 : i64, scratch_operands = 0 : i64, tpu.core_type = #tpu.core_type<tc>, window_params = [{transform_indices = @transform_0, window_bounds = array<i64: 400, 1024>}, {pipeline_mode = #tpu.pipeline_mode<synchronous>, transform_indices = @transform_1, window_bounds = array<i64: 1024, 128>}, {pipeline_mode = #tpu.pipeline_mode<synchronous>, transform_indices = @transform_2, window_bounds = array<i64: 1, 128>}, {transform_indices = @transform_3, window_bounds = array<i64: 400, 128>}]} {
    %c0 = arith.constant 0 : index
    %c0_0 = arith.constant 0 : index
    %0 = vector.load %arg1[%c0, %c0_0] : memref<400x1024xbf16, #tpu.memory_space<vmem>>, vector<400x1024xbf16>
    %c0_1 = arith.constant 0 : index
    %c0_2 = arith.constant 0 : index
    %1 = vector.load %arg2[%c0_1, %c0_2] : memref<1024x128xbf16, #tpu.memory_space<vmem>>, vector<1024x128xbf16>
    %cst = arith.constant dense<0.000000e+00> : vector<400x128xf32>
    %2 = tpu.matmul %0, %1, %cst {dimension_numbers = #tpu.dot_dimension_numbers<[1], [0], [0], [1], [0, 0, 1, 1], [], []>} : vector<400x1024xbf16>, vector<1024x128xbf16>, vector<400x128xf32> -> vector<400x128xf32>
    %c0_3 = arith.constant 0 : index
    %c0_4 = arith.constant 0 : index
    %3 = vector.load %arg3[%c0_3, %c0_4] : memref<1x128xf32, #tpu.memory_space<vmem>>, vector<1x128xf32>
    %4 = vector.broadcast %3 : vector<1x128xf32> to vector<400x128xf32>
    %5 = arith.addf %2, %4 : vector<400x128xf32>
    %cst_5 = arith.constant 0.000000e+00 : f32
    %6 = vector.broadcast %cst_5 : f32 to vector<400x128xf32>
    %7 = arith.cmpf ogt, %5, %6 : vector<400x128xf32>
    %cst_6 = arith.constant 2.000000e-01 : f32
    %8 = vector.broadcast %cst_6 : f32 to vector<400x128xf32>
    %9 = arith.mulf %8, %5 : vector<400x128xf32>
    %10 = arith.select %7, %5, %9 : vector<400x128xi1>, vector<400x128xf32>
    %11 = arith.truncf %10 : vector<400x128xf32> to vector<400x128xbf16>
    %c0_7 = arith.constant 0 : index
    %c0_8 = arith.constant 0 : index
    %12 = vector.load %arg4[%c0_7, %c0_8] : memref<400x128xbf16, #tpu.memory_space<vmem>>, vector<400x128xbf16>
    tpu.vector_store %arg4[%c0_7, %c0_8], %11 {strides = array<i32>} : memref<400x128xbf16, #tpu.memory_space<vmem>>, vector<400x128xbf16>,
    return
  }
  func.func @transform_0(%arg0: i32) -> (i32, i32) {
    %c0_i32 = arith.constant 0 : i32
    %c0_i32_0 = arith.constant 0 : i32
    return %arg0, %c0_i32 : i32, i32
  }
  func.func @transform_1(%arg0: i32) -> (i32, i32) {
    %c0_i32 = arith.constant 0 : i32
    %c0_i32_0 = arith.constant 0 : i32
    %c0_i32_1 = arith.constant 0 : i32
    return %c0_i32, %c0_i32_0 : i32, i32
  }
  func.func @transform_2(%arg0: i32) -> (i32, i32) {
    %c0_i32 = arith.constant 0 : i32
    %c0_i32_0 = arith.constant 0 : i32
    %c0_i32_1 = arith.constant 0 : i32
    return %c0_i32, %c0_i32_0 : i32, i32
  }
  func.func @transform_3(%arg0: i32) -> (i32, i32) {
    %c0_i32 = arith.constant 0 : i32
    %c0_i32_0 = arith.constant 0 : i32
    return %arg0, %c0_i32 : i32, i32
  }
}

module attributes {stable_mosaic.version = 11 : i64} {
  func.func @_fused_conv_block_kernel(%arg0: i32, %arg1: memref<32x2048xbf16, #tpu.memory_space<vmem>>, %arg2: memref<2048x256xbf16, #tpu.memory_space<vmem>>, %arg3: memref<1x256xf32, #tpu.memory_space<vmem>>, %arg4: memref<32x256xbf16, #tpu.memory_space<vmem>>) attributes {dimension_semantics = [#tpu.dimension_semantics<parallel>], iteration_bounds = array<i64: 1>, scalar_prefetch = 0 : i64, scratch_operands = 0 : i64, tpu.core_type = #tpu.core_type<tc>, window_params = [{transform_indices = @transform_0, window_bounds = array<i64: 32, 2048>}, {pipeline_mode = #tpu.pipeline_mode<synchronous>, transform_indices = @transform_1, window_bounds = array<i64: 2048, 256>}, {pipeline_mode = #tpu.pipeline_mode<synchronous>, transform_indices = @transform_2, window_bounds = array<i64: 1, 256>}, {transform_indices = @transform_3, window_bounds = array<i64: 32, 256>}]} {
    %c0 = arith.constant 0 : index
    %c0_0 = arith.constant 0 : index
    %0 = vector.load %arg1[%c0, %c0_0] : memref<32x2048xbf16, #tpu.memory_space<vmem>>, vector<32x2048xbf16>
    %c0_1 = arith.constant 0 : index
    %c0_2 = arith.constant 0 : index
    %1 = vector.load %arg2[%c0_1, %c0_2] : memref<2048x256xbf16, #tpu.memory_space<vmem>>, vector<2048x256xbf16>
    %cst = arith.constant dense<0.000000e+00> : vector<32x256xf32>
    %2 = tpu.matmul %0, %1, %cst {dimension_numbers = #tpu.dot_dimension_numbers<[1], [0], [0], [1], [0, 0, 1, 1], [], []>} : vector<32x2048xbf16>, vector<2048x256xbf16>, vector<32x256xf32> -> vector<32x256xf32>
    %c0_3 = arith.constant 0 : index
    %c0_4 = arith.constant 0 : index
    %3 = vector.load %arg3[%c0_3, %c0_4] : memref<1x256xf32, #tpu.memory_space<vmem>>, vector<1x256xf32>
    %4 = vector.broadcast %3 : vector<1x256xf32> to vector<32x256xf32>
    %5 = arith.addf %2, %4 : vector<32x256xf32>
    %cst_5 = arith.constant 0.000000e+00 : f32
    %6 = vector.broadcast %cst_5 : f32 to vector<32x256xf32>
    %7 = arith.cmpf ogt, %5, %6 : vector<32x256xf32>
    %cst_6 = arith.constant 2.000000e-01 : f32
    %8 = vector.broadcast %cst_6 : f32 to vector<32x256xf32>
    %9 = arith.mulf %8, %5 : vector<32x256xf32>
    %10 = arith.select %7, %5, %9 : vector<32x256xi1>, vector<32x256xf32>
    %11 = arith.truncf %10 : vector<32x256xf32> to vector<32x256xbf16>
    %c0_7 = arith.constant 0 : index
    %c0_8 = arith.constant 0 : index
    %12 = vector.load %arg4[%c0_7, %c0_8] : memref<32x256xbf16, #tpu.memory_space<vmem>>, vector<32x256xbf16>
    tpu.vector_store %arg4[%c0_7, %c0_8], %11 {strides = array<i32>} : memref<32x256xbf16, #tpu.memory_space<vmem>>, vector<32x256xbf16>,
    return
  }
  func.func @transform_0(%arg0: i32) -> (i32, i32) {
    %c0_i32 = arith.constant 0 : i32
    %c0_i32_0 = arith.constant 0 : i32
    return %arg0, %c0_i32 : i32, i32
  }
  func.func @transform_1(%arg0: i32) -> (i32, i32) {
    %c0_i32 = arith.constant 0 : i32
    %c0_i32_0 = arith.constant 0 : i32
    %c0_i32_1 = arith.constant 0 : i32
    return %c0_i32, %c0_i32_0 : i32, i32
  }
  func.func @transform_2(%arg0: i32) -> (i32, i32) {
    %c0_i32 = arith.constant 0 : i32
    %c0_i32_0 = arith.constant 0 : i32
    %c0_i32_1 = arith.constant 0 : i32
    return %c0_i32, %c0_i32_0 : i32, i32
  }
  func.func @transform_3(%arg0: i32) -> (i32, i32) {
    %c0_i32 = arith.constant 0 : i32
    %c0_i32_0 = arith.constant 0 : i32
    return %arg0, %c0_i32 : i32, i32
  }
}

module attributes {stable_mosaic.version = 11 : i64} {
  func.func @_fused_conv_block_kernel(%arg0: i32, %arg1: memref<16x4096xbf16, #tpu.memory_space<vmem>>, %arg2: memref<4096x128xbf16, #tpu.memory_space<vmem>>, %arg3: memref<1x128xf32, #tpu.memory_space<vmem>>, %arg4: memref<16x128xf32, #tpu.memory_space<vmem>>) attributes {dimension_semantics = [#tpu.dimension_semantics<parallel>], iteration_bounds = array<i64: 1>, scalar_prefetch = 0 : i64, scratch_operands = 0 : i64, tpu.core_type = #tpu.core_type<tc>, window_params = [{transform_indices = @transform_0, window_bounds = array<i64: 16, 4096>}, {pipeline_mode = #tpu.pipeline_mode<synchronous>, transform_indices = @transform_1, window_bounds = array<i64: 4096, 128>}, {pipeline_mode = #tpu.pipeline_mode<synchronous>, transform_indices = @transform_2, window_bounds = array<i64: 1, 128>}, {transform_indices = @transform_3, window_bounds = array<i64: 16, 128>}]} {
    %c0 = arith.constant 0 : index
    %c0_0 = arith.constant 0 : index
    %0 = vector.load %arg1[%c0, %c0_0] : memref<16x4096xbf16, #tpu.memory_space<vmem>>, vector<16x4096xbf16>
    %c0_1 = arith.constant 0 : index
    %c0_2 = arith.constant 0 : index
    %1 = vector.load %arg2[%c0_1, %c0_2] : memref<4096x128xbf16, #tpu.memory_space<vmem>>, vector<4096x128xbf16>
    %cst = arith.constant dense<0.000000e+00> : vector<16x128xf32>
    %2 = tpu.matmul %0, %1, %cst {dimension_numbers = #tpu.dot_dimension_numbers<[1], [0], [0], [1], [0, 0, 1, 1], [], []>} : vector<16x4096xbf16>, vector<4096x128xbf16>, vector<16x128xf32> -> vector<16x128xf32>
    %c0_3 = arith.constant 0 : index
    %c0_4 = arith.constant 0 : index
    %3 = vector.load %arg3[%c0_3, %c0_4] : memref<1x128xf32, #tpu.memory_space<vmem>>, vector<1x128xf32>
    %4 = vector.broadcast %3 : vector<1x128xf32> to vector<16x128xf32>
    %5 = arith.addf %2, %4 : vector<16x128xf32>
    %6 = math.tanh %5 : vector<16x128xf32>
    %c0_5 = arith.constant 0 : index
    %c0_6 = arith.constant 0 : index
    %7 = vector.load %arg4[%c0_5, %c0_6] : memref<16x128xf32, #tpu.memory_space<vmem>>, vector<16x128xf32>
    tpu.vector_store %arg4[%c0_5, %c0_6], %6 {strides = array<i32>} : memref<16x128xf32, #tpu.memory_space<vmem>>, vector<16x128xf32>,
    return
  }
  func.func @transform_0(%arg0: i32) -> (i32, i32) {
    %c0_i32 = arith.constant 0 : i32
    %c0_i32_0 = arith.constant 0 : i32
    return %arg0, %c0_i32 : i32, i32
  }
  func.func @transform_1(%arg0: i32) -> (i32, i32) {
    %c0_i32 = arith.constant 0 : i32
    %c0_i32_0 = arith.constant 0 : i32
    %c0_i32_1 = arith.constant 0 : i32
    return %c0_i32, %c0_i32_0 : i32, i32
  }
  func.func @transform_2(%arg0: i32) -> (i32, i32) {
    %c0_i32 = arith.constant 0 : i32
    %c0_i32_0 = arith.constant 0 : i32
    %c0_i32_1 = arith.constant 0 : i32
    return %c0_i32, %c0_i32_0 : i32, i32
  }
  func.func @transform_3(%arg0: i32) -> (i32, i32) {
    %c0_i32 = arith.constant 0 : i32
    %c0_i32_0 = arith.constant 0 : i32
    return %arg0, %c0_i32 : i32, i32
  }
}

</mosaic_0001>

<llo_original>
// kernel: classif_forward.4
$region0: #{classif_forward.4}
  #allocation0 [shape = 'u32[]', space=smem, size = 0x4, offset = 0x4, fixed_abs, tag = 'smem constant byte address 0x4 - core index']
  #allocation1 [shape = 'u32[144,128]{1,0:T(1,128)}', space=vmem, size = 0x12000, scoped, tag = 'internal scratch']
  %s0 = inlined_call_operand.vmem [shape: bf16[2048,128], index: 0, kind: input, shape index: {}]
  %s1 = inlined_call_operand.vmem [shape: bf16[128,128], index: 1, kind: input, shape index: {}]
  %s2 = inlined_call_operand.vmem [shape: f32[1,128], index: 2, kind: input, shape index: {}]
  %s3 = inlined_call_operand.vmem [shape: bf16[2048,128], index: 3, kind: output, shape index: {}]
  %s4 = sld [smem:[#allocation0]]
  $region45: #{classif_forward.4} parent=0
    _
  %s6 = ssub.s32 1, %s4
  %s7 = scalar_select 0, %s6, %s4
  loop: start=0, step=1, limit=6
  $region2: #{classif_forward.4} parent=0 // loop_pre_header
    _
  $region3: #{classif_forward.4} parent=0 // loop_header
    %s9 = sphi 0, %s13
    %p10 = scmp.ge.s32.totalorder %s9, 6
    %s19 = sphi 0, %s21
    %s22 = sphi 0, %s19
    %s23 = sphi 0, %s22
    %s39 = sphi 0, %s23
    %s43 = sphi 0, %s43
    %s45 = sphi 0, %s43
    %s46 = sphi 0, %s45
    %s60 = sphi 0, %s46
    %s64 = sphi 0, %s64
    %s66 = sphi 0, %s64
    %s67 = sphi 0, %s66
    %s81 = sphi 0, %s67
    %s87 = sphi 0, %s89
    %s90 = sphi 0, %s87
    %s91 = sphi 0, %s90
    %s107 = sphi 0, %s91
  $region4: #{classif_forward.4} parent=0 // loop_header_branch
    %12 = sbr.rel (%p10) target = $region8
  $region5: #{classif_forward.4} parent=0 // loop_body
    %s14 = ssub.s32 %s9, 1
    %s15 = ssub.s32 %s9, 2
    %s16 = sadd.s32 %s9, 1
    %s17 = ssub.s32 %s9, %s16
    %p18 = scmp.eq.s32.totalorder %s17, 0
    %s20 = sadd.s32 %s19, 1
    %s21 = scalar_select %p18, %s19, %s20
    %p24 = pneg %p18
    %p25 = scmp.eq.s32.totalorder %s9, 3
    %p26 = por %p24, %p25
    %p27 = scmp.ne.s32.totalorder %s19, %s22
    %p28 = scmp.eq.s32.totalorder %s9, 0
    %p29 = por %p27, %p28
    %p30 = scmp.ne.s32.totalorder %s19, %s22
    %p31 = scmp.eq.s32.totalorder %s14, 3
    %p32 = por %p30, %p31
    %p33 = scmp.ne.s32.totalorder %s22, %s23
    %p34 = scmp.eq.s32.totalorder %s14, 0
    %p35 = por %p33, %p34
    %p36 = scmp.ne.s32.totalorder %s22, %s23
    %p37 = scmp.eq.s32.totalorder %s15, 3
    %p38 = por %p36, %p37
    %p40 = scmp.ne.s32.totalorder %s23, %s39
    %p41 = scmp.eq.s32.totalorder %s15, 0
    %p42 = por %p40, %p41
    %s44 = sadd.s32 %s43, 1
    %p47 = scmp.eq.s32.totalorder %s9, 3
    %p48 = scmp.ne.s32.totalorder %s43, %s45
    %p49 = scmp.eq.s32.totalorder %s9, 0
    %p50 = por %p48, %p49
    %p51 = scmp.ne.s32.totalorder %s43, %s45
    %p52 = scmp.eq.s32.totalorder %s14, 3
    %p53 = por %p51, %p52
    %p54 = scmp.ne.s32.totalorder %s45, %s46
    %p55 = scmp.eq.s32.totalorder %s14, 0
    %p56 = por %p54, %p55
    %p57 = scmp.ne.s32.totalorder %s45, %s46
    %p58 = scmp.eq.s32.totalorder %s15, 3
    %p59 = por %p57, %p58
    %p61 = scmp.ne.s32.totalorder %s46, %s60
    %p62 = scmp.eq.s32.totalorder %s15, 0
    %p63 = por %p61, %p62
    %s65 = sadd.s32 %s64, 1
    %p68 = scmp.eq.s32.totalorder %s9, 3
    %p69 = scmp.ne.s32.totalorder %s64, %s66
    %p70 = scmp.eq.s32.totalorder %s9, 0
    %p71 = por %p69, %p70
    %p72 = scmp.ne.s32.totalorder %s64, %s66
    %p73 = scmp.eq.s32.totalorder %s14, 3
    %p74 = por %p72, %p73
    %p75 = scmp.ne.s32.totalorder %s66, %s67
    %p76 = scmp.eq.s32.totalorder %s14, 0
    %p77 = por %p75, %p76
    %p78 = scmp.ne.s32.totalorder %s66, %s67
    %p79 = scmp.eq.s32.totalorder %s15, 3
    %p80 = por %p78, %p79
    %p82 = scmp.ne.s32.totalorder %s67, %s81
    %p83 = scmp.eq.s32.totalorder %s15, 0
    %p84 = por %p82, %p83
    %s85 = ssub.s32 %s9, %s16
    %p86 = scmp.eq.s32.totalorder %s85, 0
    %s88 = sadd.s32 %s87, 1
    %s89 = scalar_select %p86, %s87, %s88
    %p92 = pneg %p86
    %p93 = scmp.eq.s32.totalorder %s9, 3
    %p94 = por %p92, %p93
    %p95 = scmp.ne.s32.totalorder %s87, %s90
    %p96 = scmp.eq.s32.totalorder %s9, 0
    %p97 = por %p95, %p96
    %p98 = scmp.ne.s32.totalorder %s87, %s90
    %p99 = scmp.eq.s32.totalorder %s14, 3
    %p100 = por %p98, %p99
    %p101 = scmp.ne.s32.totalorder %s90, %s91
    %p102 = scmp.eq.s32.totalorder %s14, 0
    %p103 = por %p101, %p102
    %p104 = scmp.ne.s32.totalorder %s90, %s91
    %p105 = scmp.eq.s32.totalorder %s15, 3
    %p106 = por %p104, %p105
    %p108 = scmp.ne.s32.totalorder %s91, %s107
    %p109 = scmp.eq.s32.totalorder %s15, 0
    %p110 = por %p108, %p109
    %p111 = scmp.le.s32.totalorder 1, %s9
    %p112 = scmp.lt.s32.totalorder %s9, 5
    %p113 = pnand %p111, %p112
    %p114 = pneg %p113
    // Predicated region
    $region9: #{classif_forward.4} parent=5 // pred_check
      _
    $region10: #{classif_forward.4} parent=5 // pred_check_branch
      %116 = sbr.rel (%p113) target = $region12
    $region11: #{classif_forward.4} parent=5 // pred_region
      %s117 = ssub.s32 %s9, 1
      // Predicated region
      $region13: #{classif_forward.4} parent=11 // pred_check
        %p118 = pneg %p56
      $region14: #{classif_forward.4} parent=11 // pred_check_branch
        %120 = sbr.rel (%p118) target = $region16
      $region15: #{classif_forward.4} parent=11 // pred_region
        _
      $region16: #{classif_forward.4} parent=11 // pred_fallthru
        _
      // Predicated region
      $region17: #{classif_forward.4} parent=11 // pred_check
        %p121 = pneg %p77
      $region18: #{classif_forward.4} parent=11 // pred_check_branch
        %123 = sbr.rel (%p121) target = $region20
      $region19: #{classif_forward.4} parent=11 // pred_region
        _
      $region20: #{classif_forward.4} parent=11 // pred_fallthru
        _
    $region12: #{classif_forward.4} parent=5 // pred_fallthru
      _
    %p124 = scmp.lt.s32.totalorder %s9, 4
    // Predicated region
    $region21: #{classif_forward.4} parent=5 // pred_check
      %p125 = pneg %p124
    $region22: #{classif_forward.4} parent=5 // pred_check_branch
      %127 = sbr.rel (%p125) target = $region24
    $region23: #{classif_forward.4} parent=5 // pred_region
      // Predicated region
      $region25: #{classif_forward.4} parent=23 // pred_check
        %p128 = pneg %p29
      $region26: #{classif_forward.4} parent=23 // pred_check_branch
        %130 = sbr.rel (%p128) target = $region28
      $region27: #{classif_forward.4} parent=23 // pred_region
        %s131 = smul.u32 64, %s9
        %p132 = scmp.lt.s32.totalorder %s131, 255
        %s133 = scalar_select %p132, %s131, 255
        %s134 = smul.addr %s133, 4
        %s135 = scalar_lea.vmem %s0, %s134
        %s136 = smul.u32 64, %s9
      $region28: #{classif_forward.4} parent=23 // pred_fallthru
        _
    $region24: #{classif_forward.4} parent=5 // pred_fallthru
      _
    %p137 = scmp.le.s32.totalorder 1, %s9
    %p138 = scmp.lt.s32.totalorder %s9, 5
    %p139 = pnand %p137, %p138
    %p140 = pneg %p139
    // Predicated region
    $region29: #{classif_forward.4} parent=5 // pred_check
      _
    $region30: #{classif_forward.4} parent=5 // pred_check_branch
      %142 = sbr.rel (%p139) target = $region32
    $region31: #{classif_forward.4} parent=5 // pred_region
      %s143 = ssub.s32 %s9, 1
      %s144 = smul.u32 64, %s14
      %p145 = scmp.lt.s32.totalorder %s144, 255
      %s146 = scalar_select %p145, %s144, 255
      %s147 = smul.addr %s146, 4
      %s148 = scalar_lea.vmem %s0, %s147
      %p149 = pneg %p35
      %p150 = pneg %p32
      %p151 = pneg %p56
      %p152 = pneg %p53
      %p153 = pneg %p77
      %p154 = pneg %p74
      %p155 = pneg %p103
      %p156 = pneg %p100
      %s157 = smul.u32 64, %s14
      %p158 = scmp.lt.s32.totalorder %s157, 255
      %s159 = scalar_select %p158, %s157, 255
      %s160 = smul.addr %s159, 4
      %s161 = scalar_lea.vmem %s3, %s160
      %s162 = smul.u32 64, %s14
      %p163 = scmp.lt.s32.totalorder %s162, 255
      %s164 = scalar_select %p163, %s162, 255
      %s165 = smul.addr %s164, 4
      %s166 = scalar_lea.vmem %s0, %s165
      %s167 = smul.u32 64, %s14
      %s168 = smul.u32 64, %s14
      %p169 = scmp.lt.s32.totalorder %s168, 255
      %s170 = scalar_select %p169, %s168, 255
      %s171 = smul.addr %s170, 4
      %s172 = scalar_lea.vmem %s3, %s171
      %s173 = smul.u32 64, %s14
      %v175 = vld [vmem:[%s166] sm:$0xf]
      %v176 = vld [vmem:[%s166 + $0x4] sm:$0xf]
      %v177 = vld [vmem:[%s166 + $0x8] sm:$0xf]
      %v178 = vld [vmem:[%s166 + $0xc] sm:$0xf]
      %v179 = vld [vmem:[%s166 + $0x10] sm:$0xf]
      %v180 = vld [vmem:[%s166 + $0x14] sm:$0xf]
      %v181 = vld [vmem:[%s166 + $0x18] sm:$0xf]
      %v182 = vld [vmem:[%s166 + $0x1c] sm:$0xf]
      %v183 = vld [vmem:[%s166 + $0x20] sm:$0xf]
      %v184 = vld [vmem:[%s166 + $0x24] sm:$0xf]
      %v185 = vld [vmem:[%s166 + $0x28] sm:$0xf]
      %v186 = vld [vmem:[%s166 + $0x2c] sm:$0xf]
      %v187 = vld [vmem:[%s166 + $0x30] sm:$0xf]
      %v188 = vld [vmem:[%s166 + $0x34] sm:$0xf]
      %v189 = vld [vmem:[%s166 + $0x38] sm:$0xf]
      %v190 = vld [vmem:[%s166 + $0x3c] sm:$0xf]
      %v191 = vld [vmem:[%s166 + $0x40] sm:$0xf]
      %v192 = vld [vmem:[%s166 + $0x44] sm:$0xf]
      %v193 = vld [vmem:[%s166 + $0x48] sm:$0xf]
      %v194 = vld [vmem:[%s166 + $0x4c] sm:$0xf]
      %v195 = vld [vmem:[%s166 + $0x50] sm:$0xf]
      %v196 = vld [vmem:[%s166 + $0x54] sm:$0xf]
      %v197 = vld [vmem:[%s166 + $0x58] sm:$0xf]
      %v198 = vld [vmem:[%s166 + $0x5c] sm:$0xf]
      %v199 = vld [vmem:[%s166 + $0x60] sm:$0xf]
      %v200 = vld [vmem:[%s166 + $0x64] sm:$0xf]
      %v201 = vld [vmem:[%s166 + $0x68] sm:$0xf]
      %v202 = vld [vmem:[%s166 + $0x6c] sm:$0xf]
      %v203 = vld [vmem:[%s166 + $0x70] sm:$0xf]
      %v204 = vld [vmem:[%s166 + $0x74] sm:$0xf]
      %v205 = vld [vmem:[%s166 + $0x78] sm:$0xf]
      %v206 = vld [vmem:[%s166 + $0x7c] sm:$0xf]
      %v207 = vld [vmem:[%s166 + $0x80] sm:$0xf]
      %v208 = vld [vmem:[%s166 + $0x84] sm:$0xf]
      %v209 = vld [vmem:[%s166 + $0x88] sm:$0xf]
      %v210 = vld [vmem:[%s166 + $0x8c] sm:$0xf]
      %v211 = vld [vmem:[%s166 + $0x90] sm:$0xf]
      %v212 = vld [vmem:[%s166 + $0x94] sm:$0xf]
      %v213 = vld [vmem:[%s166 + $0x98] sm:$0xf]
      %v214 = vld [vmem:[%s166 + $0x9c] sm:$0xf]
      %v215 = vld [vmem:[%s166 + $0xa0] sm:$0xf]
      %v216 = vld [vmem:[%s166 + $0xa4] sm:$0xf]
      %v217 = vld [vmem:[%s166 + $0xa8] sm:$0xf]
      %v218 = vld [vmem:[%s166 + $0xac] sm:$0xf]
      %v219 = vld [vmem:[%s166 + $0xb0] sm:$0xf]
      %v220 = vld [vmem:[%s166 + $0xb4] sm:$0xf]
      %v221 = vld [vmem:[%s166 + $0xb8] sm:$0xf]
      %v222 = vld [vmem:[%s166 + $0xbc] sm:$0xf]
      %v223 = vld [vmem:[%s166 + $0xc0] sm:$0xf]
      %v224 = vld [vmem:[%s166 + $0xc4] sm:$0xf]
      %v225 = vld [vmem:[%s166 + $0xc8] sm:$0xf]
      %v226 = vld [vmem:[%s166 + $0xcc] sm:$0xf]
      %v227 = vld [vmem:[%s166 + $0xd0] sm:$0xf]
      %v228 = vld [vmem:[%s166 + $0xd4] sm:$0xf]
      %v229 = vld [vmem:[%s166 + $0xd8] sm:$0xf]
      %v230 = vld [vmem:[%s166 + $0xdc] sm:$0xf]
      %v231 = vld [vmem:[%s166 + $0xe0] sm:$0xf]
      %v232 = vld [vmem:[%s166 + $0xe4] sm:$0xf]
      %v233 = vld [vmem:[%s166 + $0xe8] sm:$0xf]
      %v234 = vld [vmem:[%s166 + $0xec] sm:$0xf]
      %v235 = vld [vmem:[%s166 + $0xf0] sm:$0xf]
      %v236 = vld [vmem:[%s166 + $0xf4] sm:$0xf]
      %v237 = vld [vmem:[%s166 + $0xf8] sm:$0xf]
      %v238 = vld [vmem:[%s166 + $0xfc] sm:$0xf]
      %v239 = vld [vmem:[%s1] sm:$0xf]
      %v240 = vld [vmem:[%s1 + $0x4] sm:$0xf]
      %v241 = vld [vmem:[%s1 + $0x8] sm:$0xf]
      %v242 = vld [vmem:[%s1 + $0xc] sm:$0xf]
      %v243 = vld [vmem:[%s1 + $0x10] sm:$0xf]
      %v244 = vld [vmem:[%s1 + $0x14] sm:$0xf]
      %v245 = vld [vmem:[%s1 + $0x18] sm:$0xf]
      %v246 = vld [vmem:[%s1 + $0x1c] sm:$0xf]
      %v247 = vld [vmem:[%s1 + $0x20] sm:$0xf]
      %v248 = vld [vmem:[%s1 + $0x24] sm:$0xf]
      %v249 = vld [vmem:[%s1 + $0x28] sm:$0xf]
      %v250 = vld [vmem:[%s1 + $0x2c] sm:$0xf]
      %v251 = vld [vmem:[%s1 + $0x30] sm:$0xf]
      %v252 = vld [vmem:[%s1 + $0x34] sm:$0xf]
      %v253 = vld [vmem:[%s1 + $0x38] sm:$0xf]
      %v254 = vld [vmem:[%s1 + $0x3c] sm:$0xf]
      %v255 = vld [vmem:[%s2] sm:$0x1]
      %v257 = vlaneseq
      %v258 = vshrl.u32 %v257, 7
      %v259 = vsub.s32 0, %v258
      %v260 = vrot.slane %v255, %v259
      %v326 = vunpack.c.l.b16 %v175
      %v327 = vunpack.c.l.b16 %v176
      %v328 = vunpack.c.l.b16 %v177
      %v329 = vunpack.c.l.b16 %v178
      %v330 = vunpack.c.l.b16 %v179
      %v331 = vunpack.c.l.b16 %v180
      %v332 = vunpack.c.l.b16 %v181
      %v333 = vunpack.c.l.b16 %v182
      %v334 = vunpack.c.l.b16 %v183
      %v335 = vunpack.c.l.b16 %v184
      %v336 = vunpack.c.l.b16 %v185
      %v337 = vunpack.c.l.b16 %v186
      %v338 = vunpack.c.l.b16 %v187
      %v339 = vunpack.c.l.b16 %v188
      %v340 = vunpack.c.l.b16 %v189
      %v341 = vunpack.c.l.b16 %v190
      %v342 = vunpack.c.l.b16 %v191
      %v343 = vunpack.c.l.b16 %v192
      %v344 = vunpack.c.l.b16 %v193
      %v345 = vunpack.c.l.b16 %v194
      %v346 = vunpack.c.l.b16 %v195
      %v347 = vunpack.c.l.b16 %v196
      %v348 = vunpack.c.l.b16 %v197
      %v349 = vunpack.c.l.b16 %v198
      %v350 = vunpack.c.l.b16 %v199
      %v351 = vunpack.c.l.b16 %v200
      %v352 = vunpack.c.l.b16 %v201
      %v353 = vunpack.c.l.b16 %v202
      %v354 = vunpack.c.l.b16 %v203
      %v355 = vunpack.c.l.b16 %v204
      %v356 = vunpack.c.l.b16 %v205
      %v357 = vunpack.c.l.b16 %v206
      %v358 = vunpack.c.l.b16 %v207
      %v359 = vunpack.c.l.b16 %v208
      %v360 = vunpack.c.l.b16 %v209
      %v361 = vunpack.c.l.b16 %v210
      %v362 = vunpack.c.l.b16 %v211
      %v363 = vunpack.c.l.b16 %v212
      %v364 = vunpack.c.l.b16 %v213
      %v365 = vunpack.c.l.b16 %v214
      %v366 = vunpack.c.l.b16 %v215
      %v367 = vunpack.c.l.b16 %v216
      %v368 = vunpack.c.l.b16 %v217
      %v369 = vunpack.c.l.b16 %v218
      %v370 = vunpack.c.l.b16 %v219
      %v371 = vunpack.c.l.b16 %v220
      %v372 = vunpack.c.l.b16 %v221
      %v373 = vunpack.c.l.b16 %v222
      %v374 = vunpack.c.l.b16 %v223
      %v375 = vunpack.c.l.b16 %v224
      %v376 = vunpack.c.l.b16 %v225
      %v377 = vunpack.c.l.b16 %v226
      %v378 = vunpack.c.l.b16 %v227
      %v379 = vunpack.c.l.b16 %v228
      %v380 = vunpack.c.l.b16 %v229
      %v381 = vunpack.c.l.b16 %v230
      %v382 = vunpack.c.l.b16 %v231
      %v383 = vunpack.c.l.b16 %v232
      %v384 = vunpack.c.l.b16 %v233
      %v385 = vunpack.c.l.b16 %v234
      %v386 = vunpack.c.l.b16 %v235
      %v387 = vunpack.c.l.b16 %v236
      %v388 = vunpack.c.l.b16 %v237
      %v389 = vunpack.c.l.b16 %v238
      %v390 = vpack.c.b16 %v327, %v326
      %v391 = vpack.c.b16 %v329, %v328
      %v392 = vpack.c.b16 %v331, %v330
      %v393 = vpack.c.b16 %v333, %v332
      %v394 = vpack.c.b16 %v335, %v334
      %v395 = vpack.c.b16 %v337, %v336
      %v396 = vpack.c.b16 %v339, %v338
      %v397 = vpack.c.b16 %v341, %v340
      %v398 = vpack.c.b16 %v343, %v342
      %v399 = vpack.c.b16 %v345, %v344
      %v400 = vpack.c.b16 %v347, %v346
      %v401 = vpack.c.b16 %v349, %v348
      %v402 = vpack.c.b16 %v351, %v350
      %v403 = vpack.c.b16 %v353, %v352
      %v404 = vpack.c.b16 %v355, %v354
      %v405 = vpack.c.b16 %v357, %v356
      %v406 = vpack.c.b16 %v359, %v358
      %v407 = vpack.c.b16 %v361, %v360
      %v408 = vpack.c.b16 %v363, %v362
      %v409 = vpack.c.b16 %v365, %v364
      %v410 = vpack.c.b16 %v367, %v366
      %v411 = vpack.c.b16 %v369, %v368
      %v412 = vpack.c.b16 %v371, %v370
      %v413 = vpack.c.b16 %v373, %v372
      %v414 = vpack.c.b16 %v375, %v374
      %v415 = vpack.c.b16 %v377, %v376
      %v416 = vpack.c.b16 %v379, %v378
      %v417 = vpack.c.b16 %v381, %v380
      %v418 = vpack.c.b16 %v383, %v382
      %v419 = vpack.c.b16 %v385, %v384
      %v420 = vpack.c.b16 %v387, %v386
      %v421 = vpack.c.b16 %v389, %v388
      %v470 = vunpack.c.l.b16 %v239
      %v471 = vunpack.c.l.b16 %v240
      %v472 = vunpack.c.l.b16 %v241
      %v473 = vunpack.c.l.b16 %v242
      %v474 = vunpack.c.l.b16 %v243
      %v475 = vunpack.c.l.b16 %v244
      %v476 = vunpack.c.l.b16 %v245
      %v477 = vunpack.c.l.b16 %v246
      %v478 = vunpack.c.l.b16 %v247
      %v479 = vunpack.c.l.b16 %v248
      %v480 = vunpack.c.l.b16 %v249
      %v481 = vunpack.c.l.b16 %v250
      %v482 = vunpack.c.l.b16 %v251
      %v483 = vunpack.c.l.b16 %v252
      %v484 = vunpack.c.l.b16 %v253
      %v485 = vunpack.c.l.b16 %v254
      %v486 = vpack.c.b16 %v471, %v470
      %v487 = vpack.c.b16 %v473, %v472
      %v488 = vpack.c.b16 %v475, %v474
      %v489 = vpack.c.b16 %v477, %v476
      %v490 = vpack.c.b16 %v479, %v478
      %v491 = vpack.c.b16 %v481, %v480
      %v492 = vpack.c.b16 %v483, %v482
      %v493 = vpack.c.b16 %v485, %v484
      %502 = vmatprep.subr.bf16.mxu0 0
      %503 = vmatpush1.bf16.msra.mxu0 %v486
      %504 = vmatprep.subr.bf16.mxu0 0
      %505 = vmatpush1.bf16.msra.mxu0 %v487
      %506 = vmatprep.subr.bf16.mxu0 0
      %507 = vmatpush1.bf16.msra.mxu0 %v488
      %508 = vmatprep.subr.bf16.mxu0 0
      %509 = vmatpush1.bf16.msra.mxu0 %v489
      %510 = vmatprep.subr.bf16.mxu0 0
      %511 = vmatpush1.bf16.msra.mxu0 %v490
      %512 = vmatprep.subr.bf16.mxu0 0
      %513 = vmatpush1.bf16.msra.mxu0 %v491
      %514 = vmatprep.subr.bf16.mxu0 0
      %515 = vmatpush1.bf16.msra.mxu0 %v492
      %516 = vmatprep.subr.bf16.mxu0 0
      %517 = vmatpush1.bf16.msra.mxu0 %v493
      %518 = vmatprep.subr.bf16.mxu0 0
      %519 = vmatpush1.bf16.msra.mxu0 0
      %520 = vmatprep.subr.bf16.mxu0 0
      %521 = vmatpush1.bf16.msra.mxu0 0
      %522 = vmatprep.subr.bf16.mxu0 0
      %523 = vmatpush1.bf16.msra.mxu0 0
      %524 = vmatprep.subr.bf16.mxu0 0
      %525 = vmatpush1.bf16.msra.mxu0 0
      %526 = vmatprep.subr.bf16.mxu0 0
      %527 = vmatpush1.bf16.msra.mxu0 0
      %528 = vmatprep.subr.bf16.mxu0 0
      %529 = vmatpush1.bf16.msra.mxu0 0
      %530 = vmatprep.subr.bf16.mxu0 0
      %531 = vmatpush1.bf16.msra.mxu0 0
      %532 = vmatprep.subr.bf16.mxu0 0
      %533 = vmatpush1.bf16.msra.mxu0 0
      %534 = vmatprep.mubr.bf16.mxu0 0
      %535 = vmatmul.mubr.bf16.gmra.mrb[0].mxu0 %v390
      %v536 = vpop.f32.mrb[0].mxu0
      %v537 = vadd.f32 %v260, %v536
      %v538 = vpop.f32.mrb[0].mxu0
      %v539 = vpop.f32.mrb[0].mxu0
      %v540 = vadd.f32 %v260, %v539
      %v541 = vpop.f32.mrb[0].mxu0
      %542 = vmatprep.mubr.bf16.mxu0 0
      %543 = vmatmul.mubr.bf16.gmra.mrb[0].mxu0 %v391
      %v544 = vpop.f32.mrb[0].mxu0
      %v545 = vadd.f32 %v260, %v544
      %v546 = vpop.f32.mrb[0].mxu0
      %v547 = vpop.f32.mrb[0].mxu0
      %v548 = vadd.f32 %v260, %v547
      %v549 = vpop.f32.mrb[0].mxu0
      %550 = vmatprep.mubr.bf16.mxu0 0
      %551 = vmatmul.mubr.bf16.gmra.mrb[0].mxu0 %v392
      %v552 = vpop.f32.mrb[0].mxu0
      %v553 = vadd.f32 %v260, %v552
      %v554 = vpop.f32.mrb[0].mxu0
      %v555 = vpop.f32.mrb[0].mxu0
      %v556 = vadd.f32 %v260, %v555
      %v557 = vpop.f32.mrb[0].mxu0
      %558 = vmatprep.mubr.bf16.mxu0 0
      %559 = vmatmul.mubr.bf16.gmra.mrb[0].mxu0 %v393
      %v560 = vpop.f32.mrb[0].mxu0
      %v561 = vadd.f32 %v260, %v560
      %v562 = vpop.f32.mrb[0].mxu0
      %v563 = vpop.f32.mrb[0].mxu0
      %v564 = vadd.f32 %v260, %v563
      %v565 = vpop.f32.mrb[0].mxu0
      %566 = vmatprep.mubr.bf16.mxu0 0
      %567 = vmatmul.mubr.bf16.gmra.mrb[0].mxu0 %v394
      %v568 = vpop.f32.mrb[0].mxu0
      %v569 = vadd.f32 %v260, %v568
      %v570 = vpop.f32.mrb[0].mxu0
      %v571 = vpop.f32.mrb[0].mxu0
      %v572 = vadd.f32 %v260, %v571
      %v573 = vpop.f32.mrb[0].mxu0
      %574 = vmatprep.mubr.bf16.mxu0 0
      %575 = vmatmul.mubr.bf16.gmra.mrb[0].mxu0 %v395
      %v576 = vpop.f32.mrb[0].mxu0
      %v577 = vadd.f32 %v260, %v576
      %v578 = vpop.f32.mrb[0].mxu0
      %v579 = vpop.f32.mrb[0].mxu0
      %v580 = vadd.f32 %v260, %v579
      %v581 = vpop.f32.mrb[0].mxu0
      %582 = vmatprep.mubr.bf16.mxu0 0
      %583 = vmatmul.mubr.bf16.gmra.mrb[0].mxu0 %v396
      %v584 = vpop.f32.mrb[0].mxu0
      %v585 = vadd.f32 %v260, %v584
      %v586 = vpop.f32.mrb[0].mxu0
      %v587 = vpop.f32.mrb[0].mxu0
      %v588 = vadd.f32 %v260, %v587
      %v589 = vpop.f32.mrb[0].mxu0
      %590 = vmatprep.mubr.bf16.mxu0 0
      %591 = vmatmul.mubr.bf16.gmra.mrb[0].mxu0 %v397
      %v592 = vpop.f32.mrb[0].mxu0
      %v593 = vadd.f32 %v260, %v592
      %v594 = vpop.f32.mrb[0].mxu0
      %v595 = vpop.f32.mrb[0].mxu0
      %v596 = vadd.f32 %v260, %v595
      %v597 = vpop.f32.mrb[0].mxu0
      %598 = vmatprep.mubr.bf16.mxu0 0
      %599 = vmatmul.mubr.bf16.gmra.mrb[0].mxu0 %v398
      %v600 = vpop.f32.mrb[0].mxu0
      %v601 = vadd.f32 %v260, %v600
      %v602 = vpop.f32.mrb[0].mxu0
      %v603 = vpop.f32.mrb[0].mxu0
      %v604 = vadd.f32 %v260, %v603
      %v605 = vpop.f32.mrb[0].mxu0
      %606 = vmatprep.mubr.bf16.mxu0 0
      %607 = vmatmul.mubr.bf16.gmra.mrb[0].mxu0 %v399
      %v608 = vpop.f32.mrb[0].mxu0
      %v609 = vadd.f32 %v260, %v608
      %v610 = vpop.f32.mrb[0].mxu0
      %v611 = vpop.f32.mrb[0].mxu0
      %v612 = vadd.f32 %v260, %v611
      %v613 = vpop.f32.mrb[0].mxu0
      %614 = vmatprep.mubr.bf16.mxu0 0
      %615 = vmatmul.mubr.bf16.gmra.mrb[0].mxu0 %v400
      %v616 = vpop.f32.mrb[0].mxu0
      %v617 = vadd.f32 %v260, %v616
      %v618 = vpop.f32.mrb[0].mxu0
      %v619 = vpop.f32.mrb[0].mxu0
      %v620 = vadd.f32 %v260, %v619
      %v621 = vpop.f32.mrb[0].mxu0
      %622 = vmatprep.mubr.bf16.mxu0 0
      %623 = vmatmul.mubr.bf16.gmra.mrb[0].mxu0 %v401
      %v624 = vpop.f32.mrb[0].mxu0
      %v625 = vadd.f32 %v260, %v624
      %v626 = vpop.f32.mrb[0].mxu0
      %v627 = vpop.f32.mrb[0].mxu0
      %v628 = vadd.f32 %v260, %v627
      %v629 = vpop.f32.mrb[0].mxu0
      %630 = vmatprep.mubr.bf16.mxu0 0
      %631 = vmatmul.mubr.bf16.gmra.mrb[0].mxu0 %v402
      %v632 = vpop.f32.mrb[0].mxu0
      %v633 = vadd.f32 %v260, %v632
      %v634 = vpop.f32.mrb[0].mxu0
      %v635 = vpop.f32.mrb[0].mxu0
      %v636 = vadd.f32 %v260, %v635
      %v637 = vpop.f32.mrb[0].mxu0
      %638 = vmatprep.mubr.bf16.mxu0 0
      %639 = vmatmul.mubr.bf16.gmra.mrb[0].mxu0 %v403
      %v640 = vpop.f32.mrb[0].mxu0
      %v641 = vadd.f32 %v260, %v640
      %v642 = vpop.f32.mrb[0].mxu0
      %v643 = vpop.f32.mrb[0].mxu0
      %v644 = vadd.f32 %v260, %v643
      %v645 = vpop.f32.mrb[0].mxu0
      %646 = vmatprep.mubr.bf16.mxu0 0
      %647 = vmatmul.mubr.bf16.gmra.mrb[0].mxu0 %v404
      %v648 = vpop.f32.mrb[0].mxu0
      %v649 = vadd.f32 %v260, %v648
      %v650 = vpop.f32.mrb[0].mxu0
      %v651 = vpop.f32.mrb[0].mxu0
      %v652 = vadd.f32 %v260, %v651
      %v653 = vpop.f32.mrb[0].mxu0
      %654 = vmatprep.mubr.bf16.mxu0 0
      %655 = vmatmul.mubr.bf16.gmra.mrb[0].mxu0 %v405
      %v656 = vpop.f32.mrb[0].mxu0
      %v657 = vadd.f32 %v260, %v656
      %v658 = vpop.f32.mrb[0].mxu0
      %v659 = vpop.f32.mrb[0].mxu0
      %v660 = vadd.f32 %v260, %v659
      %v661 = vpop.f32.mrb[0].mxu0
      %662 = vmatprep.mubr.bf16.mxu0 0
      %663 = vmatmul.mubr.bf16.gmra.mrb[0].mxu0 %v406
      %v664 = vpop.f32.mrb[0].mxu0
      %v665 = vadd.f32 %v260, %v664
      %v666 = vpop.f32.mrb[0].mxu0
      %v667 = vpop.f32.mrb[0].mxu0
      %v668 = vadd.f32 %v260, %v667
      %v669 = vpop.f32.mrb[0].mxu0
      %670 = vmatprep.mubr.bf16.mxu0 0
      %671 = vmatmul.mubr.bf16.gmra.mrb[0].mxu0 %v407
      %v672 = vpop.f32.mrb[0].mxu0
      %v673 = vadd.f32 %v260, %v672
      %v674 = vpop.f32.mrb[0].mxu0
      %v675 = vpop.f32.mrb[0].mxu0
      %v676 = vadd.f32 %v260, %v675
      %v677 = vpop.f32.mrb[0].mxu0
      %678 = vmatprep.mubr.bf16.mxu0 0
      %679 = vmatmul.mubr.bf16.gmra.mrb[0].mxu0 %v408
      %v680 = vpop.f32.mrb[0].mxu0
      %v681 = vadd.f32 %v260, %v680
      %v682 = vpop.f32.mrb[0].mxu0
      %v683 = vpop.f32.mrb[0].mxu0
      %v684 = vadd.f32 %v260, %v683
      %v685 = vpop.f32.mrb[0].mxu0
      %686 = vmatprep.mubr.bf16.mxu0 0
      %687 = vmatmul.mubr.bf16.gmra.mrb[0].mxu0 %v409
      %v688 = vpop.f32.mrb[0].mxu0
      %v689 = vadd.f32 %v260, %v688
      %v690 = vpop.f32.mrb[0].mxu0
      %v691 = vpop.f32.mrb[0].mxu0
      %v692 = vadd.f32 %v260, %v691
      %v693 = vpop.f32.mrb[0].mxu0
      %694 = vmatprep.mubr.bf16.mxu0 0
      %695 = vmatmul.mubr.bf16.gmra.mrb[0].mxu0 %v410
      %v696 = vpop.f32.mrb[0].mxu0
      %v697 = vadd.f32 %v260, %v696
      %v698 = vpop.f32.mrb[0].mxu0
      %v699 = vpop.f32.mrb[0].mxu0
      %v700 = vadd.f32 %v260, %v699
      %v701 = vpop.f32.mrb[0].mxu0
      %702 = vmatprep.mubr.bf16.mxu0 0
      %703 = vmatmul.mubr.bf16.gmra.mrb[0].mxu0 %v411
      %v704 = vpop.f32.mrb[0].mxu0
      %v705 = vadd.f32 %v260, %v704
      %v706 = vpop.f32.mrb[0].mxu0
      %v707 = vpop.f32.mrb[0].mxu0
      %v708 = vadd.f32 %v260, %v707
      %v709 = vpop.f32.mrb[0].mxu0
      %710 = vmatprep.mubr.bf16.mxu0 0
      %711 = vmatmul.mubr.bf16.gmra.mrb[0].mxu0 %v412
      %v712 = vpop.f32.mrb[0].mxu0
      %v713 = vadd.f32 %v260, %v712
      %v714 = vpop.f32.mrb[0].mxu0
      %v715 = vpop.f32.mrb[0].mxu0
      %v716 = vadd.f32 %v260, %v715
      %v717 = vpop.f32.mrb[0].mxu0
      %718 = vmatprep.mubr.bf16.mxu0 0
      %719 = vmatmul.mubr.bf16.gmra.mrb[0].mxu0 %v413
      %v720 = vpop.f32.mrb[0].mxu0
      %v721 = vadd.f32 %v260, %v720
      %v722 = vpop.f32.mrb[0].mxu0
      %v723 = vpop.f32.mrb[0].mxu0
      %v724 = vadd.f32 %v260, %v723
      %v725 = vpop.f32.mrb[0].mxu0
      %726 = vmatprep.mubr.bf16.mxu0 0
      %727 = vmatmul.mubr.bf16.gmra.mrb[0].mxu0 %v414
      %v728 = vpop.f32.mrb[0].mxu0
      %v729 = vadd.f32 %v260, %v728
      %v730 = vpop.f32.mrb[0].mxu0
      %v731 = vpop.f32.mrb[0].mxu0
      %v732 = vadd.f32 %v260, %v731
      %v733 = vpop.f32.mrb[0].mxu0
      %734 = vmatprep.mubr.bf16.mxu0 0
      %735 = vmatmul.mubr.bf16.gmra.mrb[0].mxu0 %v415
      %v736 = vpop.f32.mrb[0].mxu0
      %v737 = vadd.f32 %v260, %v736
      %v738 = vpop.f32.mrb[0].mxu0
      %v739 = vpop.f32.mrb[0].mxu0
      %v740 = vadd.f32 %v260, %v739
      %v741 = vpop.f32.mrb[0].mxu0
      %742 = vmatprep.mubr.bf16.mxu0 0
      %743 = vmatmul.mubr.bf16.gmra.mrb[0].mxu0 %v416
      %v744 = vpop.f32.mrb[0].mxu0
      %v745 = vadd.f32 %v260, %v744
      %v746 = vpop.f32.mrb[0].mxu0
      %v747 = vpop.f32.mrb[0].mxu0
      %v748 = vadd.f32 %v260, %v747
      %v749 = vpop.f32.mrb[0].mxu0
      %750 = vmatprep.mubr.bf16.mxu0 0
      %751 = vmatmul.mubr.bf16.gmra.mrb[0].mxu0 %v417
      %v752 = vpop.f32.mrb[0].mxu0
      %v753 = vadd.f32 %v260, %v752
      %v754 = vpop.f32.mrb[0].mxu0
      %v755 = vpop.f32.mrb[0].mxu0
      %v756 = vadd.f32 %v260, %v755
      %v757 = vpop.f32.mrb[0].mxu0
      %758 = vmatprep.mubr.bf16.mxu0 0
      %759 = vmatmul.mubr.bf16.gmra.mrb[0].mxu0 %v418
      %v760 = vpop.f32.mrb[0].mxu0
      %v761 = vadd.f32 %v260, %v760
      %v762 = vpop.f32.mrb[0].mxu0
      %v763 = vpop.f32.mrb[0].mxu0
      %v764 = vadd.f32 %v260, %v763
      %v765 = vpop.f32.mrb[0].mxu0
      %766 = vmatprep.mubr.bf16.mxu0 0
      %767 = vmatmul.mubr.bf16.gmra.mrb[0].mxu0 %v419
      %v768 = vpop.f32.mrb[0].mxu0
      %v769 = vadd.f32 %v260, %v768
      %v770 = vpop.f32.mrb[0].mxu0
      %v771 = vpop.f32.mrb[0].mxu0
      %v772 = vadd.f32 %v260, %v771
      %v773 = vpop.f32.mrb[0].mxu0
      %774 = vmatprep.mubr.bf16.mxu0 0
      %775 = vmatmul.mubr.bf16.gmra.mrb[0].mxu0 %v420
      %v776 = vpop.f32.mrb[0].mxu0
      %v777 = vadd.f32 %v260, %v776
      %v778 = vpop.f32.mrb[0].mxu0
      %v779 = vpop.f32.mrb[0].mxu0
      %v780 = vadd.f32 %v260, %v779
      %v781 = vpop.f32.mrb[0].mxu0
      %782 = vmatprep.mubr.bf16.mxu0 0
      %783 = vmatmul.mubr.bf16.gmra.mrb[0].mxu0 %v421
      %v784 = vpop.f32.mrb[0].mxu0
      %v785 = vadd.f32 %v260, %v784
      %v786 = vpop.f32.mrb[0].mxu0
      %v787 = vpop.f32.mrb[0].mxu0
      %v788 = vadd.f32 %v260, %v787
      %v789 = vpop.f32.mrb[0].mxu0
      %790 = vdwg.mxu0
      %vm791 = vcmp.gt.f32.partialorder %v537, 0.0
      %vm792 = vcmp.gt.f32.partialorder %v540, 0.0
      %vm793 = vcmp.gt.f32.partialorder %v545, 0.0
      %vm794 = vcmp.gt.f32.partialorder %v548, 0.0
      %vm795 = vcmp.gt.f32.partialorder %v553, 0.0
      %vm796 = vcmp.gt.f32.partialorder %v556, 0.0
      %vm797 = vcmp.gt.f32.partialorder %v561, 0.0
      %vm798 = vcmp.gt.f32.partialorder %v564, 0.0
      %vm799 = vcmp.gt.f32.partialorder %v569, 0.0
      %vm800 = vcmp.gt.f32.partialorder %v572, 0.0
      %vm801 = vcmp.gt.f32.partialorder %v577, 0.0
      %vm802 = vcmp.gt.f32.partialorder %v580, 0.0
      %vm803 = vcmp.gt.f32.partialorder %v585, 0.0
      %vm804 = vcmp.gt.f32.partialorder %v588, 0.0
      %vm805 = vcmp.gt.f32.partialorder %v593, 0.0
      %vm806 = vcmp.gt.f32.partialorder %v596, 0.0
      %vm807 = vcmp.gt.f32.partialorder %v601, 0.0
      %vm808 = vcmp.gt.f32.partialorder %v604, 0.0
      %vm809 = vcmp.gt.f32.partialorder %v609, 0.0
      %vm810 = vcmp.gt.f32.partialorder %v612, 0.0
      %vm811 = vcmp.gt.f32.partialorder %v617, 0.0
      %vm812 = vcmp.gt.f32.partialorder %v620, 0.0
      %vm813 = vcmp.gt.f32.partialorder %v625, 0.0
      %vm814 = vcmp.gt.f32.partialorder %v628, 0.0
      %vm815 = vcmp.gt.f32.partialorder %v633, 0.0
      %vm816 = vcmp.gt.f32.partialorder %v636, 0.0
      %vm817 = vcmp.gt.f32.partialorder %v641, 0.0
      %vm818 = vcmp.gt.f32.partialorder %v644, 0.0
      %vm819 = vcmp.gt.f32.partialorder %v649, 0.0
      %vm820 = vcmp.gt.f32.partialorder %v652, 0.0
      %vm821 = vcmp.gt.f32.partialorder %v657, 0.0
      %vm822 = vcmp.gt.f32.partialorder %v660, 0.0
      %vm823 = vcmp.gt.f32.partialorder %v665, 0.0
      %vm824 = vcmp.gt.f32.partialorder %v668, 0.0
      %vm825 = vcmp.gt.f32.partialorder %v673, 0.0
      %vm826 = vcmp.gt.f32.partialorder %v676, 0.0
      %vm827 = vcmp.gt.f32.partialorder %v681, 0.0
      %vm828 = vcmp.gt.f32.partialorder %v684, 0.0
      %vm829 = vcmp.gt.f32.partialorder %v689, 0.0
      %vm830 = vcmp.gt.f32.partialorder %v692, 0.0
      %vm831 = vcmp.gt.f32.partialorder %v697, 0.0
      %vm832 = vcmp.gt.f32.partialorder %v700, 0.0
      %vm833 = vcmp.gt.f32.partialorder %v705, 0.0
      %vm834 = vcmp.gt.f32.partialorder %v708, 0.0
      %vm835 = vcmp.gt.f32.partialorder %v713, 0.0
      %vm836 = vcmp.gt.f32.partialorder %v716, 0.0
      %vm837 = vcmp.gt.f32.partialorder %v721, 0.0
      %vm838 = vcmp.gt.f32.partialorder %v724, 0.0
      %vm839 = vcmp.gt.f32.partialorder %v729, 0.0
      %vm840 = vcmp.gt.f32.partialorder %v732, 0.0
      %vm841 = vcmp.gt.f32.partialorder %v737, 0.0
      %vm842 = vcmp.gt.f32.partialorder %v740, 0.0
      %vm843 = vcmp.gt.f32.partialorder %v745, 0.0
      %vm844 = vcmp.gt.f32.partialorder %v748, 0.0
      %vm845 = vcmp.gt.f32.partialorder %v753, 0.0
      %vm846 = vcmp.gt.f32.partialorder %v756, 0.0
      %vm847 = vcmp.gt.f32.partialorder %v761, 0.0
      %vm848 = vcmp.gt.f32.partialorder %v764, 0.0
      %vm849 = vcmp.gt.f32.partialorder %v769, 0.0
      %vm850 = vcmp.gt.f32.partialorder %v772, 0.0
      %vm851 = vcmp.gt.f32.partialorder %v777, 0.0
      %vm852 = vcmp.gt.f32.partialorder %v780, 0.0
      %vm853 = vcmp.gt.f32.partialorder %v785, 0.0
      %vm854 = vcmp.gt.f32.partialorder %v788, 0.0
      %v855 = vmul.f32 %v537, 0.2
      %v856 = vmul.f32 %v540, 0.2
      %v857 = vmul.f32 %v545, 0.2
      %v858 = vmul.f32 %v548, 0.2
      %v859 = vmul.f32 %v553, 0.2
      %v860 = vmul.f32 %v556, 0.2
      %v861 = vmul.f32 %v561, 0.2
      %v862 = vmul.f32 %v564, 0.2
      %v863 = vmul.f32 %v569, 0.2
      %v864 = vmul.f32 %v572, 0.2
      %v865 = vmul.f32 %v577, 0.2
      %v866 = vmul.f32 %v580, 0.2
      %v867 = vmul.f32 %v585, 0.2
      %v868 = vmul.f32 %v588, 0.2
      %v869 = vmul.f32 %v593, 0.2
      %v870 = vmul.f32 %v596, 0.2
      %v871 = vmul.f32 %v601, 0.2
      %v872 = vmul.f32 %v604, 0.2
      %v873 = vmul.f32 %v609, 0.2
      %v874 = vmul.f32 %v612, 0.2
      %v875 = vmul.f32 %v617, 0.2
      %v876 = vmul.f32 %v620, 0.2
      %v877 = vmul.f32 %v625, 0.2
      %v878 = vmul.f32 %v628, 0.2
      %v879 = vmul.f32 %v633, 0.2
      %v880 = vmul.f32 %v636, 0.2
      %v881 = vmul.f32 %v641, 0.2
      %v882 = vmul.f32 %v644, 0.2
      %v883 = vmul.f32 %v649, 0.2
      %v884 = vmul.f32 %v652, 0.2
      %v885 = vmul.f32 %v657, 0.2
      %v886 = vmul.f32 %v660, 0.2
      %v887 = vmul.f32 %v665, 0.2
      %v888 = vmul.f32 %v668, 0.2
      %v889 = vmul.f32 %v673, 0.2
      %v890 = vmul.f32 %v676, 0.2
      %v891 = vmul.f32 %v681, 0.2
      %v892 = vmul.f32 %v684, 0.2
      %v893 = vmul.f32 %v689, 0.2
      %v894 = vmul.f32 %v692, 0.2
      %v895 = vmul.f32 %v697, 0.2
      %v896 = vmul.f32 %v700, 0.2
      %v897 = vmul.f32 %v705, 0.2
      %v898 = vmul.f32 %v708, 0.2
      %v899 = vmul.f32 %v713, 0.2
      %v900 = vmul.f32 %v716, 0.2
      %v901 = vmul.f32 %v721, 0.2
      %v902 = vmul.f32 %v724, 0.2
      %v903 = vmul.f32 %v729, 0.2
      %v904 = vmul.f32 %v732, 0.2
      %v905 = vmul.f32 %v737, 0.2
      %v906 = vmul.f32 %v740, 0.2
      %v907 = vmul.f32 %v745, 0.2
      %v908 = vmul.f32 %v748, 0.2
      %v909 = vmul.f32 %v753, 0.2
      %v910 = vmul.f32 %v756, 0.2
      %v911 = vmul.f32 %v761, 0.2
      %v912 = vmul.f32 %v764, 0.2
      %v913 = vmul.f32 %v769, 0.2
      %v914 = vmul.f32 %v772, 0.2
      %v915 = vmul.f32 %v777, 0.2
      %v916 = vmul.f32 %v780, 0.2
      %v917 = vmul.f32 %v785, 0.2
      %v918 = vmul.f32 %v788, 0.2
      %v919 = vsel %vm791, %v537, %v855
      %v920 = vsel %vm792, %v540, %v856
      %v921 = vsel %vm793, %v545, %v857
      %v922 = vsel %vm794, %v548, %v858
      %v923 = vsel %vm795, %v553, %v859
      %v924 = vsel %vm796, %v556, %v860
      %v925 = vsel %vm797, %v561, %v861
      %v926 = vsel %vm798, %v564, %v862
      %v927 = vsel %vm799, %v569, %v863
      %v928 = vsel %vm800, %v572, %v864
      %v929 = vsel %vm801, %v577, %v865
      %v930 = vsel %vm802, %v580, %v866
      %v931 = vsel %vm803, %v585, %v867
      %v932 = vsel %vm804, %v588, %v868
      %v933 = vsel %vm805, %v593, %v869
      %v934 = vsel %vm806, %v596, %v870
      %v935 = vsel %vm807, %v601, %v871
      %v936 = vsel %vm808, %v604, %v872
      %v937 = vsel %vm809, %v609, %v873
      %v938 = vsel %vm810, %v612, %v874
      %v939 = vsel %vm811, %v617, %v875
      %v940 = vsel %vm812, %v620, %v876
      %v941 = vsel %vm813, %v625, %v877
      %v942 = vsel %vm814, %v628, %v878
      %v943 = vsel %vm815, %v633, %v879
      %v944 = vsel %vm816, %v636, %v880
      %v945 = vsel %vm817, %v641, %v881
      %v946 = vsel %vm818, %v644, %v882
      %v947 = vsel %vm819, %v649, %v883
      %v948 = vsel %vm820, %v652, %v884
      %v949 = vsel %vm821, %v657, %v885
      %v950 = vsel %vm822, %v660, %v886
      %v951 = vsel %vm823, %v665, %v887
      %v952 = vsel %vm824, %v668, %v888
      %v953 = vsel %vm825, %v673, %v889
      %v954 = vsel %vm826, %v676, %v890
      %v955 = vsel %vm827, %v681, %v891
      %v956 = vsel %vm828, %v684, %v892
      %v957 = vsel %vm829, %v689, %v893
      %v958 = vsel %vm830, %v692, %v894
      %v959 = vsel %vm831, %v697, %v895
      %v960 = vsel %vm832, %v700, %v896
      %v961 = vsel %vm833, %v705, %v897
      %v962 = vsel %vm834, %v708, %v898
      %v963 = vsel %vm835, %v713, %v899
      %v964 = vsel %vm836, %v716, %v900
      %v965 = vsel %vm837, %v721, %v901
      %v966 = vsel %vm838, %v724, %v902
      %v967 = vsel %vm839, %v729, %v903
      %v968 = vsel %vm840, %v732, %v904
      %v969 = vsel %vm841, %v737, %v905
      %v970 = vsel %vm842, %v740, %v906
      %v971 = vsel %vm843, %v745, %v907
      %v972 = vsel %vm844, %v748, %v908
      %v973 = vsel %vm845, %v753, %v909
      %v974 = vsel %vm846, %v756, %v910
      %v975 = vsel %vm847, %v761, %v911
      %v976 = vsel %vm848, %v764, %v912
      %v977 = vsel %vm849, %v769, %v913
      %v978 = vsel %vm850, %v772, %v914
      %v979 = vsel %vm851, %v777, %v915
      %v980 = vsel %vm852, %v780, %v916
      %v981 = vsel %vm853, %v785, %v917
      %v982 = vsel %vm854, %v788, %v918
      %v983 = vpack.c.bf16 %v920, %v919
      %v984 = vpack.c.bf16 %v922, %v921
      %v985 = vpack.c.bf16 %v924, %v923
      %v986 = vpack.c.bf16 %v926, %v925
      %v987 = vpack.c.bf16 %v928, %v927
      %v988 = vpack.c.bf16 %v930, %v929
      %v989 = vpack.c.bf16 %v932, %v931
      %v990 = vpack.c.bf16 %v934, %v933
      %v991 = vpack.c.bf16 %v936, %v935
      %v992 = vpack.c.bf16 %v938, %v937
      %v993 = vpack.c.bf16 %v940, %v939
      %v994 = vpack.c.bf16 %v942, %v941
      %v995 = vpack.c.bf16 %v944, %v943
      %v996 = vpack.c.bf16 %v946, %v945
      %v997 = vpack.c.bf16 %v948, %v947
      %v998 = vpack.c.bf16 %v950, %v949
      %v999 = vpack.c.bf16 %v952, %v951
      %v1000 = vpack.c.bf16 %v954, %v953
      %v1001 = vpack.c.bf16 %v956, %v955
      %v1002 = vpack.c.bf16 %v958, %v957
      %v1003 = vpack.c.bf16 %v960, %v959
      %v1004 = vpack.c.bf16 %v962, %v961
      %v1005 = vpack.c.bf16 %v964, %v963
      %v1006 = vpack.c.bf16 %v966, %v965
      %v1007 = vpack.c.bf16 %v968, %v967
      %v1008 = vpack.c.bf16 %v970, %v969
      %v1009 = vpack.c.bf16 %v972, %v971
      %v1010 = vpack.c.bf16 %v974, %v973
      %v1011 = vpack.c.bf16 %v976, %v975
      %v1012 = vpack.c.bf16 %v978, %v977
      %v1013 = vpack.c.bf16 %v980, %v979
      %v1014 = vpack.c.bf16 %v982, %v981
      %v1047 = vunpack.c.l.b16 %v983
      %v1048 = vunpack.c.h.b16 %v983
      %v1049 = vunpack.c.l.b16 %v984
      %v1050 = vunpack.c.h.b16 %v984
      %v1051 = vunpack.c.l.b16 %v985
      %v1052 = vunpack.c.h.b16 %v985
      %v1053 = vunpack.c.l.b16 %v986
      %v1054 = vunpack.c.h.b16 %v986
      %v1055 = vunpack.c.l.b16 %v987
      %v1056 = vunpack.c.h.b16 %v987
      %v1057 = vunpack.c.l.b16 %v988
      %v1058 = vunpack.c.h.b16 %v988
      %v1059 = vunpack.c.l.b16 %v989
      %v1060 = vunpack.c.h.b16 %v989
      %v1061 = vunpack.c.l.b16 %v990
      %v1062 = vunpack.c.h.b16 %v990
      %v1063 = vunpack.c.l.b16 %v991
      %v1064 = vunpack.c.h.b16 %v991
      %v1065 = vunpack.c.l.b16 %v992
      %v1066 = vunpack.c.h.b16 %v992
      %v1067 = vunpack.c.l.b16 %v993
      %v1068 = vunpack.c.h.b16 %v993
      %v1069 = vunpack.c.l.b16 %v994
      %v1070 = vunpack.c.h.b16 %v994
      %v1071 = vunpack.c.l.b16 %v995
      %v1072 = vunpack.c.h.b16 %v995
      %v1073 = vunpack.c.l.b16 %v996
      %v1074 = vunpack.c.h.b16 %v996
      %v1075 = vunpack.c.l.b16 %v997
      %v1076 = vunpack.c.h.b16 %v997
      %v1077 = vunpack.c.l.b16 %v998
      %v1078 = vunpack.c.h.b16 %v998
      %v1079 = vunpack.c.l.b16 %v999
      %v1080 = vunpack.c.h.b16 %v999
      %v1081 = vunpack.c.l.b16 %v1000
      %v1082 = vunpack.c.h.b16 %v1000
      %v1083 = vunpack.c.l.b16 %v1001
      %v1084 = vunpack.c.h.b16 %v1001
      %v1085 = vunpack.c.l.b16 %v1002
      %v1086 = vunpack.c.h.b16 %v1002
      %v1087 = vunpack.c.l.b16 %v1003
      %v1088 = vunpack.c.h.b16 %v1003
      %v1089 = vunpack.c.l.b16 %v1004
      %v1090 = vunpack.c.h.b16 %v1004
      %v1091 = vunpack.c.l.b16 %v1005
      %v1092 = vunpack.c.h.b16 %v1005
      %v1093 = vunpack.c.l.b16 %v1006
      %v1094 = vunpack.c.h.b16 %v1006
      %v1095 = vunpack.c.l.b16 %v1007
      %v1096 = vunpack.c.h.b16 %v1007
      %v1097 = vunpack.c.l.b16 %v1008
      %v1098 = vunpack.c.h.b16 %v1008
      %v1099 = vunpack.c.l.b16 %v1009
      %v1100 = vunpack.c.h.b16 %v1009
      %v1101 = vunpack.c.l.b16 %v1010
      %v1102 = vunpack.c.h.b16 %v1010
      %v1103 = vunpack.c.l.b16 %v1011
      %v1104 = vunpack.c.h.b16 %v1011
      %v1105 = vunpack.c.l.b16 %v1012
      %v1106 = vunpack.c.h.b16 %v1012
      %v1107 = vunpack.c.l.b16 %v1013
      %v1108 = vunpack.c.h.b16 %v1013
      %v1109 = vunpack.c.l.b16 %v1014
      %v1110 = vunpack.c.h.b16 %v1014
      %v1111 = vpack.c.b16 %v1047, %v1047
      %v1112 = vpack.c.b16 %v1048, %v1048
      %v1113 = vpack.c.b16 %v1049, %v1049
      %v1114 = vpack.c.b16 %v1050, %v1050
      %v1115 = vpack.c.b16 %v1051, %v1051
      %v1116 = vpack.c.b16 %v1052, %v1052
      %v1117 = vpack.c.b16 %v1053, %v1053
      %v1118 = vpack.c.b16 %v1054, %v1054
      %v1119 = vpack.c.b16 %v1055, %v1055
      %v1120 = vpack.c.b16 %v1056, %v1056
      %v1121 = vpack.c.b16 %v1057, %v1057
      %v1122 = vpack.c.b16 %v1058, %v1058
      %v1123 = vpack.c.b16 %v1059, %v1059
      %v1124 = vpack.c.b16 %v1060, %v1060
      %v1125 = vpack.c.b16 %v1061, %v1061
      %v1126 = vpack.c.b16 %v1062, %v1062
      %v1127 = vpack.c.b16 %v1063, %v1063
      %v1128 = vpack.c.b16 %v1064, %v1064
      %v1129 = vpack.c.b16 %v1065, %v1065
      %v1130 = vpack.c.b16 %v1066, %v1066
      %v1131 = vpack.c.b16 %v1067, %v1067
      %v1132 = vpack.c.b16 %v1068, %v1068
      %v1133 = vpack.c.b16 %v1069, %v1069
      %v1134 = vpack.c.b16 %v1070, %v1070
      %v1135 = vpack.c.b16 %v1071, %v1071
      %v1136 = vpack.c.b16 %v1072, %v1072
      %v1137 = vpack.c.b16 %v1073, %v1073
      %v1138 = vpack.c.b16 %v1074, %v1074
      %v1139 = vpack.c.b16 %v1075, %v1075
      %v1140 = vpack.c.b16 %v1076, %v1076
      %v1141 = vpack.c.b16 %v1077, %v1077
      %v1142 = vpack.c.b16 %v1078, %v1078
      %v1143 = vpack.c.b16 %v1079, %v1079
      %v1144 = vpack.c.b16 %v1080, %v1080
      %v1145 = vpack.c.b16 %v1081, %v1081
      %v1146 = vpack.c.b16 %v1082, %v1082
      %v1147 = vpack.c.b16 %v1083, %v1083
      %v1148 = vpack.c.b16 %v1084, %v1084
      %v1149 = vpack.c.b16 %v1085, %v1085
      %v1150 = vpack.c.b16 %v1086, %v1086
      %v1151 = vpack.c.b16 %v1087, %v1087
      %v1152 = vpack.c.b16 %v1088, %v1088
      %v1153 = vpack.c.b16 %v1089, %v1089
      %v1154 = vpack.c.b16 %v1090, %v1090
      %v1155 = vpack.c.b16 %v1091, %v1091
      %v1156 = vpack.c.b16 %v1092, %v1092
      %v1157 = vpack.c.b16 %v1093, %v1093
      %v1158 = vpack.c.b16 %v1094, %v1094
      %v1159 = vpack.c.b16 %v1095, %v1095
      %v1160 = vpack.c.b16 %v1096, %v1096
      %v1161 = vpack.c.b16 %v1097, %v1097
      %v1162 = vpack.c.b16 %v1098, %v1098
      %v1163 = vpack.c.b16 %v1099, %v1099
      %v1164 = vpack.c.b16 %v1100, %v1100
      %v1165 = vpack.c.b16 %v1101, %v1101
      %v1166 = vpack.c.b16 %v1102, %v1102
      %v1167 = vpack.c.b16 %v1103, %v1103
      %v1168 = vpack.c.b16 %v1104, %v1104
      %v1169 = vpack.c.b16 %v1105, %v1105
      %v1170 = vpack.c.b16 %v1106, %v1106
      %v1171 = vpack.c.b16 %v1107, %v1107
      %v1172 = vpack.c.b16 %v1108, %v1108
      %v1173 = vpack.c.b16 %v1109, %v1109
      %v1174 = vpack.c.b16 %v1110, %v1110
      %1239 = vst [vmem:[%s172] sm:$0xf] %v1111
      %1240 = vst [vmem:[%s172 + $0x4] sm:$0xf] %v1112
      %1241 = vst [vmem:[%s172 + $0x8] sm:$0xf] %v1113
      %1242 = vst [vmem:[%s172 + $0xc] sm:$0xf] %v1114
      %1243 = vst [vmem:[%s172 + $0x10] sm:$0xf] %v1115
      %1244 = vst [vmem:[%s172 + $0x14] sm:$0xf] %v1116
      %1245 = vst [vmem:[%s172 + $0x18] sm:$0xf] %v1117
      %1246 = vst [vmem:[%s172 + $0x1c] sm:$0xf] %v1118
      %1247 = vst [vmem:[%s172 + $0x20] sm:$0xf] %v1119
      %1248 = vst [vmem:[%s172 + $0x24] sm:$0xf] %v1120
      %1249 = vst [vmem:[%s172 + $0x28] sm:$0xf] %v1121
      %1250 = vst [vmem:[%s172 + $0x2c] sm:$0xf] %v1122
      %1251 = vst [vmem:[%s172 + $0x30] sm:$0xf] %v1123
      %1252 = vst [vmem:[%s172 + $0x34] sm:$0xf] %v1124
      %1253 = vst [vmem:[%s172 + $0x38] sm:$0xf] %v1125
      %1254 = vst [vmem:[%s172 + $0x3c] sm:$0xf] %v1126
      %1255 = vst [vmem:[%s172 + $0x40] sm:$0xf] %v1127
      %1256 = vst [vmem:[%s172 + $0x44] sm:$0xf] %v1128
      %1257 = vst [vmem:[%s172 + $0x48] sm:$0xf] %v1129
      %1258 = vst [vmem:[%s172 + $0x4c] sm:$0xf] %v1130
      %1259 = vst [vmem:[%s172 + $0x50] sm:$0xf] %v1131
      %1260 = vst [vmem:[%s172 + $0x54] sm:$0xf] %v1132
      %1261 = vst [vmem:[%s172 + $0x58] sm:$0xf] %v1133
      %1262 = vst [vmem:[%s172 + $0x5c] sm:$0xf] %v1134
      %1263 = vst [vmem:[%s172 + $0x60] sm:$0xf] %v1135
      %1264 = vst [vmem:[%s172 + $0x64] sm:$0xf] %v1136
      %1265 = vst [vmem:[%s172 + $0x68] sm:$0xf] %v1137
      %1266 = vst [vmem:[%s172 + $0x6c] sm:$0xf] %v1138
      %1267 = vst [vmem:[%s172 + $0x70] sm:$0xf] %v1139
      %1268 = vst [vmem:[%s172 + $0x74] sm:$0xf] %v1140
      %1269 = vst [vmem:[%s172 + $0x78] sm:$0xf] %v1141
      %1270 = vst [vmem:[%s172 + $0x7c] sm:$0xf] %v1142
      %1271 = vst [vmem:[%s172 + $0x80] sm:$0xf] %v1143
      %1272 = vst [vmem:[%s172 + $0x84] sm:$0xf] %v1144
      %1273 = vst [vmem:[%s172 + $0x88] sm:$0xf] %v1145
      %1274 = vst [vmem:[%s172 + $0x8c] sm:$0xf] %v1146
      %1275 = vst [vmem:[%s172 + $0x90] sm:$0xf] %v1147
      %1276 = vst [vmem:[%s172 + $0x94] sm:$0xf] %v1148
      %1277 = vst [vmem:[%s172 + $0x98] sm:$0xf] %v1149
      %1278 = vst [vmem:[%s172 + $0x9c] sm:$0xf] %v1150
      %1279 = vst [vmem:[%s172 + $0xa0] sm:$0xf] %v1151
      %1280 = vst [vmem:[%s172 + $0xa4] sm:$0xf] %v1152
      %1281 = vst [vmem:[%s172 + $0xa8] sm:$0xf] %v1153
      %1282 = vst [vmem:[%s172 + $0xac] sm:$0xf] %v1154
      %1283 = vst [vmem:[%s172 + $0xb0] sm:$0xf] %v1155
      %1284 = vst [vmem:[%s172 + $0xb4] sm:$0xf] %v1156
      %1285 = vst [vmem:[%s172 + $0xb8] sm:$0xf] %v1157
      %1286 = vst [vmem:[%s172 + $0xbc] sm:$0xf] %v1158
      %1287 = vst [vmem:[%s172 + $0xc0] sm:$0xf] %v1159
      %1288 = vst [vmem:[%s172 + $0xc4] sm:$0xf] %v1160
      %1289 = vst [vmem:[%s172 + $0xc8] sm:$0xf] %v1161
      %1290 = vst [vmem:[%s172 + $0xcc] sm:$0xf] %v1162
      %1291 = vst [vmem:[%s172 + $0xd0] sm:$0xf] %v1163
      %1292 = vst [vmem:[%s172 + $0xd4] sm:$0xf] %v1164
      %1293 = vst [vmem:[%s172 + $0xd8] sm:$0xf] %v1165
      %1294 = vst [vmem:[%s172 + $0xdc] sm:$0xf] %v1166
      %1295 = vst [vmem:[%s172 + $0xe0] sm:$0xf] %v1167
      %1296 = vst [vmem:[%s172 + $0xe4] sm:$0xf] %v1168
      %1297 = vst [vmem:[%s172 + $0xe8] sm:$0xf] %v1169
      %1298 = vst [vmem:[%s172 + $0xec] sm:$0xf] %v1170
      %1299 = vst [vmem:[%s172 + $0xf0] sm:$0xf] %v1171
      %1300 = vst [vmem:[%s172 + $0xf4] sm:$0xf] %v1172
      %1301 = vst [vmem:[%s172 + $0xf8] sm:$0xf] %v1173
      %1302 = vst [vmem:[%s172 + $0xfc] sm:$0xf] %v1174
      %s1303 = smul.u32 64, %s14
      %p1304 = scmp.lt.s32.totalorder %s1303, 255
      %s1305 = scalar_select %p1304, %s1303, 255
      %s1306 = smul.addr %s1305, 4
      %s1307 = scalar_lea.vmem %s3, %s1306
      // Predicated region
      $region33: #{classif_forward.4} parent=31 // pred_check
        %p1308 = pneg %p100
      $region34: #{classif_forward.4} parent=31 // pred_check_branch
        %1310 = sbr.rel (%p1308) target = $region36
      $region35: #{classif_forward.4} parent=31 // pred_region
        %s1311 = smul.u32 64, %s14
      $region36: #{classif_forward.4} parent=31 // pred_fallthru
        _
    $region32: #{classif_forward.4} parent=5 // pred_fallthru
      _
    %p1312 = scmp.le.s32.totalorder 2, %s9
    // Predicated region
    $region37: #{classif_forward.4} parent=5 // pred_check
      %p1313 = pneg %p1312
    $region38: #{classif_forward.4} parent=5 // pred_check_branch
      %1315 = sbr.rel (%p1313) target = $region40
    $region39: #{classif_forward.4} parent=5 // pred_region
      %s1316 = ssub.s32 %s9, 2
      // Predicated region
      $region41: #{classif_forward.4} parent=39 // pred_check
        %p1317 = pneg %p106
      $region42: #{classif_forward.4} parent=39 // pred_check_branch
        %1319 = sbr.rel (%p1317) target = $region44
      $region43: #{classif_forward.4} parent=39 // pred_region
        %s1320 = smul.u32 64, %s15
        %p1321 = scmp.lt.s32.totalorder %s1320, 255
        %s1322 = scalar_select %p1321, %s1320, 255
        %s1323 = smul.addr %s1322, 4
        %s1324 = scalar_lea.vmem %s3, %s1323
      $region44: #{classif_forward.4} parent=39 // pred_fallthru
        _
    $region40: #{classif_forward.4} parent=5 // pred_fallthru
      _
  $region6: #{classif_forward.4} parent=0 // loop_footer
    %s13 = sadd.s32 1, %s9
  $region7: #{classif_forward.4} parent=0 // loop_footer_branch
    %8 = sbr.rel target = $region3
  $region8: #{classif_forward.4} parent=0 // loop_exit
    _

// kernel: classif_forward.5
$region0: #{classif_forward.5}
  #allocation0 [shape = 'u32[]', space=smem, size = 0x4, offset = 0x4, fixed_abs, tag = 'smem constant byte address 0x4 - core index']
  #allocation1 [shape = 'u32[144,128]{1,0:T(1,128)}', space=vmem, size = 0x12000, scoped, tag = 'internal scratch']
  %s0 = inlined_call_operand.vmem [shape: bf16[400,1024], index: 0, kind: input, shape index: {}]
  %s1 = inlined_call_operand.vmem [shape: bf16[1024,128], index: 1, kind: input, shape index: {}]
  %s2 = inlined_call_operand.vmem [shape: f32[1,128], index: 2, kind: input, shape index: {}]
  %s3 = inlined_call_operand.vmem [shape: bf16[400,128], index: 3, kind: output, shape index: {}]
  %s4 = sld [smem:[#allocation0]]
  $region22: #{classif_forward.5} parent=0
    _
  %s6 = ssub.s32 1, %s4
  %s7 = scalar_select 0, %s6, %s4
  // Predicated region
  $region2: #{classif_forward.5} parent=0 // pred_check
    _
  $region3: #{classif_forward.5} parent=0 // pred_check_branch
    %9 = sbr.rel (0) target = $region5
  $region4: #{classif_forward.5} parent=0 // pred_region
    _
  $region5: #{classif_forward.5} parent=0 // pred_fallthru
    _
  // Predicated region
  $region6: #{classif_forward.5} parent=0 // pred_check
    _
  $region7: #{classif_forward.5} parent=0 // pred_check_branch
    %11 = sbr.rel (0) target = $region9
  $region8: #{classif_forward.5} parent=0 // pred_region
    _
  $region9: #{classif_forward.5} parent=0 // pred_fallthru
    _
  // Predicated region
  $region10: #{classif_forward.5} parent=0 // pred_check
    _
  $region11: #{classif_forward.5} parent=0 // pred_check_branch
    %13 = sbr.rel (0) target = $region13
  $region12: #{classif_forward.5} parent=0 // pred_region
    _
  $region13: #{classif_forward.5} parent=0 // pred_fallthru
    _
  %v15 = vld [vmem:[%s0] sm:$0xff]
  %v16 = vld [vmem:[%s0 + $0x8] sm:$0xff]
  %v17 = vld [vmem:[%s0 + $0x10] sm:$0xff]
  %v18 = vld [vmem:[%s0 + $0x18] sm:$0xff]
  %v19 = vld [vmem:[%s0 + $0x20] sm:$0xff]
  %v20 = vld [vmem:[%s0 + $0x28] sm:$0xff]
  %v21 = vld [vmem:[%s0 + $0x30] sm:$0xff]
  %v22 = vld [vmem:[%s0 + $0x38] sm:$0xff]
  %v23 = vld [vmem:[%s0 + $0x40] sm:$0xff]
  %v24 = vld [vmem:[%s0 + $0x48] sm:$0xff]
  %v25 = vld [vmem:[%s0 + $0x50] sm:$0xff]
  %v26 = vld [vmem:[%s0 + $0x58] sm:$0xff]
  %v27 = vld [vmem:[%s0 + $0x60] sm:$0xff]
  %v28 = vld [vmem:[%s0 + $0x68] sm:$0xff]
  %v29 = vld [vmem:[%s0 + $0x70] sm:$0xff]
  %v30 = vld [vmem:[%s0 + $0x78] sm:$0xff]
  %v31 = vld [vmem:[%s0 + $0x80] sm:$0xff]
  %v32 = vld [vmem:[%s0 + $0x88] sm:$0xff]
  %v33 = vld [vmem:[%s0 + $0x90] sm:$0xff]
  %v34 = vld [vmem:[%s0 + $0x98] sm:$0xff]
  %v35 = vld [vmem:[%s0 + $0xa0] sm:$0xff]
  %v36 = vld [vmem:[%s0 + $0xa8] sm:$0xff]
  %v37 = vld [vmem:[%s0 + $0xb0] sm:$0xff]
  %v38 = vld [vmem:[%s0 + $0xb8] sm:$0xff]
  %v39 = vld [vmem:[%s0 + $0xc0] sm:$0xff]
  %v40 = vld [vmem:[%s0 + $0xc8] sm:$0xff]
  %v41 = vld [vmem:[%s0 + $0xd0] sm:$0xff]
  %v42 = vld [vmem:[%s0 + $0xd8] sm:$0xff]
  %v43 = vld [vmem:[%s0 + $0xe0] sm:$0xff]
  %v44 = vld [vmem:[%s0 + $0xe8] sm:$0xff]
  %v45 = vld [vmem:[%s0 + $0xf0] sm:$0xff]
  %v46 = vld [vmem:[%s0 + $0xf8] sm:$0xff]
  %v47 = vld [vmem:[%s0 + $0x100] sm:$0xff]
  %v48 = vld [vmem:[%s0 + $0x108] sm:$0xff]
  %v49 = vld [vmem:[%s0 + $0x110] sm:$0xff]
  %v50 = vld [vmem:[%s0 + $0x118] sm:$0xff]
  %v51 = vld [vmem:[%s0 + $0x120] sm:$0xff]
  %v52 = vld [vmem:[%s0 + $0x128] sm:$0xff]
  %v53 = vld [vmem:[%s0 + $0x130] sm:$0xff]
  %v54 = vld [vmem:[%s0 + $0x138] sm:$0xff]
  %v55 = vld [vmem:[%s0 + $0x140] sm:$0xff]
  %v56 = vld [vmem:[%s0 + $0x148] sm:$0xff]
  %v57 = vld [vmem:[%s0 + $0x150] sm:$0xff]
  %v58 = vld [vmem:[%s0 + $0x158] sm:$0xff]
  %v59 = vld [vmem:[%s0 + $0x160] sm:$0xff]
  %v60 = vld [vmem:[%s0 + $0x168] sm:$0xff]
  %v61 = vld [vmem:[%s0 + $0x170] sm:$0xff]
  %v62 = vld [vmem:[%s0 + $0x178] sm:$0xff]
  %v63 = vld [vmem:[%s0 + $0x180] sm:$0xff]
  %v64 = vld [vmem:[%s0 + $0x188] sm:$0xff]
  %v65 = vld [vmem:[%s0 + $0x190] sm:$0xff]
  %v66 = vld [vmem:[%s0 + $0x198] sm:$0xff]
  %v67 = vld [vmem:[%s0 + $0x1a0] sm:$0xff]
  %v68 = vld [vmem:[%s0 + $0x1a8] sm:$0xff]
  %v69 = vld [vmem:[%s0 + $0x1b0] sm:$0xff]
  %v70 = vld [vmem:[%s0 + $0x1b8] sm:$0xff]
  %v71 = vld [vmem:[%s0 + $0x1c0] sm:$0xff]
  %v72 = vld [vmem:[%s0 + $0x1c8] sm:$0xff]
  %v73 = vld [vmem:[%s0 + $0x1d0] sm:$0xff]
  %v74 = vld [vmem:[%s0 + $0x1d8] sm:$0xff]
  %v75 = vld [vmem:[%s0 + $0x1e0] sm:$0xff]
  %v76 = vld [vmem:[%s0 + $0x1e8] sm:$0xff]
  %v77 = vld [vmem:[%s0 + $0x1f0] sm:$0xff]
  %v78 = vld [vmem:[%s0 + $0x1f8] sm:$0xff]
  %v79 = vld [vmem:[%s0 + $0x200] sm:$0xff]
  %v80 = vld [vmem:[%s0 + $0x208] sm:$0xff]
  %v81 = vld [vmem:[%s0 + $0x210] sm:$0xff]
  %v82 = vld [vmem:[%s0 + $0x218] sm:$0xff]
  %v83 = vld [vmem:[%s0 + $0x220] sm:$0xff]
  %v84 = vld [vmem:[%s0 + $0x228] sm:$0xff]
  %v85 = vld [vmem:[%s0 + $0x230] sm:$0xff]
  %v86 = vld [vmem:[%s0 + $0x238] sm:$0xff]
  %v87 = vld [vmem:[%s0 + $0x240] sm:$0xff]
  %v88 = vld [vmem:[%s0 + $0x248] sm:$0xff]
  %v89 = vld [vmem:[%s0 + $0x250] sm:$0xff]
  %v90 = vld [vmem:[%s0 + $0x258] sm:$0xff]
  %v91 = vld [vmem:[%s0 + $0x260] sm:$0xff]
  %v92 = vld [vmem:[%s0 + $0x268] sm:$0xff]
  %v93 = vld [vmem:[%s0 + $0x270] sm:$0xff]
  %v94 = vld [vmem:[%s0 + $0x278] sm:$0xff]
  %v95 = vld [vmem:[%s0 + $0x280] sm:$0xff]
  %v96 = vld [vmem:[%s0 + $0x288] sm:$0xff]
  %v97 = vld [vmem:[%s0 + $0x290] sm:$0xff]
  %v98 = vld [vmem:[%s0 + $0x298] sm:$0xff]
  %v99 = vld [vmem:[%s0 + $0x2a0] sm:$0xff]
  %v100 = vld [vmem:[%s0 + $0x2a8] sm:$0xff]
  %v101 = vld [vmem:[%s0 + $0x2b0] sm:$0xff]
  %v102 = vld [vmem:[%s0 + $0x2b8] sm:$0xff]
  %v103 = vld [vmem:[%s0 + $0x2c0] sm:$0xff]
  %v104 = vld [vmem:[%s0 + $0x2c8] sm:$0xff]
  %v105 = vld [vmem:[%s0 + $0x2d0] sm:$0xff]
  %v106 = vld [vmem:[%s0 + $0x2d8] sm:$0xff]
  %v107 = vld [vmem:[%s0 + $0x2e0] sm:$0xff]
  %v108 = vld [vmem:[%s0 + $0x2e8] sm:$0xff]
  %v109 = vld [vmem:[%s0 + $0x2f0] sm:$0xff]
  %v110 = vld [vmem:[%s0 + $0x2f8] sm:$0xff]
  %v111 = vld [vmem:[%s0 + $0x300] sm:$0xff]
  %v112 = vld [vmem:[%s0 + $0x308] sm:$0xff]
  %v113 = vld [vmem:[%s0 + $0x310] sm:$0xff]
  %v114 = vld [vmem:[%s0 + $0x318] sm:$0xff]
  %v115 = vld [vmem:[%s0 + $0x320] sm:$0xff]
  %v116 = vld [vmem:[%s0 + $0x328] sm:$0xff]
  %v117 = vld [vmem:[%s0 + $0x330] sm:$0xff]
  %v118 = vld [vmem:[%s0 + $0x338] sm:$0xff]
  %v119 = vld [vmem:[%s0 + $0x340] sm:$0xff]
  %v120 = vld [vmem:[%s0 + $0x348] sm:$0xff]
  %v121 = vld [vmem:[%s0 + $0x350] sm:$0xff]
  %v122 = vld [vmem:[%s0 + $0x358] sm:$0xff]
  %v123 = vld [vmem:[%s0 + $0x360] sm:$0xff]
  %v124 = vld [vmem:[%s0 + $0x368] sm:$0xff]
  %v125 = vld [vmem:[%s0 + $0x370] sm:$0xff]
  %v126 = vld [vmem:[%s0 + $0x378] sm:$0xff]
  %v127 = vld [vmem:[%s0 + $0x380] sm:$0xff]
  %v128 = vld [vmem:[%s0 + $0x388] sm:$0xff]
  %v129 = vld [vmem:[%s0 + $0x390] sm:$0xff]
  %v130 = vld [vmem:[%s0 + $0x398] sm:$0xff]
  %v131 = vld [vmem:[%s0 + $0x3a0] sm:$0xff]
  %v132 = vld [vmem:[%s0 + $0x3a8] sm:$0xff]
  %v133 = vld [vmem:[%s0 + $0x3b0] sm:$0xff]
  %v134 = vld [vmem:[%s0 + $0x3b8] sm:$0xff]
  %v135 = vld [vmem:[%s0 + $0x3c0] sm:$0xff]
  %v136 = vld [vmem:[%s0 + $0x3c8] sm:$0xff]
  %v137 = vld [vmem:[%s0 + $0x3d0] sm:$0xff]
  %v138 = vld [vmem:[%s0 + $0x3d8] sm:$0xff]
  %v139 = vld [vmem:[%s0 + $0x3e0] sm:$0xff]
  %v140 = vld [vmem:[%s0 + $0x3e8] sm:$0xff]
  %v141 = vld [vmem:[%s0 + $0x3f0] sm:$0xff]
  %v142 = vld [vmem:[%s0 + $0x3f8] sm:$0xff]
  %v143 = vld [vmem:[%s0 + $0x400] sm:$0xff]
  %v144 = vld [vmem:[%s0 + $0x408] sm:$0xff]
  %v145 = vld [vmem:[%s0 + $0x410] sm:$0xff]
  %v146 = vld [vmem:[%s0 + $0x418] sm:$0xff]
  %v147 = vld [vmem:[%s0 + $0x420] sm:$0xff]
  %v148 = vld [vmem:[%s0 + $0x428] sm:$0xff]
  %v149 = vld [vmem:[%s0 + $0x430] sm:$0xff]
  %v150 = vld [vmem:[%s0 + $0x438] sm:$0xff]
  %v151 = vld [vmem:[%s0 + $0x440] sm:$0xff]
  %v152 = vld [vmem:[%s0 + $0x448] sm:$0xff]
  %v153 = vld [vmem:[%s0 + $0x450] sm:$0xff]
  %v154 = vld [vmem:[%s0 + $0x458] sm:$0xff]
  %v155 = vld [vmem:[%s0 + $0x460] sm:$0xff]
  %v156 = vld [vmem:[%s0 + $0x468] sm:$0xff]
  %v157 = vld [vmem:[%s0 + $0x470] sm:$0xff]
  %v158 = vld [vmem:[%s0 + $0x478] sm:$0xff]
  %v159 = vld [vmem:[%s0 + $0x480] sm:$0xff]
  %v160 = vld [vmem:[%s0 + $0x488] sm:$0xff]
  %v161 = vld [vmem:[%s0 + $0x490] sm:$0xff]
  %v162 = vld [vmem:[%s0 + $0x498] sm:$0xff]
  %v163 = vld [vmem:[%s0 + $0x4a0] sm:$0xff]
  %v164 = vld [vmem:[%s0 + $0x4a8] sm:$0xff]
  %v165 = vld [vmem:[%s0 + $0x4b0] sm:$0xff]
  %v166 = vld [vmem:[%s0 + $0x4b8] sm:$0xff]
  %v167 = vld [vmem:[%s0 + $0x4c0] sm:$0xff]
  %v168 = vld [vmem:[%s0 + $0x4c8] sm:$0xff]
  %v169 = vld [vmem:[%s0 + $0x4d0] sm:$0xff]
  %v170 = vld [vmem:[%s0 + $0x4d8] sm:$0xff]
  %v171 = vld [vmem:[%s0 + $0x4e0] sm:$0xff]
  %v172 = vld [vmem:[%s0 + $0x4e8] sm:$0xff]
  %v173 = vld [vmem:[%s0 + $0x4f0] sm:$0xff]
  %v174 = vld [vmem:[%s0 + $0x4f8] sm:$0xff]
  %v175 = vld [vmem:[%s0 + $0x500] sm:$0xff]
  %v176 = vld [vmem:[%s0 + $0x508] sm:$0xff]
  %v177 = vld [vmem:[%s0 + $0x510] sm:$0xff]
  %v178 = vld [vmem:[%s0 + $0x518] sm:$0xff]
  %v179 = vld [vmem:[%s0 + $0x520] sm:$0xff]
  %v180 = vld [vmem:[%s0 + $0x528] sm:$0xff]
  %v181 = vld [vmem:[%s0 + $0x530] sm:$0xff]
  %v182 = vld [vmem:[%s0 + $0x538] sm:$0xff]
  %v183 = vld [vmem:[%s0 + $0x540] sm:$0xff]
  %v184 = vld [vmem:[%s0 + $0x548] sm:$0xff]
  %v185 = vld [vmem:[%s0 + $0x550] sm:$0xff]
  %v186 = vld [vmem:[%s0 + $0x558] sm:$0xff]
  %v187 = vld [vmem:[%s0 + $0x560] sm:$0xff]
  %v188 = vld [vmem:[%s0 + $0x568] sm:$0xff]
  %v189 = vld [vmem:[%s0 + $0x570] sm:$0xff]
  %v190 = vld [vmem:[%s0 + $0x578] sm:$0xff]
  %v191 = vld [vmem:[%s0 + $0x580] sm:$0xff]
  %v192 = vld [vmem:[%s0 + $0x588] sm:$0xff]
  %v193 = vld [vmem:[%s0 + $0x590] sm:$0xff]
  %v194 = vld [vmem:[%s0 + $0x598] sm:$0xff]
  %v195 = vld [vmem:[%s0 + $0x5a0] sm:$0xff]
  %v196 = vld [vmem:[%s0 + $0x5a8] sm:$0xff]
  %v197 = vld [vmem:[%s0 + $0x5b0] sm:$0xff]
  %v198 = vld [vmem:[%s0 + $0x5b8] sm:$0xff]
  %v199 = vld [vmem:[%s0 + $0x5c0] sm:$0xff]
  %v200 = vld [vmem:[%s0 + $0x5c8] sm:$0xff]
  %v201 = vld [vmem:[%s0 + $0x5d0] sm:$0xff]
  %v202 = vld [vmem:[%s0 + $0x5d8] sm:$0xff]
  %v203 = vld [vmem:[%s0 + $0x5e0] sm:$0xff]
  %v204 = vld [vmem:[%s0 + $0x5e8] sm:$0xff]
  %v205 = vld [vmem:[%s0 + $0x5f0] sm:$0xff]
  %v206 = vld [vmem:[%s0 + $0x5f8] sm:$0xff]
  %v207 = vld [vmem:[%s0 + $0x600] sm:$0xff]
  %v208 = vld [vmem:[%s0 + $0x608] sm:$0xff]
  %v209 = vld [vmem:[%s0 + $0x610] sm:$0xff]
  %v210 = vld [vmem:[%s0 + $0x618] sm:$0xff]
  %v211 = vld [vmem:[%s0 + $0x620] sm:$0xff]
  %v212 = vld [vmem:[%s0 + $0x628] sm:$0xff]
  %v213 = vld [vmem:[%s0 + $0x630] sm:$0xff]
  %v214 = vld [vmem:[%s0 + $0x638] sm:$0xff]
  %v215 = vld [vmem:[%s1] sm:$0xf]
  %v216 = vld [vmem:[%s1 + $0x4] sm:$0xf]
  %v217 = vld [vmem:[%s1 + $0x8] sm:$0xf]
  %v218 = vld [vmem:[%s1 + $0xc] sm:$0xf]
  %v219 = vld [vmem:[%s1 + $0x10] sm:$0xf]
  %v220 = vld [vmem:[%s1 + $0x14] sm:$0xf]
  %v221 = vld [vmem:[%s1 + $0x18] sm:$0xf]
  %v222 = vld [vmem:[%s1 + $0x1c] sm:$0xf]
  %v223 = vld [vmem:[%s1 + $0x20] sm:$0xf]
  %v224 = vld [vmem:[%s1 + $0x24] sm:$0xf]
  %v225 = vld [vmem:[%s1 + $0x28] sm:$0xf]
  %v226 = vld [vmem:[%s1 + $0x2c] sm:$0xf]
  %v227 = vld [vmem:[%s1 + $0x30] sm:$0xf]
  %v228 = vld [vmem:[%s1 + $0x34] sm:$0xf]
  %v229 = vld [vmem:[%s1 + $0x38] sm:$0xf]
  %v230 = vld [vmem:[%s1 + $0x3c] sm:$0xf]
  %v231 = vld [vmem:[%s1 + $0x40] sm:$0xf]
  %v232 = vld [vmem:[%s1 + $0x44] sm:$0xf]
  %v233 = vld [vmem:[%s1 + $0x48] sm:$0xf]
  %v234 = vld [vmem:[%s1 + $0x4c] sm:$0xf]
  %v235 = vld [vmem:[%s1 + $0x50] sm:$0xf]
  %v236 = vld [vmem:[%s1 + $0x54] sm:$0xf]
  %v237 = vld [vmem:[%s1 + $0x58] sm:$0xf]
  %v238 = vld [vmem:[%s1 + $0x5c] sm:$0xf]
  %v239 = vld [vmem:[%s1 + $0x60] sm:$0xf]
  %v240 = vld [vmem:[%s1 + $0x64] sm:$0xf]
  %v241 = vld [vmem:[%s1 + $0x68] sm:$0xf]
  %v242 = vld [vmem:[%s1 + $0x6c] sm:$0xf]
  %v243 = vld [vmem:[%s1 + $0x70] sm:$0xf]
  %v244 = vld [vmem:[%s1 + $0x74] sm:$0xf]
  %v245 = vld [vmem:[%s1 + $0x78] sm:$0xf]
  %v246 = vld [vmem:[%s1 + $0x7c] sm:$0xf]
  %v247 = vld [vmem:[%s1 + $0x80] sm:$0xf]
  %v248 = vld [vmem:[%s1 + $0x84] sm:$0xf]
  %v249 = vld [vmem:[%s1 + $0x88] sm:$0xf]
  %v250 = vld [vmem:[%s1 + $0x8c] sm:$0xf]
  %v251 = vld [vmem:[%s1 + $0x90] sm:$0xf]
  %v252 = vld [vmem:[%s1 + $0x94] sm:$0xf]
  %v253 = vld [vmem:[%s1 + $0x98] sm:$0xf]
  %v254 = vld [vmem:[%s1 + $0x9c] sm:$0xf]
  %v255 = vld [vmem:[%s1 + $0xa0] sm:$0xf]
  %v256 = vld [vmem:[%s1 + $0xa4] sm:$0xf]
  %v257 = vld [vmem:[%s1 + $0xa8] sm:$0xf]
  %v258 = vld [vmem:[%s1 + $0xac] sm:$0xf]
  %v259 = vld [vmem:[%s1 + $0xb0] sm:$0xf]
  %v260 = vld [vmem:[%s1 + $0xb4] sm:$0xf]
  %v261 = vld [vmem:[%s1 + $0xb8] sm:$0xf]
  %v262 = vld [vmem:[%s1 + $0xbc] sm:$0xf]
  %v263 = vld [vmem:[%s1 + $0xc0] sm:$0xf]
  %v264 = vld [vmem:[%s1 + $0xc4] sm:$0xf]
  %v265 = vld [vmem:[%s1 + $0xc8] sm:$0xf]
  %v266 = vld [vmem:[%s1 + $0xcc] sm:$0xf]
  %v267 = vld [vmem:[%s1 + $0xd0] sm:$0xf]
  %v268 = vld [vmem:[%s1 + $0xd4] sm:$0xf]
  %v269 = vld [vmem:[%s1 + $0xd8] sm:$0xf]
  %v270 = vld [vmem:[%s1 + $0xdc] sm:$0xf]
  %v271 = vld [vmem:[%s1 + $0xe0] sm:$0xf]
  %v272 = vld [vmem:[%s1 + $0xe4] sm:$0xf]
  %v273 = vld [vmem:[%s1 + $0xe8] sm:$0xf]
  %v274 = vld [vmem:[%s1 + $0xec] sm:$0xf]
  %v275 = vld [vmem:[%s1 + $0xf0] sm:$0xf]
  %v276 = vld [vmem:[%s1 + $0xf4] sm:$0xf]
  %v277 = vld [vmem:[%s1 + $0xf8] sm:$0xf]
  %v278 = vld [vmem:[%s1 + $0xfc] sm:$0xf]
  %v279 = vld [vmem:[%s1 + $0x100] sm:$0xf]
  %v280 = vld [vmem:[%s1 + $0x104] sm:$0xf]
  %v281 = vld [vmem:[%s1 + $0x108] sm:$0xf]
  %v282 = vld [vmem:[%s1 + $0x10c] sm:$0xf]
  %v283 = vld [vmem:[%s1 + $0x110] sm:$0xf]
  %v284 = vld [vmem:[%s1 + $0x114] sm:$0xf]
  %v285 = vld [vmem:[%s1 + $0x118] sm:$0xf]
  %v286 = vld [vmem:[%s1 + $0x11c] sm:$0xf]
  %v287 = vld [vmem:[%s1 + $0x120] sm:$0xf]
  %v288 = vld [vmem:[%s1 + $0x124] sm:$0xf]
  %v289 = vld [vmem:[%s1 + $0x128] sm:$0xf]
  %v290 = vld [vmem:[%s1 + $0x12c] sm:$0xf]
  %v291 = vld [vmem:[%s1 + $0x130] sm:$0xf]
  %v292 = vld [vmem:[%s1 + $0x134] sm:$0xf]
  %v293 = vld [vmem:[%s1 + $0x138] sm:$0xf]
  %v294 = vld [vmem:[%s1 + $0x13c] sm:$0xf]
  %v295 = vld [vmem:[%s1 + $0x140] sm:$0xf]
  %v296 = vld [vmem:[%s1 + $0x144] sm:$0xf]
  %v297 = vld [vmem:[%s1 + $0x148] sm:$0xf]
  %v298 = vld [vmem:[%s1 + $0x14c] sm:$0xf]
  %v299 = vld [vmem:[%s1 + $0x150] sm:$0xf]
  %v300 = vld [vmem:[%s1 + $0x154] sm:$0xf]
  %v301 = vld [vmem:[%s1 + $0x158] sm:$0xf]
  %v302 = vld [vmem:[%s1 + $0x15c] sm:$0xf]
  %v303 = vld [vmem:[%s1 + $0x160] sm:$0xf]
  %v304 = vld [vmem:[%s1 + $0x164] sm:$0xf]
  %v305 = vld [vmem:[%s1 + $0x168] sm:$0xf]
  %v306 = vld [vmem:[%s1 + $0x16c] sm:$0xf]
  %v307 = vld [vmem:[%s1 + $0x170] sm:$0xf]
  %v308 = vld [vmem:[%s1 + $0x174] sm:$0xf]
  %v309 = vld [vmem:[%s1 + $0x178] sm:$0xf]
  %v310 = vld [vmem:[%s1 + $0x17c] sm:$0xf]
  %v311 = vld [vmem:[%s1 + $0x180] sm:$0xf]
  %v312 = vld [vmem:[%s1 + $0x184] sm:$0xf]
  %v313 = vld [vmem:[%s1 + $0x188] sm:$0xf]
  %v314 = vld [vmem:[%s1 + $0x18c] sm:$0xf]
  %v315 = vld [vmem:[%s1 + $0x190] sm:$0xf]
  %v316 = vld [vmem:[%s1 + $0x194] sm:$0xf]
  %v317 = vld [vmem:[%s1 + $0x198] sm:$0xf]
  %v318 = vld [vmem:[%s1 + $0x19c] sm:$0xf]
  %v319 = vld [vmem:[%s1 + $0x1a0] sm:$0xf]
  %v320 = vld [vmem:[%s1 + $0x1a4] sm:$0xf]
  %v321 = vld [vmem:[%s1 + $0x1a8] sm:$0xf]
  %v322 = vld [vmem:[%s1 + $0x1ac] sm:$0xf]
  %v323 = vld [vmem:[%s1 + $0x1b0] sm:$0xf]
  %v324 = vld [vmem:[%s1 + $0x1b4] sm:$0xf]
  %v325 = vld [vmem:[%s1 + $0x1b8] sm:$0xf]
  %v326 = vld [vmem:[%s1 + $0x1bc] sm:$0xf]
  %v327 = vld [vmem:[%s1 + $0x1c0] sm:$0xf]
  %v328 = vld [vmem:[%s1 + $0x1c4] sm:$0xf]
  %v329 = vld [vmem:[%s1 + $0x1c8] sm:$0xf]
  %v330 = vld [vmem:[%s1 + $0x1cc] sm:$0xf]
  %v331 = vld [vmem:[%s1 + $0x1d0] sm:$0xf]
  %v332 = vld [vmem:[%s1 + $0x1d4] sm:$0xf]
  %v333 = vld [vmem:[%s1 + $0x1d8] sm:$0xf]
  %v334 = vld [vmem:[%s1 + $0x1dc] sm:$0xf]
  %v335 = vld [vmem:[%s1 + $0x1e0] sm:$0xf]
  %v336 = vld [vmem:[%s1 + $0x1e4] sm:$0xf]
  %v337 = vld [vmem:[%s1 + $0x1e8] sm:$0xf]
  %v338 = vld [vmem:[%s1 + $0x1ec] sm:$0xf]
  %v339 = vld [vmem:[%s1 + $0x1f0] sm:$0xf]
  %v340 = vld [vmem:[%s1 + $0x1f4] sm:$0xf]
  %v341 = vld [vmem:[%s1 + $0x1f8] sm:$0xf]
  %v342 = vld [vmem:[%s1 + $0x1fc] sm:$0xf]
  %v343 = vld [vmem:[%s2] sm:$0x1]
  %v345 = vlaneseq
  %v346 = vshrl.u32 %v345, 7
  %v347 = vsub.s32 0, %v346
  %v348 = vrot.slane %v343, %v347
  %v550 = vunpack.c.l.b16 %v15
  %v551 = vunpack.c.h.b16 %v15
  %v552 = vunpack.c.l.b16 %v16
  %v553 = vunpack.c.h.b16 %v16
  %v554 = vunpack.c.l.b16 %v17
  %v555 = vunpack.c.h.b16 %v17
  %v556 = vunpack.c.l.b16 %v18
  %v557 = vunpack.c.h.b16 %v18
  %v558 = vunpack.c.l.b16 %v19
  %v559 = vunpack.c.h.b16 %v19
  %v560 = vunpack.c.l.b16 %v20
  %v561 = vunpack.c.h.b16 %v20
  %v562 = vunpack.c.l.b16 %v21
  %v563 = vunpack.c.h.b16 %v21
  %v564 = vunpack.c.l.b16 %v22
  %v565 = vunpack.c.h.b16 %v22
  %v566 = vunpack.c.l.b16 %v23
  %v567 = vunpack.c.h.b16 %v23
  %v568 = vunpack.c.l.b16 %v24
  %v569 = vunpack.c.h.b16 %v24
  %v570 = vunpack.c.l.b16 %v25
  %v571 = vunpack.c.h.b16 %v25
  %v572 = vunpack.c.l.b16 %v26
  %v573 = vunpack.c.h.b16 %v26
  %v574 = vunpack.c.l.b16 %v27
  %v575 = vunpack.c.h.b16 %v27
  %v576 = vunpack.c.l.b16 %v28
  %v577 = vunpack.c.h.b16 %v28
  %v578 = vunpack.c.l.b16 %v29
  %v579 = vunpack.c.h.b16 %v29
  %v580 = vunpack.c.l.b16 %v30
  %v581 = vunpack.c.h.b16 %v30
  %v582 = vunpack.c.l.b16 %v31
  %v583 = vunpack.c.h.b16 %v31
  %v584 = vunpack.c.l.b16 %v32
  %v585 = vunpack.c.h.b16 %v32
  %v586 = vunpack.c.l.b16 %v33
  %v587 = vunpack.c.h.b16 %v33
  %v588 = vunpack.c.l.b16 %v34
  %v589 = vunpack.c.h.b16 %v34
  %v590 = vunpack.c.l.b16 %v35
  %v591 = vunpack.c.h.b16 %v35
  %v592 = vunpack.c.l.b16 %v36
  %v593 = vunpack.c.h.b16 %v36
  %v594 = vunpack.c.l.b16 %v37
  %v595 = vunpack.c.h.b16 %v37
  %v596 = vunpack.c.l.b16 %v38
  %v597 = vunpack.c.h.b16 %v38
  %v598 = vunpack.c.l.b16 %v39
  %v599 = vunpack.c.h.b16 %v39
  %v600 = vunpack.c.l.b16 %v40
  %v601 = vunpack.c.h.b16 %v40
  %v602 = vunpack.c.l.b16 %v41
  %v603 = vunpack.c.h.b16 %v41
  %v604 = vunpack.c.l.b16 %v42
  %v605 = vunpack.c.h.b16 %v42
  %v606 = vunpack.c.l.b16 %v43
  %v607 = vunpack.c.h.b16 %v43
  %v608 = vunpack.c.l.b16 %v44
  %v609 = vunpack.c.h.b16 %v44
  %v610 = vunpack.c.l.b16 %v45
  %v611 = vunpack.c.h.b16 %v45
  %v612 = vunpack.c.l.b16 %v46
  %v613 = vunpack.c.h.b16 %v46
  %v614 = vunpack.c.l.b16 %v47
  %v615 = vunpack.c.h.b16 %v47
  %v616 = vunpack.c.l.b16 %v48
  %v617 = vunpack.c.h.b16 %v48
  %v618 = vunpack.c.l.b16 %v49
  %v619 = vunpack.c.h.b16 %v49
  %v620 = vunpack.c.l.b16 %v50
  %v621 = vunpack.c.h.b16 %v50
  %v622 = vunpack.c.l.b16 %v51
  %v623 = vunpack.c.h.b16 %v51
  %v624 = vunpack.c.l.b16 %v52
  %v625 = vunpack.c.h.b16 %v52
  %v626 = vunpack.c.l.b16 %v53
  %v627 = vunpack.c.h.b16 %v53
  %v628 = vunpack.c.l.b16 %v54
  %v629 = vunpack.c.h.b16 %v54
  %v630 = vunpack.c.l.b16 %v55
  %v631 = vunpack.c.h.b16 %v55
  %v632 = vunpack.c.l.b16 %v56
  %v633 = vunpack.c.h.b16 %v56
  %v634 = vunpack.c.l.b16 %v57
  %v635 = vunpack.c.h.b16 %v57
  %v636 = vunpack.c.l.b16 %v58
  %v637 = vunpack.c.h.b16 %v58
  %v638 = vunpack.c.l.b16 %v59
  %v639 = vunpack.c.h.b16 %v59
  %v640 = vunpack.c.l.b16 %v60
  %v641 = vunpack.c.h.b16 %v60
  %v642 = vunpack.c.l.b16 %v61
  %v643 = vunpack.c.h.b16 %v61
  %v644 = vunpack.c.l.b16 %v62
  %v645 = vunpack.c.h.b16 %v62
  %v646 = vunpack.c.l.b16 %v63
  %v647 = vunpack.c.h.b16 %v63
  %v648 = vunpack.c.l.b16 %v64
  %v649 = vunpack.c.h.b16 %v64
  %v650 = vunpack.c.l.b16 %v65
  %v651 = vunpack.c.h.b16 %v65
  %v652 = vunpack.c.l.b16 %v66
  %v653 = vunpack.c.h.b16 %v66
  %v654 = vunpack.c.l.b16 %v67
  %v655 = vunpack.c.h.b16 %v67
  %v656 = vunpack.c.l.b16 %v68
  %v657 = vunpack.c.h.b16 %v68
  %v658 = vunpack.c.l.b16 %v69
  %v659 = vunpack.c.h.b16 %v69
  %v660 = vunpack.c.l.b16 %v70
  %v661 = vunpack.c.h.b16 %v70
  %v662 = vunpack.c.l.b16 %v71
  %v663 = vunpack.c.h.b16 %v71
  %v664 = vunpack.c.l.b16 %v72
  %v665 = vunpack.c.h.b16 %v72
  %v666 = vunpack.c.l.b16 %v73
  %v667 = vunpack.c.h.b16 %v73
  %v668 = vunpack.c.l.b16 %v74
  %v669 = vunpack.c.h.b16 %v74
  %v670 = vunpack.c.l.b16 %v75
  %v671 = vunpack.c.h.b16 %v75
  %v672 = vunpack.c.l.b16 %v76
  %v673 = vunpack.c.h.b16 %v76
  %v674 = vunpack.c.l.b16 %v77
  %v675 = vunpack.c.h.b16 %v77
  %v676 = vunpack.c.l.b16 %v78
  %v677 = vunpack.c.h.b16 %v78
  %v678 = vunpack.c.l.b16 %v79
  %v679 = vunpack.c.h.b16 %v79
  %v680 = vunpack.c.l.b16 %v80
  %v681 = vunpack.c.h.b16 %v80
  %v682 = vunpack.c.l.b16 %v81
  %v683 = vunpack.c.h.b16 %v81
  %v684 = vunpack.c.l.b16 %v82
  %v685 = vunpack.c.h.b16 %v82
  %v686 = vunpack.c.l.b16 %v83
  %v687 = vunpack.c.h.b16 %v83
  %v688 = vunpack.c.l.b16 %v84
  %v689 = vunpack.c.h.b16 %v84
  %v690 = vunpack.c.l.b16 %v85
  %v691 = vunpack.c.h.b16 %v85
  %v692 = vunpack.c.l.b16 %v86
  %v693 = vunpack.c.h.b16 %v86
  %v694 = vunpack.c.l.b16 %v87
  %v695 = vunpack.c.h.b16 %v87
  %v696 = vunpack.c.l.b16 %v88
  %v697 = vunpack.c.h.b16 %v88
  %v698 = vunpack.c.l.b16 %v89
  %v699 = vunpack.c.h.b16 %v89
  %v700 = vunpack.c.l.b16 %v90
  %v701 = vunpack.c.h.b16 %v90
  %v702 = vunpack.c.l.b16 %v91
  %v703 = vunpack.c.h.b16 %v91
  %v704 = vunpack.c.l.b16 %v92
  %v705 = vunpack.c.h.b16 %v92
  %v706 = vunpack.c.l.b16 %v93
  %v707 = vunpack.c.h.b16 %v93
  %v708 = vunpack.c.l.b16 %v94
  %v709 = vunpack.c.h.b16 %v94
  %v710 = vunpack.c.l.b16 %v95
  %v711 = vunpack.c.h.b16 %v95
  %v712 = vunpack.c.l.b16 %v96
  %v713 = vunpack.c.h.b16 %v96
  %v714 = vunpack.c.l.b16 %v97
  %v715 = vunpack.c.h.b16 %v97
  %v716 = vunpack.c.l.b16 %v98
  %v717 = vunpack.c.h.b16 %v98
  %v718 = vunpack.c.l.b16 %v99
  %v719 = vunpack.c.h.b16 %v99
  %v720 = vunpack.c.l.b16 %v100
  %v721 = vunpack.c.h.b16 %v100
  %v722 = vunpack.c.l.b16 %v101
  %v723 = vunpack.c.h.b16 %v101
  %v724 = vunpack.c.l.b16 %v102
  %v725 = vunpack.c.h.b16 %v102
  %v726 = vunpack.c.l.b16 %v103
  %v727 = vunpack.c.h.b16 %v103
  %v728 = vunpack.c.l.b16 %v104
  %v729 = vunpack.c.h.b16 %v104
  %v730 = vunpack.c.l.b16 %v105
  %v731 = vunpack.c.h.b16 %v105
  %v732 = vunpack.c.l.b16 %v106
  %v733 = vunpack.c.h.b16 %v106
  %v734 = vunpack.c.l.b16 %v107
  %v735 = vunpack.c.h.b16 %v107
  %v736 = vunpack.c.l.b16 %v108
  %v737 = vunpack.c.h.b16 %v108
  %v738 = vunpack.c.l.b16 %v109
  %v739 = vunpack.c.h.b16 %v109
  %v740 = vunpack.c.l.b16 %v110
  %v741 = vunpack.c.h.b16 %v110
  %v742 = vunpack.c.l.b16 %v111
  %v743 = vunpack.c.h.b16 %v111
  %v744 = vunpack.c.l.b16 %v112
  %v745 = vunpack.c.h.b16 %v112
  %v746 = vunpack.c.l.b16 %v113
  %v747 = vunpack.c.h.b16 %v113
  %v748 = vunpack.c.l.b16 %v114
  %v749 = vunpack.c.h.b16 %v114
  %v750 = vunpack.c.l.b16 %v115
  %v751 = vunpack.c.h.b16 %v115
  %v752 = vunpack.c.l.b16 %v116
  %v753 = vunpack.c.h.b16 %v116
  %v754 = vunpack.c.l.b16 %v117
  %v755 = vunpack.c.h.b16 %v117
  %v756 = vunpack.c.l.b16 %v118
  %v757 = vunpack.c.h.b16 %v118
  %v758 = vunpack.c.l.b16 %v119
  %v759 = vunpack.c.h.b16 %v119
  %v760 = vunpack.c.l.b16 %v120
  %v761 = vunpack.c.h.b16 %v120
  %v762 = vunpack.c.l.b16 %v121
  %v763 = vunpack.c.h.b16 %v121
  %v764 = vunpack.c.l.b16 %v122
  %v765 = vunpack.c.h.b16 %v122
  %v766 = vunpack.c.l.b16 %v123
  %v767 = vunpack.c.h.b16 %v123
  %v768 = vunpack.c.l.b16 %v124
  %v769 = vunpack.c.h.b16 %v124
  %v770 = vunpack.c.l.b16 %v125
  %v771 = vunpack.c.h.b16 %v125
  %v772 = vunpack.c.l.b16 %v126
  %v773 = vunpack.c.h.b16 %v126
  %v774 = vunpack.c.l.b16 %v127
  %v775 = vunpack.c.h.b16 %v127
  %v776 = vunpack.c.l.b16 %v128
  %v777 = vunpack.c.h.b16 %v128
  %v778 = vunpack.c.l.b16 %v129
  %v779 = vunpack.c.h.b16 %v129
  %v780 = vunpack.c.l.b16 %v130
  %v781 = vunpack.c.h.b16 %v130
  %v782 = vunpack.c.l.b16 %v131
  %v783 = vunpack.c.h.b16 %v131
  %v784 = vunpack.c.l.b16 %v132
  %v785 = vunpack.c.h.b16 %v132
  %v786 = vunpack.c.l.b16 %v133
  %v787 = vunpack.c.h.b16 %v133
  %v788 = vunpack.c.l.b16 %v134
  %v789 = vunpack.c.h.b16 %v134
  %v790 = vunpack.c.l.b16 %v135
  %v791 = vunpack.c.h.b16 %v135
  %v792 = vunpack.c.l.b16 %v136
  %v793 = vunpack.c.h.b16 %v136
  %v794 = vunpack.c.l.b16 %v137
  %v795 = vunpack.c.h.b16 %v137
  %v796 = vunpack.c.l.b16 %v138
  %v797 = vunpack.c.h.b16 %v138
  %v798 = vunpack.c.l.b16 %v139
  %v799 = vunpack.c.h.b16 %v139
  %v800 = vunpack.c.l.b16 %v140
  %v801 = vunpack.c.h.b16 %v140
  %v802 = vunpack.c.l.b16 %v141
  %v803 = vunpack.c.h.b16 %v141
  %v804 = vunpack.c.l.b16 %v142
  %v805 = vunpack.c.h.b16 %v142
  %v806 = vunpack.c.l.b16 %v143
  %v807 = vunpack.c.h.b16 %v143
  %v808 = vunpack.c.l.b16 %v144
  %v809 = vunpack.c.h.b16 %v144
  %v810 = vunpack.c.l.b16 %v145
  %v811 = vunpack.c.h.b16 %v145
  %v812 = vunpack.c.l.b16 %v146
  %v813 = vunpack.c.h.b16 %v146
  %v814 = vunpack.c.l.b16 %v147
  %v815 = vunpack.c.h.b16 %v147
  %v816 = vunpack.c.l.b16 %v148
  %v817 = vunpack.c.h.b16 %v148
  %v818 = vunpack.c.l.b16 %v149
  %v819 = vunpack.c.h.b16 %v149
  %v820 = vunpack.c.l.b16 %v150
  %v821 = vunpack.c.h.b16 %v150
  %v822 = vunpack.c.l.b16 %v151
  %v823 = vunpack.c.h.b16 %v151
  %v824 = vunpack.c.l.b16 %v152
  %v825 = vunpack.c.h.b16 %v152
  %v826 = vunpack.c.l.b16 %v153
  %v827 = vunpack.c.h.b16 %v153
  %v828 = vunpack.c.l.b16 %v154
  %v829 = vunpack.c.h.b16 %v154
  %v830 = vunpack.c.l.b16 %v155
  %v831 = vunpack.c.h.b16 %v155
  %v832 = vunpack.c.l.b16 %v156
  %v833 = vunpack.c.h.b16 %v156
  %v834 = vunpack.c.l.b16 %v157
  %v835 = vunpack.c.h.b16 %v157
  %v836 = vunpack.c.l.b16 %v158
  %v837 = vunpack.c.h.b16 %v158
  %v838 = vunpack.c.l.b16 %v159
  %v839 = vunpack.c.h.b16 %v159
  %v840 = vunpack.c.l.b16 %v160
  %v841 = vunpack.c.h.b16 %v160
  %v842 = vunpack.c.l.b16 %v161
  %v843 = vunpack.c.h.b16 %v161
  %v844 = vunpack.c.l.b16 %v162
  %v845 = vunpack.c.h.b16 %v162
  %v846 = vunpack.c.l.b16 %v163
  %v847 = vunpack.c.h.b16 %v163
  %v848 = vunpack.c.l.b16 %v164
  %v849 = vunpack.c.h.b16 %v164
  %v850 = vunpack.c.l.b16 %v165
  %v851 = vunpack.c.h.b16 %v165
  %v852 = vunpack.c.l.b16 %v166
  %v853 = vunpack.c.h.b16 %v166
  %v854 = vunpack.c.l.b16 %v167
  %v855 = vunpack.c.h.b16 %v167
  %v856 = vunpack.c.l.b16 %v168
  %v857 = vunpack.c.h.b16 %v168
  %v858 = vunpack.c.l.b16 %v169
  %v859 = vunpack.c.h.b16 %v169
  %v860 = vunpack.c.l.b16 %v170
  %v861 = vunpack.c.h.b16 %v170
  %v862 = vunpack.c.l.b16 %v171
  %v863 = vunpack.c.h.b16 %v171
  %v864 = vunpack.c.l.b16 %v172
  %v865 = vunpack.c.h.b16 %v172
  %v866 = vunpack.c.l.b16 %v173
  %v867 = vunpack.c.h.b16 %v173
  %v868 = vunpack.c.l.b16 %v174
  %v869 = vunpack.c.h.b16 %v174
  %v870 = vunpack.c.l.b16 %v175
  %v871 = vunpack.c.h.b16 %v175
  %v872 = vunpack.c.l.b16 %v176
  %v873 = vunpack.c.h.b16 %v176
  %v874 = vunpack.c.l.b16 %v177
  %v875 = vunpack.c.h.b16 %v177
  %v876 = vunpack.c.l.b16 %v178
  %v877 = vunpack.c.h.b16 %v178
  %v878 = vunpack.c.l.b16 %v179
  %v879 = vunpack.c.h.b16 %v179
  %v880 = vunpack.c.l.b16 %v180
  %v881 = vunpack.c.h.b16 %v180
  %v882 = vunpack.c.l.b16 %v181
  %v883 = vunpack.c.h.b16 %v181
  %v884 = vunpack.c.l.b16 %v182
  %v885 = vunpack.c.h.b16 %v182
  %v886 = vunpack.c.l.b16 %v183
  %v887 = vunpack.c.h.b16 %v183
  %v888 = vunpack.c.l.b16 %v184
  %v889 = vunpack.c.h.b16 %v184
  %v890 = vunpack.c.l.b16 %v185
  %v891 = vunpack.c.h.b16 %v185
  %v892 = vunpack.c.l.b16 %v186
  %v893 = vunpack.c.h.b16 %v186
  %v894 = vunpack.c.l.b16 %v187
  %v895 = vunpack.c.h.b16 %v187
  %v896 = vunpack.c.l.b16 %v188
  %v897 = vunpack.c.h.b16 %v188
  %v898 = vunpack.c.l.b16 %v189
  %v899 = vunpack.c.h.b16 %v189
  %v900 = vunpack.c.l.b16 %v190
  %v901 = vunpack.c.h.b16 %v190
  %v902 = vunpack.c.l.b16 %v191
  %v903 = vunpack.c.h.b16 %v191
  %v904 = vunpack.c.l.b16 %v192
  %v905 = vunpack.c.h.b16 %v192
  %v906 = vunpack.c.l.b16 %v193
  %v907 = vunpack.c.h.b16 %v193
  %v908 = vunpack.c.l.b16 %v194
  %v909 = vunpack.c.h.b16 %v194
  %v910 = vunpack.c.l.b16 %v195
  %v911 = vunpack.c.h.b16 %v195
  %v912 = vunpack.c.l.b16 %v196
  %v913 = vunpack.c.h.b16 %v196
  %v914 = vunpack.c.l.b16 %v197
  %v915 = vunpack.c.h.b16 %v197
  %v916 = vunpack.c.l.b16 %v198
  %v917 = vunpack.c.h.b16 %v198
  %v918 = vunpack.c.l.b16 %v199
  %v919 = vunpack.c.h.b16 %v199
  %v920 = vunpack.c.l.b16 %v200
  %v921 = vunpack.c.h.b16 %v200
  %v922 = vunpack.c.l.b16 %v201
  %v923 = vunpack.c.h.b16 %v201
  %v924 = vunpack.c.l.b16 %v202
  %v925 = vunpack.c.h.b16 %v202
  %v926 = vunpack.c.l.b16 %v203
  %v927 = vunpack.c.h.b16 %v203
  %v928 = vunpack.c.l.b16 %v204
  %v929 = vunpack.c.h.b16 %v204
  %v930 = vunpack.c.l.b16 %v205
  %v931 = vunpack.c.h.b16 %v205
  %v932 = vunpack.c.l.b16 %v206
  %v933 = vunpack.c.h.b16 %v206
  %v934 = vunpack.c.l.b16 %v207
  %v935 = vunpack.c.h.b16 %v207
  %v936 = vunpack.c.l.b16 %v208
  %v937 = vunpack.c.h.b16 %v208
  %v938 = vunpack.c.l.b16 %v209
  %v939 = vunpack.c.h.b16 %v209
  %v940 = vunpack.c.l.b16 %v210
  %v941 = vunpack.c.h.b16 %v210
  %v942 = vunpack.c.l.b16 %v211
  %v943 = vunpack.c.h.b16 %v211
  %v944 = vunpack.c.l.b16 %v212
  %v945 = vunpack.c.h.b16 %v212
  %v946 = vunpack.c.l.b16 %v213
  %v947 = vunpack.c.h.b16 %v213
  %v948 = vunpack.c.l.b16 %v214
  %v949 = vunpack.c.h.b16 %v214
  %v950 = vpack.c.b16 %v558, %v550
  %v951 = vpack.c.b16 %v559, %v551
  %v952 = vpack.c.b16 %v560, %v552
  %v953 = vpack.c.b16 %v561, %v553
  %v954 = vpack.c.b16 %v562, %v554
  %v955 = vpack.c.b16 %v563, %v555
  %v956 = vpack.c.b16 %v564, %v556
  %v957 = vpack.c.b16 %v565, %v557
  %v958 = vpack.c.b16 %v574, %v566
  %v959 = vpack.c.b16 %v575, %v567
  %v960 = vpack.c.b16 %v576, %v568
  %v961 = vpack.c.b16 %v577, %v569
  %v962 = vpack.c.b16 %v578, %v570
  %v963 = vpack.c.b16 %v579, %v571
  %v964 = vpack.c.b16 %v580, %v572
  %v965 = vpack.c.b16 %v581, %v573
  %v966 = vpack.c.b16 %v590, %v582
  %v967 = vpack.c.b16 %v591, %v583
  %v968 = vpack.c.b16 %v592, %v584
  %v969 = vpack.c.b16 %v593, %v585
  %v970 = vpack.c.b16 %v594, %v586
  %v971 = vpack.c.b16 %v595, %v587
  %v972 = vpack.c.b16 %v596, %v588
  %v973 = vpack.c.b16 %v597, %v589
  %v974 = vpack.c.b16 %v606, %v598
  %v975 = vpack.c.b16 %v607, %v599
  %v976 = vpack.c.b16 %v608, %v600
  %v977 = vpack.c.b16 %v609, %v601
  %v978 = vpack.c.b16 %v610, %v602
  %v979 = vpack.c.b16 %v611, %v603
  %v980 = vpack.c.b16 %v612, %v604
  %v981 = vpack.c.b16 %v613, %v605
  %v982 = vpack.c.b16 %v622, %v614
  %v983 = vpack.c.b16 %v623, %v615
  %v984 = vpack.c.b16 %v624, %v616
  %v985 = vpack.c.b16 %v625, %v617
  %v986 = vpack.c.b16 %v626, %v618
  %v987 = vpack.c.b16 %v627, %v619
  %v988 = vpack.c.b16 %v628, %v620
  %v989 = vpack.c.b16 %v629, %v621
  %v990 = vpack.c.b16 %v638, %v630
  %v991 = vpack.c.b16 %v639, %v631
  %v992 = vpack.c.b16 %v640, %v632
  %v993 = vpack.c.b16 %v641, %v633
  %v994 = vpack.c.b16 %v642, %v634
  %v995 = vpack.c.b16 %v643, %v635
  %v996 = vpack.c.b16 %v644, %v636
  %v997 = vpack.c.b16 %v645, %v637
  %v998 = vpack.c.b16 %v654, %v646
  %v999 = vpack.c.b16 %v655, %v647
  %v1000 = vpack.c.b16 %v656, %v648
  %v1001 = vpack.c.b16 %v657, %v649
  %v1002 = vpack.c.b16 %v658, %v650
  %v1003 = vpack.c.b16 %v659, %v651
  %v1004 = vpack.c.b16 %v660, %v652
  %v1005 = vpack.c.b16 %v661, %v653
  %v1006 = vpack.c.b16 %v670, %v662
  %v1007 = vpack.c.b16 %v671, %v663
  %v1008 = vpack.c.b16 %v672, %v664
  %v1009 = vpack.c.b16 %v673, %v665
  %v1010 = vpack.c.b16 %v674, %v666
  %v1011 = vpack.c.b16 %v675, %v667
  %v1012 = vpack.c.b16 %v676, %v668
  %v1013 = vpack.c.b16 %v677, %v669
  %v1014 = vpack.c.b16 %v686, %v678
  %v1015 = vpack.c.b16 %v687, %v679
  %v1016 = vpack.c.b16 %v688, %v680
  %v1017 = vpack.c.b16 %v689, %v681
  %v1018 = vpack.c.b16 %v690, %v682
  %v1019 = vpack.c.b16 %v691, %v683
  %v1020 = vpack.c.b16 %v692, %v684
  %v1021 = vpack.c.b16 %v693, %v685
  %v1022 = vpack.c.b16 %v702, %v694
  %v1023 = vpack.c.b16 %v703, %v695
  %v1024 = vpack.c.b16 %v704, %v696
  %v1025 = vpack.c.b16 %v705, %v697
  %v1026 = vpack.c.b16 %v706, %v698
  %v1027 = vpack.c.b16 %v707, %v699
  %v1028 = vpack.c.b16 %v708, %v700
  %v1029 = vpack.c.b16 %v709, %v701
  %v1030 = vpack.c.b16 %v718, %v710
  %v1031 = vpack.c.b16 %v719, %v711
  %v1032 = vpack.c.b16 %v720, %v712
  %v1033 = vpack.c.b16 %v721, %v713
  %v1034 = vpack.c.b16 %v722, %v714
  %v1035 = vpack.c.b16 %v723, %v715
  %v1036 = vpack.c.b16 %v724, %v716
  %v1037 = vpack.c.b16 %v725, %v717
  %v1038 = vpack.c.b16 %v734, %v726
  %v1039 = vpack.c.b16 %v735, %v727
  %v1040 = vpack.c.b16 %v736, %v728
  %v1041 = vpack.c.b16 %v737, %v729
  %v1042 = vpack.c.b16 %v738, %v730
  %v1043 = vpack.c.b16 %v739, %v731
  %v1044 = vpack.c.b16 %v740, %v732
  %v1045 = vpack.c.b16 %v741, %v733
  %v1046 = vpack.c.b16 %v750, %v742
  %v1047 = vpack.c.b16 %v751, %v743
  %v1048 = vpack.c.b16 %v752, %v744
  %v1049 = vpack.c.b16 %v753, %v745
  %v1050 = vpack.c.b16 %v754, %v746
  %v1051 = vpack.c.b16 %v755, %v747
  %v1052 = vpack.c.b16 %v756, %v748
  %v1053 = vpack.c.b16 %v757, %v749
  %v1054 = vpack.c.b16 %v766, %v758
  %v1055 = vpack.c.b16 %v767, %v759
  %v1056 = vpack.c.b16 %v768, %v760
  %v1057 = vpack.c.b16 %v769, %v761
  %v1058 = vpack.c.b16 %v770, %v762
  %v1059 = vpack.c.b16 %v771, %v763
  %v1060 = vpack.c.b16 %v772, %v764
  %v1061 = vpack.c.b16 %v773, %v765
  %v1062 = vpack.c.b16 %v782, %v774
  %v1063 = vpack.c.b16 %v783, %v775
  %v1064 = vpack.c.b16 %v784, %v776
  %v1065 = vpack.c.b16 %v785, %v777
  %v1066 = vpack.c.b16 %v786, %v778
  %v1067 = vpack.c.b16 %v787, %v779
  %v1068 = vpack.c.b16 %v788, %v780
  %v1069 = vpack.c.b16 %v789, %v781
  %v1070 = vpack.c.b16 %v798, %v790
  %v1071 = vpack.c.b16 %v799, %v791
  %v1072 = vpack.c.b16 %v800, %v792
  %v1073 = vpack.c.b16 %v801, %v793
  %v1074 = vpack.c.b16 %v802, %v794
  %v1075 = vpack.c.b16 %v803, %v795
  %v1076 = vpack.c.b16 %v804, %v796
  %v1077 = vpack.c.b16 %v805, %v797
  %v1078 = vpack.c.b16 %v814, %v806
  %v1079 = vpack.c.b16 %v815, %v807
  %v1080 = vpack.c.b16 %v816, %v808
  %v1081 = vpack.c.b16 %v817, %v809
  %v1082 = vpack.c.b16 %v818, %v810
  %v1083 = vpack.c.b16 %v819, %v811
  %v1084 = vpack.c.b16 %v820, %v812
  %v1085 = vpack.c.b16 %v821, %v813
  %v1086 = vpack.c.b16 %v830, %v822
  %v1087 = vpack.c.b16 %v831, %v823
  %v1088 = vpack.c.b16 %v832, %v824
  %v1089 = vpack.c.b16 %v833, %v825
  %v1090 = vpack.c.b16 %v834, %v826
  %v1091 = vpack.c.b16 %v835, %v827
  %v1092 = vpack.c.b16 %v836, %v828
  %v1093 = vpack.c.b16 %v837, %v829
  %v1094 = vpack.c.b16 %v846, %v838
  %v1095 = vpack.c.b16 %v847, %v839
  %v1096 = vpack.c.b16 %v848, %v840
  %v1097 = vpack.c.b16 %v849, %v841
  %v1098 = vpack.c.b16 %v850, %v842
  %v1099 = vpack.c.b16 %v851, %v843
  %v1100 = vpack.c.b16 %v852, %v844
  %v1101 = vpack.c.b16 %v853, %v845
  %v1102 = vpack.c.b16 %v862, %v854
  %v1103 = vpack.c.b16 %v863, %v855
  %v1104 = vpack.c.b16 %v864, %v856
  %v1105 = vpack.c.b16 %v865, %v857
  %v1106 = vpack.c.b16 %v866, %v858
  %v1107 = vpack.c.b16 %v867, %v859
  %v1108 = vpack.c.b16 %v868, %v860
  %v1109 = vpack.c.b16 %v869, %v861
  %v1110 = vpack.c.b16 %v878, %v870
  %v1111 = vpack.c.b16 %v879, %v871
  %v1112 = vpack.c.b16 %v880, %v872
  %v1113 = vpack.c.b16 %v881, %v873
  %v1114 = vpack.c.b16 %v882, %v874
  %v1115 = vpack.c.b16 %v883, %v875
  %v1116 = vpack.c.b16 %v884, %v876
  %v1117 = vpack.c.b16 %v885, %v877
  %v1118 = vpack.c.b16 %v894, %v886
  %v1119 = vpack.c.b16 %v895, %v887
  %v1120 = vpack.c.b16 %v896, %v888
  %v1121 = vpack.c.b16 %v897, %v889
  %v1122 = vpack.c.b16 %v898, %v890
  %v1123 = vpack.c.b16 %v899, %v891
  %v1124 = vpack.c.b16 %v900, %v892
  %v1125 = vpack.c.b16 %v901, %v893
  %v1126 = vpack.c.b16 %v910, %v902
  %v1127 = vpack.c.b16 %v911, %v903
  %v1128 = vpack.c.b16 %v912, %v904
  %v1129 = vpack.c.b16 %v913, %v905
  %v1130 = vpack.c.b16 %v914, %v906
  %v1131 = vpack.c.b16 %v915, %v907
  %v1132 = vpack.c.b16 %v916, %v908
  %v1133 = vpack.c.b16 %v917, %v909
  %v1134 = vpack.c.b16 %v926, %v918
  %v1135 = vpack.c.b16 %v927, %v919
  %v1136 = vpack.c.b16 %v928, %v920
  %v1137 = vpack.c.b16 %v929, %v921
  %v1138 = vpack.c.b16 %v930, %v922
  %v1139 = vpack.c.b16 %v931, %v923
  %v1140 = vpack.c.b16 %v932, %v924
  %v1141 = vpack.c.b16 %v933, %v925
  %v1142 = vpack.c.b16 %v942, %v934
  %v1143 = vpack.c.b16 %v943, %v935
  %v1144 = vpack.c.b16 %v944, %v936
  %v1145 = vpack.c.b16 %v945, %v937
  %v1146 = vpack.c.b16 %v946, %v938
  %v1147 = vpack.c.b16 %v947, %v939
  %v1148 = vpack.c.b16 %v948, %v940
  %v1149 = vpack.c.b16 %v949, %v941
  %v1478 = vunpack.c.l.b16 %v215
  %v1479 = vunpack.c.l.b16 %v216
  %v1480 = vunpack.c.l.b16 %v217
  %v1481 = vunpack.c.l.b16 %v218
  %v1482 = vunpack.c.l.b16 %v219
  %v1483 = vunpack.c.l.b16 %v220
  %v1484 = vunpack.c.l.b16 %v221
  %v1485 = vunpack.c.l.b16 %v222
  %v1486 = vunpack.c.l.b16 %v223
  %v1487 = vunpack.c.l.b16 %v224
  %v1488 = vunpack.c.l.b16 %v225
  %v1489 = vunpack.c.l.b16 %v226
  %v1490 = vunpack.c.l.b16 %v227
  %v1491 = vunpack.c.l.b16 %v228
  %v1492 = vunpack.c.l.b16 %v229
  %v1493 = vunpack.c.l.b16 %v230
  %v1494 = vunpack.c.l.b16 %v231
  %v1495 = vunpack.c.l.b16 %v232
  %v1496 = vunpack.c.l.b16 %v233
  %v1497 = vunpack.c.l.b16 %v234
  %v1498 = vunpack.c.l.b16 %v235
  %v1499 = vunpack.c.l.b16 %v236
  %v1500 = vunpack.c.l.b16 %v237
  %v1501 = vunpack.c.l.b16 %v238
  %v1502 = vunpack.c.l.b16 %v239
  %v1503 = vunpack.c.l.b16 %v240
  %v1504 = vunpack.c.l.b16 %v241
  %v1505 = vunpack.c.l.b16 %v242
  %v1506 = vunpack.c.l.b16 %v243
  %v1507 = vunpack.c.l.b16 %v244
  %v1508 = vunpack.c.l.b16 %v245
  %v1509 = vunpack.c.l.b16 %v246
  %v1510 = vunpack.c.l.b16 %v247
  %v1511 = vunpack.c.l.b16 %v248
  %v1512 = vunpack.c.l.b16 %v249
  %v1513 = vunpack.c.l.b16 %v250
  %v1514 = vunpack.c.l.b16 %v251
  %v1515 = vunpack.c.l.b16 %v252
  %v1516 = vunpack.c.l.b16 %v253
  %v1517 = vunpack.c.l.b16 %v254
  %v1518 = vunpack.c.l.b16 %v255
  %v1519 = vunpack.c.l.b16 %v256
  %v1520 = vunpack.c.l.b16 %v257
  %v1521 = vunpack.c.l.b16 %v258
  %v1522 = vunpack.c.l.b16 %v259
  %v1523 = vunpack.c.l.b16 %v260
  %v1524 = vunpack.c.l.b16 %v261
  %v1525 = vunpack.c.l.b16 %v262
  %v1526 = vunpack.c.l.b16 %v263
  %v1527 = vunpack.c.l.b16 %v264
  %v1528 = vunpack.c.l.b16 %v265
  %v1529 = vunpack.c.l.b16 %v266
  %v1530 = vunpack.c.l.b16 %v267
  %v1531 = vunpack.c.l.b16 %v268
  %v1532 = vunpack.c.l.b16 %v269
  %v1533 = vunpack.c.l.b16 %v270
  %v1534 = vunpack.c.l.b16 %v271
  %v1535 = vunpack.c.l.b16 %v272
  %v1536 = vunpack.c.l.b16 %v273
  %v1537 = vunpack.c.l.b16 %v274
  %v1538 = vunpack.c.l.b16 %v275
  %v1539 = vunpack.c.l.b16 %v276
  %v1540 = vunpack.c.l.b16 %v277
  %v1541 = vunpack.c.l.b16 %v278
  %v1542 = vunpack.c.l.b16 %v279
  %v1543 = vunpack.c.l.b16 %v280
  %v1544 = vunpack.c.l.b16 %v281
  %v1545 = vunpack.c.l.b16 %v282
  %v1546 = vunpack.c.l.b16 %v283
  %v1547 = vunpack.c.l.b16 %v284
  %v1548 = vunpack.c.l.b16 %v285
  %v1549 = vunpack.c.l.b16 %v286
  %v1550 = vunpack.c.l.b16 %v287
  %v1551 = vunpack.c.l.b16 %v288
  %v1552 = vunpack.c.l.b16 %v289
  %v1553 = vunpack.c.l.b16 %v290
  %v1554 = vunpack.c.l.b16 %v291
  %v1555 = vunpack.c.l.b16 %v292
  %v1556 = vunpack.c.l.b16 %v293
  %v1557 = vunpack.c.l.b16 %v294
  %v1558 = vunpack.c.l.b16 %v295
  %v1559 = vunpack.c.l.b16 %v296
  %v1560 = vunpack.c.l.b16 %v297
  %v1561 = vunpack.c.l.b16 %v298
  %v1562 = vunpack.c.l.b16 %v299
  %v1563 = vunpack.c.l.b16 %v300
  %v1564 = vunpack.c.l.b16 %v301
  %v1565 = vunpack.c.l.b16 %v302
  %v1566 = vunpack.c.l.b16 %v303
  %v1567 = vunpack.c.l.b16 %v304
  %v1568 = vunpack.c.l.b16 %v305
  %v1569 = vunpack.c.l.b16 %v306
  %v1570 = vunpack.c.l.b16 %v307
  %v1571 = vunpack.c.l.b16 %v308
  %v1572 = vunpack.c.l.b16 %v309
  %v1573 = vunpack.c.l.b16 %v310
  %v1574 = vunpack.c.l.b16 %v311
  %v1575 = vunpack.c.l.b16 %v312
  %v1576 = vunpack.c.l.b16 %v313
  %v1577 = vunpack.c.l.b16 %v314
  %v1578 = vunpack.c.l.b16 %v315
  %v1579 = vunpack.c.l.b16 %v316
  %v1580 = vunpack.c.l.b16 %v317
  %v1581 = vunpack.c.l.b16 %v318
  %v1582 = vunpack.c.l.b16 %v319
  %v1583 = vunpack.c.l.b16 %v320
  %v1584 = vunpack.c.l.b16 %v321
  %v1585 = vunpack.c.l.b16 %v322
  %v1586 = vunpack.c.l.b16 %v323
  %v1587 = vunpack.c.l.b16 %v324
  %v1588 = vunpack.c.l.b16 %v325
  %v1589 = vunpack.c.l.b16 %v326
  %v1590 = vunpack.c.l.b16 %v327
  %v1591 = vunpack.c.l.b16 %v328
  %v1592 = vunpack.c.l.b16 %v329
  %v1593 = vunpack.c.l.b16 %v330
  %v1594 = vunpack.c.l.b16 %v331
  %v1595 = vunpack.c.l.b16 %v332
  %v1596 = vunpack.c.l.b16 %v333
  %v1597 = vunpack.c.l.b16 %v334
  %v1598 = vunpack.c.l.b16 %v335
  %v1599 = vunpack.c.l.b16 %v336
  %v1600 = vunpack.c.l.b16 %v337
  %v1601 = vunpack.c.l.b16 %v338
  %v1602 = vunpack.c.l.b16 %v339
  %v1603 = vunpack.c.l.b16 %v340
  %v1604 = vunpack.c.l.b16 %v341
  %v1605 = vunpack.c.l.b16 %v342
  %v1606 = vpack.c.b16 %v1479, %v1478
  %v1607 = vpack.c.b16 %v1481, %v1480
  %v1608 = vpack.c.b16 %v1483, %v1482
  %v1609 = vpack.c.b16 %v1485, %v1484
  %v1610 = vpack.c.b16 %v1487, %v1486
  %v1611 = vpack.c.b16 %v1489, %v1488
  %v1612 = vpack.c.b16 %v1491, %v1490
  %v1613 = vpack.c.b16 %v1493, %v1492
  %v1614 = vpack.c.b16 %v1495, %v1494
  %v1615 = vpack.c.b16 %v1497, %v1496
  %v1616 = vpack.c.b16 %v1499, %v1498
  %v1617 = vpack.c.b16 %v1501, %v1500
  %v1618 = vpack.c.b16 %v1503, %v1502
  %v1619 = vpack.c.b16 %v1505, %v1504
  %v1620 = vpack.c.b16 %v1507, %v1506
  %v1621 = vpack.c.b16 %v1509, %v1508
  %v1622 = vpack.c.b16 %v1511, %v1510
  %v1623 = vpack.c.b16 %v1513, %v1512
  %v1624 = vpack.c.b16 %v1515, %v1514
  %v1625 = vpack.c.b16 %v1517, %v1516
  %v1626 = vpack.c.b16 %v1519, %v1518
  %v1627 = vpack.c.b16 %v1521, %v1520
  %v1628 = vpack.c.b16 %v1523, %v1522
  %v1629 = vpack.c.b16 %v1525, %v1524
  %v1630 = vpack.c.b16 %v1527, %v1526
  %v1631 = vpack.c.b16 %v1529, %v1528
  %v1632 = vpack.c.b16 %v1531, %v1530
  %v1633 = vpack.c.b16 %v1533, %v1532
  %v1634 = vpack.c.b16 %v1535, %v1534
  %v1635 = vpack.c.b16 %v1537, %v1536
  %v1636 = vpack.c.b16 %v1539, %v1538
  %v1637 = vpack.c.b16 %v1541, %v1540
  %v1638 = vpack.c.b16 %v1543, %v1542
  %v1639 = vpack.c.b16 %v1545, %v1544
  %v1640 = vpack.c.b16 %v1547, %v1546
  %v1641 = vpack.c.b16 %v1549, %v1548
  %v1642 = vpack.c.b16 %v1551, %v1550
  %v1643 = vpack.c.b16 %v1553, %v1552
  %v1644 = vpack.c.b16 %v1555, %v1554
  %v1645 = vpack.c.b16 %v1557, %v1556
  %v1646 = vpack.c.b16 %v1559, %v1558
  %v1647 = vpack.c.b16 %v1561, %v1560
  %v1648 = vpack.c.b16 %v1563, %v1562
  %v1649 = vpack.c.b16 %v1565, %v1564
  %v1650 = vpack.c.b16 %v1567, %v1566
  %v1651 = vpack.c.b16 %v1569, %v1568
  %v1652 = vpack.c.b16 %v1571, %v1570
  %v1653 = vpack.c.b16 %v1573, %v1572
  %v1654 = vpack.c.b16 %v1575, %v1574
  %v1655 = vpack.c.b16 %v1577, %v1576
  %v1656 = vpack.c.b16 %v1579, %v1578
  %v1657 = vpack.c.b16 %v1581, %v1580
  %v1658 = vpack.c.b16 %v1583, %v1582
  %v1659 = vpack.c.b16 %v1585, %v1584
  %v1660 = vpack.c.b16 %v1587, %v1586
  %v1661 = vpack.c.b16 %v1589, %v1588
  %v1662 = vpack.c.b16 %v1591, %v1590
  %v1663 = vpack.c.b16 %v1593, %v1592
  %v1664 = vpack.c.b16 %v1595, %v1594
  %v1665 = vpack.c.b16 %v1597, %v1596
  %v1666 = vpack.c.b16 %v1599, %v1598
  %v1667 = vpack.c.b16 %v1601, %v1600
  %v1668 = vpack.c.b16 %v1603, %v1602
  %v1669 = vpack.c.b16 %v1605, %v1604
  %1734 = vmatprep.subr.bf16.mxu0 0
  %1735 = vmatpush1.bf16.msra.mxu0 %v1606
  %1736 = vmatprep.subr.bf16.mxu0 0
  %1737 = vmatpush1.bf16.msra.mxu0 %v1607
  %1738 = vmatprep.subr.bf16.mxu0 0
  %1739 = vmatpush1.bf16.msra.mxu0 %v1608
  %1740 = vmatprep.subr.bf16.mxu0 0
  %1741 = vmatpush1.bf16.msra.mxu0 %v1609
  %1742 = vmatprep.subr.bf16.mxu0 0
  %1743 = vmatpush1.bf16.msra.mxu0 %v1610
  %1744 = vmatprep.subr.bf16.mxu0 0
  %1745 = vmatpush1.bf16.msra.mxu0 %v1611
  %1746 = vmatprep.subr.bf16.mxu0 0
  %1747 = vmatpush1.bf16.msra.mxu0 %v1612
  %1748 = vmatprep.subr.bf16.mxu0 0
  %1749 = vmatpush1.bf16.msra.mxu0 %v1613
  %1750 = vmatprep.subr.bf16.mxu0 0
  %1751 = vmatpush1.bf16.msra.mxu0 %v1614
  %1752 = vmatprep.subr.bf16.mxu0 0
  %1753 = vmatpush1.bf16.msra.mxu0 %v1615
  %1754 = vmatprep.subr.bf16.mxu0 0
  %1755 = vmatpush1.bf16.msra.mxu0 %v1616
  %1756 = vmatprep.subr.bf16.mxu0 0
  %1757 = vmatpush1.bf16.msra.mxu0 %v1617
  %1758 = vmatprep.subr.bf16.mxu0 0
  %1759 = vmatpush1.bf16.msra.mxu0 %v1618
  %1760 = vmatprep.subr.bf16.mxu0 0
  %1761 = vmatpush1.bf16.msra.mxu0 %v1619
  %1762 = vmatprep.subr.bf16.mxu0 0
  %1763 = vmatpush1.bf16.msra.mxu0 %v1620
  %1764 = vmatprep.subr.bf16.mxu0 0
  %1765 = vmatpush1.bf16.msra.mxu0 %v1621
  %1766 = vmatprep.mubr.bf16.mxu0 %v951
  %1767 = vmatmul.mubr.bf16.gmra.mrb[0].mxu0 %v950
  %v1768 = vpop.f32.mrb[0].mxu0
  %v1769 = vadd.f32 %v348, %v1768
  %v1770 = vpop.f32.mrb[0].mxu0
  %v1771 = vpop.f32.mrb[0].mxu0
  %v1772 = vadd.f32 %v348, %v1771
  %v1773 = vpop.f32.mrb[0].mxu0
  %1774 = vmatprep.mubr.bf16.mxu0 %v959
  %1775 = vmatmul.mubr.bf16.gmra.mrb[0].mxu0 %v958
  %v1776 = vpop.f32.mrb[0].mxu0
  %v1777 = vadd.f32 %v348, %v1776
  %v1778 = vpop.f32.mrb[0].mxu0
  %v1779 = vpop.f32.mrb[0].mxu0
  %v1780 = vadd.f32 %v348, %v1779
  %v1781 = vpop.f32.mrb[0].mxu0
  %1782 = vmatprep.mubr.bf16.mxu0 %v967
  %1783 = vmatmul.mubr.bf16.gmra.mrb[0].mxu0 %v966
  %v1784 = vpop.f32.mrb[0].mxu0
  %v1785 = vadd.f32 %v348, %v1784
  %v1786 = vpop.f32.mrb[0].mxu0
  %v1787 = vpop.f32.mrb[0].mxu0
  %v1788 = vadd.f32 %v348, %v1787
  %v1789 = vpop.f32.mrb[0].mxu0
  %1790 = vmatprep.mubr.bf16.mxu0 %v975
  %1791 = vmatmul.mubr.bf16.gmra.mrb[0].mxu0 %v974
  %v1792 = vpop.f32.mrb[0].mxu0
  %v1793 = vadd.f32 %v348, %v1792
  %v1794 = vpop.f32.mrb[0].mxu0
  %v1795 = vpop.f32.mrb[0].mxu0
  %v1796 = vadd.f32 %v348, %v1795
  %v1797 = vpop.f32.mrb[0].mxu0
  %1798 = vmatprep.mubr.bf16.mxu0 %v983
  %1799 = vmatmul.mubr.bf16.gmra.mrb[0].mxu0 %v982
  %v1800 = vpop.f32.mrb[0].mxu0
  %v1801 = vadd.f32 %v348, %v1800
  %v1802 = vpop.f32.mrb[0].mxu0
  %v1803 = vpop.f32.mrb[0].mxu0
  %v1804 = vadd.f32 %v348, %v1803
  %v1805 = vpop.f32.mrb[0].mxu0
  %1806 = vmatprep.mubr.bf16.mxu0 %v991
  %1807 = vmatmul.mubr.bf16.gmra.mrb[0].mxu0 %v990
  %v1808 = vpop.f32.mrb[0].mxu0
  %v1809 = vadd.f32 %v348, %v1808
  %v1810 = vpop.f32.mrb[0].mxu0
  %v1811 = vpop.f32.mrb[0].mxu0
  %v1812 = vadd.f32 %v348, %v1811
  %v1813 = vpop.f32.mrb[0].mxu0
  %1814 = vmatprep.mubr.bf16.mxu0 %v999
  %1815 = vmatmul.mubr.bf16.gmra.mrb[0].mxu0 %v998
  %v1816 = vpop.f32.mrb[0].mxu0
  %v1817 = vadd.f32 %v348, %v1816
  %v1818 = vpop.f32.mrb[0].mxu0
  %v1819 = vpop.f32.mrb[0].mxu0
  %v1820 = vadd.f32 %v348, %v1819
  %v1821 = vpop.f32.mrb[0].mxu0
  %1822 = vmatprep.mubr.bf16.mxu0 %v1007
  %1823 = vmatmul.mubr.bf16.gmra.mrb[0].mxu0 %v1006
  %v1824 = vpop.f32.mrb[0].mxu0
  %v1825 = vadd.f32 %v348, %v1824
  %v1826 = vpop.f32.mrb[0].mxu0
  %v1827 = vpop.f32.mrb[0].mxu0
  %v1828 = vadd.f32 %v348, %v1827
  %v1829 = vpop.f32.mrb[0].mxu0
  %1830 = vmatprep.mubr.bf16.mxu0 %v1015
  %1831 = vmatmul.mubr.bf16.gmra.mrb[0].mxu0 %v1014
  %v1832 = vpop.f32.mrb[0].mxu0
  %v1833 = vadd.f32 %v348, %v1832
  %v1834 = vpop.f32.mrb[0].mxu0
  %v1835 = vpop.f32.mrb[0].mxu0
  %v1836 = vadd.f32 %v348, %v1835
  %v1837 = vpop.f32.mrb[0].mxu0
  %1838 = vmatprep.mubr.bf16.mxu0 %v1023
  %1839 = vmatmul.mubr.bf16.gmra.mrb[0].mxu0 %v1022
  %v1840 = vpop.f32.mrb[0].mxu0
  %v1841 = vadd.f32 %v348, %v1840
  %v1842 = vpop.f32.mrb[0].mxu0
  %v1843 = vpop.f32.mrb[0].mxu0
  %v1844 = vadd.f32 %v348, %v1843
  %v1845 = vpop.f32.mrb[0].mxu0
  %1846 = vmatprep.mubr.bf16.mxu0 %v1031
  %1847 = vmatmul.mubr.bf16.gmra.mrb[0].mxu0 %v1030
  %v1848 = vpop.f32.mrb[0].mxu0
  %v1849 = vadd.f32 %v348, %v1848
  %v1850 = vpop.f32.mrb[0].mxu0
  %v1851 = vpop.f32.mrb[0].mxu0
  %v1852 = vadd.f32 %v348, %v1851
  %v1853 = vpop.f32.mrb[0].mxu0
  %1854 = vmatprep.mubr.bf16.mxu0 %v1039
  %1855 = vmatmul.mubr.bf16.gmra.mrb[0].mxu0 %v1038
  %v1856 = vpop.f32.mrb[0].mxu0
  %v1857 = vadd.f32 %v348, %v1856
  %v1858 = vpop.f32.mrb[0].mxu0
  %v1859 = vpop.f32.mrb[0].mxu0
  %v1860 = vadd.f32 %v348, %v1859
  %v1861 = vpop.f32.mrb[0].mxu0
  %1862 = vmatprep.mubr.bf16.mxu0 %v1047
  %1863 = vmatmul.mubr.bf16.gmra.mrb[0].mxu0 %v1046
  %v1864 = vpop.f32.mrb[0].mxu0
  %v1865 = vadd.f32 %v348, %v1864
  %v1866 = vpop.f32.mrb[0].mxu0
  %v1867 = vpop.f32.mrb[0].mxu0
  %v1868 = vadd.f32 %v348, %v1867
  %v1869 = vpop.f32.mrb[0].mxu0
  %1870 = vmatprep.mubr.bf16.mxu0 %v1055
  %1871 = vmatmul.mubr.bf16.gmra.mrb[0].mxu0 %v1054
  %v1872 = vpop.f32.mrb[0].mxu0
  %v1873 = vadd.f32 %v348, %v1872
  %v1874 = vpop.f32.mrb[0].mxu0
  %v1875 = vpop.f32.mrb[0].mxu0
  %v1876 = vadd.f32 %v348, %v1875
  %v1877 = vpop.f32.mrb[0].mxu0
  %1878 = vmatprep.mubr.bf16.mxu0 %v1063
  %1879 = vmatmul.mubr.bf16.gmra.mrb[0].mxu0 %v1062
  %v1880 = vpop.f32.mrb[0].mxu0
  %v1881 = vadd.f32 %v348, %v1880
  %v1882 = vpop.f32.mrb[0].mxu0
  %v1883 = vpop.f32.mrb[0].mxu0
  %v1884 = vadd.f32 %v348, %v1883
  %v1885 = vpop.f32.mrb[0].mxu0
  %1886 = vmatprep.mubr.bf16.mxu0 %v1071
  %1887 = vmatmul.mubr.bf16.gmra.mrb[0].mxu0 %v1070
  %v1888 = vpop.f32.mrb[0].mxu0
  %v1889 = vadd.f32 %v348, %v1888
  %v1890 = vpop.f32.mrb[0].mxu0
  %v1891 = vpop.f32.mrb[0].mxu0
  %v1892 = vadd.f32 %v348, %v1891
  %v1893 = vpop.f32.mrb[0].mxu0
  %1894 = vmatprep.mubr.bf16.mxu0 %v1079
  %1895 = vmatmul.mubr.bf16.gmra.mrb[0].mxu0 %v1078
  %v1896 = vpop.f32.mrb[0].mxu0
  %v1897 = vadd.f32 %v348, %v1896
  %v1898 = vpop.f32.mrb[0].mxu0
  %v1899 = vpop.f32.mrb[0].mxu0
  %v1900 = vadd.f32 %v348, %v1899
  %v1901 = vpop.f32.mrb[0].mxu0
  %1902 = vmatprep.mubr.bf16.mxu0 %v1087
  %1903 = vmatmul.mubr.bf16.gmra.mrb[0].mxu0 %v1086
  %v1904 = vpop.f32.mrb[0].mxu0
  %v1905 = vadd.f32 %v348, %v1904
  %v1906 = vpop.f32.mrb[0].mxu0
  %v1907 = vpop.f32.mrb[0].mxu0
  %v1908 = vadd.f32 %v348, %v1907
  %v1909 = vpop.f32.mrb[0].mxu0
  %1910 = vmatprep.mubr.bf16.mxu0 %v1095
  %1911 = vmatmul.mubr.bf16.gmra.mrb[0].mxu0 %v1094
  %v1912 = vpop.f32.mrb[0].mxu0
  %v1913 = vadd.f32 %v348, %v1912
  %v1914 = vpop.f32.mrb[0].mxu0
  %v1915 = vpop.f32.mrb[0].mxu0
  %v1916 = vadd.f32 %v348, %v1915
  %v1917 = vpop.f32.mrb[0].mxu0
  %1918 = vmatprep.mubr.bf16.mxu0 %v1103
  %1919 = vmatmul.mubr.bf16.gmra.mrb[0].mxu0 %v1102
  %v1920 = vpop.f32.mrb[0].mxu0
  %v1921 = vadd.f32 %v348, %v1920
  %v1922 = vpop.f32.mrb[0].mxu0
  %v1923 = vpop.f32.mrb[0].mxu0
  %v1924 = vadd.f32 %v348, %v1923
  %v1925 = vpop.f32.mrb[0].mxu0
  %1926 = vmatprep.mubr.bf16.mxu0 %v1111
  %1927 = vmatmul.mubr.bf16.gmra.mrb[0].mxu0 %v1110
  %v1928 = vpop.f32.mrb[0].mxu0
  %v1929 = vadd.f32 %v348, %v1928
  %v1930 = vpop.f32.mrb[0].mxu0
  %v1931 = vpop.f32.mrb[0].mxu0
  %v1932 = vadd.f32 %v348, %v1931
  %v1933 = vpop.f32.mrb[0].mxu0
  %1934 = vmatprep.mubr.bf16.mxu0 %v1119
  %1935 = vmatmul.mubr.bf16.gmra.mrb[0].mxu0 %v1118
  %v1936 = vpop.f32.mrb[0].mxu0
  %v1937 = vadd.f32 %v348, %v1936
  %v1938 = vpop.f32.mrb[0].mxu0
  %v1939 = vpop.f32.mrb[0].mxu0
  %v1940 = vadd.f32 %v348, %v1939
  %v1941 = vpop.f32.mrb[0].mxu0
  %1942 = vmatprep.mubr.bf16.mxu0 %v1127
  %1943 = vmatmul.mubr.bf16.gmra.mrb[0].mxu0 %v1126
  %v1944 = vpop.f32.mrb[0].mxu0
  %v1945 = vadd.f32 %v348, %v1944
  %v1946 = vpop.f32.mrb[0].mxu0
  %v1947 = vpop.f32.mrb[0].mxu0
  %v1948 = vadd.f32 %v348, %v1947
  %v1949 = vpop.f32.mrb[0].mxu0
  %1950 = vmatprep.mubr.bf16.mxu0 %v1135
  %1951 = vmatmul.mubr.bf16.gmra.mrb[0].mxu0 %v1134
  %v1952 = vpop.f32.mrb[0].mxu0
  %v1953 = vadd.f32 %v348, %v1952
  %v1954 = vpop.f32.mrb[0].mxu0
  %v1955 = vpop.f32.mrb[0].mxu0
  %v1956 = vadd.f32 %v348, %v1955
  %v1957 = vpop.f32.mrb[0].mxu0
  %1958 = vmatprep.mubr.bf16.mxu0 %v1143
  %1959 = vmatmul.mubr.bf16.gmra.mrb[0].mxu0 %v1142
  %v1960 = vpop.f32.mrb[0].mxu0
  %v1961 = vadd.f32 %v348, %v1960
  %v1962 = vpop.f32.mrb[0].mxu0
  %v1963 = vpop.f32.mrb[0].mxu0
  %v1964 = vadd.f32 %v348, %v1963
  %v1965 = vpop.f32.mrb[0].mxu0
  %1966 = vdwg.mxu0
  %1967 = vmatprep.subr.bf16.mxu0 0
  %1968 = vmatpush1.bf16.msra.mxu0 %v1622
  %1969 = vmatprep.subr.bf16.mxu0 0
  %1970 = vmatpush1.bf16.msra.mxu0 %v1623
  %1971 = vmatprep.subr.bf16.mxu0 0
  %1972 = vmatpush1.bf16.msra.mxu0 %v1624
  %1973 = vmatprep.subr.bf16.mxu0 0
  %1974 = vmatpush1.bf16.msra.mxu0 %v1625
  %1975 = vmatprep.subr.bf16.mxu0 0
  %1976 = vmatpush1.bf16.msra.mxu0 %v1626
  %1977 = vmatprep.subr.bf16.mxu0 0
  %1978 = vmatpush1.bf16.msra.mxu0 %v1627
  %1979 = vmatprep.subr.bf16.mxu0 0
  %1980 = vmatpush1.bf16.msra.mxu0 %v1628
  %1981 = vmatprep.subr.bf16.mxu0 0
  %1982 = vmatpush1.bf16.msra.mxu0 %v1629
  %1983 = vmatprep.subr.bf16.mxu0 0
  %1984 = vmatpush1.bf16.msra.mxu0 %v1630
  %1985 = vmatprep.subr.bf16.mxu0 0
  %1986 = vmatpush1.bf16.msra.mxu0 %v1631
  %1987 = vmatprep.subr.bf16.mxu0 0
  %1988 = vmatpush1.bf16.msra.mxu0 %v1632
  %1989 = vmatprep.subr.bf16.mxu0 0
  %1990 = vmatpush1.bf16.msra.mxu0 %v1633
  %1991 = vmatprep.subr.bf16.mxu0 0
  %1992 = vmatpush1.bf16.msra.mxu0 %v1634
  %1993 = vmatprep.subr.bf16.mxu0 0
  %1994 = vmatpush1.bf16.msra.mxu0 %v1635
  %1995 = vmatprep.subr.bf16.mxu0 0
  %1996 = vmatpush1.bf16.msra.mxu0 %v1636
  %1997 = vmatprep.subr.bf16.mxu0 0
  %1998 = vmatpush1.bf16.msra.mxu0 %v1637
  %1999 = vmatprep.mubr.bf16.mxu0 %v953
  %2000 = vmatmul.mubr.bf16.gmra.mrb[0].mxu0 %v952
  %v2001 = vpop.f32.mrb[0].mxu0
  %v2002 = vadd.f32 %v1769, %v2001
  %v2003 = vpop.f32.mrb[0].mxu0
  %v2004 = vpop.f32.mrb[0].mxu0
  %v2005 = vadd.f32 %v1772, %v2004
  %v2006 = vpop.f32.mrb[0].mxu0
  %2007 = vmatprep.mubr.bf16.mxu0 %v961
  %2008 = vmatmul.mubr.bf16.gmra.mrb[0].mxu0 %v960
  %v2009 = vpop.f32.mrb[0].mxu0
  %v2010 = vadd.f32 %v1777, %v2009
  %v2011 = vpop.f32.mrb[0].mxu0
  %v2012 = vpop.f32.mrb[0].mxu0
  %v2013 = vadd.f32 %v1780, %v2012
  %v2014 = vpop.f32.mrb[0].mxu0
  %2015 = vmatprep.mubr.bf16.mxu0 %v969
  %2016 = vmatmul.mubr.bf16.gmra.mrb[0].mxu0 %v968
  %v2017 = vpop.f32.mrb[0].mxu0
  %v2018 = vadd.f32 %v1785, %v2017
  %v2019 = vpop.f32.mrb[0].mxu0
  %v2020 = vpop.f32.mrb[0].mxu0
  %v2021 = vadd.f32 %v1788, %v2020
  %v2022 = vpop.f32.mrb[0].mxu0
  %2023 = vmatprep.mubr.bf16.mxu0 %v977
  %2024 = vmatmul.mubr.bf16.gmra.mrb[0].mxu0 %v976
  %v2025 = vpop.f32.mrb[0].mxu0
  %v2026 = vadd.f32 %v1793, %v2025
  %v2027 = vpop.f32.mrb[0].mxu0
  %v2028 = vpop.f32.mrb[0].mxu0
  %v2029 = vadd.f32 %v1796, %v2028
  %v2030 = vpop.f32.mrb[0].mxu0
  %2031 = vmatprep.mubr.bf16.mxu0 %v985
  %2032 = vmatmul.mubr.bf16.gmra.mrb[0].mxu0 %v984
  %v2033 = vpop.f32.mrb[0].mxu0
  %v2034 = vadd.f32 %v1801, %v2033
  %v2035 = vpop.f32.mrb[0].mxu0
  %v2036 = vpop.f32.mrb[0].mxu0
  %v2037 = vadd.f32 %v1804, %v2036
  %v2038 = vpop.f32.mrb[0].mxu0
  %2039 = vmatprep.mubr.bf16.mxu0 %v993
  %2040 = vmatmul.mubr.bf16.gmra.mrb[0].mxu0 %v992
  %v2041 = vpop.f32.mrb[0].mxu0
  %v2042 = vadd.f32 %v1809, %v2041
  %v2043 = vpop.f32.mrb[0].mxu0
  %v2044 = vpop.f32.mrb[0].mxu0
  %v2045 = vadd.f32 %v1812, %v2044
  %v2046 = vpop.f32.mrb[0].mxu0
  %2047 = vmatprep.mubr.bf16.mxu0 %v1001
  %2048 = vmatmul.mubr.bf16.gmra.mrb[0].mxu0 %v1000
  %v2049 = vpop.f32.mrb[0].mxu0
  %v2050 = vadd.f32 %v1817, %v2049
  %v2051 = vpop.f32.mrb[0].mxu0
  %v2052 = vpop.f32.mrb[0].mxu0
  %v2053 = vadd.f32 %v1820, %v2052
  %v2054 = vpop.f32.mrb[0].mxu0
  %2055 = vmatprep.mubr.bf16.mxu0 %v1009
  %2056 = vmatmul.mubr.bf16.gmra.mrb[0].mxu0 %v1008
  %v2057 = vpop.f32.mrb[0].mxu0
  %v2058 = vadd.f32 %v1825, %v2057
  %v2059 = vpop.f32.mrb[0].mxu0
  %v2060 = vpop.f32.mrb[0].mxu0
  %v2061 = vadd.f32 %v1828, %v2060
  %v2062 = vpop.f32.mrb[0].mxu0
  %2063 = vmatprep.mubr.bf16.mxu0 %v1017
  %2064 = vmatmul.mubr.bf16.gmra.mrb[0].mxu0 %v1016
  %v2065 = vpop.f32.mrb[0].mxu0
  %v2066 = vadd.f32 %v1833, %v2065
  %v2067 = vpop.f32.mrb[0].mxu0
  %v2068 = vpop.f32.mrb[0].mxu0
  %v2069 = vadd.f32 %v1836, %v2068
  %v2070 = vpop.f32.mrb[0].mxu0
  %2071 = vmatprep.mubr.bf16.mxu0 %v1025
  %2072 = vmatmul.mubr.bf16.gmra.mrb[0].mxu0 %v1024
  %v2073 = vpop.f32.mrb[0].mxu0
  %v2074 = vadd.f32 %v1841, %v2073
  %v2075 = vpop.f32.mrb[0].mxu0
  %v2076 = vpop.f32.mrb[0].mxu0
  %v2077 = vadd.f32 %v1844, %v2076
  %v2078 = vpop.f32.mrb[0].mxu0
  %2079 = vmatprep.mubr.bf16.mxu0 %v1033
  %2080 = vmatmul.mubr.bf16.gmra.mrb[0].mxu0 %v1032
  %v2081 = vpop.f32.mrb[0].mxu0
  %v2082 = vadd.f32 %v1849, %v2081
  %v2083 = vpop.f32.mrb[0].mxu0
  %v2084 = vpop.f32.mrb[0].mxu0
  %v2085 = vadd.f32 %v1852, %v2084
  %v2086 = vpop.f32.mrb[0].mxu0
  %2087 = vmatprep.mubr.bf16.mxu0 %v1041
  %2088 = vmatmul.mubr.bf16.gmra.mrb[0].mxu0 %v1040
  %v2089 = vpop.f32.mrb[0].mxu0
  %v2090 = vadd.f32 %v1857, %v2089
  %v2091 = vpop.f32.mrb[0].mxu0
  %v2092 = vpop.f32.mrb[0].mxu0
  %v2093 = vadd.f32 %v1860, %v2092
  %v2094 = vpop.f32.mrb[0].mxu0
  %2095 = vmatprep.mubr.bf16.mxu0 %v1049
  %2096 = vmatmul.mubr.bf16.gmra.mrb[0].mxu0 %v1048
  %v2097 = vpop.f32.mrb[0].mxu0
  %v2098 = vadd.f32 %v1865, %v2097
  %v2099 = vpop.f32.mrb[0].mxu0
  %v2100 = vpop.f32.mrb[0].mxu0
  %v2101 = vadd.f32 %v1868, %v2100
  %v2102 = vpop.f32.mrb[0].mxu0
  %2103 = vmatprep.mubr.bf16.mxu0 %v1057
  %2104 = vmatmul.mubr.bf16.gmra.mrb[0].mxu0 %v1056
  %v2105 = vpop.f32.mrb[0].mxu0
  %v2106 = vadd.f32 %v1873, %v2105
  %v2107 = vpop.f32.mrb[0].mxu0
  %v2108 = vpop.f32.mrb[0].mxu0
  %v2109 = vadd.f32 %v1876, %v2108
  %v2110 = vpop.f32.mrb[0].mxu0
  %2111 = vmatprep.mubr.bf16.mxu0 %v1065
  %2112 = vmatmul.mubr.bf16.gmra.mrb[0].mxu0 %v1064
  %v2113 = vpop.f32.mrb[0].mxu0
  %v2114 = vadd.f32 %v1881, %v2113
  %v2115 = vpop.f32.mrb[0].mxu0
  %v2116 = vpop.f32.mrb[0].mxu0
  %v2117 = vadd.f32 %v1884, %v2116
  %v2118 = vpop.f32.mrb[0].mxu0
  %2119 = vmatprep.mubr.bf16.mxu0 %v1073
  %2120 = vmatmul.mubr.bf16.gmra.mrb[0].mxu0 %v1072
  %v2121 = vpop.f32.mrb[0].mxu0
  %v2122 = vadd.f32 %v1889, %v2121
  %v2123 = vpop.f32.mrb[0].mxu0
  %v2124 = vpop.f32.mrb[0].mxu0
  %v2125 = vadd.f32 %v1892, %v2124
  %v2126 = vpop.f32.mrb[0].mxu0
  %2127 = vmatprep.mubr.bf16.mxu0 %v1081
  %2128 = vmatmul.mubr.bf16.gmra.mrb[0].mxu0 %v1080
  %v2129 = vpop.f32.mrb[0].mxu0
  %v2130 = vadd.f32 %v1897, %v2129
  %v2131 = vpop.f32.mrb[0].mxu0
  %v2132 = vpop.f32.mrb[0].mxu0
  %v2133 = vadd.f32 %v1900, %v2132
  %v2134 = vpop.f32.mrb[0].mxu0
  %2135 = vmatprep.mubr.bf16.mxu0 %v1089
  %2136 = vmatmul.mubr.bf16.gmra.mrb[0].mxu0 %v1088
  %v2137 = vpop.f32.mrb[0].mxu0
  %v2138 = vadd.f32 %v1905, %v2137
  %v2139 = vpop.f32.mrb[0].mxu0
  %v2140 = vpop.f32.mrb[0].mxu0
  %v2141 = vadd.f32 %v1908, %v2140
  %v2142 = vpop.f32.mrb[0].mxu0
  %2143 = vmatprep.mubr.bf16.mxu0 %v1097
  %2144 = vmatmul.mubr.bf16.gmra.mrb[0].mxu0 %v1096
  %v2145 = vpop.f32.mrb[0].mxu0
  %v2146 = vadd.f32 %v1913, %v2145
  %v2147 = vpop.f32.mrb[0].mxu0
  %v2148 = vpop.f32.mrb[0].mxu0
  %v2149 = vadd.f32 %v1916, %v2148
  %v2150 = vpop.f32.mrb[0].mxu0
  %2151 = vmatprep.mubr.bf16.mxu0 %v1105
  %2152 = vmatmul.mubr.bf16.gmra.mrb[0].mxu0 %v1104
  %v2153 = vpop.f32.mrb[0].mxu0
  %v2154 = vadd.f32 %v1921, %v2153
  %v2155 = vpop.f32.mrb[0].mxu0
  %v2156 = vpop.f32.mrb[0].mxu0
  %v2157 = vadd.f32 %v1924, %v2156
  %v2158 = vpop.f32.mrb[0].mxu0
  %2159 = vmatprep.mubr.bf16.mxu0 %v1113
  %2160 = vmatmul.mubr.bf16.gmra.mrb[0].mxu0 %v1112
  %v2161 = vpop.f32.mrb[0].mxu0
  %v2162 = vadd.f32 %v1929, %v2161
  %v2163 = vpop.f32.mrb[0].mxu0
  %v2164 = vpop.f32.mrb[0].mxu0
  %v2165 = vadd.f32 %v1932, %v2164
  %v2166 = vpop.f32.mrb[0].mxu0
  %2167 = vmatprep.mubr.bf16.mxu0 %v1121
  %2168 = vmatmul.mubr.bf16.gmra.mrb[0].mxu0 %v1120
  %v2169 = vpop.f32.mrb[0].mxu0
  %v2170 = vadd.f32 %v1937, %v2169
  %v2171 = vpop.f32.mrb[0].mxu0
  %v2172 = vpop.f32.mrb[0].mxu0
  %v2173 = vadd.f32 %v1940, %v2172
  %v2174 = vpop.f32.mrb[0].mxu0
  %2175 = vmatprep.mubr.bf16.mxu0 %v1129
  %2176 = vmatmul.mubr.bf16.gmra.mrb[0].mxu0 %v1128
  %v2177 = vpop.f32.mrb[0].mxu0
  %v2178 = vadd.f32 %v1945, %v2177
  %v2179 = vpop.f32.mrb[0].mxu0
  %v2180 = vpop.f32.mrb[0].mxu0
  %v2181 = vadd.f32 %v1948, %v2180
  %v2182 = vpop.f32.mrb[0].mxu0
  %2183 = vmatprep.mubr.bf16.mxu0 %v1137
  %2184 = vmatmul.mubr.bf16.gmra.mrb[0].mxu0 %v1136
  %v2185 = vpop.f32.mrb[0].mxu0
  %v2186 = vadd.f32 %v1953, %v2185
  %v2187 = vpop.f32.mrb[0].mxu0
  %v2188 = vpop.f32.mrb[0].mxu0
  %v2189 = vadd.f32 %v1956, %v2188
  %v2190 = vpop.f32.mrb[0].mxu0
  %2191 = vmatprep.mubr.bf16.mxu0 %v1145
  %2192 = vmatmul.mubr.bf16.gmra.mrb[0].mxu0 %v1144
  %v2193 = vpop.f32.mrb[0].mxu0
  %v2194 = vadd.f32 %v1961, %v2193
  %v2195 = vpop.f32.mrb[0].mxu0
  %v2196 = vpop.f32.mrb[0].mxu0
  %v2197 = vadd.f32 %v1964, %v2196
  %v2198 = vpop.f32.mrb[0].mxu0
  %2199 = vdwg.mxu0
  %2200 = vmatprep.subr.bf16.mxu0 0
  %2201 = vmatpush1.bf16.msra.mxu0 %v1638
  %2202 = vmatprep.subr.bf16.mxu0 0
  %2203 = vmatpush1.bf16.msra.mxu0 %v1639
  %2204 = vmatprep.subr.bf16.mxu0 0
  %2205 = vmatpush1.bf16.msra.mxu0 %v1640
  %2206 = vmatprep.subr.bf16.mxu0 0
  %2207 = vmatpush1.bf16.msra.mxu0 %v1641
  %2208 = vmatprep.subr.bf16.mxu0 0
  %2209 = vmatpush1.bf16.msra.mxu0 %v1642
  %2210 = vmatprep.subr.bf16.mxu0 0
  %2211 = vmatpush1.bf16.msra.mxu0 %v1643
  %2212 = vmatprep.subr.bf16.mxu0 0
  %2213 = vmatpush1.bf16.msra.mxu0 %v1644
  %2214 = vmatprep.subr.bf16.mxu0 0
  %2215 = vmatpush1.bf16.msra.mxu0 %v1645
  %2216 = vmatprep.subr.bf16.mxu0 0
  %2217 = vmatpush1.bf16.msra.mxu0 %v1646
  %2218 = vmatprep.subr.bf16.mxu0 0
  %2219 = vmatpush1.bf16.msra.mxu0 %v1647
  %2220 = vmatprep.subr.bf16.mxu0 0
  %2221 = vmatpush1.bf16.msra.mxu0 %v1648
  %2222 = vmatprep.subr.bf16.mxu0 0
  %2223 = vmatpush1.bf16.msra.mxu0 %v1649
  %2224 = vmatprep.subr.bf16.mxu0 0
  %2225 = vmatpush1.bf16.msra.mxu0 %v1650
  %2226 = vmatprep.subr.bf16.mxu0 0
  %2227 = vmatpush1.bf16.msra.mxu0 %v1651
  %2228 = vmatprep.subr.bf16.mxu0 0
  %2229 = vmatpush1.bf16.msra.mxu0 %v1652
  %2230 = vmatprep.subr.bf16.mxu0 0
  %2231 = vmatpush1.bf16.msra.mxu0 %v1653
  %2232 = vmatprep.mubr.bf16.mxu0 %v955
  %2233 = vmatmul.mubr.bf16.gmra.mrb[0].mxu0 %v954
  %v2234 = vpop.f32.mrb[0].mxu0
  %v2235 = vadd.f32 %v2002, %v2234
  %v2236 = vpop.f32.mrb[0].mxu0
  %v2237 = vpop.f32.mrb[0].mxu0
  %v2238 = vadd.f32 %v2005, %v2237
  %v2239 = vpop.f32.mrb[0].mxu0
  %2240 = vmatprep.mubr.bf16.mxu0 %v963
  %2241 = vmatmul.mubr.bf16.gmra.mrb[0].mxu0 %v962
  %v2242 = vpop.f32.mrb[0].mxu0
  %v2243 = vadd.f32 %v2010, %v2242
  %v2244 = vpop.f32.mrb[0].mxu0
  %v2245 = vpop.f32.mrb[0].mxu0
  %v2246 = vadd.f32 %v2013, %v2245
  %v2247 = vpop.f32.mrb[0].mxu0
  %2248 = vmatprep.mubr.bf16.mxu0 %v971
  %2249 = vmatmul.mubr.bf16.gmra.mrb[0].mxu0 %v970
  %v2250 = vpop.f32.mrb[0].mxu0
  %v2251 = vadd.f32 %v2018, %v2250
  %v2252 = vpop.f32.mrb[0].mxu0
  %v2253 = vpop.f32.mrb[0].mxu0
  %v2254 = vadd.f32 %v2021, %v2253
  %v2255 = vpop.f32.mrb[0].mxu0
  %2256 = vmatprep.mubr.bf16.mxu0 %v979
  %2257 = vmatmul.mubr.bf16.gmra.mrb[0].mxu0 %v978
  %v2258 = vpop.f32.mrb[0].mxu0
  %v2259 = vadd.f32 %v2026, %v2258
  %v2260 = vpop.f32.mrb[0].mxu0
  %v2261 = vpop.f32.mrb[0].mxu0
  %v2262 = vadd.f32 %v2029, %v2261
  %v2263 = vpop.f32.mrb[0].mxu0
  %2264 = vmatprep.mubr.bf16.mxu0 %v987
  %2265 = vmatmul.mubr.bf16.gmra.mrb[0].mxu0 %v986
  %v2266 = vpop.f32.mrb[0].mxu0
  %v2267 = vadd.f32 %v2034, %v2266
  %v2268 = vpop.f32.mrb[0].mxu0
  %v2269 = vpop.f32.mrb[0].mxu0
  %v2270 = vadd.f32 %v2037, %v2269
  %v2271 = vpop.f32.mrb[0].mxu0
  %2272 = vmatprep.mubr.bf16.mxu0 %v995
  %2273 = vmatmul.mubr.bf16.gmra.mrb[0].mxu0 %v994
  %v2274 = vpop.f32.mrb[0].mxu0
  %v2275 = vadd.f32 %v2042, %v2274
  %v2276 = vpop.f32.mrb[0].mxu0
  %v2277 = vpop.f32.mrb[0].mxu0
  %v2278 = vadd.f32 %v2045, %v2277
  %v2279 = vpop.f32.mrb[0].mxu0
  %2280 = vmatprep.mubr.bf16.mxu0 %v1003
  %2281 = vmatmul.mubr.bf16.gmra.mrb[0].mxu0 %v1002
  %v2282 = vpop.f32.mrb[0].mxu0
  %v2283 = vadd.f32 %v2050, %v2282
  %v2284 = vpop.f32.mrb[0].mxu0
  %v2285 = vpop.f32.mrb[0].mxu0
  %v2286 = vadd.f32 %v2053, %v2285
  %v2287 = vpop.f32.mrb[0].mxu0
  %2288 = vmatprep.mubr.bf16.mxu0 %v1011
  %2289 = vmatmul.mubr.bf16.gmra.mrb[0].mxu0 %v1010
  %v2290 = vpop.f32.mrb[0].mxu0
  %v2291 = vadd.f32 %v2058, %v2290
  %v2292 = vpop.f32.mrb[0].mxu0
  %v2293 = vpop.f32.mrb[0].mxu0
  %v2294 = vadd.f32 %v2061, %v2293
  %v2295 = vpop.f32.mrb[0].mxu0
  %2296 = vmatprep.mubr.bf16.mxu0 %v1019
  %2297 = vmatmul.mubr.bf16.gmra.mrb[0].mxu0 %v1018
  %v2298 = vpop.f32.mrb[0].mxu0
  %v2299 = vadd.f32 %v2066, %v2298
  %v2300 = vpop.f32.mrb[0].mxu0
  %v2301 = vpop.f32.mrb[0].mxu0
  %v2302 = vadd.f32 %v2069, %v2301
  %v2303 = vpop.f32.mrb[0].mxu0
  %2304 = vmatprep.mubr.bf16.mxu0 %v1027
  %2305 = vmatmul.mubr.bf16.gmra.mrb[0].mxu0 %v1026
  %v2306 = vpop.f32.mrb[0].mxu0
  %v2307 = vadd.f32 %v2074, %v2306
  %v2308 = vpop.f32.mrb[0].mxu0
  %v2309 = vpop.f32.mrb[0].mxu0
  %v2310 = vadd.f32 %v2077, %v2309
  %v2311 = vpop.f32.mrb[0].mxu0
  %2312 = vmatprep.mubr.bf16.mxu0 %v1035
  %2313 = vmatmul.mubr.bf16.gmra.mrb[0].mxu0 %v1034
  %v2314 = vpop.f32.mrb[0].mxu0
  %v2315 = vadd.f32 %v2082, %v2314
  %v2316 = vpop.f32.mrb[0].mxu0
  %v2317 = vpop.f32.mrb[0].mxu0
  %v2318 = vadd.f32 %v2085, %v2317
  %v2319 = vpop.f32.mrb[0].mxu0
  %2320 = vmatprep.mubr.bf16.mxu0 %v1043
  %2321 = vmatmul.mubr.bf16.gmra.mrb[0].mxu0 %v1042
  %v2322 = vpop.f32.mrb[0].mxu0
  %v2323 = vadd.f32 %v2090, %v2322
  %v2324 = vpop.f32.mrb[0].mxu0
  %v2325 = vpop.f32.mrb[0].mxu0
  %v2326 = vadd.f32 %v2093, %v2325
  %v2327 = vpop.f32.mrb[0].mxu0
  %2328 = vmatprep.mubr.bf16.mxu0 %v1051
  %2329 = vmatmul.mubr.bf16.gmra.mrb[0].mxu0 %v1050
  %v2330 = vpop.f32.mrb[0].mxu0
  %v2331 = vadd.f32 %v2098, %v2330
  %v2332 = vpop.f32.mrb[0].mxu0
  %v2333 = vpop.f32.mrb[0].mxu0
  %v2334 = vadd.f32 %v2101, %v2333
  %v2335 = vpop.f32.mrb[0].mxu0
  %2336 = vmatprep.mubr.bf16.mxu0 %v1059
  %2337 = vmatmul.mubr.bf16.gmra.mrb[0].mxu0 %v1058
  %v2338 = vpop.f32.mrb[0].mxu0
  %v2339 = vadd.f32 %v2106, %v2338
  %v2340 = vpop.f32.mrb[0].mxu0
  %v2341 = vpop.f32.mrb[0].mxu0
  %v2342 = vadd.f32 %v2109, %v2341
  %v2343 = vpop.f32.mrb[0].mxu0
  %2344 = vmatprep.mubr.bf16.mxu0 %v1067
  %2345 = vmatmul.mubr.bf16.gmra.mrb[0].mxu0 %v1066
  %v2346 = vpop.f32.mrb[0].mxu0
  %v2347 = vadd.f32 %v2114, %v2346
  %v2348 = vpop.f32.mrb[0].mxu0
  %v2349 = vpop.f32.mrb[0].mxu0
  %v2350 = vadd.f32 %v2117, %v2349
  %v2351 = vpop.f32.mrb[0].mxu0
  %2352 = vmatprep.mubr.bf16.mxu0 %v1075
  %2353 = vmatmul.mubr.bf16.gmra.mrb[0].mxu0 %v1074
  %v2354 = vpop.f32.mrb[0].mxu0
  %v2355 = vadd.f32 %v2122, %v2354
  %v2356 = vpop.f32.mrb[0].mxu0
  %v2357 = vpop.f32.mrb[0].mxu0
  %v2358 = vadd.f32 %v2125, %v2357
  %v2359 = vpop.f32.mrb[0].mxu0
  %2360 = vmatprep.mubr.bf16.mxu0 %v1083
  %2361 = vmatmul.mubr.bf16.gmra.mrb[0].mxu0 %v1082
  %v2362 = vpop.f32.mrb[0].mxu0
  %v2363 = vadd.f32 %v2130, %v2362
  %v2364 = vpop.f32.mrb[0].mxu0
  %v2365 = vpop.f32.mrb[0].mxu0
  %v2366 = vadd.f32 %v2133, %v2365
  %v2367 = vpop.f32.mrb[0].mxu0
  %2368 = vmatprep.mubr.bf16.mxu0 %v1091
  %2369 = vmatmul.mubr.bf16.gmra.mrb[0].mxu0 %v1090
  %v2370 = vpop.f32.mrb[0].mxu0
  %v2371 = vadd.f32 %v2138, %v2370
  %v2372 = vpop.f32.mrb[0].mxu0
  %v2373 = vpop.f32.mrb[0].mxu0
  %v2374 = vadd.f32 %v2141, %v2373
  %v2375 = vpop.f32.mrb[0].mxu0
  %2376 = vmatprep.mubr.bf16.mxu0 %v1099
  %2377 = vmatmul.mubr.bf16.gmra.mrb[0].mxu0 %v1098
  %v2378 = vpop.f32.mrb[0].mxu0
  %v2379 = vadd.f32 %v2146, %v2378
  %v2380 = vpop.f32.mrb[0].mxu0
  %v2381 = vpop.f32.mrb[0].mxu0
  %v2382 = vadd.f32 %v2149, %v2381
  %v2383 = vpop.f32.mrb[0].mxu0
  %2384 = vmatprep.mubr.bf16.mxu0 %v1107
  %2385 = vmatmul.mubr.bf16.gmra.mrb[0].mxu0 %v1106
  %v2386 = vpop.f32.mrb[0].mxu0
  %v2387 = vadd.f32 %v2154, %v2386
  %v2388 = vpop.f32.mrb[0].mxu0
  %v2389 = vpop.f32.mrb[0].mxu0
  %v2390 = vadd.f32 %v2157, %v2389
  %v2391 = vpop.f32.mrb[0].mxu0
  %2392 = vmatprep.mubr.bf16.mxu0 %v1115
  %2393 = vmatmul.mubr.bf16.gmra.mrb[0].mxu0 %v1114
  %v2394 = vpop.f32.mrb[0].mxu0
  %v2395 = vadd.f32 %v2162, %v2394
  %v2396 = vpop.f32.mrb[0].mxu0
  %v2397 = vpop.f32.mrb[0].mxu0
  %v2398 = vadd.f32 %v2165, %v2397
  %v2399 = vpop.f32.mrb[0].mxu0
  %2400 = vmatprep.mubr.bf16.mxu0 %v1123
  %2401 = vmatmul.mubr.bf16.gmra.mrb[0].mxu0 %v1122
  %v2402 = vpop.f32.mrb[0].mxu0
  %v2403 = vadd.f32 %v2170, %v2402
  %v2404 = vpop.f32.mrb[0].mxu0
  %v2405 = vpop.f32.mrb[0].mxu0
  %v2406 = vadd.f32 %v2173, %v2405
  %v2407 = vpop.f32.mrb[0].mxu0
  %2408 = vmatprep.mubr.bf16.mxu0 %v1131
  %2409 = vmatmul.mubr.bf16.gmra.mrb[0].mxu0 %v1130
  %v2410 = vpop.f32.mrb[0].mxu0
  %v2411 = vadd.f32 %v2178, %v2410
  %v2412 = vpop.f32.mrb[0].mxu0
  %v2413 = vpop.f32.mrb[0].mxu0
  %v2414 = vadd.f32 %v2181, %v2413
  %v2415 = vpop.f32.mrb[0].mxu0
  %2416 = vmatprep.mubr.bf16.mxu0 %v1139
  %2417 = vmatmul.mubr.bf16.gmra.mrb[0].mxu0 %v1138
  %v2418 = vpop.f32.mrb[0].mxu0
  %v2419 = vadd.f32 %v2186, %v2418
  %v2420 = vpop.f32.mrb[0].mxu0
  %v2421 = vpop.f32.mrb[0].mxu0
  %v2422 = vadd.f32 %v2189, %v2421
  %v2423 = vpop.f32.mrb[0].mxu0
  %2424 = vmatprep.mubr.bf16.mxu0 %v1147
  %2425 = vmatmul.mubr.bf16.gmra.mrb[0].mxu0 %v1146
  %v2426 = vpop.f32.mrb[0].mxu0
  %v2427 = vadd.f32 %v2194, %v2426
  %v2428 = vpop.f32.mrb[0].mxu0
  %v2429 = vpop.f32.mrb[0].mxu0
  %v2430 = vadd.f32 %v2197, %v2429
  %v2431 = vpop.f32.mrb[0].mxu0
  %2432 = vdwg.mxu0
  %2433 = vmatprep.subr.bf16.mxu0 0
  %2434 = vmatpush1.bf16.msra.mxu0 %v1654
  %2435 = vmatprep.subr.bf16.mxu0 0
  %2436 = vmatpush1.bf16.msra.mxu0 %v1655
  %2437 = vmatprep.subr.bf16.mxu0 0
  %2438 = vmatpush1.bf16.msra.mxu0 %v1656
  %2439 = vmatprep.subr.bf16.mxu0 0
  %2440 = vmatpush1.bf16.msra.mxu0 %v1657
  %2441 = vmatprep.subr.bf16.mxu0 0
  %2442 = vmatpush1.bf16.msra.mxu0 %v1658
  %2443 = vmatprep.subr.bf16.mxu0 0
  %2444 = vmatpush1.bf16.msra.mxu0 %v1659
  %2445 = vmatprep.subr.bf16.mxu0 0
  %2446 = vmatpush1.bf16.msra.mxu0 %v1660
  %2447 = vmatprep.subr.bf16.mxu0 0
  %2448 = vmatpush1.bf16.msra.mxu0 %v1661
  %2449 = vmatprep.subr.bf16.mxu0 0
  %2450 = vmatpush1.bf16.msra.mxu0 %v1662
  %2451 = vmatprep.subr.bf16.mxu0 0
  %2452 = vmatpush1.bf16.msra.mxu0 %v1663
  %2453 = vmatprep.subr.bf16.mxu0 0
  %2454 = vmatpush1.bf16.msra.mxu0 %v1664
  %2455 = vmatprep.subr.bf16.mxu0 0
  %2456 = vmatpush1.bf16.msra.mxu0 %v1665
  %2457 = vmatprep.subr.bf16.mxu0 0
  %2458 = vmatpush1.bf16.msra.mxu0 %v1666
  %2459 = vmatprep.subr.bf16.mxu0 0
  %2460 = vmatpush1.bf16.msra.mxu0 %v1667
  %2461 = vmatprep.subr.bf16.mxu0 0
  %2462 = vmatpush1.bf16.msra.mxu0 %v1668
  %2463 = vmatprep.subr.bf16.mxu0 0
  %2464 = vmatpush1.bf16.msra.mxu0 %v1669
  %2465 = vmatprep.mubr.bf16.mxu0 %v957
  %2466 = vmatmul.mubr.bf16.gmra.mrb[0].mxu0 %v956
  %v2467 = vpop.f32.mrb[0].mxu0
  %v2468 = vadd.f32 %v2235, %v2467
  %v2469 = vpop.f32.mrb[0].mxu0
  %v2470 = vpop.f32.mrb[0].mxu0
  %v2471 = vadd.f32 %v2238, %v2470
  %v2472 = vpop.f32.mrb[0].mxu0
  %2473 = vmatprep.mubr.bf16.mxu0 %v965
  %2474 = vmatmul.mubr.bf16.gmra.mrb[0].mxu0 %v964
  %v2475 = vpop.f32.mrb[0].mxu0
  %v2476 = vadd.f32 %v2243, %v2475
  %v2477 = vpop.f32.mrb[0].mxu0
  %v2478 = vpop.f32.mrb[0].mxu0
  %v2479 = vadd.f32 %v2246, %v2478
  %v2480 = vpop.f32.mrb[0].mxu0
  %2481 = vmatprep.mubr.bf16.mxu0 %v973
  %2482 = vmatmul.mubr.bf16.gmra.mrb[0].mxu0 %v972
  %v2483 = vpop.f32.mrb[0].mxu0
  %v2484 = vadd.f32 %v2251, %v2483
  %v2485 = vpop.f32.mrb[0].mxu0
  %v2486 = vpop.f32.mrb[0].mxu0
  %v2487 = vadd.f32 %v2254, %v2486
  %v2488 = vpop.f32.mrb[0].mxu0
  %2489 = vmatprep.mubr.bf16.mxu0 %v981
  %2490 = vmatmul.mubr.bf16.gmra.mrb[0].mxu0 %v980
  %v2491 = vpop.f32.mrb[0].mxu0
  %v2492 = vadd.f32 %v2259, %v2491
  %v2493 = vpop.f32.mrb[0].mxu0
  %v2494 = vpop.f32.mrb[0].mxu0
  %v2495 = vadd.f32 %v2262, %v2494
  %v2496 = vpop.f32.mrb[0].mxu0
  %2497 = vmatprep.mubr.bf16.mxu0 %v989
  %2498 = vmatmul.mubr.bf16.gmra.mrb[0].mxu0 %v988
  %v2499 = vpop.f32.mrb[0].mxu0
  %v2500 = vadd.f32 %v2267, %v2499
  %v2501 = vpop.f32.mrb[0].mxu0
  %v2502 = vpop.f32.mrb[0].mxu0
  %v2503 = vadd.f32 %v2270, %v2502
  %v2504 = vpop.f32.mrb[0].mxu0
  %2505 = vmatprep.mubr.bf16.mxu0 %v997
  %2506 = vmatmul.mubr.bf16.gmra.mrb[0].mxu0 %v996
  %v2507 = vpop.f32.mrb[0].mxu0
  %v2508 = vadd.f32 %v2275, %v2507
  %v2509 = vpop.f32.mrb[0].mxu0
  %v2510 = vpop.f32.mrb[0].mxu0
  %v2511 = vadd.f32 %v2278, %v2510
  %v2512 = vpop.f32.mrb[0].mxu0
  %2513 = vmatprep.mubr.bf16.mxu0 %v1005
  %2514 = vmatmul.mubr.bf16.gmra.mrb[0].mxu0 %v1004
  %v2515 = vpop.f32.mrb[0].mxu0
  %v2516 = vadd.f32 %v2283, %v2515
  %v2517 = vpop.f32.mrb[0].mxu0
  %v2518 = vpop.f32.mrb[0].mxu0
  %v2519 = vadd.f32 %v2286, %v2518
  %v2520 = vpop.f32.mrb[0].mxu0
  %2521 = vmatprep.mubr.bf16.mxu0 %v1013
  %2522 = vmatmul.mubr.bf16.gmra.mrb[0].mxu0 %v1012
  %v2523 = vpop.f32.mrb[0].mxu0
  %v2524 = vadd.f32 %v2291, %v2523
  %v2525 = vpop.f32.mrb[0].mxu0
  %v2526 = vpop.f32.mrb[0].mxu0
  %v2527 = vadd.f32 %v2294, %v2526
  %v2528 = vpop.f32.mrb[0].mxu0
  %2529 = vmatprep.mubr.bf16.mxu0 %v1021
  %2530 = vmatmul.mubr.bf16.gmra.mrb[0].mxu0 %v1020
  %v2531 = vpop.f32.mrb[0].mxu0
  %v2532 = vadd.f32 %v2299, %v2531
  %v2533 = vpop.f32.mrb[0].mxu0
  %v2534 = vpop.f32.mrb[0].mxu0
  %v2535 = vadd.f32 %v2302, %v2534
  %v2536 = vpop.f32.mrb[0].mxu0
  %2537 = vmatprep.mubr.bf16.mxu0 %v1029
  %2538 = vmatmul.mubr.bf16.gmra.mrb[0].mxu0 %v1028
  %v2539 = vpop.f32.mrb[0].mxu0
  %v2540 = vadd.f32 %v2307, %v2539
  %v2541 = vpop.f32.mrb[0].mxu0
  %v2542 = vpop.f32.mrb[0].mxu0
  %v2543 = vadd.f32 %v2310, %v2542
  %v2544 = vpop.f32.mrb[0].mxu0
  %2545 = vmatprep.mubr.bf16.mxu0 %v1037
  %2546 = vmatmul.mubr.bf16.gmra.mrb[0].mxu0 %v1036
  %v2547 = vpop.f32.mrb[0].mxu0
  %v2548 = vadd.f32 %v2315, %v2547
  %v2549 = vpop.f32.mrb[0].mxu0
  %v2550 = vpop.f32.mrb[0].mxu0
  %v2551 = vadd.f32 %v2318, %v2550
  %v2552 = vpop.f32.mrb[0].mxu0
  %2553 = vmatprep.mubr.bf16.mxu0 %v1045
  %2554 = vmatmul.mubr.bf16.gmra.mrb[0].mxu0 %v1044
  %v2555 = vpop.f32.mrb[0].mxu0
  %v2556 = vadd.f32 %v2323, %v2555
  %v2557 = vpop.f32.mrb[0].mxu0
  %v2558 = vpop.f32.mrb[0].mxu0
  %v2559 = vadd.f32 %v2326, %v2558
  %v2560 = vpop.f32.mrb[0].mxu0
  %2561 = vmatprep.mubr.bf16.mxu0 %v1053
  %2562 = vmatmul.mubr.bf16.gmra.mrb[0].mxu0 %v1052
  %v2563 = vpop.f32.mrb[0].mxu0
  %v2564 = vadd.f32 %v2331, %v2563
  %v2565 = vpop.f32.mrb[0].mxu0
  %v2566 = vpop.f32.mrb[0].mxu0
  %v2567 = vadd.f32 %v2334, %v2566
  %v2568 = vpop.f32.mrb[0].mxu0
  %2569 = vmatprep.mubr.bf16.mxu0 %v1061
  %2570 = vmatmul.mubr.bf16.gmra.mrb[0].mxu0 %v1060
  %v2571 = vpop.f32.mrb[0].mxu0
  %v2572 = vadd.f32 %v2339, %v2571
  %v2573 = vpop.f32.mrb[0].mxu0
  %v2574 = vpop.f32.mrb[0].mxu0
  %v2575 = vadd.f32 %v2342, %v2574
  %v2576 = vpop.f32.mrb[0].mxu0
  %2577 = vmatprep.mubr.bf16.mxu0 %v1069
  %2578 = vmatmul.mubr.bf16.gmra.mrb[0].mxu0 %v1068
  %v2579 = vpop.f32.mrb[0].mxu0
  %v2580 = vadd.f32 %v2347, %v2579
  %v2581 = vpop.f32.mrb[0].mxu0
  %v2582 = vpop.f32.mrb[0].mxu0
  %v2583 = vadd.f32 %v2350, %v2582
  %v2584 = vpop.f32.mrb[0].mxu0
  %2585 = vmatprep.mubr.bf16.mxu0 %v1077
  %2586 = vmatmul.mubr.bf16.gmra.mrb[0].mxu0 %v1076
  %v2587 = vpop.f32.mrb[0].mxu0
  %v2588 = vadd.f32 %v2355, %v2587
  %v2589 = vpop.f32.mrb[0].mxu0
  %v2590 = vpop.f32.mrb[0].mxu0
  %v2591 = vadd.f32 %v2358, %v2590
  %v2592 = vpop.f32.mrb[0].mxu0
  %2593 = vmatprep.mubr.bf16.mxu0 %v1085
  %2594 = vmatmul.mubr.bf16.gmra.mrb[0].mxu0 %v1084
  %v2595 = vpop.f32.mrb[0].mxu0
  %v2596 = vadd.f32 %v2363, %v2595
  %v2597 = vpop.f32.mrb[0].mxu0
  %v2598 = vpop.f32.mrb[0].mxu0
  %v2599 = vadd.f32 %v2366, %v2598
  %v2600 = vpop.f32.mrb[0].mxu0
  %2601 = vmatprep.mubr.bf16.mxu0 %v1093
  %2602 = vmatmul.mubr.bf16.gmra.mrb[0].mxu0 %v1092
  %v2603 = vpop.f32.mrb[0].mxu0
  %v2604 = vadd.f32 %v2371, %v2603
  %v2605 = vpop.f32.mrb[0].mxu0
  %v2606 = vpop.f32.mrb[0].mxu0
  %v2607 = vadd.f32 %v2374, %v2606
  %v2608 = vpop.f32.mrb[0].mxu0
  %2609 = vmatprep.mubr.bf16.mxu0 %v1101
  %2610 = vmatmul.mubr.bf16.gmra.mrb[0].mxu0 %v1100
  %v2611 = vpop.f32.mrb[0].mxu0
  %v2612 = vadd.f32 %v2379, %v2611
  %v2613 = vpop.f32.mrb[0].mxu0
  %v2614 = vpop.f32.mrb[0].mxu0
  %v2615 = vadd.f32 %v2382, %v2614
  %v2616 = vpop.f32.mrb[0].mxu0
  %2617 = vmatprep.mubr.bf16.mxu0 %v1109
  %2618 = vmatmul.mubr.bf16.gmra.mrb[0].mxu0 %v1108
  %v2619 = vpop.f32.mrb[0].mxu0
  %v2620 = vadd.f32 %v2387, %v2619
  %v2621 = vpop.f32.mrb[0].mxu0
  %v2622 = vpop.f32.mrb[0].mxu0
  %v2623 = vadd.f32 %v2390, %v2622
  %v2624 = vpop.f32.mrb[0].mxu0
  %2625 = vmatprep.mubr.bf16.mxu0 %v1117
  %2626 = vmatmul.mubr.bf16.gmra.mrb[0].mxu0 %v1116
  %v2627 = vpop.f32.mrb[0].mxu0
  %v2628 = vadd.f32 %v2395, %v2627
  %v2629 = vpop.f32.mrb[0].mxu0
  %v2630 = vpop.f32.mrb[0].mxu0
  %v2631 = vadd.f32 %v2398, %v2630
  %v2632 = vpop.f32.mrb[0].mxu0
  %2633 = vmatprep.mubr.bf16.mxu0 %v1125
  %2634 = vmatmul.mubr.bf16.gmra.mrb[0].mxu0 %v1124
  %v2635 = vpop.f32.mrb[0].mxu0
  %v2636 = vadd.f32 %v2403, %v2635
  %v2637 = vpop.f32.mrb[0].mxu0
  %v2638 = vpop.f32.mrb[0].mxu0
  %v2639 = vadd.f32 %v2406, %v2638
  %v2640 = vpop.f32.mrb[0].mxu0
  %2641 = vmatprep.mubr.bf16.mxu0 %v1133
  %2642 = vmatmul.mubr.bf16.gmra.mrb[0].mxu0 %v1132
  %v2643 = vpop.f32.mrb[0].mxu0
  %v2644 = vadd.f32 %v2411, %v2643
  %v2645 = vpop.f32.mrb[0].mxu0
  %v2646 = vpop.f32.mrb[0].mxu0
  %v2647 = vadd.f32 %v2414, %v2646
  %v2648 = vpop.f32.mrb[0].mxu0
  %2649 = vmatprep.mubr.bf16.mxu0 %v1141
  %2650 = vmatmul.mubr.bf16.gmra.mrb[0].mxu0 %v1140
  %v2651 = vpop.f32.mrb[0].mxu0
  %v2652 = vadd.f32 %v2419, %v2651
  %v2653 = vpop.f32.mrb[0].mxu0
  %v2654 = vpop.f32.mrb[0].mxu0
  %v2655 = vadd.f32 %v2422, %v2654
  %v2656 = vpop.f32.mrb[0].mxu0
  %2657 = vmatprep.mubr.bf16.mxu0 %v1149
  %2658 = vmatmul.mubr.bf16.gmra.mrb[0].mxu0 %v1148
  %v2659 = vpop.f32.mrb[0].mxu0
  %v2660 = vadd.f32 %v2427, %v2659
  %v2661 = vpop.f32.mrb[0].mxu0
  %v2662 = vpop.f32.mrb[0].mxu0
  %v2663 = vadd.f32 %v2430, %v2662
  %v2664 = vpop.f32.mrb[0].mxu0
  %2665 = vdwg.mxu0
  %vm2666 = vcmp.gt.f32.partialorder %v2468, 0.0
  %vm2667 = vcmp.gt.f32.partialorder %v2471, 0.0
  %vm2668 = vcmp.gt.f32.partialorder %v2476, 0.0
  %vm2669 = vcmp.gt.f32.partialorder %v2479, 0.0
  %vm2670 = vcmp.gt.f32.partialorder %v2484, 0.0
  %vm2671 = vcmp.gt.f32.partialorder %v2487, 0.0
  %vm2672 = vcmp.gt.f32.partialorder %v2492, 0.0
  %vm2673 = vcmp.gt.f32.partialorder %v2495, 0.0
  %vm2674 = vcmp.gt.f32.partialorder %v2500, 0.0
  %vm2675 = vcmp.gt.f32.partialorder %v2503, 0.0
  %vm2676 = vcmp.gt.f32.partialorder %v2508, 0.0
  %vm2677 = vcmp.gt.f32.partialorder %v2511, 0.0
  %vm2678 = vcmp.gt.f32.partialorder %v2516, 0.0
  %vm2679 = vcmp.gt.f32.partialorder %v2519, 0.0
  %vm2680 = vcmp.gt.f32.partialorder %v2524, 0.0
  %vm2681 = vcmp.gt.f32.partialorder %v2527, 0.0
  %vm2682 = vcmp.gt.f32.partialorder %v2532, 0.0
  %vm2683 = vcmp.gt.f32.partialorder %v2535, 0.0
  %vm2684 = vcmp.gt.f32.partialorder %v2540, 0.0
  %vm2685 = vcmp.gt.f32.partialorder %v2543, 0.0
  %vm2686 = vcmp.gt.f32.partialorder %v2548, 0.0
  %vm2687 = vcmp.gt.f32.partialorder %v2551, 0.0
  %vm2688 = vcmp.gt.f32.partialorder %v2556, 0.0
  %vm2689 = vcmp.gt.f32.partialorder %v2559, 0.0
  %vm2690 = vcmp.gt.f32.partialorder %v2564, 0.0
  %vm2691 = vcmp.gt.f32.partialorder %v2567, 0.0
  %vm2692 = vcmp.gt.f32.partialorder %v2572, 0.0
  %vm2693 = vcmp.gt.f32.partialorder %v2575, 0.0
  %vm2694 = vcmp.gt.f32.partialorder %v2580, 0.0
  %vm2695 = vcmp.gt.f32.partialorder %v2583, 0.0
  %vm2696 = vcmp.gt.f32.partialorder %v2588, 0.0
  %vm2697 = vcmp.gt.f32.partialorder %v2591, 0.0
  %vm2698 = vcmp.gt.f32.partialorder %v2596, 0.0
  %vm2699 = vcmp.gt.f32.partialorder %v2599, 0.0
  %vm2700 = vcmp.gt.f32.partialorder %v2604, 0.0
  %vm2701 = vcmp.gt.f32.partialorder %v2607, 0.0
  %vm2702 = vcmp.gt.f32.partialorder %v2612, 0.0
  %vm2703 = vcmp.gt.f32.partialorder %v2615, 0.0
  %vm2704 = vcmp.gt.f32.partialorder %v2620, 0.0
  %vm2705 = vcmp.gt.f32.partialorder %v2623, 0.0
  %vm2706 = vcmp.gt.f32.partialorder %v2628, 0.0
  %vm2707 = vcmp.gt.f32.partialorder %v2631, 0.0
  %vm2708 = vcmp.gt.f32.partialorder %v2636, 0.0
  %vm2709 = vcmp.gt.f32.partialorder %v2639, 0.0
  %vm2710 = vcmp.gt.f32.partialorder %v2644, 0.0
  %vm2711 = vcmp.gt.f32.partialorder %v2647, 0.0
  %vm2712 = vcmp.gt.f32.partialorder %v2652, 0.0
  %vm2713 = vcmp.gt.f32.partialorder %v2655, 0.0
  %vm2714 = vcmp.gt.f32.partialorder %v2660, 0.0
  %vm2715 = vcmp.gt.f32.partialorder %v2663, 0.0
  %v2716 = vmul.f32 %v2468, 0.2
  %v2717 = vmul.f32 %v2471, 0.2
  %v2718 = vmul.f32 %v2476, 0.2
  %v2719 = vmul.f32 %v2479, 0.2
  %v2720 = vmul.f32 %v2484, 0.2
  %v2721 = vmul.f32 %v2487, 0.2
  %v2722 = vmul.f32 %v2492, 0.2
  %v2723 = vmul.f32 %v2495, 0.2
  %v2724 = vmul.f32 %v2500, 0.2
  %v2725 = vmul.f32 %v2503, 0.2
  %v2726 = vmul.f32 %v2508, 0.2
  %v2727 = vmul.f32 %v2511, 0.2
  %v2728 = vmul.f32 %v2516, 0.2
  %v2729 = vmul.f32 %v2519, 0.2
  %v2730 = vmul.f32 %v2524, 0.2
  %v2731 = vmul.f32 %v2527, 0.2
  %v2732 = vmul.f32 %v2532, 0.2
  %v2733 = vmul.f32 %v2535, 0.2
  %v2734 = vmul.f32 %v2540, 0.2
  %v2735 = vmul.f32 %v2543, 0.2
  %v2736 = vmul.f32 %v2548, 0.2
  %v2737 = vmul.f32 %v2551, 0.2
  %v2738 = vmul.f32 %v2556, 0.2
  %v2739 = vmul.f32 %v2559, 0.2
  %v2740 = vmul.f32 %v2564, 0.2
  %v2741 = vmul.f32 %v2567, 0.2
  %v2742 = vmul.f32 %v2572, 0.2
  %v2743 = vmul.f32 %v2575, 0.2
  %v2744 = vmul.f32 %v2580, 0.2
  %v2745 = vmul.f32 %v2583, 0.2
  %v2746 = vmul.f32 %v2588, 0.2
  %v2747 = vmul.f32 %v2591, 0.2
  %v2748 = vmul.f32 %v2596, 0.2
  %v2749 = vmul.f32 %v2599, 0.2
  %v2750 = vmul.f32 %v2604, 0.2
  %v2751 = vmul.f32 %v2607, 0.2
  %v2752 = vmul.f32 %v2612, 0.2
  %v2753 = vmul.f32 %v2615, 0.2
  %v2754 = vmul.f32 %v2620, 0.2
  %v2755 = vmul.f32 %v2623, 0.2
  %v2756 = vmul.f32 %v2628, 0.2
  %v2757 = vmul.f32 %v2631, 0.2
  %v2758 = vmul.f32 %v2636, 0.2
  %v2759 = vmul.f32 %v2639, 0.2
  %v2760 = vmul.f32 %v2644, 0.2
  %v2761 = vmul.f32 %v2647, 0.2
  %v2762 = vmul.f32 %v2652, 0.2
  %v2763 = vmul.f32 %v2655, 0.2
  %v2764 = vmul.f32 %v2660, 0.2
  %v2765 = vmul.f32 %v2663, 0.2
  %v2766 = vsel %vm2666, %v2468, %v2716
  %v2767 = vsel %vm2667, %v2471, %v2717
  %v2768 = vsel %vm2668, %v2476, %v2718
  %v2769 = vsel %vm2669, %v2479, %v2719
  %v2770 = vsel %vm2670, %v2484, %v2720
  %v2771 = vsel %vm2671, %v2487, %v2721
  %v2772 = vsel %vm2672, %v2492, %v2722
  %v2773 = vsel %vm2673, %v2495, %v2723
  %v2774 = vsel %vm2674, %v2500, %v2724
  %v2775 = vsel %vm2675, %v2503, %v2725
  %v2776 = vsel %vm2676, %v2508, %v2726
  %v2777 = vsel %vm2677, %v2511, %v2727
  %v2778 = vsel %vm2678, %v2516, %v2728
  %v2779 = vsel %vm2679, %v2519, %v2729
  %v2780 = vsel %vm2680, %v2524, %v2730
  %v2781 = vsel %vm2681, %v2527, %v2731
  %v2782 = vsel %vm2682, %v2532, %v2732
  %v2783 = vsel %vm2683, %v2535, %v2733
  %v2784 = vsel %vm2684, %v2540, %v2734
  %v2785 = vsel %vm2685, %v2543, %v2735
  %v2786 = vsel %vm2686, %v2548, %v2736
  %v2787 = vsel %vm2687, %v2551, %v2737
  %v2788 = vsel %vm2688, %v2556, %v2738
  %v2789 = vsel %vm2689, %v2559, %v2739
  %v2790 = vsel %vm2690, %v2564, %v2740
  %v2791 = vsel %vm2691, %v2567, %v2741
  %v2792 = vsel %vm2692, %v2572, %v2742
  %v2793 = vsel %vm2693, %v2575, %v2743
  %v2794 = vsel %vm2694, %v2580, %v2744
  %v2795 = vsel %vm2695, %v2583, %v2745
  %v2796 = vsel %vm2696, %v2588, %v2746
  %v2797 = vsel %vm2697, %v2591, %v2747
  %v2798 = vsel %vm2698, %v2596, %v2748
  %v2799 = vsel %vm2699, %v2599, %v2749
  %v2800 = vsel %vm2700, %v2604, %v2750
  %v2801 = vsel %vm2701, %v2607, %v2751
  %v2802 = vsel %vm2702, %v2612, %v2752
  %v2803 = vsel %vm2703, %v2615, %v2753
  %v2804 = vsel %vm2704, %v2620, %v2754
  %v2805 = vsel %vm2705, %v2623, %v2755
  %v2806 = vsel %vm2706, %v2628, %v2756
  %v2807 = vsel %vm2707, %v2631, %v2757
  %v2808 = vsel %vm2708, %v2636, %v2758
  %v2809 = vsel %vm2709, %v2639, %v2759
  %v2810 = vsel %vm2710, %v2644, %v2760
  %v2811 = vsel %vm2711, %v2647, %v2761
  %v2812 = vsel %vm2712, %v2652, %v2762
  %v2813 = vsel %vm2713, %v2655, %v2763
  %v2814 = vsel %vm2714, %v2660, %v2764
  %v2815 = vsel %vm2715, %v2663, %v2765
  %v2816 = vpack.c.bf16 %v2767, %v2766
  %v2817 = vpack.c.bf16 %v2769, %v2768
  %v2818 = vpack.c.bf16 %v2771, %v2770
  %v2819 = vpack.c.bf16 %v2773, %v2772
  %v2820 = vpack.c.bf16 %v2775, %v2774
  %v2821 = vpack.c.bf16 %v2777, %v2776
  %v2822 = vpack.c.bf16 %v2779, %v2778
  %v2823 = vpack.c.bf16 %v2781, %v2780
  %v2824 = vpack.c.bf16 %v2783, %v2782
  %v2825 = vpack.c.bf16 %v2785, %v2784
  %v2826 = vpack.c.bf16 %v2787, %v2786
  %v2827 = vpack.c.bf16 %v2789, %v2788
  %v2828 = vpack.c.bf16 %v2791, %v2790
  %v2829 = vpack.c.bf16 %v2793, %v2792
  %v2830 = vpack.c.bf16 %v2795, %v2794
  %v2831 = vpack.c.bf16 %v2797, %v2796
  %v2832 = vpack.c.bf16 %v2799, %v2798
  %v2833 = vpack.c.bf16 %v2801, %v2800
  %v2834 = vpack.c.bf16 %v2803, %v2802
  %v2835 = vpack.c.bf16 %v2805, %v2804
  %v2836 = vpack.c.bf16 %v2807, %v2806
  %v2837 = vpack.c.bf16 %v2809, %v2808
  %v2838 = vpack.c.bf16 %v2811, %v2810
  %v2839 = vpack.c.bf16 %v2813, %v2812
  %v2840 = vpack.c.bf16 %v2815, %v2814
  %v2866 = vunpack.c.l.b16 %v2816
  %v2867 = vunpack.c.h.b16 %v2816
  %v2868 = vunpack.c.l.b16 %v2817
  %v2869 = vunpack.c.h.b16 %v2817
  %v2870 = vunpack.c.l.b16 %v2818
  %v2871 = vunpack.c.h.b16 %v2818
  %v2872 = vunpack.c.l.b16 %v2819
  %v2873 = vunpack.c.h.b16 %v2819
  %v2874 = vunpack.c.l.b16 %v2820
  %v2875 = vunpack.c.h.b16 %v2820
  %v2876 = vunpack.c.l.b16 %v2821
  %v2877 = vunpack.c.h.b16 %v2821
  %v2878 = vunpack.c.l.b16 %v2822
  %v2879 = vunpack.c.h.b16 %v2822
  %v2880 = vunpack.c.l.b16 %v2823
  %v2881 = vunpack.c.h.b16 %v2823
  %v2882 = vunpack.c.l.b16 %v2824
  %v2883 = vunpack.c.h.b16 %v2824
  %v2884 = vunpack.c.l.b16 %v2825
  %v2885 = vunpack.c.h.b16 %v2825
  %v2886 = vunpack.c.l.b16 %v2826
  %v2887 = vunpack.c.h.b16 %v2826
  %v2888 = vunpack.c.l.b16 %v2827
  %v2889 = vunpack.c.h.b16 %v2827
  %v2890 = vunpack.c.l.b16 %v2828
  %v2891 = vunpack.c.h.b16 %v2828
  %v2892 = vunpack.c.l.b16 %v2829
  %v2893 = vunpack.c.h.b16 %v2829
  %v2894 = vunpack.c.l.b16 %v2830
  %v2895 = vunpack.c.h.b16 %v2830
  %v2896 = vunpack.c.l.b16 %v2831
  %v2897 = vunpack.c.h.b16 %v2831
  %v2898 = vunpack.c.l.b16 %v2832
  %v2899 = vunpack.c.h.b16 %v2832
  %v2900 = vunpack.c.l.b16 %v2833
  %v2901 = vunpack.c.h.b16 %v2833
  %v2902 = vunpack.c.l.b16 %v2834
  %v2903 = vunpack.c.h.b16 %v2834
  %v2904 = vunpack.c.l.b16 %v2835
  %v2905 = vunpack.c.h.b16 %v2835
  %v2906 = vunpack.c.l.b16 %v2836
  %v2907 = vunpack.c.h.b16 %v2836
  %v2908 = vunpack.c.l.b16 %v2837
  %v2909 = vunpack.c.h.b16 %v2837
  %v2910 = vunpack.c.l.b16 %v2838
  %v2911 = vunpack.c.h.b16 %v2838
  %v2912 = vunpack.c.l.b16 %v2839
  %v2913 = vunpack.c.h.b16 %v2839
  %v2914 = vunpack.c.l.b16 %v2840
  %v2915 = vunpack.c.h.b16 %v2840
  %v2916 = vpack.c.b16 %v2866, %v2866
  %v2917 = vpack.c.b16 %v2867, %v2867
  %v2918 = vpack.c.b16 %v2868, %v2868
  %v2919 = vpack.c.b16 %v2869, %v2869
  %v2920 = vpack.c.b16 %v2870, %v2870
  %v2921 = vpack.c.b16 %v2871, %v2871
  %v2922 = vpack.c.b16 %v2872, %v2872
  %v2923 = vpack.c.b16 %v2873, %v2873
  %v2924 = vpack.c.b16 %v2874, %v2874
  %v2925 = vpack.c.b16 %v2875, %v2875
  %v2926 = vpack.c.b16 %v2876, %v2876
  %v2927 = vpack.c.b16 %v2877, %v2877
  %v2928 = vpack.c.b16 %v2878, %v2878
  %v2929 = vpack.c.b16 %v2879, %v2879
  %v2930 = vpack.c.b16 %v2880, %v2880
  %v2931 = vpack.c.b16 %v2881, %v2881
  %v2932 = vpack.c.b16 %v2882, %v2882
  %v2933 = vpack.c.b16 %v2883, %v2883
  %v2934 = vpack.c.b16 %v2884, %v2884
  %v2935 = vpack.c.b16 %v2885, %v2885
  %v2936 = vpack.c.b16 %v2886, %v2886
  %v2937 = vpack.c.b16 %v2887, %v2887
  %v2938 = vpack.c.b16 %v2888, %v2888
  %v2939 = vpack.c.b16 %v2889, %v2889
  %v2940 = vpack.c.b16 %v2890, %v2890
  %v2941 = vpack.c.b16 %v2891, %v2891
  %v2942 = vpack.c.b16 %v2892, %v2892
  %v2943 = vpack.c.b16 %v2893, %v2893
  %v2944 = vpack.c.b16 %v2894, %v2894
  %v2945 = vpack.c.b16 %v2895, %v2895
  %v2946 = vpack.c.b16 %v2896, %v2896
  %v2947 = vpack.c.b16 %v2897, %v2897
  %v2948 = vpack.c.b16 %v2898, %v2898
  %v2949 = vpack.c.b16 %v2899, %v2899
  %v2950 = vpack.c.b16 %v2900, %v2900
  %v2951 = vpack.c.b16 %v2901, %v2901
  %v2952 = vpack.c.b16 %v2902, %v2902
  %v2953 = vpack.c.b16 %v2903, %v2903
  %v2954 = vpack.c.b16 %v2904, %v2904
  %v2955 = vpack.c.b16 %v2905, %v2905
  %v2956 = vpack.c.b16 %v2906, %v2906
  %v2957 = vpack.c.b16 %v2907, %v2907
  %v2958 = vpack.c.b16 %v2908, %v2908
  %v2959 = vpack.c.b16 %v2909, %v2909
  %v2960 = vpack.c.b16 %v2910, %v2910
  %v2961 = vpack.c.b16 %v2911, %v2911
  %v2962 = vpack.c.b16 %v2912, %v2912
  %v2963 = vpack.c.b16 %v2913, %v2913
  %v2964 = vpack.c.b16 %v2914, %v2914
  %v2965 = vpack.c.b16 %v2915, %v2915
  %3016 = vst [vmem:[%s3] sm:$0xf] %v2916
  %3017 = vst [vmem:[%s3 + $0x4] sm:$0xf] %v2917
  %3018 = vst [vmem:[%s3 + $0x8] sm:$0xf] %v2918
  %3019 = vst [vmem:[%s3 + $0xc] sm:$0xf] %v2919
  %3020 = vst [vmem:[%s3 + $0x10] sm:$0xf] %v2920
  %3021 = vst [vmem:[%s3 + $0x14] sm:$0xf] %v2921
  %3022 = vst [vmem:[%s3 + $0x18] sm:$0xf] %v2922
  %3023 = vst [vmem:[%s3 + $0x1c] sm:$0xf] %v2923
  %3024 = vst [vmem:[%s3 + $0x20] sm:$0xf] %v2924
  %3025 = vst [vmem:[%s3 + $0x24] sm:$0xf] %v2925
  %3026 = vst [vmem:[%s3 + $0x28] sm:$0xf] %v2926
  %3027 = vst [vmem:[%s3 + $0x2c] sm:$0xf] %v2927
  %3028 = vst [vmem:[%s3 + $0x30] sm:$0xf] %v2928
  %3029 = vst [vmem:[%s3 + $0x34] sm:$0xf] %v2929
  %3030 = vst [vmem:[%s3 + $0x38] sm:$0xf] %v2930
  %3031 = vst [vmem:[%s3 + $0x3c] sm:$0xf] %v2931
  %3032 = vst [vmem:[%s3 + $0x40] sm:$0xf] %v2932
  %3033 = vst [vmem:[%s3 + $0x44] sm:$0xf] %v2933
  %3034 = vst [vmem:[%s3 + $0x48] sm:$0xf] %v2934
  %3035 = vst [vmem:[%s3 + $0x4c] sm:$0xf] %v2935
  %3036 = vst [vmem:[%s3 + $0x50] sm:$0xf] %v2936
  %3037 = vst [vmem:[%s3 + $0x54] sm:$0xf] %v2937
  %3038 = vst [vmem:[%s3 + $0x58] sm:$0xf] %v2938
  %3039 = vst [vmem:[%s3 + $0x5c] sm:$0xf] %v2939
  %3040 = vst [vmem:[%s3 + $0x60] sm:$0xf] %v2940
  %3041 = vst [vmem:[%s3 + $0x64] sm:$0xf] %v2941
  %3042 = vst [vmem:[%s3 + $0x68] sm:$0xf] %v2942
  %3043 = vst [vmem:[%s3 + $0x6c] sm:$0xf] %v2943
  %3044 = vst [vmem:[%s3 + $0x70] sm:$0xf] %v2944
  %3045 = vst [vmem:[%s3 + $0x74] sm:$0xf] %v2945
  %3046 = vst [vmem:[%s3 + $0x78] sm:$0xf] %v2946
  %3047 = vst [vmem:[%s3 + $0x7c] sm:$0xf] %v2947
  %3048 = vst [vmem:[%s3 + $0x80] sm:$0xf] %v2948
  %3049 = vst [vmem:[%s3 + $0x84] sm:$0xf] %v2949
  %3050 = vst [vmem:[%s3 + $0x88] sm:$0xf] %v2950
  %3051 = vst [vmem:[%s3 + $0x8c] sm:$0xf] %v2951
  %3052 = vst [vmem:[%s3 + $0x90] sm:$0xf] %v2952
  %3053 = vst [vmem:[%s3 + $0x94] sm:$0xf] %v2953
  %3054 = vst [vmem:[%s3 + $0x98] sm:$0xf] %v2954
  %3055 = vst [vmem:[%s3 + $0x9c] sm:$0xf] %v2955
  %3056 = vst [vmem:[%s3 + $0xa0] sm:$0xf] %v2956
  %3057 = vst [vmem:[%s3 + $0xa4] sm:$0xf] %v2957
  %3058 = vst [vmem:[%s3 + $0xa8] sm:$0xf] %v2958
  %3059 = vst [vmem:[%s3 + $0xac] sm:$0xf] %v2959
  %3060 = vst [vmem:[%s3 + $0xb0] sm:$0xf] %v2960
  %3061 = vst [vmem:[%s3 + $0xb4] sm:$0xf] %v2961
  %3062 = vst [vmem:[%s3 + $0xb8] sm:$0xf] %v2962
  %3063 = vst [vmem:[%s3 + $0xbc] sm:$0xf] %v2963
  %3064 = vst [vmem:[%s3 + $0xc0] sm:$0xf] %v2964
  %3065 = vst [vmem:[%s3 + $0xc4] sm:$0xf] %v2965
  // Predicated region
  $region14: #{classif_forward.5} parent=0 // pred_check
    _
  $region15: #{classif_forward.5} parent=0 // pred_check_branch
    %3067 = sbr.rel (0) target = $region17
  $region16: #{classif_forward.5} parent=0 // pred_region
    _
  $region17: #{classif_forward.5} parent=0 // pred_fallthru
    _
  // Predicated region
  $region18: #{classif_forward.5} parent=0 // pred_check
    _
  $region19: #{classif_forward.5} parent=0 // pred_check_branch
    %3069 = sbr.rel (0) target = $region21
  $region20: #{classif_forward.5} parent=0 // pred_region
    _
  $region21: #{classif_forward.5} parent=0 // pred_fallthru
    _

// kernel: classif_forward.6
$region0: #{classif_forward.6}
  #allocation0 [shape = 'u32[]', space=smem, size = 0x4, offset = 0x4, fixed_abs, tag = 'smem constant byte address 0x4 - core index']
  #allocation1 [shape = 'u32[144,128]{1,0:T(1,128)}', space=vmem, size = 0x12000, scoped, tag = 'internal scratch']
  %s0 = inlined_call_operand.vmem [shape: bf16[32,2048], index: 0, kind: input, shape index: {}]
  %s1 = inlined_call_operand.vmem [shape: bf16[2048,256], index: 1, kind: input, shape index: {}]
  %s2 = inlined_call_operand.vmem [shape: f32[1,256], index: 2, kind: input, shape index: {}]
  %s3 = inlined_call_operand.vmem [shape: bf16[32,256], index: 3, kind: output, shape index: {}]
  %s4 = sld [smem:[#allocation0]]
  $region22: #{classif_forward.6} parent=0
    _
  %s6 = ssub.s32 1, %s4
  %s7 = scalar_select 0, %s6, %s4
  // Predicated region
  $region2: #{classif_forward.6} parent=0 // pred_check
    _
  $region3: #{classif_forward.6} parent=0 // pred_check_branch
    %9 = sbr.rel (0) target = $region5
  $region4: #{classif_forward.6} parent=0 // pred_region
    _
  $region5: #{classif_forward.6} parent=0 // pred_fallthru
    _
  // Predicated region
  $region6: #{classif_forward.6} parent=0 // pred_check
    _
  $region7: #{classif_forward.6} parent=0 // pred_check_branch
    %11 = sbr.rel (0) target = $region9
  $region8: #{classif_forward.6} parent=0 // pred_region
    _
  $region9: #{classif_forward.6} parent=0 // pred_fallthru
    _
  // Predicated region
  $region10: #{classif_forward.6} parent=0 // pred_check
    _
  $region11: #{classif_forward.6} parent=0 // pred_check_branch
    %13 = sbr.rel (0) target = $region13
  $region12: #{classif_forward.6} parent=0 // pred_region
    _
  $region13: #{classif_forward.6} parent=0 // pred_fallthru
    _
  %v14 = vld [vmem:[%s0] sm:$0xff]
  %v15 = vld [vmem:[%s0 + $0x8] sm:$0xff]
  %v16 = vld [vmem:[%s0 + $0x10] sm:$0xff]
  %v17 = vld [vmem:[%s0 + $0x18] sm:$0xff]
  %v18 = vld [vmem:[%s0 + $0x20] sm:$0xff]
  %v19 = vld [vmem:[%s0 + $0x28] sm:$0xff]
  %v20 = vld [vmem:[%s0 + $0x30] sm:$0xff]
  %v21 = vld [vmem:[%s0 + $0x38] sm:$0xff]
  %v22 = vld [vmem:[%s0 + $0x40] sm:$0xff]
  %v23 = vld [vmem:[%s0 + $0x48] sm:$0xff]
  %v24 = vld [vmem:[%s0 + $0x50] sm:$0xff]
  %v25 = vld [vmem:[%s0 + $0x58] sm:$0xff]
  %v26 = vld [vmem:[%s0 + $0x60] sm:$0xff]
  %v27 = vld [vmem:[%s0 + $0x68] sm:$0xff]
  %v28 = vld [vmem:[%s0 + $0x70] sm:$0xff]
  %v29 = vld [vmem:[%s0 + $0x78] sm:$0xff]
  %v30 = vld [vmem:[%s0 + $0x80] sm:$0xff]
  %v31 = vld [vmem:[%s0 + $0x88] sm:$0xff]
  %v32 = vld [vmem:[%s0 + $0x90] sm:$0xff]
  %v33 = vld [vmem:[%s0 + $0x98] sm:$0xff]
  %v34 = vld [vmem:[%s0 + $0xa0] sm:$0xff]
  %v35 = vld [vmem:[%s0 + $0xa8] sm:$0xff]
  %v36 = vld [vmem:[%s0 + $0xb0] sm:$0xff]
  %v37 = vld [vmem:[%s0 + $0xb8] sm:$0xff]
  %v38 = vld [vmem:[%s0 + $0xc0] sm:$0xff]
  %v39 = vld [vmem:[%s0 + $0xc8] sm:$0xff]
  %v40 = vld [vmem:[%s0 + $0xd0] sm:$0xff]
  %v41 = vld [vmem:[%s0 + $0xd8] sm:$0xff]
  %v42 = vld [vmem:[%s0 + $0xe0] sm:$0xff]
  %v43 = vld [vmem:[%s0 + $0xe8] sm:$0xff]
  %v44 = vld [vmem:[%s0 + $0xf0] sm:$0xff]
  %v45 = vld [vmem:[%s0 + $0xf8] sm:$0xff]
  %v46 = vld [vmem:[%s1] sm:$0xff]
  %v47 = vld [vmem:[%s1 + $0x8] sm:$0xff]
  %v48 = vld [vmem:[%s1 + $0x10] sm:$0xff]
  %v49 = vld [vmem:[%s1 + $0x18] sm:$0xff]
  %v50 = vld [vmem:[%s1 + $0x20] sm:$0xff]
  %v51 = vld [vmem:[%s1 + $0x28] sm:$0xff]
  %v52 = vld [vmem:[%s1 + $0x30] sm:$0xff]
  %v53 = vld [vmem:[%s1 + $0x38] sm:$0xff]
  %v54 = vld [vmem:[%s1 + $0x40] sm:$0xff]
  %v55 = vld [vmem:[%s1 + $0x48] sm:$0xff]
  %v56 = vld [vmem:[%s1 + $0x50] sm:$0xff]
  %v57 = vld [vmem:[%s1 + $0x58] sm:$0xff]
  %v58 = vld [vmem:[%s1 + $0x60] sm:$0xff]
  %v59 = vld [vmem:[%s1 + $0x68] sm:$0xff]
  %v60 = vld [vmem:[%s1 + $0x70] sm:$0xff]
  %v61 = vld [vmem:[%s1 + $0x78] sm:$0xff]
  %v62 = vld [vmem:[%s1 + $0x80] sm:$0xff]
  %v63 = vld [vmem:[%s1 + $0x88] sm:$0xff]
  %v64 = vld [vmem:[%s1 + $0x90] sm:$0xff]
  %v65 = vld [vmem:[%s1 + $0x98] sm:$0xff]
  %v66 = vld [vmem:[%s1 + $0xa0] sm:$0xff]
  %v67 = vld [vmem:[%s1 + $0xa8] sm:$0xff]
  %v68 = vld [vmem:[%s1 + $0xb0] sm:$0xff]
  %v69 = vld [vmem:[%s1 + $0xb8] sm:$0xff]
  %v70 = vld [vmem:[%s1 + $0xc0] sm:$0xff]
  %v71 = vld [vmem:[%s1 + $0xc8] sm:$0xff]
  %v72 = vld [vmem:[%s1 + $0xd0] sm:$0xff]
  %v73 = vld [vmem:[%s1 + $0xd8] sm:$0xff]
  %v74 = vld [vmem:[%s1 + $0xe0] sm:$0xff]
  %v75 = vld [vmem:[%s1 + $0xe8] sm:$0xff]
  %v76 = vld [vmem:[%s1 + $0xf0] sm:$0xff]
  %v77 = vld [vmem:[%s1 + $0xf8] sm:$0xff]
  %v78 = vld [vmem:[%s1 + $0x100] sm:$0xff]
  %v79 = vld [vmem:[%s1 + $0x108] sm:$0xff]
  %v80 = vld [vmem:[%s1 + $0x110] sm:$0xff]
  %v81 = vld [vmem:[%s1 + $0x118] sm:$0xff]
  %v82 = vld [vmem:[%s1 + $0x120] sm:$0xff]
  %v83 = vld [vmem:[%s1 + $0x128] sm:$0xff]
  %v84 = vld [vmem:[%s1 + $0x130] sm:$0xff]
  %v85 = vld [vmem:[%s1 + $0x138] sm:$0xff]
  %v86 = vld [vmem:[%s1 + $0x140] sm:$0xff]
  %v87 = vld [vmem:[%s1 + $0x148] sm:$0xff]
  %v88 = vld [vmem:[%s1 + $0x150] sm:$0xff]
  %v89 = vld [vmem:[%s1 + $0x158] sm:$0xff]
  %v90 = vld [vmem:[%s1 + $0x160] sm:$0xff]
  %v91 = vld [vmem:[%s1 + $0x168] sm:$0xff]
  %v92 = vld [vmem:[%s1 + $0x170] sm:$0xff]
  %v93 = vld [vmem:[%s1 + $0x178] sm:$0xff]
  %v94 = vld [vmem:[%s1 + $0x180] sm:$0xff]
  %v95 = vld [vmem:[%s1 + $0x188] sm:$0xff]
  %v96 = vld [vmem:[%s1 + $0x190] sm:$0xff]
  %v97 = vld [vmem:[%s1 + $0x198] sm:$0xff]
  %v98 = vld [vmem:[%s1 + $0x1a0] sm:$0xff]
  %v99 = vld [vmem:[%s1 + $0x1a8] sm:$0xff]
  %v100 = vld [vmem:[%s1 + $0x1b0] sm:$0xff]
  %v101 = vld [vmem:[%s1 + $0x1b8] sm:$0xff]
  %v102 = vld [vmem:[%s1 + $0x1c0] sm:$0xff]
  %v103 = vld [vmem:[%s1 + $0x1c8] sm:$0xff]
  %v104 = vld [vmem:[%s1 + $0x1d0] sm:$0xff]
  %v105 = vld [vmem:[%s1 + $0x1d8] sm:$0xff]
  %v106 = vld [vmem:[%s1 + $0x1e0] sm:$0xff]
  %v107 = vld [vmem:[%s1 + $0x1e8] sm:$0xff]
  %v108 = vld [vmem:[%s1 + $0x1f0] sm:$0xff]
  %v109 = vld [vmem:[%s1 + $0x1f8] sm:$0xff]
  %v110 = vld [vmem:[%s1 + $0x200] sm:$0xff]
  %v111 = vld [vmem:[%s1 + $0x208] sm:$0xff]
  %v112 = vld [vmem:[%s1 + $0x210] sm:$0xff]
  %v113 = vld [vmem:[%s1 + $0x218] sm:$0xff]
  %v114 = vld [vmem:[%s1 + $0x220] sm:$0xff]
  %v115 = vld [vmem:[%s1 + $0x228] sm:$0xff]
  %v116 = vld [vmem:[%s1 + $0x230] sm:$0xff]
  %v117 = vld [vmem:[%s1 + $0x238] sm:$0xff]
  %v118 = vld [vmem:[%s1 + $0x240] sm:$0xff]
  %v119 = vld [vmem:[%s1 + $0x248] sm:$0xff]
  %v120 = vld [vmem:[%s1 + $0x250] sm:$0xff]
  %v121 = vld [vmem:[%s1 + $0x258] sm:$0xff]
  %v122 = vld [vmem:[%s1 + $0x260] sm:$0xff]
  %v123 = vld [vmem:[%s1 + $0x268] sm:$0xff]
  %v124 = vld [vmem:[%s1 + $0x270] sm:$0xff]
  %v125 = vld [vmem:[%s1 + $0x278] sm:$0xff]
  %v126 = vld [vmem:[%s1 + $0x280] sm:$0xff]
  %v127 = vld [vmem:[%s1 + $0x288] sm:$0xff]
  %v128 = vld [vmem:[%s1 + $0x290] sm:$0xff]
  %v129 = vld [vmem:[%s1 + $0x298] sm:$0xff]
  %v130 = vld [vmem:[%s1 + $0x2a0] sm:$0xff]
  %v131 = vld [vmem:[%s1 + $0x2a8] sm:$0xff]
  %v132 = vld [vmem:[%s1 + $0x2b0] sm:$0xff]
  %v133 = vld [vmem:[%s1 + $0x2b8] sm:$0xff]
  %v134 = vld [vmem:[%s1 + $0x2c0] sm:$0xff]
  %v135 = vld [vmem:[%s1 + $0x2c8] sm:$0xff]
  %v136 = vld [vmem:[%s1 + $0x2d0] sm:$0xff]
  %v137 = vld [vmem:[%s1 + $0x2d8] sm:$0xff]
  %v138 = vld [vmem:[%s1 + $0x2e0] sm:$0xff]
  %v139 = vld [vmem:[%s1 + $0x2e8] sm:$0xff]
  %v140 = vld [vmem:[%s1 + $0x2f0] sm:$0xff]
  %v141 = vld [vmem:[%s1 + $0x2f8] sm:$0xff]
  %v142 = vld [vmem:[%s1 + $0x300] sm:$0xff]
  %v143 = vld [vmem:[%s1 + $0x308] sm:$0xff]
  %v144 = vld [vmem:[%s1 + $0x310] sm:$0xff]
  %v145 = vld [vmem:[%s1 + $0x318] sm:$0xff]
  %v146 = vld [vmem:[%s1 + $0x320] sm:$0xff]
  %v147 = vld [vmem:[%s1 + $0x328] sm:$0xff]
  %v148 = vld [vmem:[%s1 + $0x330] sm:$0xff]
  %v149 = vld [vmem:[%s1 + $0x338] sm:$0xff]
  %v150 = vld [vmem:[%s1 + $0x340] sm:$0xff]
  %v151 = vld [vmem:[%s1 + $0x348] sm:$0xff]
  %v152 = vld [vmem:[%s1 + $0x350] sm:$0xff]
  %v153 = vld [vmem:[%s1 + $0x358] sm:$0xff]
  %v154 = vld [vmem:[%s1 + $0x360] sm:$0xff]
  %v155 = vld [vmem:[%s1 + $0x368] sm:$0xff]
  %v156 = vld [vmem:[%s1 + $0x370] sm:$0xff]
  %v157 = vld [vmem:[%s1 + $0x378] sm:$0xff]
  %v158 = vld [vmem:[%s1 + $0x380] sm:$0xff]
  %v159 = vld [vmem:[%s1 + $0x388] sm:$0xff]
  %v160 = vld [vmem:[%s1 + $0x390] sm:$0xff]
  %v161 = vld [vmem:[%s1 + $0x398] sm:$0xff]
  %v162 = vld [vmem:[%s1 + $0x3a0] sm:$0xff]
  %v163 = vld [vmem:[%s1 + $0x3a8] sm:$0xff]
  %v164 = vld [vmem:[%s1 + $0x3b0] sm:$0xff]
  %v165 = vld [vmem:[%s1 + $0x3b8] sm:$0xff]
  %v166 = vld [vmem:[%s1 + $0x3c0] sm:$0xff]
  %v167 = vld [vmem:[%s1 + $0x3c8] sm:$0xff]
  %v168 = vld [vmem:[%s1 + $0x3d0] sm:$0xff]
  %v169 = vld [vmem:[%s1 + $0x3d8] sm:$0xff]
  %v170 = vld [vmem:[%s1 + $0x3e0] sm:$0xff]
  %v171 = vld [vmem:[%s1 + $0x3e8] sm:$0xff]
  %v172 = vld [vmem:[%s1 + $0x3f0] sm:$0xff]
  %v173 = vld [vmem:[%s1 + $0x3f8] sm:$0xff]
  %v174 = vld [vmem:[%s1 + $0x400] sm:$0xff]
  %v175 = vld [vmem:[%s1 + $0x408] sm:$0xff]
  %v176 = vld [vmem:[%s1 + $0x410] sm:$0xff]
  %v177 = vld [vmem:[%s1 + $0x418] sm:$0xff]
  %v178 = vld [vmem:[%s1 + $0x420] sm:$0xff]
  %v179 = vld [vmem:[%s1 + $0x428] sm:$0xff]
  %v180 = vld [vmem:[%s1 + $0x430] sm:$0xff]
  %v181 = vld [vmem:[%s1 + $0x438] sm:$0xff]
  %v182 = vld [vmem:[%s1 + $0x440] sm:$0xff]
  %v183 = vld [vmem:[%s1 + $0x448] sm:$0xff]
  %v184 = vld [vmem:[%s1 + $0x450] sm:$0xff]
  %v185 = vld [vmem:[%s1 + $0x458] sm:$0xff]
  %v186 = vld [vmem:[%s1 + $0x460] sm:$0xff]
  %v187 = vld [vmem:[%s1 + $0x468] sm:$0xff]
  %v188 = vld [vmem:[%s1 + $0x470] sm:$0xff]
  %v189 = vld [vmem:[%s1 + $0x478] sm:$0xff]
  %v190 = vld [vmem:[%s1 + $0x480] sm:$0xff]
  %v191 = vld [vmem:[%s1 + $0x488] sm:$0xff]
  %v192 = vld [vmem:[%s1 + $0x490] sm:$0xff]
  %v193 = vld [vmem:[%s1 + $0x498] sm:$0xff]
  %v194 = vld [vmem:[%s1 + $0x4a0] sm:$0xff]
  %v195 = vld [vmem:[%s1 + $0x4a8] sm:$0xff]
  %v196 = vld [vmem:[%s1 + $0x4b0] sm:$0xff]
  %v197 = vld [vmem:[%s1 + $0x4b8] sm:$0xff]
  %v198 = vld [vmem:[%s1 + $0x4c0] sm:$0xff]
  %v199 = vld [vmem:[%s1 + $0x4c8] sm:$0xff]
  %v200 = vld [vmem:[%s1 + $0x4d0] sm:$0xff]
  %v201 = vld [vmem:[%s1 + $0x4d8] sm:$0xff]
  %v202 = vld [vmem:[%s1 + $0x4e0] sm:$0xff]
  %v203 = vld [vmem:[%s1 + $0x4e8] sm:$0xff]
  %v204 = vld [vmem:[%s1 + $0x4f0] sm:$0xff]
  %v205 = vld [vmem:[%s1 + $0x4f8] sm:$0xff]
  %v206 = vld [vmem:[%s1 + $0x500] sm:$0xff]
  %v207 = vld [vmem:[%s1 + $0x508] sm:$0xff]
  %v208 = vld [vmem:[%s1 + $0x510] sm:$0xff]
  %v209 = vld [vmem:[%s1 + $0x518] sm:$0xff]
  %v210 = vld [vmem:[%s1 + $0x520] sm:$0xff]
  %v211 = vld [vmem:[%s1 + $0x528] sm:$0xff]
  %v212 = vld [vmem:[%s1 + $0x530] sm:$0xff]
  %v213 = vld [vmem:[%s1 + $0x538] sm:$0xff]
  %v214 = vld [vmem:[%s1 + $0x540] sm:$0xff]
  %v215 = vld [vmem:[%s1 + $0x548] sm:$0xff]
  %v216 = vld [vmem:[%s1 + $0x550] sm:$0xff]
  %v217 = vld [vmem:[%s1 + $0x558] sm:$0xff]
  %v218 = vld [vmem:[%s1 + $0x560] sm:$0xff]
  %v219 = vld [vmem:[%s1 + $0x568] sm:$0xff]
  %v220 = vld [vmem:[%s1 + $0x570] sm:$0xff]
  %v221 = vld [vmem:[%s1 + $0x578] sm:$0xff]
  %v222 = vld [vmem:[%s1 + $0x580] sm:$0xff]
  %v223 = vld [vmem:[%s1 + $0x588] sm:$0xff]
  %v224 = vld [vmem:[%s1 + $0x590] sm:$0xff]
  %v225 = vld [vmem:[%s1 + $0x598] sm:$0xff]
  %v226 = vld [vmem:[%s1 + $0x5a0] sm:$0xff]
  %v227 = vld [vmem:[%s1 + $0x5a8] sm:$0xff]
  %v228 = vld [vmem:[%s1 + $0x5b0] sm:$0xff]
  %v229 = vld [vmem:[%s1 + $0x5b8] sm:$0xff]
  %v230 = vld [vmem:[%s1 + $0x5c0] sm:$0xff]
  %v231 = vld [vmem:[%s1 + $0x5c8] sm:$0xff]
  %v232 = vld [vmem:[%s1 + $0x5d0] sm:$0xff]
  %v233 = vld [vmem:[%s1 + $0x5d8] sm:$0xff]
  %v234 = vld [vmem:[%s1 + $0x5e0] sm:$0xff]
  %v235 = vld [vmem:[%s1 + $0x5e8] sm:$0xff]
  %v236 = vld [vmem:[%s1 + $0x5f0] sm:$0xff]
  %v237 = vld [vmem:[%s1 + $0x5f8] sm:$0xff]
  %v238 = vld [vmem:[%s1 + $0x600] sm:$0xff]
  %v239 = vld [vmem:[%s1 + $0x608] sm:$0xff]
  %v240 = vld [vmem:[%s1 + $0x610] sm:$0xff]
  %v241 = vld [vmem:[%s1 + $0x618] sm:$0xff]
  %v242 = vld [vmem:[%s1 + $0x620] sm:$0xff]
  %v243 = vld [vmem:[%s1 + $0x628] sm:$0xff]
  %v244 = vld [vmem:[%s1 + $0x630] sm:$0xff]
  %v245 = vld [vmem:[%s1 + $0x638] sm:$0xff]
  %v246 = vld [vmem:[%s1 + $0x640] sm:$0xff]
  %v247 = vld [vmem:[%s1 + $0x648] sm:$0xff]
  %v248 = vld [vmem:[%s1 + $0x650] sm:$0xff]
  %v249 = vld [vmem:[%s1 + $0x658] sm:$0xff]
  %v250 = vld [vmem:[%s1 + $0x660] sm:$0xff]
  %v251 = vld [vmem:[%s1 + $0x668] sm:$0xff]
  %v252 = vld [vmem:[%s1 + $0x670] sm:$0xff]
  %v253 = vld [vmem:[%s1 + $0x678] sm:$0xff]
  %v254 = vld [vmem:[%s1 + $0x680] sm:$0xff]
  %v255 = vld [vmem:[%s1 + $0x688] sm:$0xff]
  %v256 = vld [vmem:[%s1 + $0x690] sm:$0xff]
  %v257 = vld [vmem:[%s1 + $0x698] sm:$0xff]
  %v258 = vld [vmem:[%s1 + $0x6a0] sm:$0xff]
  %v259 = vld [vmem:[%s1 + $0x6a8] sm:$0xff]
  %v260 = vld [vmem:[%s1 + $0x6b0] sm:$0xff]
  %v261 = vld [vmem:[%s1 + $0x6b8] sm:$0xff]
  %v262 = vld [vmem:[%s1 + $0x6c0] sm:$0xff]
  %v263 = vld [vmem:[%s1 + $0x6c8] sm:$0xff]
  %v264 = vld [vmem:[%s1 + $0x6d0] sm:$0xff]
  %v265 = vld [vmem:[%s1 + $0x6d8] sm:$0xff]
  %v266 = vld [vmem:[%s1 + $0x6e0] sm:$0xff]
  %v267 = vld [vmem:[%s1 + $0x6e8] sm:$0xff]
  %v268 = vld [vmem:[%s1 + $0x6f0] sm:$0xff]
  %v269 = vld [vmem:[%s1 + $0x6f8] sm:$0xff]
  %v270 = vld [vmem:[%s1 + $0x700] sm:$0xff]
  %v271 = vld [vmem:[%s1 + $0x708] sm:$0xff]
  %v272 = vld [vmem:[%s1 + $0x710] sm:$0xff]
  %v273 = vld [vmem:[%s1 + $0x718] sm:$0xff]
  %v274 = vld [vmem:[%s1 + $0x720] sm:$0xff]
  %v275 = vld [vmem:[%s1 + $0x728] sm:$0xff]
  %v276 = vld [vmem:[%s1 + $0x730] sm:$0xff]
  %v277 = vld [vmem:[%s1 + $0x738] sm:$0xff]
  %v278 = vld [vmem:[%s1 + $0x740] sm:$0xff]
  %v279 = vld [vmem:[%s1 + $0x748] sm:$0xff]
  %v280 = vld [vmem:[%s1 + $0x750] sm:$0xff]
  %v281 = vld [vmem:[%s1 + $0x758] sm:$0xff]
  %v282 = vld [vmem:[%s1 + $0x760] sm:$0xff]
  %v283 = vld [vmem:[%s1 + $0x768] sm:$0xff]
  %v284 = vld [vmem:[%s1 + $0x770] sm:$0xff]
  %v285 = vld [vmem:[%s1 + $0x778] sm:$0xff]
  %v286 = vld [vmem:[%s1 + $0x780] sm:$0xff]
  %v287 = vld [vmem:[%s1 + $0x788] sm:$0xff]
  %v288 = vld [vmem:[%s1 + $0x790] sm:$0xff]
  %v289 = vld [vmem:[%s1 + $0x798] sm:$0xff]
  %v290 = vld [vmem:[%s1 + $0x7a0] sm:$0xff]
  %v291 = vld [vmem:[%s1 + $0x7a8] sm:$0xff]
  %v292 = vld [vmem:[%s1 + $0x7b0] sm:$0xff]
  %v293 = vld [vmem:[%s1 + $0x7b8] sm:$0xff]
  %v294 = vld [vmem:[%s1 + $0x7c0] sm:$0xff]
  %v295 = vld [vmem:[%s1 + $0x7c8] sm:$0xff]
  %v296 = vld [vmem:[%s1 + $0x7d0] sm:$0xff]
  %v297 = vld [vmem:[%s1 + $0x7d8] sm:$0xff]
  %v298 = vld [vmem:[%s1 + $0x7e0] sm:$0xff]
  %v299 = vld [vmem:[%s1 + $0x7e8] sm:$0xff]
  %v300 = vld [vmem:[%s1 + $0x7f0] sm:$0xff]
  %v301 = vld [vmem:[%s1 + $0x7f8] sm:$0xff]
  %v302 = vld [vmem:[%s2] sm:$0x3]
  %v304 = vlaneseq
  %v305 = vshrl.u32 %v304, 7
  %v306 = vsub.s32 0, %v305
  %v307 = vrot.slane %v302, %v306
  %v308 = vlaneseq
  %v309 = vshrl.u32 %v308, 7
  %v310 = vsub.s32 1, %v309
  %v311 = vrot.slane %v302, %v310
  %v346 = vunpack.c.l.b16 %v14
  %v347 = vunpack.c.h.b16 %v14
  %v348 = vunpack.c.l.b16 %v15
  %v349 = vunpack.c.h.b16 %v15
  %v350 = vunpack.c.l.b16 %v16
  %v351 = vunpack.c.h.b16 %v16
  %v352 = vunpack.c.l.b16 %v17
  %v353 = vunpack.c.h.b16 %v17
  %v354 = vunpack.c.l.b16 %v18
  %v355 = vunpack.c.h.b16 %v18
  %v356 = vunpack.c.l.b16 %v19
  %v357 = vunpack.c.h.b16 %v19
  %v358 = vunpack.c.l.b16 %v20
  %v359 = vunpack.c.h.b16 %v20
  %v360 = vunpack.c.l.b16 %v21
  %v361 = vunpack.c.h.b16 %v21
  %v362 = vunpack.c.l.b16 %v22
  %v363 = vunpack.c.h.b16 %v22
  %v364 = vunpack.c.l.b16 %v23
  %v365 = vunpack.c.h.b16 %v23
  %v366 = vunpack.c.l.b16 %v24
  %v367 = vunpack.c.h.b16 %v24
  %v368 = vunpack.c.l.b16 %v25
  %v369 = vunpack.c.h.b16 %v25
  %v370 = vunpack.c.l.b16 %v26
  %v371 = vunpack.c.h.b16 %v26
  %v372 = vunpack.c.l.b16 %v27
  %v373 = vunpack.c.h.b16 %v27
  %v374 = vunpack.c.l.b16 %v28
  %v375 = vunpack.c.h.b16 %v28
  %v376 = vunpack.c.l.b16 %v29
  %v377 = vunpack.c.h.b16 %v29
  %v378 = vunpack.c.l.b16 %v30
  %v379 = vunpack.c.h.b16 %v30
  %v380 = vunpack.c.l.b16 %v31
  %v381 = vunpack.c.h.b16 %v31
  %v382 = vunpack.c.l.b16 %v32
  %v383 = vunpack.c.h.b16 %v32
  %v384 = vunpack.c.l.b16 %v33
  %v385 = vunpack.c.h.b16 %v33
  %v386 = vunpack.c.l.b16 %v34
  %v387 = vunpack.c.h.b16 %v34
  %v388 = vunpack.c.l.b16 %v35
  %v389 = vunpack.c.h.b16 %v35
  %v390 = vunpack.c.l.b16 %v36
  %v391 = vunpack.c.h.b16 %v36
  %v392 = vunpack.c.l.b16 %v37
  %v393 = vunpack.c.h.b16 %v37
  %v394 = vunpack.c.l.b16 %v38
  %v395 = vunpack.c.h.b16 %v38
  %v396 = vunpack.c.l.b16 %v39
  %v397 = vunpack.c.h.b16 %v39
  %v398 = vunpack.c.l.b16 %v40
  %v399 = vunpack.c.h.b16 %v40
  %v400 = vunpack.c.l.b16 %v41
  %v401 = vunpack.c.h.b16 %v41
  %v402 = vunpack.c.l.b16 %v42
  %v403 = vunpack.c.h.b16 %v42
  %v404 = vunpack.c.l.b16 %v43
  %v405 = vunpack.c.h.b16 %v43
  %v406 = vunpack.c.l.b16 %v44
  %v407 = vunpack.c.h.b16 %v44
  %v408 = vunpack.c.l.b16 %v45
  %v409 = vunpack.c.h.b16 %v45
  %v410 = vpack.c.b16 %v362, %v346
  %v411 = vpack.c.b16 %v363, %v347
  %v412 = vpack.c.b16 %v364, %v348
  %v413 = vpack.c.b16 %v365, %v349
  %v414 = vpack.c.b16 %v366, %v350
  %v415 = vpack.c.b16 %v367, %v351
  %v416 = vpack.c.b16 %v368, %v352
  %v417 = vpack.c.b16 %v369, %v353
  %v418 = vpack.c.b16 %v370, %v354
  %v419 = vpack.c.b16 %v371, %v355
  %v420 = vpack.c.b16 %v372, %v356
  %v421 = vpack.c.b16 %v373, %v357
  %v422 = vpack.c.b16 %v374, %v358
  %v423 = vpack.c.b16 %v375, %v359
  %v424 = vpack.c.b16 %v376, %v360
  %v425 = vpack.c.b16 %v377, %v361
  %v426 = vpack.c.b16 %v394, %v378
  %v427 = vpack.c.b16 %v395, %v379
  %v428 = vpack.c.b16 %v396, %v380
  %v429 = vpack.c.b16 %v397, %v381
  %v430 = vpack.c.b16 %v398, %v382
  %v431 = vpack.c.b16 %v399, %v383
  %v432 = vpack.c.b16 %v400, %v384
  %v433 = vpack.c.b16 %v401, %v385
  %v434 = vpack.c.b16 %v402, %v386
  %v435 = vpack.c.b16 %v403, %v387
  %v436 = vpack.c.b16 %v404, %v388
  %v437 = vpack.c.b16 %v405, %v389
  %v438 = vpack.c.b16 %v406, %v390
  %v439 = vpack.c.b16 %v407, %v391
  %v440 = vpack.c.b16 %v408, %v392
  %v441 = vpack.c.b16 %v409, %v393
  %v730 = vunpack.c.l.b16 %v46
  %v731 = vunpack.c.h.b16 %v46
  %v732 = vunpack.c.l.b16 %v47
  %v733 = vunpack.c.h.b16 %v47
  %v734 = vunpack.c.l.b16 %v48
  %v735 = vunpack.c.h.b16 %v48
  %v736 = vunpack.c.l.b16 %v49
  %v737 = vunpack.c.h.b16 %v49
  %v738 = vunpack.c.l.b16 %v50
  %v739 = vunpack.c.h.b16 %v50
  %v740 = vunpack.c.l.b16 %v51
  %v741 = vunpack.c.h.b16 %v51
  %v742 = vunpack.c.l.b16 %v52
  %v743 = vunpack.c.h.b16 %v52
  %v744 = vunpack.c.l.b16 %v53
  %v745 = vunpack.c.h.b16 %v53
  %v746 = vunpack.c.l.b16 %v54
  %v747 = vunpack.c.h.b16 %v54
  %v748 = vunpack.c.l.b16 %v55
  %v749 = vunpack.c.h.b16 %v55
  %v750 = vunpack.c.l.b16 %v56
  %v751 = vunpack.c.h.b16 %v56
  %v752 = vunpack.c.l.b16 %v57
  %v753 = vunpack.c.h.b16 %v57
  %v754 = vunpack.c.l.b16 %v58
  %v755 = vunpack.c.h.b16 %v58
  %v756 = vunpack.c.l.b16 %v59
  %v757 = vunpack.c.h.b16 %v59
  %v758 = vunpack.c.l.b16 %v60
  %v759 = vunpack.c.h.b16 %v60
  %v760 = vunpack.c.l.b16 %v61
  %v761 = vunpack.c.h.b16 %v61
  %v762 = vunpack.c.l.b16 %v62
  %v763 = vunpack.c.h.b16 %v62
  %v764 = vunpack.c.l.b16 %v63
  %v765 = vunpack.c.h.b16 %v63
  %v766 = vunpack.c.l.b16 %v64
  %v767 = vunpack.c.h.b16 %v64
  %v768 = vunpack.c.l.b16 %v65
  %v769 = vunpack.c.h.b16 %v65
  %v770 = vunpack.c.l.b16 %v66
  %v771 = vunpack.c.h.b16 %v66
  %v772 = vunpack.c.l.b16 %v67
  %v773 = vunpack.c.h.b16 %v67
  %v774 = vunpack.c.l.b16 %v68
  %v775 = vunpack.c.h.b16 %v68
  %v776 = vunpack.c.l.b16 %v69
  %v777 = vunpack.c.h.b16 %v69
  %v778 = vunpack.c.l.b16 %v70
  %v779 = vunpack.c.h.b16 %v70
  %v780 = vunpack.c.l.b16 %v71
  %v781 = vunpack.c.h.b16 %v71
  %v782 = vunpack.c.l.b16 %v72
  %v783 = vunpack.c.h.b16 %v72
  %v784 = vunpack.c.l.b16 %v73
  %v785 = vunpack.c.h.b16 %v73
  %v786 = vunpack.c.l.b16 %v74
  %v787 = vunpack.c.h.b16 %v74
  %v788 = vunpack.c.l.b16 %v75
  %v789 = vunpack.c.h.b16 %v75
  %v790 = vunpack.c.l.b16 %v76
  %v791 = vunpack.c.h.b16 %v76
  %v792 = vunpack.c.l.b16 %v77
  %v793 = vunpack.c.h.b16 %v77
  %v794 = vunpack.c.l.b16 %v78
  %v795 = vunpack.c.h.b16 %v78
  %v796 = vunpack.c.l.b16 %v79
  %v797 = vunpack.c.h.b16 %v79
  %v798 = vunpack.c.l.b16 %v80
  %v799 = vunpack.c.h.b16 %v80
  %v800 = vunpack.c.l.b16 %v81
  %v801 = vunpack.c.h.b16 %v81
  %v802 = vunpack.c.l.b16 %v82
  %v803 = vunpack.c.h.b16 %v82
  %v804 = vunpack.c.l.b16 %v83
  %v805 = vunpack.c.h.b16 %v83
  %v806 = vunpack.c.l.b16 %v84
  %v807 = vunpack.c.h.b16 %v84
  %v808 = vunpack.c.l.b16 %v85
  %v809 = vunpack.c.h.b16 %v85
  %v810 = vunpack.c.l.b16 %v86
  %v811 = vunpack.c.h.b16 %v86
  %v812 = vunpack.c.l.b16 %v87
  %v813 = vunpack.c.h.b16 %v87
  %v814 = vunpack.c.l.b16 %v88
  %v815 = vunpack.c.h.b16 %v88
  %v816 = vunpack.c.l.b16 %v89
  %v817 = vunpack.c.h.b16 %v89
  %v818 = vunpack.c.l.b16 %v90
  %v819 = vunpack.c.h.b16 %v90
  %v820 = vunpack.c.l.b16 %v91
  %v821 = vunpack.c.h.b16 %v91
  %v822 = vunpack.c.l.b16 %v92
  %v823 = vunpack.c.h.b16 %v92
  %v824 = vunpack.c.l.b16 %v93
  %v825 = vunpack.c.h.b16 %v93
  %v826 = vunpack.c.l.b16 %v94
  %v827 = vunpack.c.h.b16 %v94
  %v828 = vunpack.c.l.b16 %v95
  %v829 = vunpack.c.h.b16 %v95
  %v830 = vunpack.c.l.b16 %v96
  %v831 = vunpack.c.h.b16 %v96
  %v832 = vunpack.c.l.b16 %v97
  %v833 = vunpack.c.h.b16 %v97
  %v834 = vunpack.c.l.b16 %v98
  %v835 = vunpack.c.h.b16 %v98
  %v836 = vunpack.c.l.b16 %v99
  %v837 = vunpack.c.h.b16 %v99
  %v838 = vunpack.c.l.b16 %v100
  %v839 = vunpack.c.h.b16 %v100
  %v840 = vunpack.c.l.b16 %v101
  %v841 = vunpack.c.h.b16 %v101
  %v842 = vunpack.c.l.b16 %v102
  %v843 = vunpack.c.h.b16 %v102
  %v844 = vunpack.c.l.b16 %v103
  %v845 = vunpack.c.h.b16 %v103
  %v846 = vunpack.c.l.b16 %v104
  %v847 = vunpack.c.h.b16 %v104
  %v848 = vunpack.c.l.b16 %v105
  %v849 = vunpack.c.h.b16 %v105
  %v850 = vunpack.c.l.b16 %v106
  %v851 = vunpack.c.h.b16 %v106
  %v852 = vunpack.c.l.b16 %v107
  %v853 = vunpack.c.h.b16 %v107
  %v854 = vunpack.c.l.b16 %v108
  %v855 = vunpack.c.h.b16 %v108
  %v856 = vunpack.c.l.b16 %v109
  %v857 = vunpack.c.h.b16 %v109
  %v858 = vunpack.c.l.b16 %v110
  %v859 = vunpack.c.h.b16 %v110
  %v860 = vunpack.c.l.b16 %v111
  %v861 = vunpack.c.h.b16 %v111
  %v862 = vunpack.c.l.b16 %v112
  %v863 = vunpack.c.h.b16 %v112
  %v864 = vunpack.c.l.b16 %v113
  %v865 = vunpack.c.h.b16 %v113
  %v866 = vunpack.c.l.b16 %v114
  %v867 = vunpack.c.h.b16 %v114
  %v868 = vunpack.c.l.b16 %v115
  %v869 = vunpack.c.h.b16 %v115
  %v870 = vunpack.c.l.b16 %v116
  %v871 = vunpack.c.h.b16 %v116
  %v872 = vunpack.c.l.b16 %v117
  %v873 = vunpack.c.h.b16 %v117
  %v874 = vunpack.c.l.b16 %v118
  %v875 = vunpack.c.h.b16 %v118
  %v876 = vunpack.c.l.b16 %v119
  %v877 = vunpack.c.h.b16 %v119
  %v878 = vunpack.c.l.b16 %v120
  %v879 = vunpack.c.h.b16 %v120
  %v880 = vunpack.c.l.b16 %v121
  %v881 = vunpack.c.h.b16 %v121
  %v882 = vunpack.c.l.b16 %v122
  %v883 = vunpack.c.h.b16 %v122
  %v884 = vunpack.c.l.b16 %v123
  %v885 = vunpack.c.h.b16 %v123
  %v886 = vunpack.c.l.b16 %v124
  %v887 = vunpack.c.h.b16 %v124
  %v888 = vunpack.c.l.b16 %v125
  %v889 = vunpack.c.h.b16 %v125
  %v890 = vunpack.c.l.b16 %v126
  %v891 = vunpack.c.h.b16 %v126
  %v892 = vunpack.c.l.b16 %v127
  %v893 = vunpack.c.h.b16 %v127
  %v894 = vunpack.c.l.b16 %v128
  %v895 = vunpack.c.h.b16 %v128
  %v896 = vunpack.c.l.b16 %v129
  %v897 = vunpack.c.h.b16 %v129
  %v898 = vunpack.c.l.b16 %v130
  %v899 = vunpack.c.h.b16 %v130
  %v900 = vunpack.c.l.b16 %v131
  %v901 = vunpack.c.h.b16 %v131
  %v902 = vunpack.c.l.b16 %v132
  %v903 = vunpack.c.h.b16 %v132
  %v904 = vunpack.c.l.b16 %v133
  %v905 = vunpack.c.h.b16 %v133
  %v906 = vunpack.c.l.b16 %v134
  %v907 = vunpack.c.h.b16 %v134
  %v908 = vunpack.c.l.b16 %v135
  %v909 = vunpack.c.h.b16 %v135
  %v910 = vunpack.c.l.b16 %v136
  %v911 = vunpack.c.h.b16 %v136
  %v912 = vunpack.c.l.b16 %v137
  %v913 = vunpack.c.h.b16 %v137
  %v914 = vunpack.c.l.b16 %v138
  %v915 = vunpack.c.h.b16 %v138
  %v916 = vunpack.c.l.b16 %v139
  %v917 = vunpack.c.h.b16 %v139
  %v918 = vunpack.c.l.b16 %v140
  %v919 = vunpack.c.h.b16 %v140
  %v920 = vunpack.c.l.b16 %v141
  %v921 = vunpack.c.h.b16 %v141
  %v922 = vunpack.c.l.b16 %v142
  %v923 = vunpack.c.h.b16 %v142
  %v924 = vunpack.c.l.b16 %v143
  %v925 = vunpack.c.h.b16 %v143
  %v926 = vunpack.c.l.b16 %v144
  %v927 = vunpack.c.h.b16 %v144
  %v928 = vunpack.c.l.b16 %v145
  %v929 = vunpack.c.h.b16 %v145
  %v930 = vunpack.c.l.b16 %v146
  %v931 = vunpack.c.h.b16 %v146
  %v932 = vunpack.c.l.b16 %v147
  %v933 = vunpack.c.h.b16 %v147
  %v934 = vunpack.c.l.b16 %v148
  %v935 = vunpack.c.h.b16 %v148
  %v936 = vunpack.c.l.b16 %v149
  %v937 = vunpack.c.h.b16 %v149
  %v938 = vunpack.c.l.b16 %v150
  %v939 = vunpack.c.h.b16 %v150
  %v940 = vunpack.c.l.b16 %v151
  %v941 = vunpack.c.h.b16 %v151
  %v942 = vunpack.c.l.b16 %v152
  %v943 = vunpack.c.h.b16 %v152
  %v944 = vunpack.c.l.b16 %v153
  %v945 = vunpack.c.h.b16 %v153
  %v946 = vunpack.c.l.b16 %v154
  %v947 = vunpack.c.h.b16 %v154
  %v948 = vunpack.c.l.b16 %v155
  %v949 = vunpack.c.h.b16 %v155
  %v950 = vunpack.c.l.b16 %v156
  %v951 = vunpack.c.h.b16 %v156
  %v952 = vunpack.c.l.b16 %v157
  %v953 = vunpack.c.h.b16 %v157
  %v954 = vunpack.c.l.b16 %v158
  %v955 = vunpack.c.h.b16 %v158
  %v956 = vunpack.c.l.b16 %v159
  %v957 = vunpack.c.h.b16 %v159
  %v958 = vunpack.c.l.b16 %v160
  %v959 = vunpack.c.h.b16 %v160
  %v960 = vunpack.c.l.b16 %v161
  %v961 = vunpack.c.h.b16 %v161
  %v962 = vunpack.c.l.b16 %v162
  %v963 = vunpack.c.h.b16 %v162
  %v964 = vunpack.c.l.b16 %v163
  %v965 = vunpack.c.h.b16 %v163
  %v966 = vunpack.c.l.b16 %v164
  %v967 = vunpack.c.h.b16 %v164
  %v968 = vunpack.c.l.b16 %v165
  %v969 = vunpack.c.h.b16 %v165
  %v970 = vunpack.c.l.b16 %v166
  %v971 = vunpack.c.h.b16 %v166
  %v972 = vunpack.c.l.b16 %v167
  %v973 = vunpack.c.h.b16 %v167
  %v974 = vunpack.c.l.b16 %v168
  %v975 = vunpack.c.h.b16 %v168
  %v976 = vunpack.c.l.b16 %v169
  %v977 = vunpack.c.h.b16 %v169
  %v978 = vunpack.c.l.b16 %v170
  %v979 = vunpack.c.h.b16 %v170
  %v980 = vunpack.c.l.b16 %v171
  %v981 = vunpack.c.h.b16 %v171
  %v982 = vunpack.c.l.b16 %v172
  %v983 = vunpack.c.h.b16 %v172
  %v984 = vunpack.c.l.b16 %v173
  %v985 = vunpack.c.h.b16 %v173
  %v986 = vunpack.c.l.b16 %v174
  %v987 = vunpack.c.h.b16 %v174
  %v988 = vunpack.c.l.b16 %v175
  %v989 = vunpack.c.h.b16 %v175
  %v990 = vunpack.c.l.b16 %v176
  %v991 = vunpack.c.h.b16 %v176
  %v992 = vunpack.c.l.b16 %v177
  %v993 = vunpack.c.h.b16 %v177
  %v994 = vunpack.c.l.b16 %v178
  %v995 = vunpack.c.h.b16 %v178
  %v996 = vunpack.c.l.b16 %v179
  %v997 = vunpack.c.h.b16 %v179
  %v998 = vunpack.c.l.b16 %v180
  %v999 = vunpack.c.h.b16 %v180
  %v1000 = vunpack.c.l.b16 %v181
  %v1001 = vunpack.c.h.b16 %v181
  %v1002 = vunpack.c.l.b16 %v182
  %v1003 = vunpack.c.h.b16 %v182
  %v1004 = vunpack.c.l.b16 %v183
  %v1005 = vunpack.c.h.b16 %v183
  %v1006 = vunpack.c.l.b16 %v184
  %v1007 = vunpack.c.h.b16 %v184
  %v1008 = vunpack.c.l.b16 %v185
  %v1009 = vunpack.c.h.b16 %v185
  %v1010 = vunpack.c.l.b16 %v186
  %v1011 = vunpack.c.h.b16 %v186
  %v1012 = vunpack.c.l.b16 %v187
  %v1013 = vunpack.c.h.b16 %v187
  %v1014 = vunpack.c.l.b16 %v188
  %v1015 = vunpack.c.h.b16 %v188
  %v1016 = vunpack.c.l.b16 %v189
  %v1017 = vunpack.c.h.b16 %v189
  %v1018 = vunpack.c.l.b16 %v190
  %v1019 = vunpack.c.h.b16 %v190
  %v1020 = vunpack.c.l.b16 %v191
  %v1021 = vunpack.c.h.b16 %v191
  %v1022 = vunpack.c.l.b16 %v192
  %v1023 = vunpack.c.h.b16 %v192
  %v1024 = vunpack.c.l.b16 %v193
  %v1025 = vunpack.c.h.b16 %v193
  %v1026 = vunpack.c.l.b16 %v194
  %v1027 = vunpack.c.h.b16 %v194
  %v1028 = vunpack.c.l.b16 %v195
  %v1029 = vunpack.c.h.b16 %v195
  %v1030 = vunpack.c.l.b16 %v196
  %v1031 = vunpack.c.h.b16 %v196
  %v1032 = vunpack.c.l.b16 %v197
  %v1033 = vunpack.c.h.b16 %v197
  %v1034 = vunpack.c.l.b16 %v198
  %v1035 = vunpack.c.h.b16 %v198
  %v1036 = vunpack.c.l.b16 %v199
  %v1037 = vunpack.c.h.b16 %v199
  %v1038 = vunpack.c.l.b16 %v200
  %v1039 = vunpack.c.h.b16 %v200
  %v1040 = vunpack.c.l.b16 %v201
  %v1041 = vunpack.c.h.b16 %v201
  %v1042 = vunpack.c.l.b16 %v202
  %v1043 = vunpack.c.h.b16 %v202
  %v1044 = vunpack.c.l.b16 %v203
  %v1045 = vunpack.c.h.b16 %v203
  %v1046 = vunpack.c.l.b16 %v204
  %v1047 = vunpack.c.h.b16 %v204
  %v1048 = vunpack.c.l.b16 %v205
  %v1049 = vunpack.c.h.b16 %v205
  %v1050 = vunpack.c.l.b16 %v206
  %v1051 = vunpack.c.h.b16 %v206
  %v1052 = vunpack.c.l.b16 %v207
  %v1053 = vunpack.c.h.b16 %v207
  %v1054 = vunpack.c.l.b16 %v208
  %v1055 = vunpack.c.h.b16 %v208
  %v1056 = vunpack.c.l.b16 %v209
  %v1057 = vunpack.c.h.b16 %v209
  %v1058 = vunpack.c.l.b16 %v210
  %v1059 = vunpack.c.h.b16 %v210
  %v1060 = vunpack.c.l.b16 %v211
  %v1061 = vunpack.c.h.b16 %v211
  %v1062 = vunpack.c.l.b16 %v212
  %v1063 = vunpack.c.h.b16 %v212
  %v1064 = vunpack.c.l.b16 %v213
  %v1065 = vunpack.c.h.b16 %v213
  %v1066 = vunpack.c.l.b16 %v214
  %v1067 = vunpack.c.h.b16 %v214
  %v1068 = vunpack.c.l.b16 %v215
  %v1069 = vunpack.c.h.b16 %v215
  %v1070 = vunpack.c.l.b16 %v216
  %v1071 = vunpack.c.h.b16 %v216
  %v1072 = vunpack.c.l.b16 %v217
  %v1073 = vunpack.c.h.b16 %v217
  %v1074 = vunpack.c.l.b16 %v218
  %v1075 = vunpack.c.h.b16 %v218
  %v1076 = vunpack.c.l.b16 %v219
  %v1077 = vunpack.c.h.b16 %v219
  %v1078 = vunpack.c.l.b16 %v220
  %v1079 = vunpack.c.h.b16 %v220
  %v1080 = vunpack.c.l.b16 %v221
  %v1081 = vunpack.c.h.b16 %v221
  %v1082 = vunpack.c.l.b16 %v222
  %v1083 = vunpack.c.h.b16 %v222
  %v1084 = vunpack.c.l.b16 %v223
  %v1085 = vunpack.c.h.b16 %v223
  %v1086 = vunpack.c.l.b16 %v224
  %v1087 = vunpack.c.h.b16 %v224
  %v1088 = vunpack.c.l.b16 %v225
  %v1089 = vunpack.c.h.b16 %v225
  %v1090 = vunpack.c.l.b16 %v226
  %v1091 = vunpack.c.h.b16 %v226
  %v1092 = vunpack.c.l.b16 %v227
  %v1093 = vunpack.c.h.b16 %v227
  %v1094 = vunpack.c.l.b16 %v228
  %v1095 = vunpack.c.h.b16 %v228
  %v1096 = vunpack.c.l.b16 %v229
  %v1097 = vunpack.c.h.b16 %v229
  %v1098 = vunpack.c.l.b16 %v230
  %v1099 = vunpack.c.h.b16 %v230
  %v1100 = vunpack.c.l.b16 %v231
  %v1101 = vunpack.c.h.b16 %v231
  %v1102 = vunpack.c.l.b16 %v232
  %v1103 = vunpack.c.h.b16 %v232
  %v1104 = vunpack.c.l.b16 %v233
  %v1105 = vunpack.c.h.b16 %v233
  %v1106 = vunpack.c.l.b16 %v234
  %v1107 = vunpack.c.h.b16 %v234
  %v1108 = vunpack.c.l.b16 %v235
  %v1109 = vunpack.c.h.b16 %v235
  %v1110 = vunpack.c.l.b16 %v236
  %v1111 = vunpack.c.h.b16 %v236
  %v1112 = vunpack.c.l.b16 %v237
  %v1113 = vunpack.c.h.b16 %v237
  %v1114 = vunpack.c.l.b16 %v238
  %v1115 = vunpack.c.h.b16 %v238
  %v1116 = vunpack.c.l.b16 %v239
  %v1117 = vunpack.c.h.b16 %v239
  %v1118 = vunpack.c.l.b16 %v240
  %v1119 = vunpack.c.h.b16 %v240
  %v1120 = vunpack.c.l.b16 %v241
  %v1121 = vunpack.c.h.b16 %v241
  %v1122 = vunpack.c.l.b16 %v242
  %v1123 = vunpack.c.h.b16 %v242
  %v1124 = vunpack.c.l.b16 %v243
  %v1125 = vunpack.c.h.b16 %v243
  %v1126 = vunpack.c.l.b16 %v244
  %v1127 = vunpack.c.h.b16 %v244
  %v1128 = vunpack.c.l.b16 %v245
  %v1129 = vunpack.c.h.b16 %v245
  %v1130 = vunpack.c.l.b16 %v246
  %v1131 = vunpack.c.h.b16 %v246
  %v1132 = vunpack.c.l.b16 %v247
  %v1133 = vunpack.c.h.b16 %v247
  %v1134 = vunpack.c.l.b16 %v248
  %v1135 = vunpack.c.h.b16 %v248
  %v1136 = vunpack.c.l.b16 %v249
  %v1137 = vunpack.c.h.b16 %v249
  %v1138 = vunpack.c.l.b16 %v250
  %v1139 = vunpack.c.h.b16 %v250
  %v1140 = vunpack.c.l.b16 %v251
  %v1141 = vunpack.c.h.b16 %v251
  %v1142 = vunpack.c.l.b16 %v252
  %v1143 = vunpack.c.h.b16 %v252
  %v1144 = vunpack.c.l.b16 %v253
  %v1145 = vunpack.c.h.b16 %v253
  %v1146 = vunpack.c.l.b16 %v254
  %v1147 = vunpack.c.h.b16 %v254
  %v1148 = vunpack.c.l.b16 %v255
  %v1149 = vunpack.c.h.b16 %v255
  %v1150 = vunpack.c.l.b16 %v256
  %v1151 = vunpack.c.h.b16 %v256
  %v1152 = vunpack.c.l.b16 %v257
  %v1153 = vunpack.c.h.b16 %v257
  %v1154 = vunpack.c.l.b16 %v258
  %v1155 = vunpack.c.h.b16 %v258
  %v1156 = vunpack.c.l.b16 %v259
  %v1157 = vunpack.c.h.b16 %v259
  %v1158 = vunpack.c.l.b16 %v260
  %v1159 = vunpack.c.h.b16 %v260
  %v1160 = vunpack.c.l.b16 %v261
  %v1161 = vunpack.c.h.b16 %v261
  %v1162 = vunpack.c.l.b16 %v262
  %v1163 = vunpack.c.h.b16 %v262
  %v1164 = vunpack.c.l.b16 %v263
  %v1165 = vunpack.c.h.b16 %v263
  %v1166 = vunpack.c.l.b16 %v264
  %v1167 = vunpack.c.h.b16 %v264
  %v1168 = vunpack.c.l.b16 %v265
  %v1169 = vunpack.c.h.b16 %v265
  %v1170 = vunpack.c.l.b16 %v266
  %v1171 = vunpack.c.h.b16 %v266
  %v1172 = vunpack.c.l.b16 %v267
  %v1173 = vunpack.c.h.b16 %v267
  %v1174 = vunpack.c.l.b16 %v268
  %v1175 = vunpack.c.h.b16 %v268
  %v1176 = vunpack.c.l.b16 %v269
  %v1177 = vunpack.c.h.b16 %v269
  %v1178 = vunpack.c.l.b16 %v270
  %v1179 = vunpack.c.h.b16 %v270
  %v1180 = vunpack.c.l.b16 %v271
  %v1181 = vunpack.c.h.b16 %v271
  %v1182 = vunpack.c.l.b16 %v272
  %v1183 = vunpack.c.h.b16 %v272
  %v1184 = vunpack.c.l.b16 %v273
  %v1185 = vunpack.c.h.b16 %v273
  %v1186 = vunpack.c.l.b16 %v274
  %v1187 = vunpack.c.h.b16 %v274
  %v1188 = vunpack.c.l.b16 %v275
  %v1189 = vunpack.c.h.b16 %v275
  %v1190 = vunpack.c.l.b16 %v276
  %v1191 = vunpack.c.h.b16 %v276
  %v1192 = vunpack.c.l.b16 %v277
  %v1193 = vunpack.c.h.b16 %v277
  %v1194 = vunpack.c.l.b16 %v278
  %v1195 = vunpack.c.h.b16 %v278
  %v1196 = vunpack.c.l.b16 %v279
  %v1197 = vunpack.c.h.b16 %v279
  %v1198 = vunpack.c.l.b16 %v280
  %v1199 = vunpack.c.h.b16 %v280
  %v1200 = vunpack.c.l.b16 %v281
  %v1201 = vunpack.c.h.b16 %v281
  %v1202 = vunpack.c.l.b16 %v282
  %v1203 = vunpack.c.h.b16 %v282
  %v1204 = vunpack.c.l.b16 %v283
  %v1205 = vunpack.c.h.b16 %v283
  %v1206 = vunpack.c.l.b16 %v284
  %v1207 = vunpack.c.h.b16 %v284
  %v1208 = vunpack.c.l.b16 %v285
  %v1209 = vunpack.c.h.b16 %v285
  %v1210 = vunpack.c.l.b16 %v286
  %v1211 = vunpack.c.h.b16 %v286
  %v1212 = vunpack.c.l.b16 %v287
  %v1213 = vunpack.c.h.b16 %v287
  %v1214 = vunpack.c.l.b16 %v288
  %v1215 = vunpack.c.h.b16 %v288
  %v1216 = vunpack.c.l.b16 %v289
  %v1217 = vunpack.c.h.b16 %v289
  %v1218 = vunpack.c.l.b16 %v290
  %v1219 = vunpack.c.h.b16 %v290
  %v1220 = vunpack.c.l.b16 %v291
  %v1221 = vunpack.c.h.b16 %v291
  %v1222 = vunpack.c.l.b16 %v292
  %v1223 = vunpack.c.h.b16 %v292
  %v1224 = vunpack.c.l.b16 %v293
  %v1225 = vunpack.c.h.b16 %v293
  %v1226 = vunpack.c.l.b16 %v294
  %v1227 = vunpack.c.h.b16 %v294
  %v1228 = vunpack.c.l.b16 %v295
  %v1229 = vunpack.c.h.b16 %v295
  %v1230 = vunpack.c.l.b16 %v296
  %v1231 = vunpack.c.h.b16 %v296
  %v1232 = vunpack.c.l.b16 %v297
  %v1233 = vunpack.c.h.b16 %v297
  %v1234 = vunpack.c.l.b16 %v298
  %v1235 = vunpack.c.h.b16 %v298
  %v1236 = vunpack.c.l.b16 %v299
  %v1237 = vunpack.c.h.b16 %v299
  %v1238 = vunpack.c.l.b16 %v300
  %v1239 = vunpack.c.h.b16 %v300
  %v1240 = vunpack.c.l.b16 %v301
  %v1241 = vunpack.c.h.b16 %v301
  %v1242 = vpack.c.b16 %v732, %v730
  %v1243 = vpack.c.b16 %v733, %v731
  %v1244 = vpack.c.b16 %v736, %v734
  %v1245 = vpack.c.b16 %v737, %v735
  %v1246 = vpack.c.b16 %v740, %v738
  %v1247 = vpack.c.b16 %v741, %v739
  %v1248 = vpack.c.b16 %v744, %v742
  %v1249 = vpack.c.b16 %v745, %v743
  %v1250 = vpack.c.b16 %v748, %v746
  %v1251 = vpack.c.b16 %v749, %v747
  %v1252 = vpack.c.b16 %v752, %v750
  %v1253 = vpack.c.b16 %v753, %v751
  %v1254 = vpack.c.b16 %v756, %v754
  %v1255 = vpack.c.b16 %v757, %v755
  %v1256 = vpack.c.b16 %v760, %v758
  %v1257 = vpack.c.b16 %v761, %v759
  %v1258 = vpack.c.b16 %v764, %v762
  %v1259 = vpack.c.b16 %v765, %v763
  %v1260 = vpack.c.b16 %v768, %v766
  %v1261 = vpack.c.b16 %v769, %v767
  %v1262 = vpack.c.b16 %v772, %v770
  %v1263 = vpack.c.b16 %v773, %v771
  %v1264 = vpack.c.b16 %v776, %v774
  %v1265 = vpack.c.b16 %v777, %v775
  %v1266 = vpack.c.b16 %v780, %v778
  %v1267 = vpack.c.b16 %v781, %v779
  %v1268 = vpack.c.b16 %v784, %v782
  %v1269 = vpack.c.b16 %v785, %v783
  %v1270 = vpack.c.b16 %v788, %v786
  %v1271 = vpack.c.b16 %v789, %v787
  %v1272 = vpack.c.b16 %v792, %v790
  %v1273 = vpack.c.b16 %v793, %v791
  %v1274 = vpack.c.b16 %v796, %v794
  %v1275 = vpack.c.b16 %v797, %v795
  %v1276 = vpack.c.b16 %v800, %v798
  %v1277 = vpack.c.b16 %v801, %v799
  %v1278 = vpack.c.b16 %v804, %v802
  %v1279 = vpack.c.b16 %v805, %v803
  %v1280 = vpack.c.b16 %v808, %v806
  %v1281 = vpack.c.b16 %v809, %v807
  %v1282 = vpack.c.b16 %v812, %v810
  %v1283 = vpack.c.b16 %v813, %v811
  %v1284 = vpack.c.b16 %v816, %v814
  %v1285 = vpack.c.b16 %v817, %v815
  %v1286 = vpack.c.b16 %v820, %v818
  %v1287 = vpack.c.b16 %v821, %v819
  %v1288 = vpack.c.b16 %v824, %v822
  %v1289 = vpack.c.b16 %v825, %v823
  %v1290 = vpack.c.b16 %v828, %v826
  %v1291 = vpack.c.b16 %v829, %v827
  %v1292 = vpack.c.b16 %v832, %v830
  %v1293 = vpack.c.b16 %v833, %v831
  %v1294 = vpack.c.b16 %v836, %v834
  %v1295 = vpack.c.b16 %v837, %v835
  %v1296 = vpack.c.b16 %v840, %v838
  %v1297 = vpack.c.b16 %v841, %v839
  %v1298 = vpack.c.b16 %v844, %v842
  %v1299 = vpack.c.b16 %v845, %v843
  %v1300 = vpack.c.b16 %v848, %v846
  %v1301 = vpack.c.b16 %v849, %v847
  %v1302 = vpack.c.b16 %v852, %v850
  %v1303 = vpack.c.b16 %v853, %v851
  %v1304 = vpack.c.b16 %v856, %v854
  %v1305 = vpack.c.b16 %v857, %v855
  %v1306 = vpack.c.b16 %v860, %v858
  %v1307 = vpack.c.b16 %v861, %v859
  %v1308 = vpack.c.b16 %v864, %v862
  %v1309 = vpack.c.b16 %v865, %v863
  %v1310 = vpack.c.b16 %v868, %v866
  %v1311 = vpack.c.b16 %v869, %v867
  %v1312 = vpack.c.b16 %v872, %v870
  %v1313 = vpack.c.b16 %v873, %v871
  %v1314 = vpack.c.b16 %v876, %v874
  %v1315 = vpack.c.b16 %v877, %v875
  %v1316 = vpack.c.b16 %v880, %v878
  %v1317 = vpack.c.b16 %v881, %v879
  %v1318 = vpack.c.b16 %v884, %v882
  %v1319 = vpack.c.b16 %v885, %v883
  %v1320 = vpack.c.b16 %v888, %v886
  %v1321 = vpack.c.b16 %v889, %v887
  %v1322 = vpack.c.b16 %v892, %v890
  %v1323 = vpack.c.b16 %v893, %v891
  %v1324 = vpack.c.b16 %v896, %v894
  %v1325 = vpack.c.b16 %v897, %v895
  %v1326 = vpack.c.b16 %v900, %v898
  %v1327 = vpack.c.b16 %v901, %v899
  %v1328 = vpack.c.b16 %v904, %v902
  %v1329 = vpack.c.b16 %v905, %v903
  %v1330 = vpack.c.b16 %v908, %v906
  %v1331 = vpack.c.b16 %v909, %v907
  %v1332 = vpack.c.b16 %v912, %v910
  %v1333 = vpack.c.b16 %v913, %v911
  %v1334 = vpack.c.b16 %v916, %v914
  %v1335 = vpack.c.b16 %v917, %v915
  %v1336 = vpack.c.b16 %v920, %v918
  %v1337 = vpack.c.b16 %v921, %v919
  %v1338 = vpack.c.b16 %v924, %v922
  %v1339 = vpack.c.b16 %v925, %v923
  %v1340 = vpack.c.b16 %v928, %v926
  %v1341 = vpack.c.b16 %v929, %v927
  %v1342 = vpack.c.b16 %v932, %v930
  %v1343 = vpack.c.b16 %v933, %v931
  %v1344 = vpack.c.b16 %v936, %v934
  %v1345 = vpack.c.b16 %v937, %v935
  %v1346 = vpack.c.b16 %v940, %v938
  %v1347 = vpack.c.b16 %v941, %v939
  %v1348 = vpack.c.b16 %v944, %v942
  %v1349 = vpack.c.b16 %v945, %v943
  %v1350 = vpack.c.b16 %v948, %v946
  %v1351 = vpack.c.b16 %v949, %v947
  %v1352 = vpack.c.b16 %v952, %v950
  %v1353 = vpack.c.b16 %v953, %v951
  %v1354 = vpack.c.b16 %v956, %v954
  %v1355 = vpack.c.b16 %v957, %v955
  %v1356 = vpack.c.b16 %v960, %v958
  %v1357 = vpack.c.b16 %v961, %v959
  %v1358 = vpack.c.b16 %v964, %v962
  %v1359 = vpack.c.b16 %v965, %v963
  %v1360 = vpack.c.b16 %v968, %v966
  %v1361 = vpack.c.b16 %v969, %v967
  %v1362 = vpack.c.b16 %v972, %v970
  %v1363 = vpack.c.b16 %v973, %v971
  %v1364 = vpack.c.b16 %v976, %v974
  %v1365 = vpack.c.b16 %v977, %v975
  %v1366 = vpack.c.b16 %v980, %v978
  %v1367 = vpack.c.b16 %v981, %v979
  %v1368 = vpack.c.b16 %v984, %v982
  %v1369 = vpack.c.b16 %v985, %v983
  %v1370 = vpack.c.b16 %v988, %v986
  %v1371 = vpack.c.b16 %v989, %v987
  %v1372 = vpack.c.b16 %v992, %v990
  %v1373 = vpack.c.b16 %v993, %v991
  %v1374 = vpack.c.b16 %v996, %v994
  %v1375 = vpack.c.b16 %v997, %v995
  %v1376 = vpack.c.b16 %v1000, %v998
  %v1377 = vpack.c.b16 %v1001, %v999
  %v1378 = vpack.c.b16 %v1004, %v1002
  %v1379 = vpack.c.b16 %v1005, %v1003
  %v1380 = vpack.c.b16 %v1008, %v1006
  %v1381 = vpack.c.b16 %v1009, %v1007
  %v1382 = vpack.c.b16 %v1012, %v1010
  %v1383 = vpack.c.b16 %v1013, %v1011
  %v1384 = vpack.c.b16 %v1016, %v1014
  %v1385 = vpack.c.b16 %v1017, %v1015
  %v1386 = vpack.c.b16 %v1020, %v1018
  %v1387 = vpack.c.b16 %v1021, %v1019
  %v1388 = vpack.c.b16 %v1024, %v1022
  %v1389 = vpack.c.b16 %v1025, %v1023
  %v1390 = vpack.c.b16 %v1028, %v1026
  %v1391 = vpack.c.b16 %v1029, %v1027
  %v1392 = vpack.c.b16 %v1032, %v1030
  %v1393 = vpack.c.b16 %v1033, %v1031
  %v1394 = vpack.c.b16 %v1036, %v1034
  %v1395 = vpack.c.b16 %v1037, %v1035
  %v1396 = vpack.c.b16 %v1040, %v1038
  %v1397 = vpack.c.b16 %v1041, %v1039
  %v1398 = vpack.c.b16 %v1044, %v1042
  %v1399 = vpack.c.b16 %v1045, %v1043
  %v1400 = vpack.c.b16 %v1048, %v1046
  %v1401 = vpack.c.b16 %v1049, %v1047
  %v1402 = vpack.c.b16 %v1052, %v1050
  %v1403 = vpack.c.b16 %v1053, %v1051
  %v1404 = vpack.c.b16 %v1056, %v1054
  %v1405 = vpack.c.b16 %v1057, %v1055
  %v1406 = vpack.c.b16 %v1060, %v1058
  %v1407 = vpack.c.b16 %v1061, %v1059
  %v1408 = vpack.c.b16 %v1064, %v1062
  %v1409 = vpack.c.b16 %v1065, %v1063
  %v1410 = vpack.c.b16 %v1068, %v1066
  %v1411 = vpack.c.b16 %v1069, %v1067
  %v1412 = vpack.c.b16 %v1072, %v1070
  %v1413 = vpack.c.b16 %v1073, %v1071
  %v1414 = vpack.c.b16 %v1076, %v1074
  %v1415 = vpack.c.b16 %v1077, %v1075
  %v1416 = vpack.c.b16 %v1080, %v1078
  %v1417 = vpack.c.b16 %v1081, %v1079
  %v1418 = vpack.c.b16 %v1084, %v1082
  %v1419 = vpack.c.b16 %v1085, %v1083
  %v1420 = vpack.c.b16 %v1088, %v1086
  %v1421 = vpack.c.b16 %v1089, %v1087
  %v1422 = vpack.c.b16 %v1092, %v1090
  %v1423 = vpack.c.b16 %v1093, %v1091
  %v1424 = vpack.c.b16 %v1096, %v1094
  %v1425 = vpack.c.b16 %v1097, %v1095
  %v1426 = vpack.c.b16 %v1100, %v1098
  %v1427 = vpack.c.b16 %v1101, %v1099
  %v1428 = vpack.c.b16 %v1104, %v1102
  %v1429 = vpack.c.b16 %v1105, %v1103
  %v1430 = vpack.c.b16 %v1108, %v1106
  %v1431 = vpack.c.b16 %v1109, %v1107
  %v1432 = vpack.c.b16 %v1112, %v1110
  %v1433 = vpack.c.b16 %v1113, %v1111
  %v1434 = vpack.c.b16 %v1116, %v1114
  %v1435 = vpack.c.b16 %v1117, %v1115
  %v1436 = vpack.c.b16 %v1120, %v1118
  %v1437 = vpack.c.b16 %v1121, %v1119
  %v1438 = vpack.c.b16 %v1124, %v1122
  %v1439 = vpack.c.b16 %v1125, %v1123
  %v1440 = vpack.c.b16 %v1128, %v1126
  %v1441 = vpack.c.b16 %v1129, %v1127
  %v1442 = vpack.c.b16 %v1132, %v1130
  %v1443 = vpack.c.b16 %v1133, %v1131
  %v1444 = vpack.c.b16 %v1136, %v1134
  %v1445 = vpack.c.b16 %v1137, %v1135
  %v1446 = vpack.c.b16 %v1140, %v1138
  %v1447 = vpack.c.b16 %v1141, %v1139
  %v1448 = vpack.c.b16 %v1144, %v1142
  %v1449 = vpack.c.b16 %v1145, %v1143
  %v1450 = vpack.c.b16 %v1148, %v1146
  %v1451 = vpack.c.b16 %v1149, %v1147
  %v1452 = vpack.c.b16 %v1152, %v1150
  %v1453 = vpack.c.b16 %v1153, %v1151
  %v1454 = vpack.c.b16 %v1156, %v1154
  %v1455 = vpack.c.b16 %v1157, %v1155
  %v1456 = vpack.c.b16 %v1160, %v1158
  %v1457 = vpack.c.b16 %v1161, %v1159
  %v1458 = vpack.c.b16 %v1164, %v1162
  %v1459 = vpack.c.b16 %v1165, %v1163
  %v1460 = vpack.c.b16 %v1168, %v1166
  %v1461 = vpack.c.b16 %v1169, %v1167
  %v1462 = vpack.c.b16 %v1172, %v1170
  %v1463 = vpack.c.b16 %v1173, %v1171
  %v1464 = vpack.c.b16 %v1176, %v1174
  %v1465 = vpack.c.b16 %v1177, %v1175
  %v1466 = vpack.c.b16 %v1180, %v1178
  %v1467 = vpack.c.b16 %v1181, %v1179
  %v1468 = vpack.c.b16 %v1184, %v1182
  %v1469 = vpack.c.b16 %v1185, %v1183
  %v1470 = vpack.c.b16 %v1188, %v1186
  %v1471 = vpack.c.b16 %v1189, %v1187
  %v1472 = vpack.c.b16 %v1192, %v1190
  %v1473 = vpack.c.b16 %v1193, %v1191
  %v1474 = vpack.c.b16 %v1196, %v1194
  %v1475 = vpack.c.b16 %v1197, %v1195
  %v1476 = vpack.c.b16 %v1200, %v1198
  %v1477 = vpack.c.b16 %v1201, %v1199
  %v1478 = vpack.c.b16 %v1204, %v1202
  %v1479 = vpack.c.b16 %v1205, %v1203
  %v1480 = vpack.c.b16 %v1208, %v1206
  %v1481 = vpack.c.b16 %v1209, %v1207
  %v1482 = vpack.c.b16 %v1212, %v1210
  %v1483 = vpack.c.b16 %v1213, %v1211
  %v1484 = vpack.c.b16 %v1216, %v1214
  %v1485 = vpack.c.b16 %v1217, %v1215
  %v1486 = vpack.c.b16 %v1220, %v1218
  %v1487 = vpack.c.b16 %v1221, %v1219
  %v1488 = vpack.c.b16 %v1224, %v1222
  %v1489 = vpack.c.b16 %v1225, %v1223
  %v1490 = vpack.c.b16 %v1228, %v1226
  %v1491 = vpack.c.b16 %v1229, %v1227
  %v1492 = vpack.c.b16 %v1232, %v1230
  %v1493 = vpack.c.b16 %v1233, %v1231
  %v1494 = vpack.c.b16 %v1236, %v1234
  %v1495 = vpack.c.b16 %v1237, %v1235
  %v1496 = vpack.c.b16 %v1240, %v1238
  %v1497 = vpack.c.b16 %v1241, %v1239
  %1754 = vmatprep.subr.bf16.mxu0 %v1243
  %1755 = vmatpush1.bf16.msra.mxu0 %v1242
  %1756 = vmatprep.subr.bf16.mxu0 %v1245
  %1757 = vmatpush1.bf16.msra.mxu0 %v1244
  %1758 = vmatprep.subr.bf16.mxu0 %v1247
  %1759 = vmatpush1.bf16.msra.mxu0 %v1246
  %1760 = vmatprep.subr.bf16.mxu0 %v1249
  %1761 = vmatpush1.bf16.msra.mxu0 %v1248
  %1762 = vmatprep.subr.bf16.mxu0 %v1251
  %1763 = vmatpush1.bf16.msra.mxu0 %v1250
  %1764 = vmatprep.subr.bf16.mxu0 %v1253
  %1765 = vmatpush1.bf16.msra.mxu0 %v1252
  %1766 = vmatprep.subr.bf16.mxu0 %v1255
  %1767 = vmatpush1.bf16.msra.mxu0 %v1254
  %1768 = vmatprep.subr.bf16.mxu0 %v1257
  %1769 = vmatpush1.bf16.msra.mxu0 %v1256
  %1770 = vmatprep.subr.bf16.mxu0 %v1259
  %1771 = vmatpush1.bf16.msra.mxu0 %v1258
  %1772 = vmatprep.subr.bf16.mxu0 %v1261
  %1773 = vmatpush1.bf16.msra.mxu0 %v1260
  %1774 = vmatprep.subr.bf16.mxu0 %v1263
  %1775 = vmatpush1.bf16.msra.mxu0 %v1262
  %1776 = vmatprep.subr.bf16.mxu0 %v1265
  %1777 = vmatpush1.bf16.msra.mxu0 %v1264
  %1778 = vmatprep.subr.bf16.mxu0 %v1267
  %1779 = vmatpush1.bf16.msra.mxu0 %v1266
  %1780 = vmatprep.subr.bf16.mxu0 %v1269
  %1781 = vmatpush1.bf16.msra.mxu0 %v1268
  %1782 = vmatprep.subr.bf16.mxu0 %v1271
  %1783 = vmatpush1.bf16.msra.mxu0 %v1270
  %1784 = vmatprep.subr.bf16.mxu0 %v1273
  %1785 = vmatpush1.bf16.msra.mxu0 %v1272
  %1786 = vmatprep.mubr.bf16.mxu0 %v411
  %1787 = vmatmul.mubr.bf16.gmra.mrb[0].mxu0 %v410
  %v1788 = vpop.f32.mrb[0].mxu0
  %v1789 = vadd.f32 %v307, %v1788
  %v1790 = vpop.f32.mrb[0].mxu0
  %v1791 = vadd.f32 %v311, %v1790
  %v1792 = vpop.f32.mrb[0].mxu0
  %v1793 = vadd.f32 %v307, %v1792
  %v1794 = vpop.f32.mrb[0].mxu0
  %v1795 = vadd.f32 %v311, %v1794
  %1796 = vmatprep.mubr.bf16.mxu0 %v427
  %1797 = vmatmul.mubr.bf16.gmra.mrb[0].mxu0 %v426
  %v1798 = vpop.f32.mrb[0].mxu0
  %v1799 = vadd.f32 %v307, %v1798
  %v1800 = vpop.f32.mrb[0].mxu0
  %v1801 = vadd.f32 %v311, %v1800
  %v1802 = vpop.f32.mrb[0].mxu0
  %v1803 = vadd.f32 %v307, %v1802
  %v1804 = vpop.f32.mrb[0].mxu0
  %v1805 = vadd.f32 %v311, %v1804
  %1806 = vdwg.mxu0
  %1807 = vmatprep.subr.bf16.mxu0 %v1275
  %1808 = vmatpush1.bf16.msra.mxu0 %v1274
  %1809 = vmatprep.subr.bf16.mxu0 %v1277
  %1810 = vmatpush1.bf16.msra.mxu0 %v1276
  %1811 = vmatprep.subr.bf16.mxu0 %v1279
  %1812 = vmatpush1.bf16.msra.mxu0 %v1278
  %1813 = vmatprep.subr.bf16.mxu0 %v1281
  %1814 = vmatpush1.bf16.msra.mxu0 %v1280
  %1815 = vmatprep.subr.bf16.mxu0 %v1283
  %1816 = vmatpush1.bf16.msra.mxu0 %v1282
  %1817 = vmatprep.subr.bf16.mxu0 %v1285
  %1818 = vmatpush1.bf16.msra.mxu0 %v1284
  %1819 = vmatprep.subr.bf16.mxu0 %v1287
  %1820 = vmatpush1.bf16.msra.mxu0 %v1286
  %1821 = vmatprep.subr.bf16.mxu0 %v1289
  %1822 = vmatpush1.bf16.msra.mxu0 %v1288
  %1823 = vmatprep.subr.bf16.mxu0 %v1291
  %1824 = vmatpush1.bf16.msra.mxu0 %v1290
  %1825 = vmatprep.subr.bf16.mxu0 %v1293
  %1826 = vmatpush1.bf16.msra.mxu0 %v1292
  %1827 = vmatprep.subr.bf16.mxu0 %v1295
  %1828 = vmatpush1.bf16.msra.mxu0 %v1294
  %1829 = vmatprep.subr.bf16.mxu0 %v1297
  %1830 = vmatpush1.bf16.msra.mxu0 %v1296
  %1831 = vmatprep.subr.bf16.mxu0 %v1299
  %1832 = vmatpush1.bf16.msra.mxu0 %v1298
  %1833 = vmatprep.subr.bf16.mxu0 %v1301
  %1834 = vmatpush1.bf16.msra.mxu0 %v1300
  %1835 = vmatprep.subr.bf16.mxu0 %v1303
  %1836 = vmatpush1.bf16.msra.mxu0 %v1302
  %1837 = vmatprep.subr.bf16.mxu0 %v1305
  %1838 = vmatpush1.bf16.msra.mxu0 %v1304
  %1839 = vmatprep.mubr.bf16.mxu0 %v413
  %1840 = vmatmul.mubr.bf16.gmra.mrb[0].mxu0 %v412
  %v1841 = vpop.f32.mrb[0].mxu0
  %v1842 = vadd.f32 %v1789, %v1841
  %v1843 = vpop.f32.mrb[0].mxu0
  %v1844 = vadd.f32 %v1791, %v1843
  %v1845 = vpop.f32.mrb[0].mxu0
  %v1846 = vadd.f32 %v1793, %v1845
  %v1847 = vpop.f32.mrb[0].mxu0
  %v1848 = vadd.f32 %v1795, %v1847
  %1849 = vmatprep.mubr.bf16.mxu0 %v429
  %1850 = vmatmul.mubr.bf16.gmra.mrb[0].mxu0 %v428
  %v1851 = vpop.f32.mrb[0].mxu0
  %v1852 = vadd.f32 %v1799, %v1851
  %v1853 = vpop.f32.mrb[0].mxu0
  %v1854 = vadd.f32 %v1801, %v1853
  %v1855 = vpop.f32.mrb[0].mxu0
  %v1856 = vadd.f32 %v1803, %v1855
  %v1857 = vpop.f32.mrb[0].mxu0
  %v1858 = vadd.f32 %v1805, %v1857
  %1859 = vdwg.mxu0
  %1860 = vmatprep.subr.bf16.mxu0 %v1307
  %1861 = vmatpush1.bf16.msra.mxu0 %v1306
  %1862 = vmatprep.subr.bf16.mxu0 %v1309
  %1863 = vmatpush1.bf16.msra.mxu0 %v1308
  %1864 = vmatprep.subr.bf16.mxu0 %v1311
  %1865 = vmatpush1.bf16.msra.mxu0 %v1310
  %1866 = vmatprep.subr.bf16.mxu0 %v1313
  %1867 = vmatpush1.bf16.msra.mxu0 %v1312
  %1868 = vmatprep.subr.bf16.mxu0 %v1315
  %1869 = vmatpush1.bf16.msra.mxu0 %v1314
  %1870 = vmatprep.subr.bf16.mxu0 %v1317
  %1871 = vmatpush1.bf16.msra.mxu0 %v1316
  %1872 = vmatprep.subr.bf16.mxu0 %v1319
  %1873 = vmatpush1.bf16.msra.mxu0 %v1318
  %1874 = vmatprep.subr.bf16.mxu0 %v1321
  %1875 = vmatpush1.bf16.msra.mxu0 %v1320
  %1876 = vmatprep.subr.bf16.mxu0 %v1323
  %1877 = vmatpush1.bf16.msra.mxu0 %v1322
  %1878 = vmatprep.subr.bf16.mxu0 %v1325
  %1879 = vmatpush1.bf16.msra.mxu0 %v1324
  %1880 = vmatprep.subr.bf16.mxu0 %v1327
  %1881 = vmatpush1.bf16.msra.mxu0 %v1326
  %1882 = vmatprep.subr.bf16.mxu0 %v1329
  %1883 = vmatpush1.bf16.msra.mxu0 %v1328
  %1884 = vmatprep.subr.bf16.mxu0 %v1331
  %1885 = vmatpush1.bf16.msra.mxu0 %v1330
  %1886 = vmatprep.subr.bf16.mxu0 %v1333
  %1887 = vmatpush1.bf16.msra.mxu0 %v1332
  %1888 = vmatprep.subr.bf16.mxu0 %v1335
  %1889 = vmatpush1.bf16.msra.mxu0 %v1334
  %1890 = vmatprep.subr.bf16.mxu0 %v1337
  %1891 = vmatpush1.bf16.msra.mxu0 %v1336
  %1892 = vmatprep.mubr.bf16.mxu0 %v415
  %1893 = vmatmul.mubr.bf16.gmra.mrb[0].mxu0 %v414
  %v1894 = vpop.f32.mrb[0].mxu0
  %v1895 = vadd.f32 %v1842, %v1894
  %v1896 = vpop.f32.mrb[0].mxu0
  %v1897 = vadd.f32 %v1844, %v1896
  %v1898 = vpop.f32.mrb[0].mxu0
  %v1899 = vadd.f32 %v1846, %v1898
  %v1900 = vpop.f32.mrb[0].mxu0
  %v1901 = vadd.f32 %v1848, %v1900
  %1902 = vmatprep.mubr.bf16.mxu0 %v431
  %1903 = vmatmul.mubr.bf16.gmra.mrb[0].mxu0 %v430
  %v1904 = vpop.f32.mrb[0].mxu0
  %v1905 = vadd.f32 %v1852, %v1904
  %v1906 = vpop.f32.mrb[0].mxu0
  %v1907 = vadd.f32 %v1854, %v1906
  %v1908 = vpop.f32.mrb[0].mxu0
  %v1909 = vadd.f32 %v1856, %v1908
  %v1910 = vpop.f32.mrb[0].mxu0
  %v1911 = vadd.f32 %v1858, %v1910
  %1912 = vdwg.mxu0
  %1913 = vmatprep.subr.bf16.mxu0 %v1339
  %1914 = vmatpush1.bf16.msra.mxu0 %v1338
  %1915 = vmatprep.subr.bf16.mxu0 %v1341
  %1916 = vmatpush1.bf16.msra.mxu0 %v1340
  %1917 = vmatprep.subr.bf16.mxu0 %v1343
  %1918 = vmatpush1.bf16.msra.mxu0 %v1342
  %1919 = vmatprep.subr.bf16.mxu0 %v1345
  %1920 = vmatpush1.bf16.msra.mxu0 %v1344
  %1921 = vmatprep.subr.bf16.mxu0 %v1347
  %1922 = vmatpush1.bf16.msra.mxu0 %v1346
  %1923 = vmatprep.subr.bf16.mxu0 %v1349
  %1924 = vmatpush1.bf16.msra.mxu0 %v1348
  %1925 = vmatprep.subr.bf16.mxu0 %v1351
  %1926 = vmatpush1.bf16.msra.mxu0 %v1350
  %1927 = vmatprep.subr.bf16.mxu0 %v1353
  %1928 = vmatpush1.bf16.msra.mxu0 %v1352
  %1929 = vmatprep.subr.bf16.mxu0 %v1355
  %1930 = vmatpush1.bf16.msra.mxu0 %v1354
  %1931 = vmatprep.subr.bf16.mxu0 %v1357
  %1932 = vmatpush1.bf16.msra.mxu0 %v1356
  %1933 = vmatprep.subr.bf16.mxu0 %v1359
  %1934 = vmatpush1.bf16.msra.mxu0 %v1358
  %1935 = vmatprep.subr.bf16.mxu0 %v1361
  %1936 = vmatpush1.bf16.msra.mxu0 %v1360
  %1937 = vmatprep.subr.bf16.mxu0 %v1363
  %1938 = vmatpush1.bf16.msra.mxu0 %v1362
  %1939 = vmatprep.subr.bf16.mxu0 %v1365
  %1940 = vmatpush1.bf16.msra.mxu0 %v1364
  %1941 = vmatprep.subr.bf16.mxu0 %v1367
  %1942 = vmatpush1.bf16.msra.mxu0 %v1366
  %1943 = vmatprep.subr.bf16.mxu0 %v1369
  %1944 = vmatpush1.bf16.msra.mxu0 %v1368
  %1945 = vmatprep.mubr.bf16.mxu0 %v417
  %1946 = vmatmul.mubr.bf16.gmra.mrb[0].mxu0 %v416
  %v1947 = vpop.f32.mrb[0].mxu0
  %v1948 = vadd.f32 %v1895, %v1947
  %v1949 = vpop.f32.mrb[0].mxu0
  %v1950 = vadd.f32 %v1897, %v1949
  %v1951 = vpop.f32.mrb[0].mxu0
  %v1952 = vadd.f32 %v1899, %v1951
  %v1953 = vpop.f32.mrb[0].mxu0
  %v1954 = vadd.f32 %v1901, %v1953
  %1955 = vmatprep.mubr.bf16.mxu0 %v433
  %1956 = vmatmul.mubr.bf16.gmra.mrb[0].mxu0 %v432
  %v1957 = vpop.f32.mrb[0].mxu0
  %v1958 = vadd.f32 %v1905, %v1957
  %v1959 = vpop.f32.mrb[0].mxu0
  %v1960 = vadd.f32 %v1907, %v1959
  %v1961 = vpop.f32.mrb[0].mxu0
  %v1962 = vadd.f32 %v1909, %v1961
  %v1963 = vpop.f32.mrb[0].mxu0
  %v1964 = vadd.f32 %v1911, %v1963
  %1965 = vdwg.mxu0
  %1966 = vmatprep.subr.bf16.mxu0 %v1371
  %1967 = vmatpush1.bf16.msra.mxu0 %v1370
  %1968 = vmatprep.subr.bf16.mxu0 %v1373
  %1969 = vmatpush1.bf16.msra.mxu0 %v1372
  %1970 = vmatprep.subr.bf16.mxu0 %v1375
  %1971 = vmatpush1.bf16.msra.mxu0 %v1374
  %1972 = vmatprep.subr.bf16.mxu0 %v1377
  %1973 = vmatpush1.bf16.msra.mxu0 %v1376
  %1974 = vmatprep.subr.bf16.mxu0 %v1379
  %1975 = vmatpush1.bf16.msra.mxu0 %v1378
  %1976 = vmatprep.subr.bf16.mxu0 %v1381
  %1977 = vmatpush1.bf16.msra.mxu0 %v1380
  %1978 = vmatprep.subr.bf16.mxu0 %v1383
  %1979 = vmatpush1.bf16.msra.mxu0 %v1382
  %1980 = vmatprep.subr.bf16.mxu0 %v1385
  %1981 = vmatpush1.bf16.msra.mxu0 %v1384
  %1982 = vmatprep.subr.bf16.mxu0 %v1387
  %1983 = vmatpush1.bf16.msra.mxu0 %v1386
  %1984 = vmatprep.subr.bf16.mxu0 %v1389
  %1985 = vmatpush1.bf16.msra.mxu0 %v1388
  %1986 = vmatprep.subr.bf16.mxu0 %v1391
  %1987 = vmatpush1.bf16.msra.mxu0 %v1390
  %1988 = vmatprep.subr.bf16.mxu0 %v1393
  %1989 = vmatpush1.bf16.msra.mxu0 %v1392
  %1990 = vmatprep.subr.bf16.mxu0 %v1395
  %1991 = vmatpush1.bf16.msra.mxu0 %v1394
  %1992 = vmatprep.subr.bf16.mxu0 %v1397
  %1993 = vmatpush1.bf16.msra.mxu0 %v1396
  %1994 = vmatprep.subr.bf16.mxu0 %v1399
  %1995 = vmatpush1.bf16.msra.mxu0 %v1398
  %1996 = vmatprep.subr.bf16.mxu0 %v1401
  %1997 = vmatpush1.bf16.msra.mxu0 %v1400
  %1998 = vmatprep.mubr.bf16.mxu0 %v419
  %1999 = vmatmul.mubr.bf16.gmra.mrb[0].mxu0 %v418
  %v2000 = vpop.f32.mrb[0].mxu0
  %v2001 = vadd.f32 %v1948, %v2000
  %v2002 = vpop.f32.mrb[0].mxu0
  %v2003 = vadd.f32 %v1950, %v2002
  %v2004 = vpop.f32.mrb[0].mxu0
  %v2005 = vadd.f32 %v1952, %v2004
  %v2006 = vpop.f32.mrb[0].mxu0
  %v2007 = vadd.f32 %v1954, %v2006
  %2008 = vmatprep.mubr.bf16.mxu0 %v435
  %2009 = vmatmul.mubr.bf16.gmra.mrb[0].mxu0 %v434
  %v2010 = vpop.f32.mrb[0].mxu0
  %v2011 = vadd.f32 %v1958, %v2010
  %v2012 = vpop.f32.mrb[0].mxu0
  %v2013 = vadd.f32 %v1960, %v2012
  %v2014 = vpop.f32.mrb[0].mxu0
  %v2015 = vadd.f32 %v1962, %v2014
  %v2016 = vpop.f32.mrb[0].mxu0
  %v2017 = vadd.f32 %v1964, %v2016
  %2018 = vdwg.mxu0
  %2019 = vmatprep.subr.bf16.mxu0 %v1403
  %2020 = vmatpush1.bf16.msra.mxu0 %v1402
  %2021 = vmatprep.subr.bf16.mxu0 %v1405
  %2022 = vmatpush1.bf16.msra.mxu0 %v1404
  %2023 = vmatprep.subr.bf16.mxu0 %v1407
  %2024 = vmatpush1.bf16.msra.mxu0 %v1406
  %2025 = vmatprep.subr.bf16.mxu0 %v1409
  %2026 = vmatpush1.bf16.msra.mxu0 %v1408
  %2027 = vmatprep.subr.bf16.mxu0 %v1411
  %2028 = vmatpush1.bf16.msra.mxu0 %v1410
  %2029 = vmatprep.subr.bf16.mxu0 %v1413
  %2030 = vmatpush1.bf16.msra.mxu0 %v1412
  %2031 = vmatprep.subr.bf16.mxu0 %v1415
  %2032 = vmatpush1.bf16.msra.mxu0 %v1414
  %2033 = vmatprep.subr.bf16.mxu0 %v1417
  %2034 = vmatpush1.bf16.msra.mxu0 %v1416
  %2035 = vmatprep.subr.bf16.mxu0 %v1419
  %2036 = vmatpush1.bf16.msra.mxu0 %v1418
  %2037 = vmatprep.subr.bf16.mxu0 %v1421
  %2038 = vmatpush1.bf16.msra.mxu0 %v1420
  %2039 = vmatprep.subr.bf16.mxu0 %v1423
  %2040 = vmatpush1.bf16.msra.mxu0 %v1422
  %2041 = vmatprep.subr.bf16.mxu0 %v1425
  %2042 = vmatpush1.bf16.msra.mxu0 %v1424
  %2043 = vmatprep.subr.bf16.mxu0 %v1427
  %2044 = vmatpush1.bf16.msra.mxu0 %v1426
  %2045 = vmatprep.subr.bf16.mxu0 %v1429
  %2046 = vmatpush1.bf16.msra.mxu0 %v1428
  %2047 = vmatprep.subr.bf16.mxu0 %v1431
  %2048 = vmatpush1.bf16.msra.mxu0 %v1430
  %2049 = vmatprep.subr.bf16.mxu0 %v1433
  %2050 = vmatpush1.bf16.msra.mxu0 %v1432
  %2051 = vmatprep.mubr.bf16.mxu0 %v421
  %2052 = vmatmul.mubr.bf16.gmra.mrb[0].mxu0 %v420
  %v2053 = vpop.f32.mrb[0].mxu0
  %v2054 = vadd.f32 %v2001, %v2053
  %v2055 = vpop.f32.mrb[0].mxu0
  %v2056 = vadd.f32 %v2003, %v2055
  %v2057 = vpop.f32.mrb[0].mxu0
  %v2058 = vadd.f32 %v2005, %v2057
  %v2059 = vpop.f32.mrb[0].mxu0
  %v2060 = vadd.f32 %v2007, %v2059
  %2061 = vmatprep.mubr.bf16.mxu0 %v437
  %2062 = vmatmul.mubr.bf16.gmra.mrb[0].mxu0 %v436
  %v2063 = vpop.f32.mrb[0].mxu0
  %v2064 = vadd.f32 %v2011, %v2063
  %v2065 = vpop.f32.mrb[0].mxu0
  %v2066 = vadd.f32 %v2013, %v2065
  %v2067 = vpop.f32.mrb[0].mxu0
  %v2068 = vadd.f32 %v2015, %v2067
  %v2069 = vpop.f32.mrb[0].mxu0
  %v2070 = vadd.f32 %v2017, %v2069
  %2071 = vdwg.mxu0
  %2072 = vmatprep.subr.bf16.mxu0 %v1435
  %2073 = vmatpush1.bf16.msra.mxu0 %v1434
  %2074 = vmatprep.subr.bf16.mxu0 %v1437
  %2075 = vmatpush1.bf16.msra.mxu0 %v1436
  %2076 = vmatprep.subr.bf16.mxu0 %v1439
  %2077 = vmatpush1.bf16.msra.mxu0 %v1438
  %2078 = vmatprep.subr.bf16.mxu0 %v1441
  %2079 = vmatpush1.bf16.msra.mxu0 %v1440
  %2080 = vmatprep.subr.bf16.mxu0 %v1443
  %2081 = vmatpush1.bf16.msra.mxu0 %v1442
  %2082 = vmatprep.subr.bf16.mxu0 %v1445
  %2083 = vmatpush1.bf16.msra.mxu0 %v1444
  %2084 = vmatprep.subr.bf16.mxu0 %v1447
  %2085 = vmatpush1.bf16.msra.mxu0 %v1446
  %2086 = vmatprep.subr.bf16.mxu0 %v1449
  %2087 = vmatpush1.bf16.msra.mxu0 %v1448
  %2088 = vmatprep.subr.bf16.mxu0 %v1451
  %2089 = vmatpush1.bf16.msra.mxu0 %v1450
  %2090 = vmatprep.subr.bf16.mxu0 %v1453
  %2091 = vmatpush1.bf16.msra.mxu0 %v1452
  %2092 = vmatprep.subr.bf16.mxu0 %v1455
  %2093 = vmatpush1.bf16.msra.mxu0 %v1454
  %2094 = vmatprep.subr.bf16.mxu0 %v1457
  %2095 = vmatpush1.bf16.msra.mxu0 %v1456
  %2096 = vmatprep.subr.bf16.mxu0 %v1459
  %2097 = vmatpush1.bf16.msra.mxu0 %v1458
  %2098 = vmatprep.subr.bf16.mxu0 %v1461
  %2099 = vmatpush1.bf16.msra.mxu0 %v1460
  %2100 = vmatprep.subr.bf16.mxu0 %v1463
  %2101 = vmatpush1.bf16.msra.mxu0 %v1462
  %2102 = vmatprep.subr.bf16.mxu0 %v1465
  %2103 = vmatpush1.bf16.msra.mxu0 %v1464
  %2104 = vmatprep.mubr.bf16.mxu0 %v423
  %2105 = vmatmul.mubr.bf16.gmra.mrb[0].mxu0 %v422
  %v2106 = vpop.f32.mrb[0].mxu0
  %v2107 = vadd.f32 %v2054, %v2106
  %v2108 = vpop.f32.mrb[0].mxu0
  %v2109 = vadd.f32 %v2056, %v2108
  %v2110 = vpop.f32.mrb[0].mxu0
  %v2111 = vadd.f32 %v2058, %v2110
  %v2112 = vpop.f32.mrb[0].mxu0
  %v2113 = vadd.f32 %v2060, %v2112
  %2114 = vmatprep.mubr.bf16.mxu0 %v439
  %2115 = vmatmul.mubr.bf16.gmra.mrb[0].mxu0 %v438
  %v2116 = vpop.f32.mrb[0].mxu0
  %v2117 = vadd.f32 %v2064, %v2116
  %v2118 = vpop.f32.mrb[0].mxu0
  %v2119 = vadd.f32 %v2066, %v2118
  %v2120 = vpop.f32.mrb[0].mxu0
  %v2121 = vadd.f32 %v2068, %v2120
  %v2122 = vpop.f32.mrb[0].mxu0
  %v2123 = vadd.f32 %v2070, %v2122
  %2124 = vdwg.mxu0
  %2125 = vmatprep.subr.bf16.mxu0 %v1467
  %2126 = vmatpush1.bf16.msra.mxu0 %v1466
  %2127 = vmatprep.subr.bf16.mxu0 %v1469
  %2128 = vmatpush1.bf16.msra.mxu0 %v1468
  %2129 = vmatprep.subr.bf16.mxu0 %v1471
  %2130 = vmatpush1.bf16.msra.mxu0 %v1470
  %2131 = vmatprep.subr.bf16.mxu0 %v1473
  %2132 = vmatpush1.bf16.msra.mxu0 %v1472
  %2133 = vmatprep.subr.bf16.mxu0 %v1475
  %2134 = vmatpush1.bf16.msra.mxu0 %v1474
  %2135 = vmatprep.subr.bf16.mxu0 %v1477
  %2136 = vmatpush1.bf16.msra.mxu0 %v1476
  %2137 = vmatprep.subr.bf16.mxu0 %v1479
  %2138 = vmatpush1.bf16.msra.mxu0 %v1478
  %2139 = vmatprep.subr.bf16.mxu0 %v1481
  %2140 = vmatpush1.bf16.msra.mxu0 %v1480
  %2141 = vmatprep.subr.bf16.mxu0 %v1483
  %2142 = vmatpush1.bf16.msra.mxu0 %v1482
  %2143 = vmatprep.subr.bf16.mxu0 %v1485
  %2144 = vmatpush1.bf16.msra.mxu0 %v1484
  %2145 = vmatprep.subr.bf16.mxu0 %v1487
  %2146 = vmatpush1.bf16.msra.mxu0 %v1486
  %2147 = vmatprep.subr.bf16.mxu0 %v1489
  %2148 = vmatpush1.bf16.msra.mxu0 %v1488
  %2149 = vmatprep.subr.bf16.mxu0 %v1491
  %2150 = vmatpush1.bf16.msra.mxu0 %v1490
  %2151 = vmatprep.subr.bf16.mxu0 %v1493
  %2152 = vmatpush1.bf16.msra.mxu0 %v1492
  %2153 = vmatprep.subr.bf16.mxu0 %v1495
  %2154 = vmatpush1.bf16.msra.mxu0 %v1494
  %2155 = vmatprep.subr.bf16.mxu0 %v1497
  %2156 = vmatpush1.bf16.msra.mxu0 %v1496
  %2157 = vmatprep.mubr.bf16.mxu0 %v425
  %2158 = vmatmul.mubr.bf16.gmra.mrb[0].mxu0 %v424
  %v2159 = vpop.f32.mrb[0].mxu0
  %v2160 = vadd.f32 %v2107, %v2159
  %v2161 = vpop.f32.mrb[0].mxu0
  %v2162 = vadd.f32 %v2109, %v2161
  %v2163 = vpop.f32.mrb[0].mxu0
  %v2164 = vadd.f32 %v2111, %v2163
  %v2165 = vpop.f32.mrb[0].mxu0
  %v2166 = vadd.f32 %v2113, %v2165
  %2167 = vmatprep.mubr.bf16.mxu0 %v441
  %2168 = vmatmul.mubr.bf16.gmra.mrb[0].mxu0 %v440
  %v2169 = vpop.f32.mrb[0].mxu0
  %v2170 = vadd.f32 %v2117, %v2169
  %v2171 = vpop.f32.mrb[0].mxu0
  %v2172 = vadd.f32 %v2119, %v2171
  %v2173 = vpop.f32.mrb[0].mxu0
  %v2174 = vadd.f32 %v2121, %v2173
  %v2175 = vpop.f32.mrb[0].mxu0
  %v2176 = vadd.f32 %v2123, %v2175
  %2177 = vdwg.mxu0
  %vm2178 = vcmp.gt.f32.partialorder %v2160, 0.0
  %vm2179 = vcmp.gt.f32.partialorder %v2162, 0.0
  %vm2180 = vcmp.gt.f32.partialorder %v2164, 0.0
  %vm2181 = vcmp.gt.f32.partialorder %v2166, 0.0
  %vm2182 = vcmp.gt.f32.partialorder %v2170, 0.0
  %vm2183 = vcmp.gt.f32.partialorder %v2172, 0.0
  %vm2184 = vcmp.gt.f32.partialorder %v2174, 0.0
  %vm2185 = vcmp.gt.f32.partialorder %v2176, 0.0
  %v2186 = vmul.f32 %v2160, 0.2
  %v2187 = vmul.f32 %v2162, 0.2
  %v2188 = vmul.f32 %v2164, 0.2
  %v2189 = vmul.f32 %v2166, 0.2
  %v2190 = vmul.f32 %v2170, 0.2
  %v2191 = vmul.f32 %v2172, 0.2
  %v2192 = vmul.f32 %v2174, 0.2
  %v2193 = vmul.f32 %v2176, 0.2
  %v2194 = vsel %vm2178, %v2160, %v2186
  %v2195 = vsel %vm2179, %v2162, %v2187
  %v2196 = vsel %vm2180, %v2164, %v2188
  %v2197 = vsel %vm2181, %v2166, %v2189
  %v2198 = vsel %vm2182, %v2170, %v2190
  %v2199 = vsel %vm2183, %v2172, %v2191
  %v2200 = vsel %vm2184, %v2174, %v2192
  %v2201 = vsel %vm2185, %v2176, %v2193
  %v2202 = vpack.c.bf16 %v2196, %v2194
  %v2203 = vpack.c.bf16 %v2197, %v2195
  %v2204 = vpack.c.bf16 %v2200, %v2198
  %v2205 = vpack.c.bf16 %v2201, %v2199
  %v2210 = vunpack.c.l.b16 %v2202
  %v2211 = vunpack.c.l.b16 %v2203
  %v2212 = vunpack.c.h.b16 %v2202
  %v2213 = vunpack.c.h.b16 %v2203
  %v2214 = vunpack.c.l.b16 %v2204
  %v2215 = vunpack.c.l.b16 %v2205
  %v2216 = vunpack.c.h.b16 %v2204
  %v2217 = vunpack.c.h.b16 %v2205
  %v2218 = vpack.c.b16 %v2211, %v2210
  %v2219 = vpack.c.b16 %v2213, %v2212
  %v2220 = vpack.c.b16 %v2215, %v2214
  %v2221 = vpack.c.b16 %v2217, %v2216
  %2226 = vst [vmem:[%s3] sm:$0xff] %v2218
  %2227 = vst [vmem:[%s3 + $0x8] sm:$0xff] %v2219
  %2228 = vst [vmem:[%s3 + $0x10] sm:$0xff] %v2220
  %2229 = vst [vmem:[%s3 + $0x18] sm:$0xff] %v2221
  // Predicated region
  $region14: #{classif_forward.6} parent=0 // pred_check
    _
  $region15: #{classif_forward.6} parent=0 // pred_check_branch
    %2231 = sbr.rel (0) target = $region17
  $region16: #{classif_forward.6} parent=0 // pred_region
    _
  $region17: #{classif_forward.6} parent=0 // pred_fallthru
    _
  // Predicated region
  $region18: #{classif_forward.6} parent=0 // pred_check
    _
  $region19: #{classif_forward.6} parent=0 // pred_check_branch
    %2233 = sbr.rel (0) target = $region21
  $region20: #{classif_forward.6} parent=0 // pred_region
    _
  $region21: #{classif_forward.6} parent=0 // pred_fallthru
    _

// kernel: classif_forward.7
$region0: #{classif_forward.7}
  #allocation0 [shape = 'u32[]', space=smem, size = 0x4, offset = 0x4, fixed_abs, tag = 'smem constant byte address 0x4 - core index']
  #allocation1 [shape = 'u32[144,128]{1,0:T(1,128)}', space=vmem, size = 0x12000, scoped, tag = 'internal scratch']
  %s0 = inlined_call_operand.vmem [shape: bf16[16,4096], index: 0, kind: input, shape index: {}]
  %s1 = inlined_call_operand.vmem [shape: bf16[4096,128], index: 1, kind: input, shape index: {}]
  %s2 = inlined_call_operand.vmem [shape: f32[1,128], index: 2, kind: input, shape index: {}]
  %s3 = inlined_call_operand.vmem [shape: f32[16,128], index: 3, kind: output, shape index: {}]
  %s4 = sld [smem:[#allocation0]]
  $region22: #{classif_forward.7} parent=0
    _
  %s6 = ssub.s32 1, %s4
  %s7 = scalar_select 0, %s6, %s4
  // Predicated region
  $region2: #{classif_forward.7} parent=0 // pred_check
    _
  $region3: #{classif_forward.7} parent=0 // pred_check_branch
    %9 = sbr.rel (0) target = $region5
  $region4: #{classif_forward.7} parent=0 // pred_region
    _
  $region5: #{classif_forward.7} parent=0 // pred_fallthru
    _
  // Predicated region
  $region6: #{classif_forward.7} parent=0 // pred_check
    _
  $region7: #{classif_forward.7} parent=0 // pred_check_branch
    %11 = sbr.rel (0) target = $region9
  $region8: #{classif_forward.7} parent=0 // pred_region
    _
  $region9: #{classif_forward.7} parent=0 // pred_fallthru
    _
  // Predicated region
  $region10: #{classif_forward.7} parent=0 // pred_check
    _
  $region11: #{classif_forward.7} parent=0 // pred_check_branch
    %13 = sbr.rel (0) target = $region13
  $region12: #{classif_forward.7} parent=0 // pred_region
    _
  $region13: #{classif_forward.7} parent=0 // pred_fallthru
    _
  %v15 = vld [vmem:[%s0] sm:$0xff]
  %v16 = vld [vmem:[%s0 + $0x8] sm:$0xff]
  %v17 = vld [vmem:[%s0 + $0x10] sm:$0xff]
  %v18 = vld [vmem:[%s0 + $0x18] sm:$0xff]
  %v19 = vld [vmem:[%s0 + $0x20] sm:$0xff]
  %v20 = vld [vmem:[%s0 + $0x28] sm:$0xff]
  %v21 = vld [vmem:[%s0 + $0x30] sm:$0xff]
  %v22 = vld [vmem:[%s0 + $0x38] sm:$0xff]
  %v23 = vld [vmem:[%s0 + $0x40] sm:$0xff]
  %v24 = vld [vmem:[%s0 + $0x48] sm:$0xff]
  %v25 = vld [vmem:[%s0 + $0x50] sm:$0xff]
  %v26 = vld [vmem:[%s0 + $0x58] sm:$0xff]
  %v27 = vld [vmem:[%s0 + $0x60] sm:$0xff]
  %v28 = vld [vmem:[%s0 + $0x68] sm:$0xff]
  %v29 = vld [vmem:[%s0 + $0x70] sm:$0xff]
  %v30 = vld [vmem:[%s0 + $0x78] sm:$0xff]
  %v31 = vld [vmem:[%s0 + $0x80] sm:$0xff]
  %v32 = vld [vmem:[%s0 + $0x88] sm:$0xff]
  %v33 = vld [vmem:[%s0 + $0x90] sm:$0xff]
  %v34 = vld [vmem:[%s0 + $0x98] sm:$0xff]
  %v35 = vld [vmem:[%s0 + $0xa0] sm:$0xff]
  %v36 = vld [vmem:[%s0 + $0xa8] sm:$0xff]
  %v37 = vld [vmem:[%s0 + $0xb0] sm:$0xff]
  %v38 = vld [vmem:[%s0 + $0xb8] sm:$0xff]
  %v39 = vld [vmem:[%s0 + $0xc0] sm:$0xff]
  %v40 = vld [vmem:[%s0 + $0xc8] sm:$0xff]
  %v41 = vld [vmem:[%s0 + $0xd0] sm:$0xff]
  %v42 = vld [vmem:[%s0 + $0xd8] sm:$0xff]
  %v43 = vld [vmem:[%s0 + $0xe0] sm:$0xff]
  %v44 = vld [vmem:[%s0 + $0xe8] sm:$0xff]
  %v45 = vld [vmem:[%s0 + $0xf0] sm:$0xff]
  %v46 = vld [vmem:[%s0 + $0xf8] sm:$0xff]
  %v47 = vld [vmem:[%s1] sm:$0xf]
  %v48 = vld [vmem:[%s1 + $0x4] sm:$0xf]
  %v49 = vld [vmem:[%s1 + $0x8] sm:$0xf]
  %v50 = vld [vmem:[%s1 + $0xc] sm:$0xf]
  %v51 = vld [vmem:[%s1 + $0x10] sm:$0xf]
  %v52 = vld [vmem:[%s1 + $0x14] sm:$0xf]
  %v53 = vld [vmem:[%s1 + $0x18] sm:$0xf]
  %v54 = vld [vmem:[%s1 + $0x1c] sm:$0xf]
  %v55 = vld [vmem:[%s1 + $0x20] sm:$0xf]
  %v56 = vld [vmem:[%s1 + $0x24] sm:$0xf]
  %v57 = vld [vmem:[%s1 + $0x28] sm:$0xf]
  %v58 = vld [vmem:[%s1 + $0x2c] sm:$0xf]
  %v59 = vld [vmem:[%s1 + $0x30] sm:$0xf]
  %v60 = vld [vmem:[%s1 + $0x34] sm:$0xf]
  %v61 = vld [vmem:[%s1 + $0x38] sm:$0xf]
  %v62 = vld [vmem:[%s1 + $0x3c] sm:$0xf]
  %v63 = vld [vmem:[%s1 + $0x40] sm:$0xf]
  %v64 = vld [vmem:[%s1 + $0x44] sm:$0xf]
  %v65 = vld [vmem:[%s1 + $0x48] sm:$0xf]
  %v66 = vld [vmem:[%s1 + $0x4c] sm:$0xf]
  %v67 = vld [vmem:[%s1 + $0x50] sm:$0xf]
  %v68 = vld [vmem:[%s1 + $0x54] sm:$0xf]
  %v69 = vld [vmem:[%s1 + $0x58] sm:$0xf]
  %v70 = vld [vmem:[%s1 + $0x5c] sm:$0xf]
  %v71 = vld [vmem:[%s1 + $0x60] sm:$0xf]
  %v72 = vld [vmem:[%s1 + $0x64] sm:$0xf]
  %v73 = vld [vmem:[%s1 + $0x68] sm:$0xf]
  %v74 = vld [vmem:[%s1 + $0x6c] sm:$0xf]
  %v75 = vld [vmem:[%s1 + $0x70] sm:$0xf]
  %v76 = vld [vmem:[%s1 + $0x74] sm:$0xf]
  %v77 = vld [vmem:[%s1 + $0x78] sm:$0xf]
  %v78 = vld [vmem:[%s1 + $0x7c] sm:$0xf]
  %v79 = vld [vmem:[%s1 + $0x80] sm:$0xf]
  %v80 = vld [vmem:[%s1 + $0x84] sm:$0xf]
  %v81 = vld [vmem:[%s1 + $0x88] sm:$0xf]
  %v82 = vld [vmem:[%s1 + $0x8c] sm:$0xf]
  %v83 = vld [vmem:[%s1 + $0x90] sm:$0xf]
  %v84 = vld [vmem:[%s1 + $0x94] sm:$0xf]
  %v85 = vld [vmem:[%s1 + $0x98] sm:$0xf]
  %v86 = vld [vmem:[%s1 + $0x9c] sm:$0xf]
  %v87 = vld [vmem:[%s1 + $0xa0] sm:$0xf]
  %v88 = vld [vmem:[%s1 + $0xa4] sm:$0xf]
  %v89 = vld [vmem:[%s1 + $0xa8] sm:$0xf]
  %v90 = vld [vmem:[%s1 + $0xac] sm:$0xf]
  %v91 = vld [vmem:[%s1 + $0xb0] sm:$0xf]
  %v92 = vld [vmem:[%s1 + $0xb4] sm:$0xf]
  %v93 = vld [vmem:[%s1 + $0xb8] sm:$0xf]
  %v94 = vld [vmem:[%s1 + $0xbc] sm:$0xf]
  %v95 = vld [vmem:[%s1 + $0xc0] sm:$0xf]
  %v96 = vld [vmem:[%s1 + $0xc4] sm:$0xf]
  %v97 = vld [vmem:[%s1 + $0xc8] sm:$0xf]
  %v98 = vld [vmem:[%s1 + $0xcc] sm:$0xf]
  %v99 = vld [vmem:[%s1 + $0xd0] sm:$0xf]
  %v100 = vld [vmem:[%s1 + $0xd4] sm:$0xf]
  %v101 = vld [vmem:[%s1 + $0xd8] sm:$0xf]
  %v102 = vld [vmem:[%s1 + $0xdc] sm:$0xf]
  %v103 = vld [vmem:[%s1 + $0xe0] sm:$0xf]
  %v104 = vld [vmem:[%s1 + $0xe4] sm:$0xf]
  %v105 = vld [vmem:[%s1 + $0xe8] sm:$0xf]
  %v106 = vld [vmem:[%s1 + $0xec] sm:$0xf]
  %v107 = vld [vmem:[%s1 + $0xf0] sm:$0xf]
  %v108 = vld [vmem:[%s1 + $0xf4] sm:$0xf]
  %v109 = vld [vmem:[%s1 + $0xf8] sm:$0xf]
  %v110 = vld [vmem:[%s1 + $0xfc] sm:$0xf]
  %v111 = vld [vmem:[%s1 + $0x100] sm:$0xf]
  %v112 = vld [vmem:[%s1 + $0x104] sm:$0xf]
  %v113 = vld [vmem:[%s1 + $0x108] sm:$0xf]
  %v114 = vld [vmem:[%s1 + $0x10c] sm:$0xf]
  %v115 = vld [vmem:[%s1 + $0x110] sm:$0xf]
  %v116 = vld [vmem:[%s1 + $0x114] sm:$0xf]
  %v117 = vld [vmem:[%s1 + $0x118] sm:$0xf]
  %v118 = vld [vmem:[%s1 + $0x11c] sm:$0xf]
  %v119 = vld [vmem:[%s1 + $0x120] sm:$0xf]
  %v120 = vld [vmem:[%s1 + $0x124] sm:$0xf]
  %v121 = vld [vmem:[%s1 + $0x128] sm:$0xf]
  %v122 = vld [vmem:[%s1 + $0x12c] sm:$0xf]
  %v123 = vld [vmem:[%s1 + $0x130] sm:$0xf]
  %v124 = vld [vmem:[%s1 + $0x134] sm:$0xf]
  %v125 = vld [vmem:[%s1 + $0x138] sm:$0xf]
  %v126 = vld [vmem:[%s1 + $0x13c] sm:$0xf]
  %v127 = vld [vmem:[%s1 + $0x140] sm:$0xf]
  %v128 = vld [vmem:[%s1 + $0x144] sm:$0xf]
  %v129 = vld [vmem:[%s1 + $0x148] sm:$0xf]
  %v130 = vld [vmem:[%s1 + $0x14c] sm:$0xf]
  %v131 = vld [vmem:[%s1 + $0x150] sm:$0xf]
  %v132 = vld [vmem:[%s1 + $0x154] sm:$0xf]
  %v133 = vld [vmem:[%s1 + $0x158] sm:$0xf]
  %v134 = vld [vmem:[%s1 + $0x15c] sm:$0xf]
  %v135 = vld [vmem:[%s1 + $0x160] sm:$0xf]
  %v136 = vld [vmem:[%s1 + $0x164] sm:$0xf]
  %v137 = vld [vmem:[%s1 + $0x168] sm:$0xf]
  %v138 = vld [vmem:[%s1 + $0x16c] sm:$0xf]
  %v139 = vld [vmem:[%s1 + $0x170] sm:$0xf]
  %v140 = vld [vmem:[%s1 + $0x174] sm:$0xf]
  %v141 = vld [vmem:[%s1 + $0x178] sm:$0xf]
  %v142 = vld [vmem:[%s1 + $0x17c] sm:$0xf]
  %v143 = vld [vmem:[%s1 + $0x180] sm:$0xf]
  %v144 = vld [vmem:[%s1 + $0x184] sm:$0xf]
  %v145 = vld [vmem:[%s1 + $0x188] sm:$0xf]
  %v146 = vld [vmem:[%s1 + $0x18c] sm:$0xf]
  %v147 = vld [vmem:[%s1 + $0x190] sm:$0xf]
  %v148 = vld [vmem:[%s1 + $0x194] sm:$0xf]
  %v149 = vld [vmem:[%s1 + $0x198] sm:$0xf]
  %v150 = vld [vmem:[%s1 + $0x19c] sm:$0xf]
  %v151 = vld [vmem:[%s1 + $0x1a0] sm:$0xf]
  %v152 = vld [vmem:[%s1 + $0x1a4] sm:$0xf]
  %v153 = vld [vmem:[%s1 + $0x1a8] sm:$0xf]
  %v154 = vld [vmem:[%s1 + $0x1ac] sm:$0xf]
  %v155 = vld [vmem:[%s1 + $0x1b0] sm:$0xf]
  %v156 = vld [vmem:[%s1 + $0x1b4] sm:$0xf]
  %v157 = vld [vmem:[%s1 + $0x1b8] sm:$0xf]
  %v158 = vld [vmem:[%s1 + $0x1bc] sm:$0xf]
  %v159 = vld [vmem:[%s1 + $0x1c0] sm:$0xf]
  %v160 = vld [vmem:[%s1 + $0x1c4] sm:$0xf]
  %v161 = vld [vmem:[%s1 + $0x1c8] sm:$0xf]
  %v162 = vld [vmem:[%s1 + $0x1cc] sm:$0xf]
  %v163 = vld [vmem:[%s1 + $0x1d0] sm:$0xf]
  %v164 = vld [vmem:[%s1 + $0x1d4] sm:$0xf]
  %v165 = vld [vmem:[%s1 + $0x1d8] sm:$0xf]
  %v166 = vld [vmem:[%s1 + $0x1dc] sm:$0xf]
  %v167 = vld [vmem:[%s1 + $0x1e0] sm:$0xf]
  %v168 = vld [vmem:[%s1 + $0x1e4] sm:$0xf]
  %v169 = vld [vmem:[%s1 + $0x1e8] sm:$0xf]
  %v170 = vld [vmem:[%s1 + $0x1ec] sm:$0xf]
  %v171 = vld [vmem:[%s1 + $0x1f0] sm:$0xf]
  %v172 = vld [vmem:[%s1 + $0x1f4] sm:$0xf]
  %v173 = vld [vmem:[%s1 + $0x1f8] sm:$0xf]
  %v174 = vld [vmem:[%s1 + $0x1fc] sm:$0xf]
  %v175 = vld [vmem:[%s1 + $0x200] sm:$0xf]
  %v176 = vld [vmem:[%s1 + $0x204] sm:$0xf]
  %v177 = vld [vmem:[%s1 + $0x208] sm:$0xf]
  %v178 = vld [vmem:[%s1 + $0x20c] sm:$0xf]
  %v179 = vld [vmem:[%s1 + $0x210] sm:$0xf]
  %v180 = vld [vmem:[%s1 + $0x214] sm:$0xf]
  %v181 = vld [vmem:[%s1 + $0x218] sm:$0xf]
  %v182 = vld [vmem:[%s1 + $0x21c] sm:$0xf]
  %v183 = vld [vmem:[%s1 + $0x220] sm:$0xf]
  %v184 = vld [vmem:[%s1 + $0x224] sm:$0xf]
  %v185 = vld [vmem:[%s1 + $0x228] sm:$0xf]
  %v186 = vld [vmem:[%s1 + $0x22c] sm:$0xf]
  %v187 = vld [vmem:[%s1 + $0x230] sm:$0xf]
  %v188 = vld [vmem:[%s1 + $0x234] sm:$0xf]
  %v189 = vld [vmem:[%s1 + $0x238] sm:$0xf]
  %v190 = vld [vmem:[%s1 + $0x23c] sm:$0xf]
  %v191 = vld [vmem:[%s1 + $0x240] sm:$0xf]
  %v192 = vld [vmem:[%s1 + $0x244] sm:$0xf]
  %v193 = vld [vmem:[%s1 + $0x248] sm:$0xf]
  %v194 = vld [vmem:[%s1 + $0x24c] sm:$0xf]
  %v195 = vld [vmem:[%s1 + $0x250] sm:$0xf]
  %v196 = vld [vmem:[%s1 + $0x254] sm:$0xf]
  %v197 = vld [vmem:[%s1 + $0x258] sm:$0xf]
  %v198 = vld [vmem:[%s1 + $0x25c] sm:$0xf]
  %v199 = vld [vmem:[%s1 + $0x260] sm:$0xf]
  %v200 = vld [vmem:[%s1 + $0x264] sm:$0xf]
  %v201 = vld [vmem:[%s1 + $0x268] sm:$0xf]
  %v202 = vld [vmem:[%s1 + $0x26c] sm:$0xf]
  %v203 = vld [vmem:[%s1 + $0x270] sm:$0xf]
  %v204 = vld [vmem:[%s1 + $0x274] sm:$0xf]
  %v205 = vld [vmem:[%s1 + $0x278] sm:$0xf]
  %v206 = vld [vmem:[%s1 + $0x27c] sm:$0xf]
  %v207 = vld [vmem:[%s1 + $0x280] sm:$0xf]
  %v208 = vld [vmem:[%s1 + $0x284] sm:$0xf]
  %v209 = vld [vmem:[%s1 + $0x288] sm:$0xf]
  %v210 = vld [vmem:[%s1 + $0x28c] sm:$0xf]
  %v211 = vld [vmem:[%s1 + $0x290] sm:$0xf]
  %v212 = vld [vmem:[%s1 + $0x294] sm:$0xf]
  %v213 = vld [vmem:[%s1 + $0x298] sm:$0xf]
  %v214 = vld [vmem:[%s1 + $0x29c] sm:$0xf]
  %v215 = vld [vmem:[%s1 + $0x2a0] sm:$0xf]
  %v216 = vld [vmem:[%s1 + $0x2a4] sm:$0xf]
  %v217 = vld [vmem:[%s1 + $0x2a8] sm:$0xf]
  %v218 = vld [vmem:[%s1 + $0x2ac] sm:$0xf]
  %v219 = vld [vmem:[%s1 + $0x2b0] sm:$0xf]
  %v220 = vld [vmem:[%s1 + $0x2b4] sm:$0xf]
  %v221 = vld [vmem:[%s1 + $0x2b8] sm:$0xf]
  %v222 = vld [vmem:[%s1 + $0x2bc] sm:$0xf]
  %v223 = vld [vmem:[%s1 + $0x2c0] sm:$0xf]
  %v224 = vld [vmem:[%s1 + $0x2c4] sm:$0xf]
  %v225 = vld [vmem:[%s1 + $0x2c8] sm:$0xf]
  %v226 = vld [vmem:[%s1 + $0x2cc] sm:$0xf]
  %v227 = vld [vmem:[%s1 + $0x2d0] sm:$0xf]
  %v228 = vld [vmem:[%s1 + $0x2d4] sm:$0xf]
  %v229 = vld [vmem:[%s1 + $0x2d8] sm:$0xf]
  %v230 = vld [vmem:[%s1 + $0x2dc] sm:$0xf]
  %v231 = vld [vmem:[%s1 + $0x2e0] sm:$0xf]
  %v232 = vld [vmem:[%s1 + $0x2e4] sm:$0xf]
  %v233 = vld [vmem:[%s1 + $0x2e8] sm:$0xf]
  %v234 = vld [vmem:[%s1 + $0x2ec] sm:$0xf]
  %v235 = vld [vmem:[%s1 + $0x2f0] sm:$0xf]
  %v236 = vld [vmem:[%s1 + $0x2f4] sm:$0xf]
  %v237 = vld [vmem:[%s1 + $0x2f8] sm:$0xf]
  %v238 = vld [vmem:[%s1 + $0x2fc] sm:$0xf]
  %v239 = vld [vmem:[%s1 + $0x300] sm:$0xf]
  %v240 = vld [vmem:[%s1 + $0x304] sm:$0xf]
  %v241 = vld [vmem:[%s1 + $0x308] sm:$0xf]
  %v242 = vld [vmem:[%s1 + $0x30c] sm:$0xf]
  %v243 = vld [vmem:[%s1 + $0x310] sm:$0xf]
  %v244 = vld [vmem:[%s1 + $0x314] sm:$0xf]
  %v245 = vld [vmem:[%s1 + $0x318] sm:$0xf]
  %v246 = vld [vmem:[%s1 + $0x31c] sm:$0xf]
  %v247 = vld [vmem:[%s1 + $0x320] sm:$0xf]
  %v248 = vld [vmem:[%s1 + $0x324] sm:$0xf]
  %v249 = vld [vmem:[%s1 + $0x328] sm:$0xf]
  %v250 = vld [vmem:[%s1 + $0x32c] sm:$0xf]
  %v251 = vld [vmem:[%s1 + $0x330] sm:$0xf]
  %v252 = vld [vmem:[%s1 + $0x334] sm:$0xf]
  %v253 = vld [vmem:[%s1 + $0x338] sm:$0xf]
  %v254 = vld [vmem:[%s1 + $0x33c] sm:$0xf]
  %v255 = vld [vmem:[%s1 + $0x340] sm:$0xf]
  %v256 = vld [vmem:[%s1 + $0x344] sm:$0xf]
  %v257 = vld [vmem:[%s1 + $0x348] sm:$0xf]
  %v258 = vld [vmem:[%s1 + $0x34c] sm:$0xf]
  %v259 = vld [vmem:[%s1 + $0x350] sm:$0xf]
  %v260 = vld [vmem:[%s1 + $0x354] sm:$0xf]
  %v261 = vld [vmem:[%s1 + $0x358] sm:$0xf]
  %v262 = vld [vmem:[%s1 + $0x35c] sm:$0xf]
  %v263 = vld [vmem:[%s1 + $0x360] sm:$0xf]
  %v264 = vld [vmem:[%s1 + $0x364] sm:$0xf]
  %v265 = vld [vmem:[%s1 + $0x368] sm:$0xf]
  %v266 = vld [vmem:[%s1 + $0x36c] sm:$0xf]
  %v267 = vld [vmem:[%s1 + $0x370] sm:$0xf]
  %v268 = vld [vmem:[%s1 + $0x374] sm:$0xf]
  %v269 = vld [vmem:[%s1 + $0x378] sm:$0xf]
  %v270 = vld [vmem:[%s1 + $0x37c] sm:$0xf]
  %v271 = vld [vmem:[%s1 + $0x380] sm:$0xf]
  %v272 = vld [vmem:[%s1 + $0x384] sm:$0xf]
  %v273 = vld [vmem:[%s1 + $0x388] sm:$0xf]
  %v274 = vld [vmem:[%s1 + $0x38c] sm:$0xf]
  %v275 = vld [vmem:[%s1 + $0x390] sm:$0xf]
  %v276 = vld [vmem:[%s1 + $0x394] sm:$0xf]
  %v277 = vld [vmem:[%s1 + $0x398] sm:$0xf]
  %v278 = vld [vmem:[%s1 + $0x39c] sm:$0xf]
  %v279 = vld [vmem:[%s1 + $0x3a0] sm:$0xf]
  %v280 = vld [vmem:[%s1 + $0x3a4] sm:$0xf]
  %v281 = vld [vmem:[%s1 + $0x3a8] sm:$0xf]
  %v282 = vld [vmem:[%s1 + $0x3ac] sm:$0xf]
  %v283 = vld [vmem:[%s1 + $0x3b0] sm:$0xf]
  %v284 = vld [vmem:[%s1 + $0x3b4] sm:$0xf]
  %v285 = vld [vmem:[%s1 + $0x3b8] sm:$0xf]
  %v286 = vld [vmem:[%s1 + $0x3bc] sm:$0xf]
  %v287 = vld [vmem:[%s1 + $0x3c0] sm:$0xf]
  %v288 = vld [vmem:[%s1 + $0x3c4] sm:$0xf]
  %v289 = vld [vmem:[%s1 + $0x3c8] sm:$0xf]
  %v290 = vld [vmem:[%s1 + $0x3cc] sm:$0xf]
  %v291 = vld [vmem:[%s1 + $0x3d0] sm:$0xf]
  %v292 = vld [vmem:[%s1 + $0x3d4] sm:$0xf]
  %v293 = vld [vmem:[%s1 + $0x3d8] sm:$0xf]
  %v294 = vld [vmem:[%s1 + $0x3dc] sm:$0xf]
  %v295 = vld [vmem:[%s1 + $0x3e0] sm:$0xf]
  %v296 = vld [vmem:[%s1 + $0x3e4] sm:$0xf]
  %v297 = vld [vmem:[%s1 + $0x3e8] sm:$0xf]
  %v298 = vld [vmem:[%s1 + $0x3ec] sm:$0xf]
  %v299 = vld [vmem:[%s1 + $0x3f0] sm:$0xf]
  %v300 = vld [vmem:[%s1 + $0x3f4] sm:$0xf]
  %v301 = vld [vmem:[%s1 + $0x3f8] sm:$0xf]
  %v302 = vld [vmem:[%s1 + $0x3fc] sm:$0xf]
  %v303 = vld [vmem:[%s1 + $0x400] sm:$0xf]
  %v304 = vld [vmem:[%s1 + $0x404] sm:$0xf]
  %v305 = vld [vmem:[%s1 + $0x408] sm:$0xf]
  %v306 = vld [vmem:[%s1 + $0x40c] sm:$0xf]
  %v307 = vld [vmem:[%s1 + $0x410] sm:$0xf]
  %v308 = vld [vmem:[%s1 + $0x414] sm:$0xf]
  %v309 = vld [vmem:[%s1 + $0x418] sm:$0xf]
  %v310 = vld [vmem:[%s1 + $0x41c] sm:$0xf]
  %v311 = vld [vmem:[%s1 + $0x420] sm:$0xf]
  %v312 = vld [vmem:[%s1 + $0x424] sm:$0xf]
  %v313 = vld [vmem:[%s1 + $0x428] sm:$0xf]
  %v314 = vld [vmem:[%s1 + $0x42c] sm:$0xf]
  %v315 = vld [vmem:[%s1 + $0x430] sm:$0xf]
  %v316 = vld [vmem:[%s1 + $0x434] sm:$0xf]
  %v317 = vld [vmem:[%s1 + $0x438] sm:$0xf]
  %v318 = vld [vmem:[%s1 + $0x43c] sm:$0xf]
  %v319 = vld [vmem:[%s1 + $0x440] sm:$0xf]
  %v320 = vld [vmem:[%s1 + $0x444] sm:$0xf]
  %v321 = vld [vmem:[%s1 + $0x448] sm:$0xf]
  %v322 = vld [vmem:[%s1 + $0x44c] sm:$0xf]
  %v323 = vld [vmem:[%s1 + $0x450] sm:$0xf]
  %v324 = vld [vmem:[%s1 + $0x454] sm:$0xf]
  %v325 = vld [vmem:[%s1 + $0x458] sm:$0xf]
  %v326 = vld [vmem:[%s1 + $0x45c] sm:$0xf]
  %v327 = vld [vmem:[%s1 + $0x460] sm:$0xf]
  %v328 = vld [vmem:[%s1 + $0x464] sm:$0xf]
  %v329 = vld [vmem:[%s1 + $0x468] sm:$0xf]
  %v330 = vld [vmem:[%s1 + $0x46c] sm:$0xf]
  %v331 = vld [vmem:[%s1 + $0x470] sm:$0xf]
  %v332 = vld [vmem:[%s1 + $0x474] sm:$0xf]
  %v333 = vld [vmem:[%s1 + $0x478] sm:$0xf]
  %v334 = vld [vmem:[%s1 + $0x47c] sm:$0xf]
  %v335 = vld [vmem:[%s1 + $0x480] sm:$0xf]
  %v336 = vld [vmem:[%s1 + $0x484] sm:$0xf]
  %v337 = vld [vmem:[%s1 + $0x488] sm:$0xf]
  %v338 = vld [vmem:[%s1 + $0x48c] sm:$0xf]
  %v339 = vld [vmem:[%s1 + $0x490] sm:$0xf]
  %v340 = vld [vmem:[%s1 + $0x494] sm:$0xf]
  %v341 = vld [vmem:[%s1 + $0x498] sm:$0xf]
  %v342 = vld [vmem:[%s1 + $0x49c] sm:$0xf]
  %v343 = vld [vmem:[%s1 + $0x4a0] sm:$0xf]
  %v344 = vld [vmem:[%s1 + $0x4a4] sm:$0xf]
  %v345 = vld [vmem:[%s1 + $0x4a8] sm:$0xf]
  %v346 = vld [vmem:[%s1 + $0x4ac] sm:$0xf]
  %v347 = vld [vmem:[%s1 + $0x4b0] sm:$0xf]
  %v348 = vld [vmem:[%s1 + $0x4b4] sm:$0xf]
  %v349 = vld [vmem:[%s1 + $0x4b8] sm:$0xf]
  %v350 = vld [vmem:[%s1 + $0x4bc] sm:$0xf]
  %v351 = vld [vmem:[%s1 + $0x4c0] sm:$0xf]
  %v352 = vld [vmem:[%s1 + $0x4c4] sm:$0xf]
  %v353 = vld [vmem:[%s1 + $0x4c8] sm:$0xf]
  %v354 = vld [vmem:[%s1 + $0x4cc] sm:$0xf]
  %v355 = vld [vmem:[%s1 + $0x4d0] sm:$0xf]
  %v356 = vld [vmem:[%s1 + $0x4d4] sm:$0xf]
  %v357 = vld [vmem:[%s1 + $0x4d8] sm:$0xf]
  %v358 = vld [vmem:[%s1 + $0x4dc] sm:$0xf]
  %v359 = vld [vmem:[%s1 + $0x4e0] sm:$0xf]
  %v360 = vld [vmem:[%s1 + $0x4e4] sm:$0xf]
  %v361 = vld [vmem:[%s1 + $0x4e8] sm:$0xf]
  %v362 = vld [vmem:[%s1 + $0x4ec] sm:$0xf]
  %v363 = vld [vmem:[%s1 + $0x4f0] sm:$0xf]
  %v364 = vld [vmem:[%s1 + $0x4f4] sm:$0xf]
  %v365 = vld [vmem:[%s1 + $0x4f8] sm:$0xf]
  %v366 = vld [vmem:[%s1 + $0x4fc] sm:$0xf]
  %v367 = vld [vmem:[%s1 + $0x500] sm:$0xf]
  %v368 = vld [vmem:[%s1 + $0x504] sm:$0xf]
  %v369 = vld [vmem:[%s1 + $0x508] sm:$0xf]
  %v370 = vld [vmem:[%s1 + $0x50c] sm:$0xf]
  %v371 = vld [vmem:[%s1 + $0x510] sm:$0xf]
  %v372 = vld [vmem:[%s1 + $0x514] sm:$0xf]
  %v373 = vld [vmem:[%s1 + $0x518] sm:$0xf]
  %v374 = vld [vmem:[%s1 + $0x51c] sm:$0xf]
  %v375 = vld [vmem:[%s1 + $0x520] sm:$0xf]
  %v376 = vld [vmem:[%s1 + $0x524] sm:$0xf]
  %v377 = vld [vmem:[%s1 + $0x528] sm:$0xf]
  %v378 = vld [vmem:[%s1 + $0x52c] sm:$0xf]
  %v379 = vld [vmem:[%s1 + $0x530] sm:$0xf]
  %v380 = vld [vmem:[%s1 + $0x534] sm:$0xf]
  %v381 = vld [vmem:[%s1 + $0x538] sm:$0xf]
  %v382 = vld [vmem:[%s1 + $0x53c] sm:$0xf]
  %v383 = vld [vmem:[%s1 + $0x540] sm:$0xf]
  %v384 = vld [vmem:[%s1 + $0x544] sm:$0xf]
  %v385 = vld [vmem:[%s1 + $0x548] sm:$0xf]
  %v386 = vld [vmem:[%s1 + $0x54c] sm:$0xf]
  %v387 = vld [vmem:[%s1 + $0x550] sm:$0xf]
  %v388 = vld [vmem:[%s1 + $0x554] sm:$0xf]
  %v389 = vld [vmem:[%s1 + $0x558] sm:$0xf]
  %v390 = vld [vmem:[%s1 + $0x55c] sm:$0xf]
  %v391 = vld [vmem:[%s1 + $0x560] sm:$0xf]
  %v392 = vld [vmem:[%s1 + $0x564] sm:$0xf]
  %v393 = vld [vmem:[%s1 + $0x568] sm:$0xf]
  %v394 = vld [vmem:[%s1 + $0x56c] sm:$0xf]
  %v395 = vld [vmem:[%s1 + $0x570] sm:$0xf]
  %v396 = vld [vmem:[%s1 + $0x574] sm:$0xf]
  %v397 = vld [vmem:[%s1 + $0x578] sm:$0xf]
  %v398 = vld [vmem:[%s1 + $0x57c] sm:$0xf]
  %v399 = vld [vmem:[%s1 + $0x580] sm:$0xf]
  %v400 = vld [vmem:[%s1 + $0x584] sm:$0xf]
  %v401 = vld [vmem:[%s1 + $0x588] sm:$0xf]
  %v402 = vld [vmem:[%s1 + $0x58c] sm:$0xf]
  %v403 = vld [vmem:[%s1 + $0x590] sm:$0xf]
  %v404 = vld [vmem:[%s1 + $0x594] sm:$0xf]
  %v405 = vld [vmem:[%s1 + $0x598] sm:$0xf]
  %v406 = vld [vmem:[%s1 + $0x59c] sm:$0xf]
  %v407 = vld [vmem:[%s1 + $0x5a0] sm:$0xf]
  %v408 = vld [vmem:[%s1 + $0x5a4] sm:$0xf]
  %v409 = vld [vmem:[%s1 + $0x5a8] sm:$0xf]
  %v410 = vld [vmem:[%s1 + $0x5ac] sm:$0xf]
  %v411 = vld [vmem:[%s1 + $0x5b0] sm:$0xf]
  %v412 = vld [vmem:[%s1 + $0x5b4] sm:$0xf]
  %v413 = vld [vmem:[%s1 + $0x5b8] sm:$0xf]
  %v414 = vld [vmem:[%s1 + $0x5bc] sm:$0xf]
  %v415 = vld [vmem:[%s1 + $0x5c0] sm:$0xf]
  %v416 = vld [vmem:[%s1 + $0x5c4] sm:$0xf]
  %v417 = vld [vmem:[%s1 + $0x5c8] sm:$0xf]
  %v418 = vld [vmem:[%s1 + $0x5cc] sm:$0xf]
  %v419 = vld [vmem:[%s1 + $0x5d0] sm:$0xf]
  %v420 = vld [vmem:[%s1 + $0x5d4] sm:$0xf]
  %v421 = vld [vmem:[%s1 + $0x5d8] sm:$0xf]
  %v422 = vld [vmem:[%s1 + $0x5dc] sm:$0xf]
  %v423 = vld [vmem:[%s1 + $0x5e0] sm:$0xf]
  %v424 = vld [vmem:[%s1 + $0x5e4] sm:$0xf]
  %v425 = vld [vmem:[%s1 + $0x5e8] sm:$0xf]
  %v426 = vld [vmem:[%s1 + $0x5ec] sm:$0xf]
  %v427 = vld [vmem:[%s1 + $0x5f0] sm:$0xf]
  %v428 = vld [vmem:[%s1 + $0x5f4] sm:$0xf]
  %v429 = vld [vmem:[%s1 + $0x5f8] sm:$0xf]
  %v430 = vld [vmem:[%s1 + $0x5fc] sm:$0xf]
  %v431 = vld [vmem:[%s1 + $0x600] sm:$0xf]
  %v432 = vld [vmem:[%s1 + $0x604] sm:$0xf]
  %v433 = vld [vmem:[%s1 + $0x608] sm:$0xf]
  %v434 = vld [vmem:[%s1 + $0x60c] sm:$0xf]
  %v435 = vld [vmem:[%s1 + $0x610] sm:$0xf]
  %v436 = vld [vmem:[%s1 + $0x614] sm:$0xf]
  %v437 = vld [vmem:[%s1 + $0x618] sm:$0xf]
  %v438 = vld [vmem:[%s1 + $0x61c] sm:$0xf]
  %v439 = vld [vmem:[%s1 + $0x620] sm:$0xf]
  %v440 = vld [vmem:[%s1 + $0x624] sm:$0xf]
  %v441 = vld [vmem:[%s1 + $0x628] sm:$0xf]
  %v442 = vld [vmem:[%s1 + $0x62c] sm:$0xf]
  %v443 = vld [vmem:[%s1 + $0x630] sm:$0xf]
  %v444 = vld [vmem:[%s1 + $0x634] sm:$0xf]
  %v445 = vld [vmem:[%s1 + $0x638] sm:$0xf]
  %v446 = vld [vmem:[%s1 + $0x63c] sm:$0xf]
  %v447 = vld [vmem:[%s1 + $0x640] sm:$0xf]
  %v448 = vld [vmem:[%s1 + $0x644] sm:$0xf]
  %v449 = vld [vmem:[%s1 + $0x648] sm:$0xf]
  %v450 = vld [vmem:[%s1 + $0x64c] sm:$0xf]
  %v451 = vld [vmem:[%s1 + $0x650] sm:$0xf]
  %v452 = vld [vmem:[%s1 + $0x654] sm:$0xf]
  %v453 = vld [vmem:[%s1 + $0x658] sm:$0xf]
  %v454 = vld [vmem:[%s1 + $0x65c] sm:$0xf]
  %v455 = vld [vmem:[%s1 + $0x660] sm:$0xf]
  %v456 = vld [vmem:[%s1 + $0x664] sm:$0xf]
  %v457 = vld [vmem:[%s1 + $0x668] sm:$0xf]
  %v458 = vld [vmem:[%s1 + $0x66c] sm:$0xf]
  %v459 = vld [vmem:[%s1 + $0x670] sm:$0xf]
  %v460 = vld [vmem:[%s1 + $0x674] sm:$0xf]
  %v461 = vld [vmem:[%s1 + $0x678] sm:$0xf]
  %v462 = vld [vmem:[%s1 + $0x67c] sm:$0xf]
  %v463 = vld [vmem:[%s1 + $0x680] sm:$0xf]
  %v464 = vld [vmem:[%s1 + $0x684] sm:$0xf]
  %v465 = vld [vmem:[%s1 + $0x688] sm:$0xf]
  %v466 = vld [vmem:[%s1 + $0x68c] sm:$0xf]
  %v467 = vld [vmem:[%s1 + $0x690] sm:$0xf]
  %v468 = vld [vmem:[%s1 + $0x694] sm:$0xf]
  %v469 = vld [vmem:[%s1 + $0x698] sm:$0xf]
  %v470 = vld [vmem:[%s1 + $0x69c] sm:$0xf]
  %v471 = vld [vmem:[%s1 + $0x6a0] sm:$0xf]
  %v472 = vld [vmem:[%s1 + $0x6a4] sm:$0xf]
  %v473 = vld [vmem:[%s1 + $0x6a8] sm:$0xf]
  %v474 = vld [vmem:[%s1 + $0x6ac] sm:$0xf]
  %v475 = vld [vmem:[%s1 + $0x6b0] sm:$0xf]
  %v476 = vld [vmem:[%s1 + $0x6b4] sm:$0xf]
  %v477 = vld [vmem:[%s1 + $0x6b8] sm:$0xf]
  %v478 = vld [vmem:[%s1 + $0x6bc] sm:$0xf]
  %v479 = vld [vmem:[%s1 + $0x6c0] sm:$0xf]
  %v480 = vld [vmem:[%s1 + $0x6c4] sm:$0xf]
  %v481 = vld [vmem:[%s1 + $0x6c8] sm:$0xf]
  %v482 = vld [vmem:[%s1 + $0x6cc] sm:$0xf]
  %v483 = vld [vmem:[%s1 + $0x6d0] sm:$0xf]
  %v484 = vld [vmem:[%s1 + $0x6d4] sm:$0xf]
  %v485 = vld [vmem:[%s1 + $0x6d8] sm:$0xf]
  %v486 = vld [vmem:[%s1 + $0x6dc] sm:$0xf]
  %v487 = vld [vmem:[%s1 + $0x6e0] sm:$0xf]
  %v488 = vld [vmem:[%s1 + $0x6e4] sm:$0xf]
  %v489 = vld [vmem:[%s1 + $0x6e8] sm:$0xf]
  %v490 = vld [vmem:[%s1 + $0x6ec] sm:$0xf]
  %v491 = vld [vmem:[%s1 + $0x6f0] sm:$0xf]
  %v492 = vld [vmem:[%s1 + $0x6f4] sm:$0xf]
  %v493 = vld [vmem:[%s1 + $0x6f8] sm:$0xf]
  %v494 = vld [vmem:[%s1 + $0x6fc] sm:$0xf]
  %v495 = vld [vmem:[%s1 + $0x700] sm:$0xf]
  %v496 = vld [vmem:[%s1 + $0x704] sm:$0xf]
  %v497 = vld [vmem:[%s1 + $0x708] sm:$0xf]
  %v498 = vld [vmem:[%s1 + $0x70c] sm:$0xf]
  %v499 = vld [vmem:[%s1 + $0x710] sm:$0xf]
  %v500 = vld [vmem:[%s1 + $0x714] sm:$0xf]
  %v501 = vld [vmem:[%s1 + $0x718] sm:$0xf]
  %v502 = vld [vmem:[%s1 + $0x71c] sm:$0xf]
  %v503 = vld [vmem:[%s1 + $0x720] sm:$0xf]
  %v504 = vld [vmem:[%s1 + $0x724] sm:$0xf]
  %v505 = vld [vmem:[%s1 + $0x728] sm:$0xf]
  %v506 = vld [vmem:[%s1 + $0x72c] sm:$0xf]
  %v507 = vld [vmem:[%s1 + $0x730] sm:$0xf]
  %v508 = vld [vmem:[%s1 + $0x734] sm:$0xf]
  %v509 = vld [vmem:[%s1 + $0x738] sm:$0xf]
  %v510 = vld [vmem:[%s1 + $0x73c] sm:$0xf]
  %v511 = vld [vmem:[%s1 + $0x740] sm:$0xf]
  %v512 = vld [vmem:[%s1 + $0x744] sm:$0xf]
  %v513 = vld [vmem:[%s1 + $0x748] sm:$0xf]
  %v514 = vld [vmem:[%s1 + $0x74c] sm:$0xf]
  %v515 = vld [vmem:[%s1 + $0x750] sm:$0xf]
  %v516 = vld [vmem:[%s1 + $0x754] sm:$0xf]
  %v517 = vld [vmem:[%s1 + $0x758] sm:$0xf]
  %v518 = vld [vmem:[%s1 + $0x75c] sm:$0xf]
  %v519 = vld [vmem:[%s1 + $0x760] sm:$0xf]
  %v520 = vld [vmem:[%s1 + $0x764] sm:$0xf]
  %v521 = vld [vmem:[%s1 + $0x768] sm:$0xf]
  %v522 = vld [vmem:[%s1 + $0x76c] sm:$0xf]
  %v523 = vld [vmem:[%s1 + $0x770] sm:$0xf]
  %v524 = vld [vmem:[%s1 + $0x774] sm:$0xf]
  %v525 = vld [vmem:[%s1 + $0x778] sm:$0xf]
  %v526 = vld [vmem:[%s1 + $0x77c] sm:$0xf]
  %v527 = vld [vmem:[%s1 + $0x780] sm:$0xf]
  %v528 = vld [vmem:[%s1 + $0x784] sm:$0xf]
  %v529 = vld [vmem:[%s1 + $0x788] sm:$0xf]
  %v530 = vld [vmem:[%s1 + $0x78c] sm:$0xf]
  %v531 = vld [vmem:[%s1 + $0x790] sm:$0xf]
  %v532 = vld [vmem:[%s1 + $0x794] sm:$0xf]
  %v533 = vld [vmem:[%s1 + $0x798] sm:$0xf]
  %v534 = vld [vmem:[%s1 + $0x79c] sm:$0xf]
  %v535 = vld [vmem:[%s1 + $0x7a0] sm:$0xf]
  %v536 = vld [vmem:[%s1 + $0x7a4] sm:$0xf]
  %v537 = vld [vmem:[%s1 + $0x7a8] sm:$0xf]
  %v538 = vld [vmem:[%s1 + $0x7ac] sm:$0xf]
  %v539 = vld [vmem:[%s1 + $0x7b0] sm:$0xf]
  %v540 = vld [vmem:[%s1 + $0x7b4] sm:$0xf]
  %v541 = vld [vmem:[%s1 + $0x7b8] sm:$0xf]
  %v542 = vld [vmem:[%s1 + $0x7bc] sm:$0xf]
  %v543 = vld [vmem:[%s1 + $0x7c0] sm:$0xf]
  %v544 = vld [vmem:[%s1 + $0x7c4] sm:$0xf]
  %v545 = vld [vmem:[%s1 + $0x7c8] sm:$0xf]
  %v546 = vld [vmem:[%s1 + $0x7cc] sm:$0xf]
  %v547 = vld [vmem:[%s1 + $0x7d0] sm:$0xf]
  %v548 = vld [vmem:[%s1 + $0x7d4] sm:$0xf]
  %v549 = vld [vmem:[%s1 + $0x7d8] sm:$0xf]
  %v550 = vld [vmem:[%s1 + $0x7dc] sm:$0xf]
  %v551 = vld [vmem:[%s1 + $0x7e0] sm:$0xf]
  %v552 = vld [vmem:[%s1 + $0x7e4] sm:$0xf]
  %v553 = vld [vmem:[%s1 + $0x7e8] sm:$0xf]
  %v554 = vld [vmem:[%s1 + $0x7ec] sm:$0xf]
  %v555 = vld [vmem:[%s1 + $0x7f0] sm:$0xf]
  %v556 = vld [vmem:[%s1 + $0x7f4] sm:$0xf]
  %v557 = vld [vmem:[%s1 + $0x7f8] sm:$0xf]
  %v558 = vld [vmem:[%s1 + $0x7fc] sm:$0xf]
  %v559 = vld [vmem:[%s2] sm:$0x1]
  %v561 = vlaneseq
  %v562 = vshrl.u32 %v561, 7
  %v563 = vsub.s32 0, %v562
  %v564 = vrot.slane %v559, %v563
  %v598 = vunpack.c.l.b16 %v15
  %v599 = vunpack.c.h.b16 %v15
  %v600 = vunpack.c.l.b16 %v16
  %v601 = vunpack.c.h.b16 %v16
  %v602 = vunpack.c.l.b16 %v17
  %v603 = vunpack.c.h.b16 %v17
  %v604 = vunpack.c.l.b16 %v18
  %v605 = vunpack.c.h.b16 %v18
  %v606 = vunpack.c.l.b16 %v19
  %v607 = vunpack.c.h.b16 %v19
  %v608 = vunpack.c.l.b16 %v20
  %v609 = vunpack.c.h.b16 %v20
  %v610 = vunpack.c.l.b16 %v21
  %v611 = vunpack.c.h.b16 %v21
  %v612 = vunpack.c.l.b16 %v22
  %v613 = vunpack.c.h.b16 %v22
  %v614 = vunpack.c.l.b16 %v23
  %v615 = vunpack.c.h.b16 %v23
  %v616 = vunpack.c.l.b16 %v24
  %v617 = vunpack.c.h.b16 %v24
  %v618 = vunpack.c.l.b16 %v25
  %v619 = vunpack.c.h.b16 %v25
  %v620 = vunpack.c.l.b16 %v26
  %v621 = vunpack.c.h.b16 %v26
  %v622 = vunpack.c.l.b16 %v27
  %v623 = vunpack.c.h.b16 %v27
  %v624 = vunpack.c.l.b16 %v28
  %v625 = vunpack.c.h.b16 %v28
  %v626 = vunpack.c.l.b16 %v29
  %v627 = vunpack.c.h.b16 %v29
  %v628 = vunpack.c.l.b16 %v30
  %v629 = vunpack.c.h.b16 %v30
  %v630 = vunpack.c.l.b16 %v31
  %v631 = vunpack.c.h.b16 %v31
  %v632 = vunpack.c.l.b16 %v32
  %v633 = vunpack.c.h.b16 %v32
  %v634 = vunpack.c.l.b16 %v33
  %v635 = vunpack.c.h.b16 %v33
  %v636 = vunpack.c.l.b16 %v34
  %v637 = vunpack.c.h.b16 %v34
  %v638 = vunpack.c.l.b16 %v35
  %v639 = vunpack.c.h.b16 %v35
  %v640 = vunpack.c.l.b16 %v36
  %v641 = vunpack.c.h.b16 %v36
  %v642 = vunpack.c.l.b16 %v37
  %v643 = vunpack.c.h.b16 %v37
  %v644 = vunpack.c.l.b16 %v38
  %v645 = vunpack.c.h.b16 %v38
  %v646 = vunpack.c.l.b16 %v39
  %v647 = vunpack.c.h.b16 %v39
  %v648 = vunpack.c.l.b16 %v40
  %v649 = vunpack.c.h.b16 %v40
  %v650 = vunpack.c.l.b16 %v41
  %v651 = vunpack.c.h.b16 %v41
  %v652 = vunpack.c.l.b16 %v42
  %v653 = vunpack.c.h.b16 %v42
  %v654 = vunpack.c.l.b16 %v43
  %v655 = vunpack.c.h.b16 %v43
  %v656 = vunpack.c.l.b16 %v44
  %v657 = vunpack.c.h.b16 %v44
  %v658 = vunpack.c.l.b16 %v45
  %v659 = vunpack.c.h.b16 %v45
  %v660 = vunpack.c.l.b16 %v46
  %v661 = vunpack.c.h.b16 %v46
  %v662 = vpack.c.b16 %v630, %v598
  %v663 = vpack.c.b16 %v631, %v599
  %v664 = vpack.c.b16 %v632, %v600
  %v665 = vpack.c.b16 %v633, %v601
  %v666 = vpack.c.b16 %v634, %v602
  %v667 = vpack.c.b16 %v635, %v603
  %v668 = vpack.c.b16 %v636, %v604
  %v669 = vpack.c.b16 %v637, %v605
  %v670 = vpack.c.b16 %v638, %v606
  %v671 = vpack.c.b16 %v639, %v607
  %v672 = vpack.c.b16 %v640, %v608
  %v673 = vpack.c.b16 %v641, %v609
  %v674 = vpack.c.b16 %v642, %v610
  %v675 = vpack.c.b16 %v643, %v611
  %v676 = vpack.c.b16 %v644, %v612
  %v677 = vpack.c.b16 %v645, %v613
  %v678 = vpack.c.b16 %v646, %v614
  %v679 = vpack.c.b16 %v647, %v615
  %v680 = vpack.c.b16 %v648, %v616
  %v681 = vpack.c.b16 %v649, %v617
  %v682 = vpack.c.b16 %v650, %v618
  %v683 = vpack.c.b16 %v651, %v619
  %v684 = vpack.c.b16 %v652, %v620
  %v685 = vpack.c.b16 %v653, %v621
  %v686 = vpack.c.b16 %v654, %v622
  %v687 = vpack.c.b16 %v655, %v623
  %v688 = vpack.c.b16 %v656, %v624
  %v689 = vpack.c.b16 %v657, %v625
  %v690 = vpack.c.b16 %v658, %v626
  %v691 = vpack.c.b16 %v659, %v627
  %v692 = vpack.c.b16 %v660, %v628
  %v693 = vpack.c.b16 %v661, %v629
  %v1238 = vunpack.c.l.b16 %v47
  %v1239 = vunpack.c.l.b16 %v48
  %v1240 = vunpack.c.l.b16 %v49
  %v1241 = vunpack.c.l.b16 %v50
  %v1242 = vunpack.c.l.b16 %v51
  %v1243 = vunpack.c.l.b16 %v52
  %v1244 = vunpack.c.l.b16 %v53
  %v1245 = vunpack.c.l.b16 %v54
  %v1246 = vunpack.c.l.b16 %v55
  %v1247 = vunpack.c.l.b16 %v56
  %v1248 = vunpack.c.l.b16 %v57
  %v1249 = vunpack.c.l.b16 %v58
  %v1250 = vunpack.c.l.b16 %v59
  %v1251 = vunpack.c.l.b16 %v60
  %v1252 = vunpack.c.l.b16 %v61
  %v1253 = vunpack.c.l.b16 %v62
  %v1254 = vunpack.c.l.b16 %v63
  %v1255 = vunpack.c.l.b16 %v64
  %v1256 = vunpack.c.l.b16 %v65
  %v1257 = vunpack.c.l.b16 %v66
  %v1258 = vunpack.c.l.b16 %v67
  %v1259 = vunpack.c.l.b16 %v68
  %v1260 = vunpack.c.l.b16 %v69
  %v1261 = vunpack.c.l.b16 %v70
  %v1262 = vunpack.c.l.b16 %v71
  %v1263 = vunpack.c.l.b16 %v72
  %v1264 = vunpack.c.l.b16 %v73
  %v1265 = vunpack.c.l.b16 %v74
  %v1266 = vunpack.c.l.b16 %v75
  %v1267 = vunpack.c.l.b16 %v76
  %v1268 = vunpack.c.l.b16 %v77
  %v1269 = vunpack.c.l.b16 %v78
  %v1270 = vunpack.c.l.b16 %v79
  %v1271 = vunpack.c.l.b16 %v80
  %v1272 = vunpack.c.l.b16 %v81
  %v1273 = vunpack.c.l.b16 %v82
  %v1274 = vunpack.c.l.b16 %v83
  %v1275 = vunpack.c.l.b16 %v84
  %v1276 = vunpack.c.l.b16 %v85
  %v1277 = vunpack.c.l.b16 %v86
  %v1278 = vunpack.c.l.b16 %v87
  %v1279 = vunpack.c.l.b16 %v88
  %v1280 = vunpack.c.l.b16 %v89
  %v1281 = vunpack.c.l.b16 %v90
  %v1282 = vunpack.c.l.b16 %v91
  %v1283 = vunpack.c.l.b16 %v92
  %v1284 = vunpack.c.l.b16 %v93
  %v1285 = vunpack.c.l.b16 %v94
  %v1286 = vunpack.c.l.b16 %v95
  %v1287 = vunpack.c.l.b16 %v96
  %v1288 = vunpack.c.l.b16 %v97
  %v1289 = vunpack.c.l.b16 %v98
  %v1290 = vunpack.c.l.b16 %v99
  %v1291 = vunpack.c.l.b16 %v100
  %v1292 = vunpack.c.l.b16 %v101
  %v1293 = vunpack.c.l.b16 %v102
  %v1294 = vunpack.c.l.b16 %v103
  %v1295 = vunpack.c.l.b16 %v104
  %v1296 = vunpack.c.l.b16 %v105
  %v1297 = vunpack.c.l.b16 %v106
  %v1298 = vunpack.c.l.b16 %v107
  %v1299 = vunpack.c.l.b16 %v108
  %v1300 = vunpack.c.l.b16 %v109
  %v1301 = vunpack.c.l.b16 %v110
  %v1302 = vunpack.c.l.b16 %v111
  %v1303 = vunpack.c.l.b16 %v112
  %v1304 = vunpack.c.l.b16 %v113
  %v1305 = vunpack.c.l.b16 %v114
  %v1306 = vunpack.c.l.b16 %v115
  %v1307 = vunpack.c.l.b16 %v116
  %v1308 = vunpack.c.l.b16 %v117
  %v1309 = vunpack.c.l.b16 %v118
  %v1310 = vunpack.c.l.b16 %v119
  %v1311 = vunpack.c.l.b16 %v120
  %v1312 = vunpack.c.l.b16 %v121
  %v1313 = vunpack.c.l.b16 %v122
  %v1314 = vunpack.c.l.b16 %v123
  %v1315 = vunpack.c.l.b16 %v124
  %v1316 = vunpack.c.l.b16 %v125
  %v1317 = vunpack.c.l.b16 %v126
  %v1318 = vunpack.c.l.b16 %v127
  %v1319 = vunpack.c.l.b16 %v128
  %v1320 = vunpack.c.l.b16 %v129
  %v1321 = vunpack.c.l.b16 %v130
  %v1322 = vunpack.c.l.b16 %v131
  %v1323 = vunpack.c.l.b16 %v132
  %v1324 = vunpack.c.l.b16 %v133
  %v1325 = vunpack.c.l.b16 %v134
  %v1326 = vunpack.c.l.b16 %v135
  %v1327 = vunpack.c.l.b16 %v136
  %v1328 = vunpack.c.l.b16 %v137
  %v1329 = vunpack.c.l.b16 %v138
  %v1330 = vunpack.c.l.b16 %v139
  %v1331 = vunpack.c.l.b16 %v140
  %v1332 = vunpack.c.l.b16 %v141
  %v1333 = vunpack.c.l.b16 %v142
  %v1334 = vunpack.c.l.b16 %v143
  %v1335 = vunpack.c.l.b16 %v144
  %v1336 = vunpack.c.l.b16 %v145
  %v1337 = vunpack.c.l.b16 %v146
  %v1338 = vunpack.c.l.b16 %v147
  %v1339 = vunpack.c.l.b16 %v148
  %v1340 = vunpack.c.l.b16 %v149
  %v1341 = vunpack.c.l.b16 %v150
  %v1342 = vunpack.c.l.b16 %v151
  %v1343 = vunpack.c.l.b16 %v152
  %v1344 = vunpack.c.l.b16 %v153
  %v1345 = vunpack.c.l.b16 %v154
  %v1346 = vunpack.c.l.b16 %v155
  %v1347 = vunpack.c.l.b16 %v156
  %v1348 = vunpack.c.l.b16 %v157
  %v1349 = vunpack.c.l.b16 %v158
  %v1350 = vunpack.c.l.b16 %v159
  %v1351 = vunpack.c.l.b16 %v160
  %v1352 = vunpack.c.l.b16 %v161
  %v1353 = vunpack.c.l.b16 %v162
  %v1354 = vunpack.c.l.b16 %v163
  %v1355 = vunpack.c.l.b16 %v164
  %v1356 = vunpack.c.l.b16 %v165
  %v1357 = vunpack.c.l.b16 %v166
  %v1358 = vunpack.c.l.b16 %v167
  %v1359 = vunpack.c.l.b16 %v168
  %v1360 = vunpack.c.l.b16 %v169
  %v1361 = vunpack.c.l.b16 %v170
  %v1362 = vunpack.c.l.b16 %v171
  %v1363 = vunpack.c.l.b16 %v172
  %v1364 = vunpack.c.l.b16 %v173
  %v1365 = vunpack.c.l.b16 %v174
  %v1366 = vunpack.c.l.b16 %v175
  %v1367 = vunpack.c.l.b16 %v176
  %v1368 = vunpack.c.l.b16 %v177
  %v1369 = vunpack.c.l.b16 %v178
  %v1370 = vunpack.c.l.b16 %v179
  %v1371 = vunpack.c.l.b16 %v180
  %v1372 = vunpack.c.l.b16 %v181
  %v1373 = vunpack.c.l.b16 %v182
  %v1374 = vunpack.c.l.b16 %v183
  %v1375 = vunpack.c.l.b16 %v184
  %v1376 = vunpack.c.l.b16 %v185
  %v1377 = vunpack.c.l.b16 %v186
  %v1378 = vunpack.c.l.b16 %v187
  %v1379 = vunpack.c.l.b16 %v188
  %v1380 = vunpack.c.l.b16 %v189
  %v1381 = vunpack.c.l.b16 %v190
  %v1382 = vunpack.c.l.b16 %v191
  %v1383 = vunpack.c.l.b16 %v192
  %v1384 = vunpack.c.l.b16 %v193
  %v1385 = vunpack.c.l.b16 %v194
  %v1386 = vunpack.c.l.b16 %v195
  %v1387 = vunpack.c.l.b16 %v196
  %v1388 = vunpack.c.l.b16 %v197
  %v1389 = vunpack.c.l.b16 %v198
  %v1390 = vunpack.c.l.b16 %v199
  %v1391 = vunpack.c.l.b16 %v200
  %v1392 = vunpack.c.l.b16 %v201
  %v1393 = vunpack.c.l.b16 %v202
  %v1394 = vunpack.c.l.b16 %v203
  %v1395 = vunpack.c.l.b16 %v204
  %v1396 = vunpack.c.l.b16 %v205
  %v1397 = vunpack.c.l.b16 %v206
  %v1398 = vunpack.c.l.b16 %v207
  %v1399 = vunpack.c.l.b16 %v208
  %v1400 = vunpack.c.l.b16 %v209
  %v1401 = vunpack.c.l.b16 %v210
  %v1402 = vunpack.c.l.b16 %v211
  %v1403 = vunpack.c.l.b16 %v212
  %v1404 = vunpack.c.l.b16 %v213
  %v1405 = vunpack.c.l.b16 %v214
  %v1406 = vunpack.c.l.b16 %v215
  %v1407 = vunpack.c.l.b16 %v216
  %v1408 = vunpack.c.l.b16 %v217
  %v1409 = vunpack.c.l.b16 %v218
  %v1410 = vunpack.c.l.b16 %v219
  %v1411 = vunpack.c.l.b16 %v220
  %v1412 = vunpack.c.l.b16 %v221
  %v1413 = vunpack.c.l.b16 %v222
  %v1414 = vunpack.c.l.b16 %v223
  %v1415 = vunpack.c.l.b16 %v224
  %v1416 = vunpack.c.l.b16 %v225
  %v1417 = vunpack.c.l.b16 %v226
  %v1418 = vunpack.c.l.b16 %v227
  %v1419 = vunpack.c.l.b16 %v228
  %v1420 = vunpack.c.l.b16 %v229
  %v1421 = vunpack.c.l.b16 %v230
  %v1422 = vunpack.c.l.b16 %v231
  %v1423 = vunpack.c.l.b16 %v232
  %v1424 = vunpack.c.l.b16 %v233
  %v1425 = vunpack.c.l.b16 %v234
  %v1426 = vunpack.c.l.b16 %v235
  %v1427 = vunpack.c.l.b16 %v236
  %v1428 = vunpack.c.l.b16 %v237
  %v1429 = vunpack.c.l.b16 %v238
  %v1430 = vunpack.c.l.b16 %v239
  %v1431 = vunpack.c.l.b16 %v240
  %v1432 = vunpack.c.l.b16 %v241
  %v1433 = vunpack.c.l.b16 %v242
  %v1434 = vunpack.c.l.b16 %v243
  %v1435 = vunpack.c.l.b16 %v244
  %v1436 = vunpack.c.l.b16 %v245
  %v1437 = vunpack.c.l.b16 %v246
  %v1438 = vunpack.c.l.b16 %v247
  %v1439 = vunpack.c.l.b16 %v248
  %v1440 = vunpack.c.l.b16 %v249
  %v1441 = vunpack.c.l.b16 %v250
  %v1442 = vunpack.c.l.b16 %v251
  %v1443 = vunpack.c.l.b16 %v252
  %v1444 = vunpack.c.l.b16 %v253
  %v1445 = vunpack.c.l.b16 %v254
  %v1446 = vunpack.c.l.b16 %v255
  %v1447 = vunpack.c.l.b16 %v256
  %v1448 = vunpack.c.l.b16 %v257
  %v1449 = vunpack.c.l.b16 %v258
  %v1450 = vunpack.c.l.b16 %v259
  %v1451 = vunpack.c.l.b16 %v260
  %v1452 = vunpack.c.l.b16 %v261
  %v1453 = vunpack.c.l.b16 %v262
  %v1454 = vunpack.c.l.b16 %v263
  %v1455 = vunpack.c.l.b16 %v264
  %v1456 = vunpack.c.l.b16 %v265
  %v1457 = vunpack.c.l.b16 %v266
  %v1458 = vunpack.c.l.b16 %v267
  %v1459 = vunpack.c.l.b16 %v268
  %v1460 = vunpack.c.l.b16 %v269
  %v1461 = vunpack.c.l.b16 %v270
  %v1462 = vunpack.c.l.b16 %v271
  %v1463 = vunpack.c.l.b16 %v272
  %v1464 = vunpack.c.l.b16 %v273
  %v1465 = vunpack.c.l.b16 %v274
  %v1466 = vunpack.c.l.b16 %v275
  %v1467 = vunpack.c.l.b16 %v276
  %v1468 = vunpack.c.l.b16 %v277
  %v1469 = vunpack.c.l.b16 %v278
  %v1470 = vunpack.c.l.b16 %v279
  %v1471 = vunpack.c.l.b16 %v280
  %v1472 = vunpack.c.l.b16 %v281
  %v1473 = vunpack.c.l.b16 %v282
  %v1474 = vunpack.c.l.b16 %v283
  %v1475 = vunpack.c.l.b16 %v284
  %v1476 = vunpack.c.l.b16 %v285
  %v1477 = vunpack.c.l.b16 %v286
  %v1478 = vunpack.c.l.b16 %v287
  %v1479 = vunpack.c.l.b16 %v288
  %v1480 = vunpack.c.l.b16 %v289
  %v1481 = vunpack.c.l.b16 %v290
  %v1482 = vunpack.c.l.b16 %v291
  %v1483 = vunpack.c.l.b16 %v292
  %v1484 = vunpack.c.l.b16 %v293
  %v1485 = vunpack.c.l.b16 %v294
  %v1486 = vunpack.c.l.b16 %v295
  %v1487 = vunpack.c.l.b16 %v296
  %v1488 = vunpack.c.l.b16 %v297
  %v1489 = vunpack.c.l.b16 %v298
  %v1490 = vunpack.c.l.b16 %v299
  %v1491 = vunpack.c.l.b16 %v300
  %v1492 = vunpack.c.l.b16 %v301
  %v1493 = vunpack.c.l.b16 %v302
  %v1494 = vunpack.c.l.b16 %v303
  %v1495 = vunpack.c.l.b16 %v304
  %v1496 = vunpack.c.l.b16 %v305
  %v1497 = vunpack.c.l.b16 %v306
  %v1498 = vunpack.c.l.b16 %v307
  %v1499 = vunpack.c.l.b16 %v308
  %v1500 = vunpack.c.l.b16 %v309
  %v1501 = vunpack.c.l.b16 %v310
  %v1502 = vunpack.c.l.b16 %v311
  %v1503 = vunpack.c.l.b16 %v312
  %v1504 = vunpack.c.l.b16 %v313
  %v1505 = vunpack.c.l.b16 %v314
  %v1506 = vunpack.c.l.b16 %v315
  %v1507 = vunpack.c.l.b16 %v316
  %v1508 = vunpack.c.l.b16 %v317
  %v1509 = vunpack.c.l.b16 %v318
  %v1510 = vunpack.c.l.b16 %v319
  %v1511 = vunpack.c.l.b16 %v320
  %v1512 = vunpack.c.l.b16 %v321
  %v1513 = vunpack.c.l.b16 %v322
  %v1514 = vunpack.c.l.b16 %v323
  %v1515 = vunpack.c.l.b16 %v324
  %v1516 = vunpack.c.l.b16 %v325
  %v1517 = vunpack.c.l.b16 %v326
  %v1518 = vunpack.c.l.b16 %v327
  %v1519 = vunpack.c.l.b16 %v328
  %v1520 = vunpack.c.l.b16 %v329
  %v1521 = vunpack.c.l.b16 %v330
  %v1522 = vunpack.c.l.b16 %v331
  %v1523 = vunpack.c.l.b16 %v332
  %v1524 = vunpack.c.l.b16 %v333
  %v1525 = vunpack.c.l.b16 %v334
  %v1526 = vunpack.c.l.b16 %v335
  %v1527 = vunpack.c.l.b16 %v336
  %v1528 = vunpack.c.l.b16 %v337
  %v1529 = vunpack.c.l.b16 %v338
  %v1530 = vunpack.c.l.b16 %v339
  %v1531 = vunpack.c.l.b16 %v340
  %v1532 = vunpack.c.l.b16 %v341
  %v1533 = vunpack.c.l.b16 %v342
  %v1534 = vunpack.c.l.b16 %v343
  %v1535 = vunpack.c.l.b16 %v344
  %v1536 = vunpack.c.l.b16 %v345
  %v1537 = vunpack.c.l.b16 %v346
  %v1538 = vunpack.c.l.b16 %v347
  %v1539 = vunpack.c.l.b16 %v348
  %v1540 = vunpack.c.l.b16 %v349
  %v1541 = vunpack.c.l.b16 %v350
  %v1542 = vunpack.c.l.b16 %v351
  %v1543 = vunpack.c.l.b16 %v352
  %v1544 = vunpack.c.l.b16 %v353
  %v1545 = vunpack.c.l.b16 %v354
  %v1546 = vunpack.c.l.b16 %v355
  %v1547 = vunpack.c.l.b16 %v356
  %v1548 = vunpack.c.l.b16 %v357
  %v1549 = vunpack.c.l.b16 %v358
  %v1550 = vunpack.c.l.b16 %v359
  %v1551 = vunpack.c.l.b16 %v360
  %v1552 = vunpack.c.l.b16 %v361
  %v1553 = vunpack.c.l.b16 %v362
  %v1554 = vunpack.c.l.b16 %v363
  %v1555 = vunpack.c.l.b16 %v364
  %v1556 = vunpack.c.l.b16 %v365
  %v1557 = vunpack.c.l.b16 %v366
  %v1558 = vunpack.c.l.b16 %v367
  %v1559 = vunpack.c.l.b16 %v368
  %v1560 = vunpack.c.l.b16 %v369
  %v1561 = vunpack.c.l.b16 %v370
  %v1562 = vunpack.c.l.b16 %v371
  %v1563 = vunpack.c.l.b16 %v372
  %v1564 = vunpack.c.l.b16 %v373
  %v1565 = vunpack.c.l.b16 %v374
  %v1566 = vunpack.c.l.b16 %v375
  %v1567 = vunpack.c.l.b16 %v376
  %v1568 = vunpack.c.l.b16 %v377
  %v1569 = vunpack.c.l.b16 %v378
  %v1570 = vunpack.c.l.b16 %v379
  %v1571 = vunpack.c.l.b16 %v380
  %v1572 = vunpack.c.l.b16 %v381
  %v1573 = vunpack.c.l.b16 %v382
  %v1574 = vunpack.c.l.b16 %v383
  %v1575 = vunpack.c.l.b16 %v384
  %v1576 = vunpack.c.l.b16 %v385
  %v1577 = vunpack.c.l.b16 %v386
  %v1578 = vunpack.c.l.b16 %v387
  %v1579 = vunpack.c.l.b16 %v388
  %v1580 = vunpack.c.l.b16 %v389
  %v1581 = vunpack.c.l.b16 %v390
  %v1582 = vunpack.c.l.b16 %v391
  %v1583 = vunpack.c.l.b16 %v392
  %v1584 = vunpack.c.l.b16 %v393
  %v1585 = vunpack.c.l.b16 %v394
  %v1586 = vunpack.c.l.b16 %v395
  %v1587 = vunpack.c.l.b16 %v396
  %v1588 = vunpack.c.l.b16 %v397
  %v1589 = vunpack.c.l.b16 %v398
  %v1590 = vunpack.c.l.b16 %v399
  %v1591 = vunpack.c.l.b16 %v400
  %v1592 = vunpack.c.l.b16 %v401
  %v1593 = vunpack.c.l.b16 %v402
  %v1594 = vunpack.c.l.b16 %v403
  %v1595 = vunpack.c.l.b16 %v404
  %v1596 = vunpack.c.l.b16 %v405
  %v1597 = vunpack.c.l.b16 %v406
  %v1598 = vunpack.c.l.b16 %v407
  %v1599 = vunpack.c.l.b16 %v408
  %v1600 = vunpack.c.l.b16 %v409
  %v1601 = vunpack.c.l.b16 %v410
  %v1602 = vunpack.c.l.b16 %v411
  %v1603 = vunpack.c.l.b16 %v412
  %v1604 = vunpack.c.l.b16 %v413
  %v1605 = vunpack.c.l.b16 %v414
  %v1606 = vunpack.c.l.b16 %v415
  %v1607 = vunpack.c.l.b16 %v416
  %v1608 = vunpack.c.l.b16 %v417
  %v1609 = vunpack.c.l.b16 %v418
  %v1610 = vunpack.c.l.b16 %v419
  %v1611 = vunpack.c.l.b16 %v420
  %v1612 = vunpack.c.l.b16 %v421
  %v1613 = vunpack.c.l.b16 %v422
  %v1614 = vunpack.c.l.b16 %v423
  %v1615 = vunpack.c.l.b16 %v424
  %v1616 = vunpack.c.l.b16 %v425
  %v1617 = vunpack.c.l.b16 %v426
  %v1618 = vunpack.c.l.b16 %v427
  %v1619 = vunpack.c.l.b16 %v428
  %v1620 = vunpack.c.l.b16 %v429
  %v1621 = vunpack.c.l.b16 %v430
  %v1622 = vunpack.c.l.b16 %v431
  %v1623 = vunpack.c.l.b16 %v432
  %v1624 = vunpack.c.l.b16 %v433
  %v1625 = vunpack.c.l.b16 %v434
  %v1626 = vunpack.c.l.b16 %v435
  %v1627 = vunpack.c.l.b16 %v436
  %v1628 = vunpack.c.l.b16 %v437
  %v1629 = vunpack.c.l.b16 %v438
  %v1630 = vunpack.c.l.b16 %v439
  %v1631 = vunpack.c.l.b16 %v440
  %v1632 = vunpack.c.l.b16 %v441
  %v1633 = vunpack.c.l.b16 %v442
  %v1634 = vunpack.c.l.b16 %v443
  %v1635 = vunpack.c.l.b16 %v444
  %v1636 = vunpack.c.l.b16 %v445
  %v1637 = vunpack.c.l.b16 %v446
  %v1638 = vunpack.c.l.b16 %v447
  %v1639 = vunpack.c.l.b16 %v448
  %v1640 = vunpack.c.l.b16 %v449
  %v1641 = vunpack.c.l.b16 %v450
  %v1642 = vunpack.c.l.b16 %v451
  %v1643 = vunpack.c.l.b16 %v452
  %v1644 = vunpack.c.l.b16 %v453
  %v1645 = vunpack.c.l.b16 %v454
  %v1646 = vunpack.c.l.b16 %v455
  %v1647 = vunpack.c.l.b16 %v456
  %v1648 = vunpack.c.l.b16 %v457
  %v1649 = vunpack.c.l.b16 %v458
  %v1650 = vunpack.c.l.b16 %v459
  %v1651 = vunpack.c.l.b16 %v460
  %v1652 = vunpack.c.l.b16 %v461
  %v1653 = vunpack.c.l.b16 %v462
  %v1654 = vunpack.c.l.b16 %v463
  %v1655 = vunpack.c.l.b16 %v464
  %v1656 = vunpack.c.l.b16 %v465
  %v1657 = vunpack.c.l.b16 %v466
  %v1658 = vunpack.c.l.b16 %v467
  %v1659 = vunpack.c.l.b16 %v468
  %v1660 = vunpack.c.l.b16 %v469
  %v1661 = vunpack.c.l.b16 %v470
  %v1662 = vunpack.c.l.b16 %v471
  %v1663 = vunpack.c.l.b16 %v472
  %v1664 = vunpack.c.l.b16 %v473
  %v1665 = vunpack.c.l.b16 %v474
  %v1666 = vunpack.c.l.b16 %v475
  %v1667 = vunpack.c.l.b16 %v476
  %v1668 = vunpack.c.l.b16 %v477
  %v1669 = vunpack.c.l.b16 %v478
  %v1670 = vunpack.c.l.b16 %v479
  %v1671 = vunpack.c.l.b16 %v480
  %v1672 = vunpack.c.l.b16 %v481
  %v1673 = vunpack.c.l.b16 %v482
  %v1674 = vunpack.c.l.b16 %v483
  %v1675 = vunpack.c.l.b16 %v484
  %v1676 = vunpack.c.l.b16 %v485
  %v1677 = vunpack.c.l.b16 %v486
  %v1678 = vunpack.c.l.b16 %v487
  %v1679 = vunpack.c.l.b16 %v488
  %v1680 = vunpack.c.l.b16 %v489
  %v1681 = vunpack.c.l.b16 %v490
  %v1682 = vunpack.c.l.b16 %v491
  %v1683 = vunpack.c.l.b16 %v492
  %v1684 = vunpack.c.l.b16 %v493
  %v1685 = vunpack.c.l.b16 %v494
  %v1686 = vunpack.c.l.b16 %v495
  %v1687 = vunpack.c.l.b16 %v496
  %v1688 = vunpack.c.l.b16 %v497
  %v1689 = vunpack.c.l.b16 %v498
  %v1690 = vunpack.c.l.b16 %v499
  %v1691 = vunpack.c.l.b16 %v500
  %v1692 = vunpack.c.l.b16 %v501
  %v1693 = vunpack.c.l.b16 %v502
  %v1694 = vunpack.c.l.b16 %v503
  %v1695 = vunpack.c.l.b16 %v504
  %v1696 = vunpack.c.l.b16 %v505
  %v1697 = vunpack.c.l.b16 %v506
  %v1698 = vunpack.c.l.b16 %v507
  %v1699 = vunpack.c.l.b16 %v508
  %v1700 = vunpack.c.l.b16 %v509
  %v1701 = vunpack.c.l.b16 %v510
  %v1702 = vunpack.c.l.b16 %v511
  %v1703 = vunpack.c.l.b16 %v512
  %v1704 = vunpack.c.l.b16 %v513
  %v1705 = vunpack.c.l.b16 %v514
  %v1706 = vunpack.c.l.b16 %v515
  %v1707 = vunpack.c.l.b16 %v516
  %v1708 = vunpack.c.l.b16 %v517
  %v1709 = vunpack.c.l.b16 %v518
  %v1710 = vunpack.c.l.b16 %v519
  %v1711 = vunpack.c.l.b16 %v520
  %v1712 = vunpack.c.l.b16 %v521
  %v1713 = vunpack.c.l.b16 %v522
  %v1714 = vunpack.c.l.b16 %v523
  %v1715 = vunpack.c.l.b16 %v524
  %v1716 = vunpack.c.l.b16 %v525
  %v1717 = vunpack.c.l.b16 %v526
  %v1718 = vunpack.c.l.b16 %v527
  %v1719 = vunpack.c.l.b16 %v528
  %v1720 = vunpack.c.l.b16 %v529
  %v1721 = vunpack.c.l.b16 %v530
  %v1722 = vunpack.c.l.b16 %v531
  %v1723 = vunpack.c.l.b16 %v532
  %v1724 = vunpack.c.l.b16 %v533
  %v1725 = vunpack.c.l.b16 %v534
  %v1726 = vunpack.c.l.b16 %v535
  %v1727 = vunpack.c.l.b16 %v536
  %v1728 = vunpack.c.l.b16 %v537
  %v1729 = vunpack.c.l.b16 %v538
  %v1730 = vunpack.c.l.b16 %v539
  %v1731 = vunpack.c.l.b16 %v540
  %v1732 = vunpack.c.l.b16 %v541
  %v1733 = vunpack.c.l.b16 %v542
  %v1734 = vunpack.c.l.b16 %v543
  %v1735 = vunpack.c.l.b16 %v544
  %v1736 = vunpack.c.l.b16 %v545
  %v1737 = vunpack.c.l.b16 %v546
  %v1738 = vunpack.c.l.b16 %v547
  %v1739 = vunpack.c.l.b16 %v548
  %v1740 = vunpack.c.l.b16 %v549
  %v1741 = vunpack.c.l.b16 %v550
  %v1742 = vunpack.c.l.b16 %v551
  %v1743 = vunpack.c.l.b16 %v552
  %v1744 = vunpack.c.l.b16 %v553
  %v1745 = vunpack.c.l.b16 %v554
  %v1746 = vunpack.c.l.b16 %v555
  %v1747 = vunpack.c.l.b16 %v556
  %v1748 = vunpack.c.l.b16 %v557
  %v1749 = vunpack.c.l.b16 %v558
  %v1750 = vpack.c.b16 %v1239, %v1238
  %v1751 = vpack.c.b16 %v1241, %v1240
  %v1752 = vpack.c.b16 %v1243, %v1242
  %v1753 = vpack.c.b16 %v1245, %v1244
  %v1754 = vpack.c.b16 %v1247, %v1246
  %v1755 = vpack.c.b16 %v1249, %v1248
  %v1756 = vpack.c.b16 %v1251, %v1250
  %v1757 = vpack.c.b16 %v1253, %v1252
  %v1758 = vpack.c.b16 %v1255, %v1254
  %v1759 = vpack.c.b16 %v1257, %v1256
  %v1760 = vpack.c.b16 %v1259, %v1258
  %v1761 = vpack.c.b16 %v1261, %v1260
  %v1762 = vpack.c.b16 %v1263, %v1262
  %v1763 = vpack.c.b16 %v1265, %v1264
  %v1764 = vpack.c.b16 %v1267, %v1266
  %v1765 = vpack.c.b16 %v1269, %v1268
  %v1766 = vpack.c.b16 %v1271, %v1270
  %v1767 = vpack.c.b16 %v1273, %v1272
  %v1768 = vpack.c.b16 %v1275, %v1274
  %v1769 = vpack.c.b16 %v1277, %v1276
  %v1770 = vpack.c.b16 %v1279, %v1278
  %v1771 = vpack.c.b16 %v1281, %v1280
  %v1772 = vpack.c.b16 %v1283, %v1282
  %v1773 = vpack.c.b16 %v1285, %v1284
  %v1774 = vpack.c.b16 %v1287, %v1286
  %v1775 = vpack.c.b16 %v1289, %v1288
  %v1776 = vpack.c.b16 %v1291, %v1290
  %v1777 = vpack.c.b16 %v1293, %v1292
  %v1778 = vpack.c.b16 %v1295, %v1294
  %v1779 = vpack.c.b16 %v1297, %v1296
  %v1780 = vpack.c.b16 %v1299, %v1298
  %v1781 = vpack.c.b16 %v1301, %v1300
  %v1782 = vpack.c.b16 %v1303, %v1302
  %v1783 = vpack.c.b16 %v1305, %v1304
  %v1784 = vpack.c.b16 %v1307, %v1306
  %v1785 = vpack.c.b16 %v1309, %v1308
  %v1786 = vpack.c.b16 %v1311, %v1310
  %v1787 = vpack.c.b16 %v1313, %v1312
  %v1788 = vpack.c.b16 %v1315, %v1314
  %v1789 = vpack.c.b16 %v1317, %v1316
  %v1790 = vpack.c.b16 %v1319, %v1318
  %v1791 = vpack.c.b16 %v1321, %v1320
  %v1792 = vpack.c.b16 %v1323, %v1322
  %v1793 = vpack.c.b16 %v1325, %v1324
  %v1794 = vpack.c.b16 %v1327, %v1326
  %v1795 = vpack.c.b16 %v1329, %v1328
  %v1796 = vpack.c.b16 %v1331, %v1330
  %v1797 = vpack.c.b16 %v1333, %v1332
  %v1798 = vpack.c.b16 %v1335, %v1334
  %v1799 = vpack.c.b16 %v1337, %v1336
  %v1800 = vpack.c.b16 %v1339, %v1338
  %v1801 = vpack.c.b16 %v1341, %v1340
  %v1802 = vpack.c.b16 %v1343, %v1342
  %v1803 = vpack.c.b16 %v1345, %v1344
  %v1804 = vpack.c.b16 %v1347, %v1346
  %v1805 = vpack.c.b16 %v1349, %v1348
  %v1806 = vpack.c.b16 %v1351, %v1350
  %v1807 = vpack.c.b16 %v1353, %v1352
  %v1808 = vpack.c.b16 %v1355, %v1354
  %v1809 = vpack.c.b16 %v1357, %v1356
  %v1810 = vpack.c.b16 %v1359, %v1358
  %v1811 = vpack.c.b16 %v1361, %v1360
  %v1812 = vpack.c.b16 %v1363, %v1362
  %v1813 = vpack.c.b16 %v1365, %v1364
  %v1814 = vpack.c.b16 %v1367, %v1366
  %v1815 = vpack.c.b16 %v1369, %v1368
  %v1816 = vpack.c.b16 %v1371, %v1370
  %v1817 = vpack.c.b16 %v1373, %v1372
  %v1818 = vpack.c.b16 %v1375, %v1374
  %v1819 = vpack.c.b16 %v1377, %v1376
  %v1820 = vpack.c.b16 %v1379, %v1378
  %v1821 = vpack.c.b16 %v1381, %v1380
  %v1822 = vpack.c.b16 %v1383, %v1382
  %v1823 = vpack.c.b16 %v1385, %v1384
  %v1824 = vpack.c.b16 %v1387, %v1386
  %v1825 = vpack.c.b16 %v1389, %v1388
  %v1826 = vpack.c.b16 %v1391, %v1390
  %v1827 = vpack.c.b16 %v1393, %v1392
  %v1828 = vpack.c.b16 %v1395, %v1394
  %v1829 = vpack.c.b16 %v1397, %v1396
  %v1830 = vpack.c.b16 %v1399, %v1398
  %v1831 = vpack.c.b16 %v1401, %v1400
  %v1832 = vpack.c.b16 %v1403, %v1402
  %v1833 = vpack.c.b16 %v1405, %v1404
  %v1834 = vpack.c.b16 %v1407, %v1406
  %v1835 = vpack.c.b16 %v1409, %v1408
  %v1836 = vpack.c.b16 %v1411, %v1410
  %v1837 = vpack.c.b16 %v1413, %v1412
  %v1838 = vpack.c.b16 %v1415, %v1414
  %v1839 = vpack.c.b16 %v1417, %v1416
  %v1840 = vpack.c.b16 %v1419, %v1418
  %v1841 = vpack.c.b16 %v1421, %v1420
  %v1842 = vpack.c.b16 %v1423, %v1422
  %v1843 = vpack.c.b16 %v1425, %v1424
  %v1844 = vpack.c.b16 %v1427, %v1426
  %v1845 = vpack.c.b16 %v1429, %v1428
  %v1846 = vpack.c.b16 %v1431, %v1430
  %v1847 = vpack.c.b16 %v1433, %v1432
  %v1848 = vpack.c.b16 %v1435, %v1434
  %v1849 = vpack.c.b16 %v1437, %v1436
  %v1850 = vpack.c.b16 %v1439, %v1438
  %v1851 = vpack.c.b16 %v1441, %v1440
  %v1852 = vpack.c.b16 %v1443, %v1442
  %v1853 = vpack.c.b16 %v1445, %v1444
  %v1854 = vpack.c.b16 %v1447, %v1446
  %v1855 = vpack.c.b16 %v1449, %v1448
  %v1856 = vpack.c.b16 %v1451, %v1450
  %v1857 = vpack.c.b16 %v1453, %v1452
  %v1858 = vpack.c.b16 %v1455, %v1454
  %v1859 = vpack.c.b16 %v1457, %v1456
  %v1860 = vpack.c.b16 %v1459, %v1458
  %v1861 = vpack.c.b16 %v1461, %v1460
  %v1862 = vpack.c.b16 %v1463, %v1462
  %v1863 = vpack.c.b16 %v1465, %v1464
  %v1864 = vpack.c.b16 %v1467, %v1466
  %v1865 = vpack.c.b16 %v1469, %v1468
  %v1866 = vpack.c.b16 %v1471, %v1470
  %v1867 = vpack.c.b16 %v1473, %v1472
  %v1868 = vpack.c.b16 %v1475, %v1474
  %v1869 = vpack.c.b16 %v1477, %v1476
  %v1870 = vpack.c.b16 %v1479, %v1478
  %v1871 = vpack.c.b16 %v1481, %v1480
  %v1872 = vpack.c.b16 %v1483, %v1482
  %v1873 = vpack.c.b16 %v1485, %v1484
  %v1874 = vpack.c.b16 %v1487, %v1486
  %v1875 = vpack.c.b16 %v1489, %v1488
  %v1876 = vpack.c.b16 %v1491, %v1490
  %v1877 = vpack.c.b16 %v1493, %v1492
  %v1878 = vpack.c.b16 %v1495, %v1494
  %v1879 = vpack.c.b16 %v1497, %v1496
  %v1880 = vpack.c.b16 %v1499, %v1498
  %v1881 = vpack.c.b16 %v1501, %v1500
  %v1882 = vpack.c.b16 %v1503, %v1502
  %v1883 = vpack.c.b16 %v1505, %v1504
  %v1884 = vpack.c.b16 %v1507, %v1506
  %v1885 = vpack.c.b16 %v1509, %v1508
  %v1886 = vpack.c.b16 %v1511, %v1510
  %v1887 = vpack.c.b16 %v1513, %v1512
  %v1888 = vpack.c.b16 %v1515, %v1514
  %v1889 = vpack.c.b16 %v1517, %v1516
  %v1890 = vpack.c.b16 %v1519, %v1518
  %v1891 = vpack.c.b16 %v1521, %v1520
  %v1892 = vpack.c.b16 %v1523, %v1522
  %v1893 = vpack.c.b16 %v1525, %v1524
  %v1894 = vpack.c.b16 %v1527, %v1526
  %v1895 = vpack.c.b16 %v1529, %v1528
  %v1896 = vpack.c.b16 %v1531, %v1530
  %v1897 = vpack.c.b16 %v1533, %v1532
  %v1898 = vpack.c.b16 %v1535, %v1534
  %v1899 = vpack.c.b16 %v1537, %v1536
  %v1900 = vpack.c.b16 %v1539, %v1538
  %v1901 = vpack.c.b16 %v1541, %v1540
  %v1902 = vpack.c.b16 %v1543, %v1542
  %v1903 = vpack.c.b16 %v1545, %v1544
  %v1904 = vpack.c.b16 %v1547, %v1546
  %v1905 = vpack.c.b16 %v1549, %v1548
  %v1906 = vpack.c.b16 %v1551, %v1550
  %v1907 = vpack.c.b16 %v1553, %v1552
  %v1908 = vpack.c.b16 %v1555, %v1554
  %v1909 = vpack.c.b16 %v1557, %v1556
  %v1910 = vpack.c.b16 %v1559, %v1558
  %v1911 = vpack.c.b16 %v1561, %v1560
  %v1912 = vpack.c.b16 %v1563, %v1562
  %v1913 = vpack.c.b16 %v1565, %v1564
  %v1914 = vpack.c.b16 %v1567, %v1566
  %v1915 = vpack.c.b16 %v1569, %v1568
  %v1916 = vpack.c.b16 %v1571, %v1570
  %v1917 = vpack.c.b16 %v1573, %v1572
  %v1918 = vpack.c.b16 %v1575, %v1574
  %v1919 = vpack.c.b16 %v1577, %v1576
  %v1920 = vpack.c.b16 %v1579, %v1578
  %v1921 = vpack.c.b16 %v1581, %v1580
  %v1922 = vpack.c.b16 %v1583, %v1582
  %v1923 = vpack.c.b16 %v1585, %v1584
  %v1924 = vpack.c.b16 %v1587, %v1586
  %v1925 = vpack.c.b16 %v1589, %v1588
  %v1926 = vpack.c.b16 %v1591, %v1590
  %v1927 = vpack.c.b16 %v1593, %v1592
  %v1928 = vpack.c.b16 %v1595, %v1594
  %v1929 = vpack.c.b16 %v1597, %v1596
  %v1930 = vpack.c.b16 %v1599, %v1598
  %v1931 = vpack.c.b16 %v1601, %v1600
  %v1932 = vpack.c.b16 %v1603, %v1602
  %v1933 = vpack.c.b16 %v1605, %v1604
  %v1934 = vpack.c.b16 %v1607, %v1606
  %v1935 = vpack.c.b16 %v1609, %v1608
  %v1936 = vpack.c.b16 %v1611, %v1610
  %v1937 = vpack.c.b16 %v1613, %v1612
  %v1938 = vpack.c.b16 %v1615, %v1614
  %v1939 = vpack.c.b16 %v1617, %v1616
  %v1940 = vpack.c.b16 %v1619, %v1618
  %v1941 = vpack.c.b16 %v1621, %v1620
  %v1942 = vpack.c.b16 %v1623, %v1622
  %v1943 = vpack.c.b16 %v1625, %v1624
  %v1944 = vpack.c.b16 %v1627, %v1626
  %v1945 = vpack.c.b16 %v1629, %v1628
  %v1946 = vpack.c.b16 %v1631, %v1630
  %v1947 = vpack.c.b16 %v1633, %v1632
  %v1948 = vpack.c.b16 %v1635, %v1634
  %v1949 = vpack.c.b16 %v1637, %v1636
  %v1950 = vpack.c.b16 %v1639, %v1638
  %v1951 = vpack.c.b16 %v1641, %v1640
  %v1952 = vpack.c.b16 %v1643, %v1642
  %v1953 = vpack.c.b16 %v1645, %v1644
  %v1954 = vpack.c.b16 %v1647, %v1646
  %v1955 = vpack.c.b16 %v1649, %v1648
  %v1956 = vpack.c.b16 %v1651, %v1650
  %v1957 = vpack.c.b16 %v1653, %v1652
  %v1958 = vpack.c.b16 %v1655, %v1654
  %v1959 = vpack.c.b16 %v1657, %v1656
  %v1960 = vpack.c.b16 %v1659, %v1658
  %v1961 = vpack.c.b16 %v1661, %v1660
  %v1962 = vpack.c.b16 %v1663, %v1662
  %v1963 = vpack.c.b16 %v1665, %v1664
  %v1964 = vpack.c.b16 %v1667, %v1666
  %v1965 = vpack.c.b16 %v1669, %v1668
  %v1966 = vpack.c.b16 %v1671, %v1670
  %v1967 = vpack.c.b16 %v1673, %v1672
  %v1968 = vpack.c.b16 %v1675, %v1674
  %v1969 = vpack.c.b16 %v1677, %v1676
  %v1970 = vpack.c.b16 %v1679, %v1678
  %v1971 = vpack.c.b16 %v1681, %v1680
  %v1972 = vpack.c.b16 %v1683, %v1682
  %v1973 = vpack.c.b16 %v1685, %v1684
  %v1974 = vpack.c.b16 %v1687, %v1686
  %v1975 = vpack.c.b16 %v1689, %v1688
  %v1976 = vpack.c.b16 %v1691, %v1690
  %v1977 = vpack.c.b16 %v1693, %v1692
  %v1978 = vpack.c.b16 %v1695, %v1694
  %v1979 = vpack.c.b16 %v1697, %v1696
  %v1980 = vpack.c.b16 %v1699, %v1698
  %v1981 = vpack.c.b16 %v1701, %v1700
  %v1982 = vpack.c.b16 %v1703, %v1702
  %v1983 = vpack.c.b16 %v1705, %v1704
  %v1984 = vpack.c.b16 %v1707, %v1706
  %v1985 = vpack.c.b16 %v1709, %v1708
  %v1986 = vpack.c.b16 %v1711, %v1710
  %v1987 = vpack.c.b16 %v1713, %v1712
  %v1988 = vpack.c.b16 %v1715, %v1714
  %v1989 = vpack.c.b16 %v1717, %v1716
  %v1990 = vpack.c.b16 %v1719, %v1718
  %v1991 = vpack.c.b16 %v1721, %v1720
  %v1992 = vpack.c.b16 %v1723, %v1722
  %v1993 = vpack.c.b16 %v1725, %v1724
  %v1994 = vpack.c.b16 %v1727, %v1726
  %v1995 = vpack.c.b16 %v1729, %v1728
  %v1996 = vpack.c.b16 %v1731, %v1730
  %v1997 = vpack.c.b16 %v1733, %v1732
  %v1998 = vpack.c.b16 %v1735, %v1734
  %v1999 = vpack.c.b16 %v1737, %v1736
  %v2000 = vpack.c.b16 %v1739, %v1738
  %v2001 = vpack.c.b16 %v1741, %v1740
  %v2002 = vpack.c.b16 %v1743, %v1742
  %v2003 = vpack.c.b16 %v1745, %v1744
  %v2004 = vpack.c.b16 %v1747, %v1746
  %v2005 = vpack.c.b16 %v1749, %v1748
  %2262 = vmatprep.subr.bf16.mxu0 0
  %2263 = vmatpush1.bf16.msra.mxu0 %v1750
  %2264 = vmatprep.subr.bf16.mxu0 0
  %2265 = vmatpush1.bf16.msra.mxu0 %v1751
  %2266 = vmatprep.subr.bf16.mxu0 0
  %2267 = vmatpush1.bf16.msra.mxu0 %v1752
  %2268 = vmatprep.subr.bf16.mxu0 0
  %2269 = vmatpush1.bf16.msra.mxu0 %v1753
  %2270 = vmatprep.subr.bf16.mxu0 0
  %2271 = vmatpush1.bf16.msra.mxu0 %v1754
  %2272 = vmatprep.subr.bf16.mxu0 0
  %2273 = vmatpush1.bf16.msra.mxu0 %v1755
  %2274 = vmatprep.subr.bf16.mxu0 0
  %2275 = vmatpush1.bf16.msra.mxu0 %v1756
  %2276 = vmatprep.subr.bf16.mxu0 0
  %2277 = vmatpush1.bf16.msra.mxu0 %v1757
  %2278 = vmatprep.subr.bf16.mxu0 0
  %2279 = vmatpush1.bf16.msra.mxu0 %v1758
  %2280 = vmatprep.subr.bf16.mxu0 0
  %2281 = vmatpush1.bf16.msra.mxu0 %v1759
  %2282 = vmatprep.subr.bf16.mxu0 0
  %2283 = vmatpush1.bf16.msra.mxu0 %v1760
  %2284 = vmatprep.subr.bf16.mxu0 0
  %2285 = vmatpush1.bf16.msra.mxu0 %v1761
  %2286 = vmatprep.subr.bf16.mxu0 0
  %2287 = vmatpush1.bf16.msra.mxu0 %v1762
  %2288 = vmatprep.subr.bf16.mxu0 0
  %2289 = vmatpush1.bf16.msra.mxu0 %v1763
  %2290 = vmatprep.subr.bf16.mxu0 0
  %2291 = vmatpush1.bf16.msra.mxu0 %v1764
  %2292 = vmatprep.subr.bf16.mxu0 0
  %2293 = vmatpush1.bf16.msra.mxu0 %v1765
  %2294 = vmatprep.mubr.bf16.mxu0 %v663
  %2295 = vmatmul.mubr.bf16.gmra.mrb[0].mxu0 %v662
  %v2296 = vpop.f32.mrb[0].mxu0
  %v2297 = vadd.f32 %v564, %v2296
  %v2298 = vpop.f32.mrb[0].mxu0
  %v2299 = vpop.f32.mrb[0].mxu0
  %v2300 = vadd.f32 %v564, %v2299
  %v2301 = vpop.f32.mrb[0].mxu0
  %2302 = vdwg.mxu0
  %2303 = vmatprep.subr.bf16.mxu0 0
  %2304 = vmatpush1.bf16.msra.mxu0 %v1766
  %2305 = vmatprep.subr.bf16.mxu0 0
  %2306 = vmatpush1.bf16.msra.mxu0 %v1767
  %2307 = vmatprep.subr.bf16.mxu0 0
  %2308 = vmatpush1.bf16.msra.mxu0 %v1768
  %2309 = vmatprep.subr.bf16.mxu0 0
  %2310 = vmatpush1.bf16.msra.mxu0 %v1769
  %2311 = vmatprep.subr.bf16.mxu0 0
  %2312 = vmatpush1.bf16.msra.mxu0 %v1770
  %2313 = vmatprep.subr.bf16.mxu0 0
  %2314 = vmatpush1.bf16.msra.mxu0 %v1771
  %2315 = vmatprep.subr.bf16.mxu0 0
  %2316 = vmatpush1.bf16.msra.mxu0 %v1772
  %2317 = vmatprep.subr.bf16.mxu0 0
  %2318 = vmatpush1.bf16.msra.mxu0 %v1773
  %2319 = vmatprep.subr.bf16.mxu0 0
  %2320 = vmatpush1.bf16.msra.mxu0 %v1774
  %2321 = vmatprep.subr.bf16.mxu0 0
  %2322 = vmatpush1.bf16.msra.mxu0 %v1775
  %2323 = vmatprep.subr.bf16.mxu0 0
  %2324 = vmatpush1.bf16.msra.mxu0 %v1776
  %2325 = vmatprep.subr.bf16.mxu0 0
  %2326 = vmatpush1.bf16.msra.mxu0 %v1777
  %2327 = vmatprep.subr.bf16.mxu0 0
  %2328 = vmatpush1.bf16.msra.mxu0 %v1778
  %2329 = vmatprep.subr.bf16.mxu0 0
  %2330 = vmatpush1.bf16.msra.mxu0 %v1779
  %2331 = vmatprep.subr.bf16.mxu0 0
  %2332 = vmatpush1.bf16.msra.mxu0 %v1780
  %2333 = vmatprep.subr.bf16.mxu0 0
  %2334 = vmatpush1.bf16.msra.mxu0 %v1781
  %2335 = vmatprep.mubr.bf16.mxu0 %v665
  %2336 = vmatmul.mubr.bf16.gmra.mrb[0].mxu0 %v664
  %v2337 = vpop.f32.mrb[0].mxu0
  %v2338 = vadd.f32 %v2297, %v2337
  %v2339 = vpop.f32.mrb[0].mxu0
  %v2340 = vpop.f32.mrb[0].mxu0
  %v2341 = vadd.f32 %v2300, %v2340
  %v2342 = vpop.f32.mrb[0].mxu0
  %2343 = vdwg.mxu0
  %2344 = vmatprep.subr.bf16.mxu0 0
  %2345 = vmatpush1.bf16.msra.mxu0 %v1782
  %2346 = vmatprep.subr.bf16.mxu0 0
  %2347 = vmatpush1.bf16.msra.mxu0 %v1783
  %2348 = vmatprep.subr.bf16.mxu0 0
  %2349 = vmatpush1.bf16.msra.mxu0 %v1784
  %2350 = vmatprep.subr.bf16.mxu0 0
  %2351 = vmatpush1.bf16.msra.mxu0 %v1785
  %2352 = vmatprep.subr.bf16.mxu0 0
  %2353 = vmatpush1.bf16.msra.mxu0 %v1786
  %2354 = vmatprep.subr.bf16.mxu0 0
  %2355 = vmatpush1.bf16.msra.mxu0 %v1787
  %2356 = vmatprep.subr.bf16.mxu0 0
  %2357 = vmatpush1.bf16.msra.mxu0 %v1788
  %2358 = vmatprep.subr.bf16.mxu0 0
  %2359 = vmatpush1.bf16.msra.mxu0 %v1789
  %2360 = vmatprep.subr.bf16.mxu0 0
  %2361 = vmatpush1.bf16.msra.mxu0 %v1790
  %2362 = vmatprep.subr.bf16.mxu0 0
  %2363 = vmatpush1.bf16.msra.mxu0 %v1791
  %2364 = vmatprep.subr.bf16.mxu0 0
  %2365 = vmatpush1.bf16.msra.mxu0 %v1792
  %2366 = vmatprep.subr.bf16.mxu0 0
  %2367 = vmatpush1.bf16.msra.mxu0 %v1793
  %2368 = vmatprep.subr.bf16.mxu0 0
  %2369 = vmatpush1.bf16.msra.mxu0 %v1794
  %2370 = vmatprep.subr.bf16.mxu0 0
  %2371 = vmatpush1.bf16.msra.mxu0 %v1795
  %2372 = vmatprep.subr.bf16.mxu0 0
  %2373 = vmatpush1.bf16.msra.mxu0 %v1796
  %2374 = vmatprep.subr.bf16.mxu0 0
  %2375 = vmatpush1.bf16.msra.mxu0 %v1797
  %2376 = vmatprep.mubr.bf16.mxu0 %v667
  %2377 = vmatmul.mubr.bf16.gmra.mrb[0].mxu0 %v666
  %v2378 = vpop.f32.mrb[0].mxu0
  %v2379 = vadd.f32 %v2338, %v2378
  %v2380 = vpop.f32.mrb[0].mxu0
  %v2381 = vpop.f32.mrb[0].mxu0
  %v2382 = vadd.f32 %v2341, %v2381
  %v2383 = vpop.f32.mrb[0].mxu0
  %2384 = vdwg.mxu0
  %2385 = vmatprep.subr.bf16.mxu0 0
  %2386 = vmatpush1.bf16.msra.mxu0 %v1798
  %2387 = vmatprep.subr.bf16.mxu0 0
  %2388 = vmatpush1.bf16.msra.mxu0 %v1799
  %2389 = vmatprep.subr.bf16.mxu0 0
  %2390 = vmatpush1.bf16.msra.mxu0 %v1800
  %2391 = vmatprep.subr.bf16.mxu0 0
  %2392 = vmatpush1.bf16.msra.mxu0 %v1801
  %2393 = vmatprep.subr.bf16.mxu0 0
  %2394 = vmatpush1.bf16.msra.mxu0 %v1802
  %2395 = vmatprep.subr.bf16.mxu0 0
  %2396 = vmatpush1.bf16.msra.mxu0 %v1803
  %2397 = vmatprep.subr.bf16.mxu0 0
  %2398 = vmatpush1.bf16.msra.mxu0 %v1804
  %2399 = vmatprep.subr.bf16.mxu0 0
  %2400 = vmatpush1.bf16.msra.mxu0 %v1805
  %2401 = vmatprep.subr.bf16.mxu0 0
  %2402 = vmatpush1.bf16.msra.mxu0 %v1806
  %2403 = vmatprep.subr.bf16.mxu0 0
  %2404 = vmatpush1.bf16.msra.mxu0 %v1807
  %2405 = vmatprep.subr.bf16.mxu0 0
  %2406 = vmatpush1.bf16.msra.mxu0 %v1808
  %2407 = vmatprep.subr.bf16.mxu0 0
  %2408 = vmatpush1.bf16.msra.mxu0 %v1809
  %2409 = vmatprep.subr.bf16.mxu0 0
  %2410 = vmatpush1.bf16.msra.mxu0 %v1810
  %2411 = vmatprep.subr.bf16.mxu0 0
  %2412 = vmatpush1.bf16.msra.mxu0 %v1811
  %2413 = vmatprep.subr.bf16.mxu0 0
  %2414 = vmatpush1.bf16.msra.mxu0 %v1812
  %2415 = vmatprep.subr.bf16.mxu0 0
  %2416 = vmatpush1.bf16.msra.mxu0 %v1813
  %2417 = vmatprep.mubr.bf16.mxu0 %v669
  %2418 = vmatmul.mubr.bf16.gmra.mrb[0].mxu0 %v668
  %v2419 = vpop.f32.mrb[0].mxu0
  %v2420 = vadd.f32 %v2379, %v2419
  %v2421 = vpop.f32.mrb[0].mxu0
  %v2422 = vpop.f32.mrb[0].mxu0
  %v2423 = vadd.f32 %v2382, %v2422
  %v2424 = vpop.f32.mrb[0].mxu0
  %2425 = vdwg.mxu0
  %2426 = vmatprep.subr.bf16.mxu0 0
  %2427 = vmatpush1.bf16.msra.mxu0 %v1814
  %2428 = vmatprep.subr.bf16.mxu0 0
  %2429 = vmatpush1.bf16.msra.mxu0 %v1815
  %2430 = vmatprep.subr.bf16.mxu0 0
  %2431 = vmatpush1.bf16.msra.mxu0 %v1816
  %2432 = vmatprep.subr.bf16.mxu0 0
  %2433 = vmatpush1.bf16.msra.mxu0 %v1817
  %2434 = vmatprep.subr.bf16.mxu0 0
  %2435 = vmatpush1.bf16.msra.mxu0 %v1818
  %2436 = vmatprep.subr.bf16.mxu0 0
  %2437 = vmatpush1.bf16.msra.mxu0 %v1819
  %2438 = vmatprep.subr.bf16.mxu0 0
  %2439 = vmatpush1.bf16.msra.mxu0 %v1820
  %2440 = vmatprep.subr.bf16.mxu0 0
  %2441 = vmatpush1.bf16.msra.mxu0 %v1821
  %2442 = vmatprep.subr.bf16.mxu0 0
  %2443 = vmatpush1.bf16.msra.mxu0 %v1822
  %2444 = vmatprep.subr.bf16.mxu0 0
  %2445 = vmatpush1.bf16.msra.mxu0 %v1823
  %2446 = vmatprep.subr.bf16.mxu0 0
  %2447 = vmatpush1.bf16.msra.mxu0 %v1824
  %2448 = vmatprep.subr.bf16.mxu0 0
  %2449 = vmatpush1.bf16.msra.mxu0 %v1825
  %2450 = vmatprep.subr.bf16.mxu0 0
  %2451 = vmatpush1.bf16.msra.mxu0 %v1826
  %2452 = vmatprep.subr.bf16.mxu0 0
  %2453 = vmatpush1.bf16.msra.mxu0 %v1827
  %2454 = vmatprep.subr.bf16.mxu0 0
  %2455 = vmatpush1.bf16.msra.mxu0 %v1828
  %2456 = vmatprep.subr.bf16.mxu0 0
  %2457 = vmatpush1.bf16.msra.mxu0 %v1829
  %2458 = vmatprep.mubr.bf16.mxu0 %v671
  %2459 = vmatmul.mubr.bf16.gmra.mrb[0].mxu0 %v670
  %v2460 = vpop.f32.mrb[0].mxu0
  %v2461 = vadd.f32 %v2420, %v2460
  %v2462 = vpop.f32.mrb[0].mxu0
  %v2463 = vpop.f32.mrb[0].mxu0
  %v2464 = vadd.f32 %v2423, %v2463
  %v2465 = vpop.f32.mrb[0].mxu0
  %2466 = vdwg.mxu0
  %2467 = vmatprep.subr.bf16.mxu0 0
  %2468 = vmatpush1.bf16.msra.mxu0 %v1830
  %2469 = vmatprep.subr.bf16.mxu0 0
  %2470 = vmatpush1.bf16.msra.mxu0 %v1831
  %2471 = vmatprep.subr.bf16.mxu0 0
  %2472 = vmatpush1.bf16.msra.mxu0 %v1832
  %2473 = vmatprep.subr.bf16.mxu0 0
  %2474 = vmatpush1.bf16.msra.mxu0 %v1833
  %2475 = vmatprep.subr.bf16.mxu0 0
  %2476 = vmatpush1.bf16.msra.mxu0 %v1834
  %2477 = vmatprep.subr.bf16.mxu0 0
  %2478 = vmatpush1.bf16.msra.mxu0 %v1835
  %2479 = vmatprep.subr.bf16.mxu0 0
  %2480 = vmatpush1.bf16.msra.mxu0 %v1836
  %2481 = vmatprep.subr.bf16.mxu0 0
  %2482 = vmatpush1.bf16.msra.mxu0 %v1837
  %2483 = vmatprep.subr.bf16.mxu0 0
  %2484 = vmatpush1.bf16.msra.mxu0 %v1838
  %2485 = vmatprep.subr.bf16.mxu0 0
  %2486 = vmatpush1.bf16.msra.mxu0 %v1839
  %2487 = vmatprep.subr.bf16.mxu0 0
  %2488 = vmatpush1.bf16.msra.mxu0 %v1840
  %2489 = vmatprep.subr.bf16.mxu0 0
  %2490 = vmatpush1.bf16.msra.mxu0 %v1841
  %2491 = vmatprep.subr.bf16.mxu0 0
  %2492 = vmatpush1.bf16.msra.mxu0 %v1842
  %2493 = vmatprep.subr.bf16.mxu0 0
  %2494 = vmatpush1.bf16.msra.mxu0 %v1843
  %2495 = vmatprep.subr.bf16.mxu0 0
  %2496 = vmatpush1.bf16.msra.mxu0 %v1844
  %2497 = vmatprep.subr.bf16.mxu0 0
  %2498 = vmatpush1.bf16.msra.mxu0 %v1845
  %2499 = vmatprep.mubr.bf16.mxu0 %v673
  %2500 = vmatmul.mubr.bf16.gmra.mrb[0].mxu0 %v672
  %v2501 = vpop.f32.mrb[0].mxu0
  %v2502 = vadd.f32 %v2461, %v2501
  %v2503 = vpop.f32.mrb[0].mxu0
  %v2504 = vpop.f32.mrb[0].mxu0
  %v2505 = vadd.f32 %v2464, %v2504
  %v2506 = vpop.f32.mrb[0].mxu0
  %2507 = vdwg.mxu0
  %2508 = vmatprep.subr.bf16.mxu0 0
  %2509 = vmatpush1.bf16.msra.mxu0 %v1846
  %2510 = vmatprep.subr.bf16.mxu0 0
  %2511 = vmatpush1.bf16.msra.mxu0 %v1847
  %2512 = vmatprep.subr.bf16.mxu0 0
  %2513 = vmatpush1.bf16.msra.mxu0 %v1848
  %2514 = vmatprep.subr.bf16.mxu0 0
  %2515 = vmatpush1.bf16.msra.mxu0 %v1849
  %2516 = vmatprep.subr.bf16.mxu0 0
  %2517 = vmatpush1.bf16.msra.mxu0 %v1850
  %2518 = vmatprep.subr.bf16.mxu0 0
  %2519 = vmatpush1.bf16.msra.mxu0 %v1851
  %2520 = vmatprep.subr.bf16.mxu0 0
  %2521 = vmatpush1.bf16.msra.mxu0 %v1852
  %2522 = vmatprep.subr.bf16.mxu0 0
  %2523 = vmatpush1.bf16.msra.mxu0 %v1853
  %2524 = vmatprep.subr.bf16.mxu0 0
  %2525 = vmatpush1.bf16.msra.mxu0 %v1854
  %2526 = vmatprep.subr.bf16.mxu0 0
  %2527 = vmatpush1.bf16.msra.mxu0 %v1855
  %2528 = vmatprep.subr.bf16.mxu0 0
  %2529 = vmatpush1.bf16.msra.mxu0 %v1856
  %2530 = vmatprep.subr.bf16.mxu0 0
  %2531 = vmatpush1.bf16.msra.mxu0 %v1857
  %2532 = vmatprep.subr.bf16.mxu0 0
  %2533 = vmatpush1.bf16.msra.mxu0 %v1858
  %2534 = vmatprep.subr.bf16.mxu0 0
  %2535 = vmatpush1.bf16.msra.mxu0 %v1859
  %2536 = vmatprep.subr.bf16.mxu0 0
  %2537 = vmatpush1.bf16.msra.mxu0 %v1860
  %2538 = vmatprep.subr.bf16.mxu0 0
  %2539 = vmatpush1.bf16.msra.mxu0 %v1861
  %2540 = vmatprep.mubr.bf16.mxu0 %v675
  %2541 = vmatmul.mubr.bf16.gmra.mrb[0].mxu0 %v674
  %v2542 = vpop.f32.mrb[0].mxu0
  %v2543 = vadd.f32 %v2502, %v2542
  %v2544 = vpop.f32.mrb[0].mxu0
  %v2545 = vpop.f32.mrb[0].mxu0
  %v2546 = vadd.f32 %v2505, %v2545
  %v2547 = vpop.f32.mrb[0].mxu0
  %2548 = vdwg.mxu0
  %2549 = vmatprep.subr.bf16.mxu0 0
  %2550 = vmatpush1.bf16.msra.mxu0 %v1862
  %2551 = vmatprep.subr.bf16.mxu0 0
  %2552 = vmatpush1.bf16.msra.mxu0 %v1863
  %2553 = vmatprep.subr.bf16.mxu0 0
  %2554 = vmatpush1.bf16.msra.mxu0 %v1864
  %2555 = vmatprep.subr.bf16.mxu0 0
  %2556 = vmatpush1.bf16.msra.mxu0 %v1865
  %2557 = vmatprep.subr.bf16.mxu0 0
  %2558 = vmatpush1.bf16.msra.mxu0 %v1866
  %2559 = vmatprep.subr.bf16.mxu0 0
  %2560 = vmatpush1.bf16.msra.mxu0 %v1867
  %2561 = vmatprep.subr.bf16.mxu0 0
  %2562 = vmatpush1.bf16.msra.mxu0 %v1868
  %2563 = vmatprep.subr.bf16.mxu0 0
  %2564 = vmatpush1.bf16.msra.mxu0 %v1869
  %2565 = vmatprep.subr.bf16.mxu0 0
  %2566 = vmatpush1.bf16.msra.mxu0 %v1870
  %2567 = vmatprep.subr.bf16.mxu0 0
  %2568 = vmatpush1.bf16.msra.mxu0 %v1871
  %2569 = vmatprep.subr.bf16.mxu0 0
  %2570 = vmatpush1.bf16.msra.mxu0 %v1872
  %2571 = vmatprep.subr.bf16.mxu0 0
  %2572 = vmatpush1.bf16.msra.mxu0 %v1873
  %2573 = vmatprep.subr.bf16.mxu0 0
  %2574 = vmatpush1.bf16.msra.mxu0 %v1874
  %2575 = vmatprep.subr.bf16.mxu0 0
  %2576 = vmatpush1.bf16.msra.mxu0 %v1875
  %2577 = vmatprep.subr.bf16.mxu0 0
  %2578 = vmatpush1.bf16.msra.mxu0 %v1876
  %2579 = vmatprep.subr.bf16.mxu0 0
  %2580 = vmatpush1.bf16.msra.mxu0 %v1877
  %2581 = vmatprep.mubr.bf16.mxu0 %v677
  %2582 = vmatmul.mubr.bf16.gmra.mrb[0].mxu0 %v676
  %v2583 = vpop.f32.mrb[0].mxu0
  %v2584 = vadd.f32 %v2543, %v2583
  %v2585 = vpop.f32.mrb[0].mxu0
  %v2586 = vpop.f32.mrb[0].mxu0
  %v2587 = vadd.f32 %v2546, %v2586
  %v2588 = vpop.f32.mrb[0].mxu0
  %2589 = vdwg.mxu0
  %2590 = vmatprep.subr.bf16.mxu0 0
  %2591 = vmatpush1.bf16.msra.mxu0 %v1878
  %2592 = vmatprep.subr.bf16.mxu0 0
  %2593 = vmatpush1.bf16.msra.mxu0 %v1879
  %2594 = vmatprep.subr.bf16.mxu0 0
  %2595 = vmatpush1.bf16.msra.mxu0 %v1880
  %2596 = vmatprep.subr.bf16.mxu0 0
  %2597 = vmatpush1.bf16.msra.mxu0 %v1881
  %2598 = vmatprep.subr.bf16.mxu0 0
  %2599 = vmatpush1.bf16.msra.mxu0 %v1882
  %2600 = vmatprep.subr.bf16.mxu0 0
  %2601 = vmatpush1.bf16.msra.mxu0 %v1883
  %2602 = vmatprep.subr.bf16.mxu0 0
  %2603 = vmatpush1.bf16.msra.mxu0 %v1884
  %2604 = vmatprep.subr.bf16.mxu0 0
  %2605 = vmatpush1.bf16.msra.mxu0 %v1885
  %2606 = vmatprep.subr.bf16.mxu0 0
  %2607 = vmatpush1.bf16.msra.mxu0 %v1886
  %2608 = vmatprep.subr.bf16.mxu0 0
  %2609 = vmatpush1.bf16.msra.mxu0 %v1887
  %2610 = vmatprep.subr.bf16.mxu0 0
  %2611 = vmatpush1.bf16.msra.mxu0 %v1888
  %2612 = vmatprep.subr.bf16.mxu0 0
  %2613 = vmatpush1.bf16.msra.mxu0 %v1889
  %2614 = vmatprep.subr.bf16.mxu0 0
  %2615 = vmatpush1.bf16.msra.mxu0 %v1890
  %2616 = vmatprep.subr.bf16.mxu0 0
  %2617 = vmatpush1.bf16.msra.mxu0 %v1891
  %2618 = vmatprep.subr.bf16.mxu0 0
  %2619 = vmatpush1.bf16.msra.mxu0 %v1892
  %2620 = vmatprep.subr.bf16.mxu0 0
  %2621 = vmatpush1.bf16.msra.mxu0 %v1893
  %2622 = vmatprep.mubr.bf16.mxu0 %v679
  %2623 = vmatmul.mubr.bf16.gmra.mrb[0].mxu0 %v678
  %v2624 = vpop.f32.mrb[0].mxu0
  %v2625 = vadd.f32 %v2584, %v2624
  %v2626 = vpop.f32.mrb[0].mxu0
  %v2627 = vpop.f32.mrb[0].mxu0
  %v2628 = vadd.f32 %v2587, %v2627
  %v2629 = vpop.f32.mrb[0].mxu0
  %2630 = vdwg.mxu0
  %2631 = vmatprep.subr.bf16.mxu0 0
  %2632 = vmatpush1.bf16.msra.mxu0 %v1894
  %2633 = vmatprep.subr.bf16.mxu0 0
  %2634 = vmatpush1.bf16.msra.mxu0 %v1895
  %2635 = vmatprep.subr.bf16.mxu0 0
  %2636 = vmatpush1.bf16.msra.mxu0 %v1896
  %2637 = vmatprep.subr.bf16.mxu0 0
  %2638 = vmatpush1.bf16.msra.mxu0 %v1897
  %2639 = vmatprep.subr.bf16.mxu0 0
  %2640 = vmatpush1.bf16.msra.mxu0 %v1898
  %2641 = vmatprep.subr.bf16.mxu0 0
  %2642 = vmatpush1.bf16.msra.mxu0 %v1899
  %2643 = vmatprep.subr.bf16.mxu0 0
  %2644 = vmatpush1.bf16.msra.mxu0 %v1900
  %2645 = vmatprep.subr.bf16.mxu0 0
  %2646 = vmatpush1.bf16.msra.mxu0 %v1901
  %2647 = vmatprep.subr.bf16.mxu0 0
  %2648 = vmatpush1.bf16.msra.mxu0 %v1902
  %2649 = vmatprep.subr.bf16.mxu0 0
  %2650 = vmatpush1.bf16.msra.mxu0 %v1903
  %2651 = vmatprep.subr.bf16.mxu0 0
  %2652 = vmatpush1.bf16.msra.mxu0 %v1904
  %2653 = vmatprep.subr.bf16.mxu0 0
  %2654 = vmatpush1.bf16.msra.mxu0 %v1905
  %2655 = vmatprep.subr.bf16.mxu0 0
  %2656 = vmatpush1.bf16.msra.mxu0 %v1906
  %2657 = vmatprep.subr.bf16.mxu0 0
  %2658 = vmatpush1.bf16.msra.mxu0 %v1907
  %2659 = vmatprep.subr.bf16.mxu0 0
  %2660 = vmatpush1.bf16.msra.mxu0 %v1908
  %2661 = vmatprep.subr.bf16.mxu0 0
  %2662 = vmatpush1.bf16.msra.mxu0 %v1909
  %2663 = vmatprep.mubr.bf16.mxu0 %v681
  %2664 = vmatmul.mubr.bf16.gmra.mrb[0].mxu0 %v680
  %v2665 = vpop.f32.mrb[0].mxu0
  %v2666 = vadd.f32 %v2625, %v2665
  %v2667 = vpop.f32.mrb[0].mxu0
  %v2668 = vpop.f32.mrb[0].mxu0
  %v2669 = vadd.f32 %v2628, %v2668
  %v2670 = vpop.f32.mrb[0].mxu0
  %2671 = vdwg.mxu0
  %2672 = vmatprep.subr.bf16.mxu0 0
  %2673 = vmatpush1.bf16.msra.mxu0 %v1910
  %2674 = vmatprep.subr.bf16.mxu0 0
  %2675 = vmatpush1.bf16.msra.mxu0 %v1911
  %2676 = vmatprep.subr.bf16.mxu0 0
  %2677 = vmatpush1.bf16.msra.mxu0 %v1912
  %2678 = vmatprep.subr.bf16.mxu0 0
  %2679 = vmatpush1.bf16.msra.mxu0 %v1913
  %2680 = vmatprep.subr.bf16.mxu0 0
  %2681 = vmatpush1.bf16.msra.mxu0 %v1914
  %2682 = vmatprep.subr.bf16.mxu0 0
  %2683 = vmatpush1.bf16.msra.mxu0 %v1915
  %2684 = vmatprep.subr.bf16.mxu0 0
  %2685 = vmatpush1.bf16.msra.mxu0 %v1916
  %2686 = vmatprep.subr.bf16.mxu0 0
  %2687 = vmatpush1.bf16.msra.mxu0 %v1917
  %2688 = vmatprep.subr.bf16.mxu0 0
  %2689 = vmatpush1.bf16.msra.mxu0 %v1918
  %2690 = vmatprep.subr.bf16.mxu0 0
  %2691 = vmatpush1.bf16.msra.mxu0 %v1919
  %2692 = vmatprep.subr.bf16.mxu0 0
  %2693 = vmatpush1.bf16.msra.mxu0 %v1920
  %2694 = vmatprep.subr.bf16.mxu0 0
  %2695 = vmatpush1.bf16.msra.mxu0 %v1921
  %2696 = vmatprep.subr.bf16.mxu0 0
  %2697 = vmatpush1.bf16.msra.mxu0 %v1922
  %2698 = vmatprep.subr.bf16.mxu0 0
  %2699 = vmatpush1.bf16.msra.mxu0 %v1923
  %2700 = vmatprep.subr.bf16.mxu0 0
  %2701 = vmatpush1.bf16.msra.mxu0 %v1924
  %2702 = vmatprep.subr.bf16.mxu0 0
  %2703 = vmatpush1.bf16.msra.mxu0 %v1925
  %2704 = vmatprep.mubr.bf16.mxu0 %v683
  %2705 = vmatmul.mubr.bf16.gmra.mrb[0].mxu0 %v682
  %v2706 = vpop.f32.mrb[0].mxu0
  %v2707 = vadd.f32 %v2666, %v2706
  %v2708 = vpop.f32.mrb[0].mxu0
  %v2709 = vpop.f32.mrb[0].mxu0
  %v2710 = vadd.f32 %v2669, %v2709
  %v2711 = vpop.f32.mrb[0].mxu0
  %2712 = vdwg.mxu0
  %2713 = vmatprep.subr.bf16.mxu0 0
  %2714 = vmatpush1.bf16.msra.mxu0 %v1926
  %2715 = vmatprep.subr.bf16.mxu0 0
  %2716 = vmatpush1.bf16.msra.mxu0 %v1927
  %2717 = vmatprep.subr.bf16.mxu0 0
  %2718 = vmatpush1.bf16.msra.mxu0 %v1928
  %2719 = vmatprep.subr.bf16.mxu0 0
  %2720 = vmatpush1.bf16.msra.mxu0 %v1929
  %2721 = vmatprep.subr.bf16.mxu0 0
  %2722 = vmatpush1.bf16.msra.mxu0 %v1930
  %2723 = vmatprep.subr.bf16.mxu0 0
  %2724 = vmatpush1.bf16.msra.mxu0 %v1931
  %2725 = vmatprep.subr.bf16.mxu0 0
  %2726 = vmatpush1.bf16.msra.mxu0 %v1932
  %2727 = vmatprep.subr.bf16.mxu0 0
  %2728 = vmatpush1.bf16.msra.mxu0 %v1933
  %2729 = vmatprep.subr.bf16.mxu0 0
  %2730 = vmatpush1.bf16.msra.mxu0 %v1934
  %2731 = vmatprep.subr.bf16.mxu0 0
  %2732 = vmatpush1.bf16.msra.mxu0 %v1935
  %2733 = vmatprep.subr.bf16.mxu0 0
  %2734 = vmatpush1.bf16.msra.mxu0 %v1936
  %2735 = vmatprep.subr.bf16.mxu0 0
  %2736 = vmatpush1.bf16.msra.mxu0 %v1937
  %2737 = vmatprep.subr.bf16.mxu0 0
  %2738 = vmatpush1.bf16.msra.mxu0 %v1938
  %2739 = vmatprep.subr.bf16.mxu0 0
  %2740 = vmatpush1.bf16.msra.mxu0 %v1939
  %2741 = vmatprep.subr.bf16.mxu0 0
  %2742 = vmatpush1.bf16.msra.mxu0 %v1940
  %2743 = vmatprep.subr.bf16.mxu0 0
  %2744 = vmatpush1.bf16.msra.mxu0 %v1941
  %2745 = vmatprep.mubr.bf16.mxu0 %v685
  %2746 = vmatmul.mubr.bf16.gmra.mrb[0].mxu0 %v684
  %v2747 = vpop.f32.mrb[0].mxu0
  %v2748 = vadd.f32 %v2707, %v2747
  %v2749 = vpop.f32.mrb[0].mxu0
  %v2750 = vpop.f32.mrb[0].mxu0
  %v2751 = vadd.f32 %v2710, %v2750
  %v2752 = vpop.f32.mrb[0].mxu0
  %2753 = vdwg.mxu0
  %2754 = vmatprep.subr.bf16.mxu0 0
  %2755 = vmatpush1.bf16.msra.mxu0 %v1942
  %2756 = vmatprep.subr.bf16.mxu0 0
  %2757 = vmatpush1.bf16.msra.mxu0 %v1943
  %2758 = vmatprep.subr.bf16.mxu0 0
  %2759 = vmatpush1.bf16.msra.mxu0 %v1944
  %2760 = vmatprep.subr.bf16.mxu0 0
  %2761 = vmatpush1.bf16.msra.mxu0 %v1945
  %2762 = vmatprep.subr.bf16.mxu0 0
  %2763 = vmatpush1.bf16.msra.mxu0 %v1946
  %2764 = vmatprep.subr.bf16.mxu0 0
  %2765 = vmatpush1.bf16.msra.mxu0 %v1947
  %2766 = vmatprep.subr.bf16.mxu0 0
  %2767 = vmatpush1.bf16.msra.mxu0 %v1948
  %2768 = vmatprep.subr.bf16.mxu0 0
  %2769 = vmatpush1.bf16.msra.mxu0 %v1949
  %2770 = vmatprep.subr.bf16.mxu0 0
  %2771 = vmatpush1.bf16.msra.mxu0 %v1950
  %2772 = vmatprep.subr.bf16.mxu0 0
  %2773 = vmatpush1.bf16.msra.mxu0 %v1951
  %2774 = vmatprep.subr.bf16.mxu0 0
  %2775 = vmatpush1.bf16.msra.mxu0 %v1952
  %2776 = vmatprep.subr.bf16.mxu0 0
  %2777 = vmatpush1.bf16.msra.mxu0 %v1953
  %2778 = vmatprep.subr.bf16.mxu0 0
  %2779 = vmatpush1.bf16.msra.mxu0 %v1954
  %2780 = vmatprep.subr.bf16.mxu0 0
  %2781 = vmatpush1.bf16.msra.mxu0 %v1955
  %2782 = vmatprep.subr.bf16.mxu0 0
  %2783 = vmatpush1.bf16.msra.mxu0 %v1956
  %2784 = vmatprep.subr.bf16.mxu0 0
  %2785 = vmatpush1.bf16.msra.mxu0 %v1957
  %2786 = vmatprep.mubr.bf16.mxu0 %v687
  %2787 = vmatmul.mubr.bf16.gmra.mrb[0].mxu0 %v686
  %v2788 = vpop.f32.mrb[0].mxu0
  %v2789 = vadd.f32 %v2748, %v2788
  %v2790 = vpop.f32.mrb[0].mxu0
  %v2791 = vpop.f32.mrb[0].mxu0
  %v2792 = vadd.f32 %v2751, %v2791
  %v2793 = vpop.f32.mrb[0].mxu0
  %2794 = vdwg.mxu0
  %2795 = vmatprep.subr.bf16.mxu0 0
  %2796 = vmatpush1.bf16.msra.mxu0 %v1958
  %2797 = vmatprep.subr.bf16.mxu0 0
  %2798 = vmatpush1.bf16.msra.mxu0 %v1959
  %2799 = vmatprep.subr.bf16.mxu0 0
  %2800 = vmatpush1.bf16.msra.mxu0 %v1960
  %2801 = vmatprep.subr.bf16.mxu0 0
  %2802 = vmatpush1.bf16.msra.mxu0 %v1961
  %2803 = vmatprep.subr.bf16.mxu0 0
  %2804 = vmatpush1.bf16.msra.mxu0 %v1962
  %2805 = vmatprep.subr.bf16.mxu0 0
  %2806 = vmatpush1.bf16.msra.mxu0 %v1963
  %2807 = vmatprep.subr.bf16.mxu0 0
  %2808 = vmatpush1.bf16.msra.mxu0 %v1964
  %2809 = vmatprep.subr.bf16.mxu0 0
  %2810 = vmatpush1.bf16.msra.mxu0 %v1965
  %2811 = vmatprep.subr.bf16.mxu0 0
  %2812 = vmatpush1.bf16.msra.mxu0 %v1966
  %2813 = vmatprep.subr.bf16.mxu0 0
  %2814 = vmatpush1.bf16.msra.mxu0 %v1967
  %2815 = vmatprep.subr.bf16.mxu0 0
  %2816 = vmatpush1.bf16.msra.mxu0 %v1968
  %2817 = vmatprep.subr.bf16.mxu0 0
  %2818 = vmatpush1.bf16.msra.mxu0 %v1969
  %2819 = vmatprep.subr.bf16.mxu0 0
  %2820 = vmatpush1.bf16.msra.mxu0 %v1970
  %2821 = vmatprep.subr.bf16.mxu0 0
  %2822 = vmatpush1.bf16.msra.mxu0 %v1971
  %2823 = vmatprep.subr.bf16.mxu0 0
  %2824 = vmatpush1.bf16.msra.mxu0 %v1972
  %2825 = vmatprep.subr.bf16.mxu0 0
  %2826 = vmatpush1.bf16.msra.mxu0 %v1973
  %2827 = vmatprep.mubr.bf16.mxu0 %v689
  %2828 = vmatmul.mubr.bf16.gmra.mrb[0].mxu0 %v688
  %v2829 = vpop.f32.mrb[0].mxu0
  %v2830 = vadd.f32 %v2789, %v2829
  %v2831 = vpop.f32.mrb[0].mxu0
  %v2832 = vpop.f32.mrb[0].mxu0
  %v2833 = vadd.f32 %v2792, %v2832
  %v2834 = vpop.f32.mrb[0].mxu0
  %2835 = vdwg.mxu0
  %2836 = vmatprep.subr.bf16.mxu0 0
  %2837 = vmatpush1.bf16.msra.mxu0 %v1974
  %2838 = vmatprep.subr.bf16.mxu0 0
  %2839 = vmatpush1.bf16.msra.mxu0 %v1975
  %2840 = vmatprep.subr.bf16.mxu0 0
  %2841 = vmatpush1.bf16.msra.mxu0 %v1976
  %2842 = vmatprep.subr.bf16.mxu0 0
  %2843 = vmatpush1.bf16.msra.mxu0 %v1977
  %2844 = vmatprep.subr.bf16.mxu0 0
  %2845 = vmatpush1.bf16.msra.mxu0 %v1978
  %2846 = vmatprep.subr.bf16.mxu0 0
  %2847 = vmatpush1.bf16.msra.mxu0 %v1979
  %2848 = vmatprep.subr.bf16.mxu0 0
  %2849 = vmatpush1.bf16.msra.mxu0 %v1980
  %2850 = vmatprep.subr.bf16.mxu0 0
  %2851 = vmatpush1.bf16.msra.mxu0 %v1981
  %2852 = vmatprep.subr.bf16.mxu0 0
  %2853 = vmatpush1.bf16.msra.mxu0 %v1982
  %2854 = vmatprep.subr.bf16.mxu0 0
  %2855 = vmatpush1.bf16.msra.mxu0 %v1983
  %2856 = vmatprep.subr.bf16.mxu0 0
  %2857 = vmatpush1.bf16.msra.mxu0 %v1984
  %2858 = vmatprep.subr.bf16.mxu0 0
  %2859 = vmatpush1.bf16.msra.mxu0 %v1985
  %2860 = vmatprep.subr.bf16.mxu0 0
  %2861 = vmatpush1.bf16.msra.mxu0 %v1986
  %2862 = vmatprep.subr.bf16.mxu0 0
  %2863 = vmatpush1.bf16.msra.mxu0 %v1987
  %2864 = vmatprep.subr.bf16.mxu0 0
  %2865 = vmatpush1.bf16.msra.mxu0 %v1988
  %2866 = vmatprep.subr.bf16.mxu0 0
  %2867 = vmatpush1.bf16.msra.mxu0 %v1989
  %2868 = vmatprep.mubr.bf16.mxu0 %v691
  %2869 = vmatmul.mubr.bf16.gmra.mrb[0].mxu0 %v690
  %v2870 = vpop.f32.mrb[0].mxu0
  %v2871 = vadd.f32 %v2830, %v2870
  %v2872 = vpop.f32.mrb[0].mxu0
  %v2873 = vpop.f32.mrb[0].mxu0
  %v2874 = vadd.f32 %v2833, %v2873
  %v2875 = vpop.f32.mrb[0].mxu0
  %2876 = vdwg.mxu0
  %2877 = vmatprep.subr.bf16.mxu0 0
  %2878 = vmatpush1.bf16.msra.mxu0 %v1990
  %2879 = vmatprep.subr.bf16.mxu0 0
  %2880 = vmatpush1.bf16.msra.mxu0 %v1991
  %2881 = vmatprep.subr.bf16.mxu0 0
  %2882 = vmatpush1.bf16.msra.mxu0 %v1992
  %2883 = vmatprep.subr.bf16.mxu0 0
  %2884 = vmatpush1.bf16.msra.mxu0 %v1993
  %2885 = vmatprep.subr.bf16.mxu0 0
  %2886 = vmatpush1.bf16.msra.mxu0 %v1994
  %2887 = vmatprep.subr.bf16.mxu0 0
  %2888 = vmatpush1.bf16.msra.mxu0 %v1995
  %2889 = vmatprep.subr.bf16.mxu0 0
  %2890 = vmatpush1.bf16.msra.mxu0 %v1996
  %2891 = vmatprep.subr.bf16.mxu0 0
  %2892 = vmatpush1.bf16.msra.mxu0 %v1997
  %2893 = vmatprep.subr.bf16.mxu0 0
  %2894 = vmatpush1.bf16.msra.mxu0 %v1998
  %2895 = vmatprep.subr.bf16.mxu0 0
  %2896 = vmatpush1.bf16.msra.mxu0 %v1999
  %2897 = vmatprep.subr.bf16.mxu0 0
  %2898 = vmatpush1.bf16.msra.mxu0 %v2000
  %2899 = vmatprep.subr.bf16.mxu0 0
  %2900 = vmatpush1.bf16.msra.mxu0 %v2001
  %2901 = vmatprep.subr.bf16.mxu0 0
  %2902 = vmatpush1.bf16.msra.mxu0 %v2002
  %2903 = vmatprep.subr.bf16.mxu0 0
  %2904 = vmatpush1.bf16.msra.mxu0 %v2003
  %2905 = vmatprep.subr.bf16.mxu0 0
  %2906 = vmatpush1.bf16.msra.mxu0 %v2004
  %2907 = vmatprep.subr.bf16.mxu0 0
  %2908 = vmatpush1.bf16.msra.mxu0 %v2005
  %2909 = vmatprep.mubr.bf16.mxu0 %v693
  %2910 = vmatmul.mubr.bf16.gmra.mrb[0].mxu0 %v692
  %v2911 = vpop.f32.mrb[0].mxu0
  %v2912 = vadd.f32 %v2871, %v2911
  %v2913 = vpop.f32.mrb[0].mxu0
  %v2914 = vpop.f32.mrb[0].mxu0
  %v2915 = vadd.f32 %v2874, %v2914
  %v2916 = vpop.f32.mrb[0].mxu0
  %2917 = vdwg.mxu0
  %v2918 = vtanh.pop %v2912
  %v2919 = vtanh.pop %v2915
  %2920 = vst [vmem:[%s3] sm:$0xff] %v2918
  %2921 = vst [vmem:[%s3 + $0x8] sm:$0xff] %v2919
  // Predicated region
  $region14: #{classif_forward.7} parent=0 // pred_check
    _
  $region15: #{classif_forward.7} parent=0 // pred_check_branch
    %2923 = sbr.rel (0) target = $region17
  $region16: #{classif_forward.7} parent=0 // pred_region
    _
  $region17: #{classif_forward.7} parent=0 // pred_fallthru
    _
  // Predicated region
  $region18: #{classif_forward.7} parent=0 // pred_check
    _
  $region19: #{classif_forward.7} parent=0 // pred_check_branch
    %2925 = sbr.rel (0) target = $region21
  $region20: #{classif_forward.7} parent=0 // pred_region
    _
  $region21: #{classif_forward.7} parent=0 // pred_fallthru
    _

</llo_original>
